<compile_context>
chip_gen: v7x
topology: tpu7x:2x2x1
jax: 0.10.0
libtpu: 0.0.40
codegen_flags: <defaults>
</compile_context>

<pallas_src>
import functools

import numpy as np
import jax
import jax.numpy as jnp
from jax.experimental import pallas as pl
from jax.experimental.pallas import tpu as pltpu


def _round_up(x, m):
    return ((x + m - 1) // m) * m


_F_PAD = 128  # Fourier-feature width padded 60 -> 128 (zero columns)

_PARAM_ORDER = (
    "dW1", "db1", "dW2", "db2", "dW3", "db3", "dW4", "db4", "dW5", "db5",
    "dW6", "db6",
    "rW1d", "rW1p", "rb1", "rW2", "rb2", "rW3", "rb3", "rW4", "rb4",
    "rW5", "rb5", "rW6", "rb6",
)


# ---------------------------------------------------------------------------
# Device heuristics (perf-only: numerics are identical on every generation)
# ---------------------------------------------------------------------------
def _device_info():
    kind = ""
    try:
        kind = (jax.devices()[0].device_kind or "").lower()
    except Exception:
        pass
    is_v5e = ("v5 lite" in kind) or ("v5e" in kind) or ("v5litepod" in kind)
    # Chips whose Pallas device exposes two TensorCores (v4/v5p megacore, v7x).
    two_core = any(t in kind for t in ("v4", "v5p", "7x", "v7"))
    # v4/v5e/v5p/v6e have 128 MiB physical VMEM; v7x only has 64 MiB.
    big_vmem = any(t in kind for t in ("v4", "v5", "v6"))
    return {
        "bf16_relu": not is_v5e,                      # v5e VPU has no bf16 path
        "num_cores": 2 if two_core else 1,
        "vmem_limit": (96 if big_vmem else 48) * 1024 * 1024,
        "default_tile": 1024 if (big_vmem and not two_core) else 512,
    }


def _choose_tile(batch, max_tile, num_cores):
    """Batch tile (multiple of 8) minimizing padded rows on the busiest core.

    The batch grid axis is "parallel", so on two-TensorCore chips we prefer an
    even tile count; padding waste is capped by also considering an exact
    single tile and small tiles (128/256)."""
    b8 = _round_up(max(batch, 1), 8)
    max_tile = max(8, min(max_tile, 1024))
    if b8 <= max_tile and b8 <= 256:
        return b8                              # tiny batch: one exact tile
    cands = {t for t in (1024, 512, 256, 128) if t <= max_tile}
    if b8 <= max_tile:
        cands.add(b8)                          # exact single tile (zero padding)
    best_t, best_cost = None, None
    for t in sorted(cands, reverse=True):
        n_tiles = -(-b8 // t)
        cost = -(-n_tiles // num_cores) * t    # rows on the busiest TensorCore
        if best_cost is None or cost < best_cost:
            best_t, best_cost = t, cost
    return best_t


# ---------------------------------------------------------------------------
# Kernel: fused DiffractionPatternEmbedder + PositionEmbedder + regressor head
# ---------------------------------------------------------------------------
def _regressor_kernel(
    dp_ref, arg_ref,
    # diffraction embedder (1024->512 zero-padded from 1000, then 5x 512->512)
    dW1, db1, dW2, db2, dW3, db3, dW4, db4, dW5, db5, dW6, db6,
    # regressor (fc1 split into 512-part and padded 128-part), fc2..fc5, fc6
    rW1d, rW1p, rb1, rW2, rb2, rW3, rb3, rW4, rb4, rW5, rb5, rW6, rb6,
    out_ref,
    *, bf16_relu,
):
    f32 = jnp.float32
    bf16 = jnp.bfloat16

    def lin(x, w_ref, b_ref):
        # bf16 x bf16 MXU matmul with f32 accumulation, f32 bias add.
        return jnp.dot(x, w_ref[...], preferred_element_type=f32) + b_ref[...]

    if bf16_relu:
        # v6e/v7x: run the max on packed bf16 vregs (exact for ReLU; bias add
        # stays in f32 above).
        def relu(v):
            return jnp.maximum(v.astype(bf16), 0)
    else:
        # v5e: no bf16 VALU -> keep the max in f32, cast afterwards.
        def relu(v):
            return jnp.maximum(v, 0.0).astype(bf16)

    # ---- DiffractionPatternEmbedder ----
    x = dp_ref[...]                               # (TB, 1024) bf16
    h = relu(lin(x, dW1, db1))                    # (TB, 512) bf16
    h1 = h
    h = relu(lin(h, dW2, db2))
    h = relu(lin(h, dW3, db3))
    h = relu(lin(h, dW4, db4))
    h = relu(lin(h + h1, dW5, db5))
    d_emb = relu(lin(h, dW6, db6))                # (TB, 512) bf16

    # ---- PositionEmbedder (Fourier features) ----
    # The wrapper folds the cos half into sin via a +pi/2 phase and zero-pads
    # the width to 128, so only one EUP sin runs here (padded columns give 0
    # against zero-padded rW1p rows).
    p_emb = jnp.sin(arg_ref[...]).astype(bf16)    # (TB, 128) bf16

    # ---- Regressor head ----
    # concat([d_emb, p_emb]) @ W1 == d_emb @ W1[:512] + p_emb @ W1[512:]
    y = (jnp.dot(d_emb, rW1d[...], preferred_element_type=f32)
         + jnp.dot(p_emb, rW1p[...], preferred_element_type=f32)
         + rb1[...])
    y = relu(y)                                   # (TB, 512)
    y1 = y
    y = relu(lin(y, rW2, rb2))
    y = relu(lin(y, rW3, rb3))
    y = relu(lin(y, rW4, rb4))
    y = relu(lin(y + y1, rW5, rb5))
    # fc6 (512 -> 1): VPU multiply + lane reduction instead of an N=1 matmul.
    # Output kept as a (TB, 1) column (contiguous in HBM, kernel is MXU-bound).
    out = jnp.sum(y.astype(f32) * rW6[...], axis=-1, keepdims=True) + rb6[...]
    out_ref[...] = out                            # (TB, 1) f32


# ---------------------------------------------------------------------------
# Wrapper
# ---------------------------------------------------------------------------
def charge_density_regressor(diffraction_pattern, position, params, *, tile_b=None):
    """Forward pass of ChargeDensityRegressor.

    diffraction_pattern: (B, 1000) f32, position: (B, 3) f32.
    `params` must come from `prepare_params(make_params(...))`.
    Returns (B,) f32 (matches torch's x.squeeze() on a (B, 1) tensor, B > 1).
    """
    B = diffraction_pattern.shape[0]
    assert diffraction_pattern.shape == (B, 1000)
    assert position.shape == (B, 3)

    info = _device_info()
    if tile_b is None:
        tile_b = info["default_tile"]
    tile = _choose_tile(B, tile_b, info["num_cores"])
    b_pad = _round_up(B, tile)
    num_tiles = b_pad // tile

    # Pad batch rows (zeros, sliced away at the end) and K 1000 -> 1024; bf16.
    dp = jnp.pad(diffraction_pattern.astype(jnp.float32),
                 ((0, b_pad - B), (0, 1024 - 1000))).astype(jnp.bfloat16)

    # Fourier-feature arguments: arg[:, c] = 2*pi*freq(c)*pos[:, c % 3], with a
    # +pi/2 phase on the cos half (sin(x + pi/2) == cos(x)) and zero-padding to
    # width 128 for clean lane/sublane alignment.  The sin runs in-kernel (EUP).
    freqs = jnp.repeat(jnp.arange(10, dtype=jnp.float32), 3)        # (30,)
    freqs = jnp.concatenate([freqs, freqs])                         # (60,)
    phase = jnp.concatenate([jnp.zeros((30,), jnp.float32),
                             jnp.full((30,), 0.5 * np.pi, jnp.float32)])
    pos = jnp.pad(position.astype(jnp.float32), ((0, b_pad - B), (0, 0)))
    arg60 = (2.0 * np.pi) * jnp.tile(pos, (1, 20)) * freqs[None, :] + phase[None, :]
    arg = jnp.pad(arg60, ((0, 0), (0, _F_PAD - 60)))                # (b_pad, 128)

    flat = [params[k] for k in _PARAM_ORDER]
    # Whole-array blocks, constant index_map, single-buffered: every weight is
    # DMA'd to VMEM once and stays resident (no wasted second buffer).
    weight_specs = [
        pl.BlockSpec(p.shape, lambda i: (0, 0), pipeline_mode=pl.Buffered(1))
        for p in flat
    ]

    kernel = functools.partial(_regressor_kernel, bf16_relu=info["bf16_relu"])

    out = pl.pallas_call(
        kernel,
        out_shape=jax.ShapeDtypeStruct((b_pad, 1), jnp.float32),
        grid=(num_tiles,),
        in_specs=[pl.BlockSpec((tile, 1024), lambda i: (i, 0)),
                  pl.BlockSpec((tile, _F_PAD), lambda i: (i, 0))] + weight_specs,
        out_specs=pl.BlockSpec((tile, 1), lambda i: (i, 0)),
        compiler_params=pltpu.CompilerParams(
            dimension_semantics=("parallel",),
            vmem_limit_bytes=info["vmem_limit"]),
    )(dp, arg, *flat)

    return jnp.squeeze(out[:B], axis=-1)


# ---------------------------------------------------------------------------
# Parameters: synthetic f32 params (PyTorch shapes) + kernel-layout preparation
# ---------------------------------------------------------------------------
def make_params(key):
    """Deterministic synthetic params in (in_features, out_features) layout, f32."""
    ks = jax.random.split(key, 32)
    k_iter = iter(ks)

    def linear(key_w, in_f, out_f, scale=0.02):
        w = scale * jax.random.normal(key_w, (in_f, out_f), dtype=jnp.float32)
        b = jnp.zeros((1, out_f), dtype=jnp.float32)
        return w, b

    p = {}
    # DiffractionPatternEmbedder: fc1 (1000->512), fc2..fc6 (512->512)
    p["dW1"], p["db1"] = linear(next(k_iter), 1000, 512)
    for i in range(2, 7):
        p[f"dW{i}"], p[f"db{i}"] = linear(next(k_iter), 512, 512)

    # ChargeDensityRegressor: fc1 (572->512) split into (512->512) + (60->512)
    w1_full = 0.02 * jax.random.normal(next(k_iter), (572, 512), dtype=jnp.float32)
    p["rW1d"] = w1_full[:512, :]
    p["rW1p"] = w1_full[512:, :]
    p["rb1"] = jnp.zeros((1, 512), dtype=jnp.float32)
    for i in range(2, 6):
        p[f"rW{i}"], p[f"rb{i}"] = linear(next(k_iter), 512, 512)
    p["rW6"], p["rb6"] = linear(next(k_iter), 512, 1)
    return p


def prepare_params(p):
    """Convert raw f32 params to the kernel layout: bf16 weights, f32 biases,
    dW1 zero-padded 1000 -> 1024 (K), rW1p zero-padded 60 -> 128 (K), and rW6
    stored as a (1, 512) f32 row."""
    bf16 = jnp.bfloat16
    f32 = jnp.float32
    q = {}
    q["dW1"] = jnp.pad(p["dW1"], ((0, 1024 - 1000), (0, 0))).astype(bf16)
    q["db1"] = p["db1"].astype(f32)
    for i in range(2, 7):
        q[f"dW{i}"] = p[f"dW{i}"].astype(bf16)
        q[f"db{i}"] = p[f"db{i}"].astype(f32)
    q["rW1d"] = p["rW1d"].astype(bf16)
    q["rW1p"] = jnp.pad(p["rW1p"], ((0, _F_PAD - 60), (0, 0))).astype(bf16)
    q["rb1"] = p["rb1"].astype(f32)
    for i in range(2, 6):
        q[f"rW{i}"] = p[f"rW{i}"].astype(bf16)
        q[f"rb{i}"] = p[f"rb{i}"].astype(f32)
    q["rW6"] = p["rW6"].reshape(1, 512).astype(f32)   # (512, 1) -> (1, 512) row
    q["rb6"] = p["rb6"].astype(f32)                   # (1, 1)
    return q


if __name__ == "__main__":
    key = jax.random.PRNGKey(0)
    k_dp, k_pos, k_params = jax.random.split(key, 3)

    B = 8
    diffraction_pattern = jax.random.normal(k_dp, (B, 1000), dtype=jnp.float32)
    position = jax.random.uniform(k_pos, (B, 3), dtype=jnp.float32)

    params = prepare_params(make_params(k_params))

    out = charge_density_regressor(diffraction_pattern, position, params)
    out = jax.block_until_ready(out)
    assert out.shape == (B,), out.shape
    assert bool(jnp.all(jnp.isfinite(out)))
    print("KERNEL_OK")
</pallas_src>

<mosaic_0001>
module attributes {stable_mosaic.version = 11 : i64} {
  func.func @_regressor_kernel(%arg0: i32, %arg1: memref<8x1024xbf16, #tpu.memory_space<vmem>>, %arg2: memref<8x128xf32, #tpu.memory_space<vmem>>, %arg3: memref<1024x512xbf16, #tpu.memory_space<vmem>>, %arg4: memref<1x512xf32, #tpu.memory_space<vmem>>, %arg5: memref<512x512xbf16, #tpu.memory_space<vmem>>, %arg6: memref<1x512xf32, #tpu.memory_space<vmem>>, %arg7: memref<512x512xbf16, #tpu.memory_space<vmem>>, %arg8: memref<1x512xf32, #tpu.memory_space<vmem>>, %arg9: memref<512x512xbf16, #tpu.memory_space<vmem>>, %arg10: memref<1x512xf32, #tpu.memory_space<vmem>>, %arg11: memref<512x512xbf16, #tpu.memory_space<vmem>>, %arg12: memref<1x512xf32, #tpu.memory_space<vmem>>, %arg13: memref<512x512xbf16, #tpu.memory_space<vmem>>, %arg14: memref<1x512xf32, #tpu.memory_space<vmem>>, %arg15: memref<512x512xbf16, #tpu.memory_space<vmem>>, %arg16: memref<128x512xbf16, #tpu.memory_space<vmem>>, %arg17: memref<1x512xf32, #tpu.memory_space<vmem>>, %arg18: memref<512x512xbf16, #tpu.memory_space<vmem>>, %arg19: memref<1x512xf32, #tpu.memory_space<vmem>>, %arg20: memref<512x512xbf16, #tpu.memory_space<vmem>>, %arg21: memref<1x512xf32, #tpu.memory_space<vmem>>, %arg22: memref<512x512xbf16, #tpu.memory_space<vmem>>, %arg23: memref<1x512xf32, #tpu.memory_space<vmem>>, %arg24: memref<512x512xbf16, #tpu.memory_space<vmem>>, %arg25: memref<1x512xf32, #tpu.memory_space<vmem>>, %arg26: memref<1x512xf32, #tpu.memory_space<vmem>>, %arg27: memref<1x1xf32, #tpu.memory_space<vmem>>, %arg28: memref<8x1xf32, #tpu.memory_space<vmem>>) attributes {dimension_semantics = [#tpu.dimension_semantics<parallel>], iteration_bounds = array<i64: 1>, scalar_prefetch = 0 : i64, scratch_operands = 0 : i64, tpu.core_type = #tpu.core_type<tc>, window_params = [{transform_indices = @transform_0, window_bounds = array<i64: 8, 1024>}, {transform_indices = @transform_1, window_bounds = array<i64: 8, 128>}, {pipeline_mode = #tpu.pipeline_mode<synchronous>, transform_indices = @transform_2, window_bounds = array<i64: 1024, 512>}, {pipeline_mode = #tpu.pipeline_mode<synchronous>, transform_indices = @transform_3, window_bounds = array<i64: 1, 512>}, {pipeline_mode = #tpu.pipeline_mode<synchronous>, transform_indices = @transform_4, window_bounds = array<i64: 512, 512>}, {pipeline_mode = #tpu.pipeline_mode<synchronous>, transform_indices = @transform_5, window_bounds = array<i64: 1, 512>}, {pipeline_mode = #tpu.pipeline_mode<synchronous>, transform_indices = @transform_6, window_bounds = array<i64: 512, 512>}, {pipeline_mode = #tpu.pipeline_mode<synchronous>, transform_indices = @transform_7, window_bounds = array<i64: 1, 512>}, {pipeline_mode = #tpu.pipeline_mode<synchronous>, transform_indices = @transform_8, window_bounds = array<i64: 512, 512>}, {pipeline_mode = #tpu.pipeline_mode<synchronous>, transform_indices = @transform_9, window_bounds = array<i64: 1, 512>}, {pipeline_mode = #tpu.pipeline_mode<synchronous>, transform_indices = @transform_10, window_bounds = array<i64: 512, 512>}, {pipeline_mode = #tpu.pipeline_mode<synchronous>, transform_indices = @transform_11, window_bounds = array<i64: 1, 512>}, {pipeline_mode = #tpu.pipeline_mode<synchronous>, transform_indices = @transform_12, window_bounds = array<i64: 512, 512>}, {pipeline_mode = #tpu.pipeline_mode<synchronous>, transform_indices = @transform_13, window_bounds = array<i64: 1, 512>}, {pipeline_mode = #tpu.pipeline_mode<synchronous>, transform_indices = @transform_14, window_bounds = array<i64: 512, 512>}, {pipeline_mode = #tpu.pipeline_mode<synchronous>, transform_indices = @transform_15, window_bounds = array<i64: 128, 512>}, {pipeline_mode = #tpu.pipeline_mode<synchronous>, transform_indices = @transform_16, window_bounds = array<i64: 1, 512>}, {pipeline_mode = #tpu.pipeline_mode<synchronous>, transform_indices = @transform_17, window_bounds = array<i64: 512, 512>}, {pipeline_mode = #tpu.pipeline_mode<synchronous>, transform_indices = @transform_18, window_bounds = array<i64: 1, 512>}, {pipeline_mode = #tpu.pipeline_mode<synchronous>, transform_indices = @transform_19, window_bounds = array<i64: 512, 512>}, {pipeline_mode = #tpu.pipeline_mode<synchronous>, transform_indices = @transform_20, window_bounds = array<i64: 1, 512>}, {pipeline_mode = #tpu.pipeline_mode<synchronous>, transform_indices = @transform_21, window_bounds = array<i64: 512, 512>}, {pipeline_mode = #tpu.pipeline_mode<synchronous>, transform_indices = @transform_22, window_bounds = array<i64: 1, 512>}, {pipeline_mode = #tpu.pipeline_mode<synchronous>, transform_indices = @transform_23, window_bounds = array<i64: 512, 512>}, {pipeline_mode = #tpu.pipeline_mode<synchronous>, transform_indices = @transform_24, window_bounds = array<i64: 1, 512>}, {pipeline_mode = #tpu.pipeline_mode<synchronous>, transform_indices = @transform_25, window_bounds = array<i64: 1, 512>}, {pipeline_mode = #tpu.pipeline_mode<synchronous>, transform_indices = @transform_26, window_bounds = array<i64: 1, 1>}, {transform_indices = @transform_27, window_bounds = array<i64: 8, 1>}]} {
    %c0 = arith.constant 0 : index
    %c0_0 = arith.constant 0 : index
    %0 = vector.load %arg1[%c0, %c0_0] : memref<8x1024xbf16, #tpu.memory_space<vmem>>, vector<8x1024xbf16>
    %c0_1 = arith.constant 0 : index
    %c0_2 = arith.constant 0 : index
    %1 = vector.load %arg3[%c0_1, %c0_2] : memref<1024x512xbf16, #tpu.memory_space<vmem>>, vector<1024x512xbf16>
    %cst = arith.constant dense<0.000000e+00> : vector<8x512xf32>
    %2 = tpu.matmul %0, %1, %cst {dimension_numbers = #tpu.dot_dimension_numbers<[1], [0], [0], [1], [0, 0, 1, 1], [], []>} : vector<8x1024xbf16>, vector<1024x512xbf16>, vector<8x512xf32> -> vector<8x512xf32>
    %c0_3 = arith.constant 0 : index
    %c0_4 = arith.constant 0 : index
    %3 = vector.load %arg4[%c0_3, %c0_4] : memref<1x512xf32, #tpu.memory_space<vmem>>, vector<1x512xf32>
    %4 = vector.broadcast %3 : vector<1x512xf32> to vector<8x512xf32>
    %5 = arith.addf %2, %4 : vector<8x512xf32>
    %6 = arith.truncf %5 : vector<8x512xf32> to vector<8x512xbf16>
    %cst_5 = arith.constant 0.000000e+00 : bf16
    %7 = vector.broadcast %cst_5 : bf16 to vector<8x512xbf16>
    %8 = arith.maximumf %6, %7 : vector<8x512xbf16>
    %c0_6 = arith.constant 0 : index
    %c0_7 = arith.constant 0 : index
    %9 = vector.load %arg5[%c0_6, %c0_7] : memref<512x512xbf16, #tpu.memory_space<vmem>>, vector<512x512xbf16>
    %cst_8 = arith.constant dense<0.000000e+00> : vector<8x512xf32>
    %10 = tpu.matmul %8, %9, %cst_8 {dimension_numbers = #tpu.dot_dimension_numbers<[1], [0], [0], [1], [0, 0, 1, 1], [], []>} : vector<8x512xbf16>, vector<512x512xbf16>, vector<8x512xf32> -> vector<8x512xf32>
    %c0_9 = arith.constant 0 : index
    %c0_10 = arith.constant 0 : index
    %11 = vector.load %arg6[%c0_9, %c0_10] : memref<1x512xf32, #tpu.memory_space<vmem>>, vector<1x512xf32>
    %12 = vector.broadcast %11 : vector<1x512xf32> to vector<8x512xf32>
    %13 = arith.addf %10, %12 : vector<8x512xf32>
    %14 = arith.truncf %13 : vector<8x512xf32> to vector<8x512xbf16>
    %cst_11 = arith.constant 0.000000e+00 : bf16
    %15 = vector.broadcast %cst_11 : bf16 to vector<8x512xbf16>
    %16 = arith.maximumf %14, %15 : vector<8x512xbf16>
    %c0_12 = arith.constant 0 : index
    %c0_13 = arith.constant 0 : index
    %17 = vector.load %arg7[%c0_12, %c0_13] : memref<512x512xbf16, #tpu.memory_space<vmem>>, vector<512x512xbf16>
    %cst_14 = arith.constant dense<0.000000e+00> : vector<8x512xf32>
    %18 = tpu.matmul %16, %17, %cst_14 {dimension_numbers = #tpu.dot_dimension_numbers<[1], [0], [0], [1], [0, 0, 1, 1], [], []>} : vector<8x512xbf16>, vector<512x512xbf16>, vector<8x512xf32> -> vector<8x512xf32>
    %c0_15 = arith.constant 0 : index
    %c0_16 = arith.constant 0 : index
    %19 = vector.load %arg8[%c0_15, %c0_16] : memref<1x512xf32, #tpu.memory_space<vmem>>, vector<1x512xf32>
    %20 = vector.broadcast %19 : vector<1x512xf32> to vector<8x512xf32>
    %21 = arith.addf %18, %20 : vector<8x512xf32>
    %22 = arith.truncf %21 : vector<8x512xf32> to vector<8x512xbf16>
    %cst_17 = arith.constant 0.000000e+00 : bf16
    %23 = vector.broadcast %cst_17 : bf16 to vector<8x512xbf16>
    %24 = arith.maximumf %22, %23 : vector<8x512xbf16>
    %c0_18 = arith.constant 0 : index
    %c0_19 = arith.constant 0 : index
    %25 = vector.load %arg9[%c0_18, %c0_19] : memref<512x512xbf16, #tpu.memory_space<vmem>>, vector<512x512xbf16>
    %cst_20 = arith.constant dense<0.000000e+00> : vector<8x512xf32>
    %26 = tpu.matmul %24, %25, %cst_20 {dimension_numbers = #tpu.dot_dimension_numbers<[1], [0], [0], [1], [0, 0, 1, 1], [], []>} : vector<8x512xbf16>, vector<512x512xbf16>, vector<8x512xf32> -> vector<8x512xf32>
    %c0_21 = arith.constant 0 : index
    %c0_22 = arith.constant 0 : index
    %27 = vector.load %arg10[%c0_21, %c0_22] : memref<1x512xf32, #tpu.memory_space<vmem>>, vector<1x512xf32>
    %28 = vector.broadcast %27 : vector<1x512xf32> to vector<8x512xf32>
    %29 = arith.addf %26, %28 : vector<8x512xf32>
    %30 = arith.truncf %29 : vector<8x512xf32> to vector<8x512xbf16>
    %cst_23 = arith.constant 0.000000e+00 : bf16
    %31 = vector.broadcast %cst_23 : bf16 to vector<8x512xbf16>
    %32 = arith.maximumf %30, %31 : vector<8x512xbf16>
    %33 = arith.addf %32, %8 : vector<8x512xbf16>
    %c0_24 = arith.constant 0 : index
    %c0_25 = arith.constant 0 : index
    %34 = vector.load %arg11[%c0_24, %c0_25] : memref<512x512xbf16, #tpu.memory_space<vmem>>, vector<512x512xbf16>
    %cst_26 = arith.constant dense<0.000000e+00> : vector<8x512xf32>
    %35 = tpu.matmul %33, %34, %cst_26 {dimension_numbers = #tpu.dot_dimension_numbers<[1], [0], [0], [1], [0, 0, 1, 1], [], []>} : vector<8x512xbf16>, vector<512x512xbf16>, vector<8x512xf32> -> vector<8x512xf32>
    %c0_27 = arith.constant 0 : index
    %c0_28 = arith.constant 0 : index
    %36 = vector.load %arg12[%c0_27, %c0_28] : memref<1x512xf32, #tpu.memory_space<vmem>>, vector<1x512xf32>
    %37 = vector.broadcast %36 : vector<1x512xf32> to vector<8x512xf32>
    %38 = arith.addf %35, %37 : vector<8x512xf32>
    %39 = arith.truncf %38 : vector<8x512xf32> to vector<8x512xbf16>
    %cst_29 = arith.constant 0.000000e+00 : bf16
    %40 = vector.broadcast %cst_29 : bf16 to vector<8x512xbf16>
    %41 = arith.maximumf %39, %40 : vector<8x512xbf16>
    %c0_30 = arith.constant 0 : index
    %c0_31 = arith.constant 0 : index
    %42 = vector.load %arg13[%c0_30, %c0_31] : memref<512x512xbf16, #tpu.memory_space<vmem>>, vector<512x512xbf16>
    %cst_32 = arith.constant dense<0.000000e+00> : vector<8x512xf32>
    %43 = tpu.matmul %41, %42, %cst_32 {dimension_numbers = #tpu.dot_dimension_numbers<[1], [0], [0], [1], [0, 0, 1, 1], [], []>} : vector<8x512xbf16>, vector<512x512xbf16>, vector<8x512xf32> -> vector<8x512xf32>
    %c0_33 = arith.constant 0 : index
    %c0_34 = arith.constant 0 : index
    %44 = vector.load %arg14[%c0_33, %c0_34] : memref<1x512xf32, #tpu.memory_space<vmem>>, vector<1x512xf32>
    %45 = vector.broadcast %44 : vector<1x512xf32> to vector<8x512xf32>
    %46 = arith.addf %43, %45 : vector<8x512xf32>
    %47 = arith.truncf %46 : vector<8x512xf32> to vector<8x512xbf16>
    %cst_35 = arith.constant 0.000000e+00 : bf16
    %48 = vector.broadcast %cst_35 : bf16 to vector<8x512xbf16>
    %49 = arith.maximumf %47, %48 : vector<8x512xbf16>
    %c0_36 = arith.constant 0 : index
    %c0_37 = arith.constant 0 : index
    %50 = vector.load %arg2[%c0_36, %c0_37] : memref<8x128xf32, #tpu.memory_space<vmem>>, vector<8x128xf32>
    %51 = math.sin %50 : vector<8x128xf32>
    %52 = arith.truncf %51 : vector<8x128xf32> to vector<8x128xbf16>
    %c0_38 = arith.constant 0 : index
    %c0_39 = arith.constant 0 : index
    %53 = vector.load %arg15[%c0_38, %c0_39] : memref<512x512xbf16, #tpu.memory_space<vmem>>, vector<512x512xbf16>
    %cst_40 = arith.constant dense<0.000000e+00> : vector<8x512xf32>
    %54 = tpu.matmul %49, %53, %cst_40 {dimension_numbers = #tpu.dot_dimension_numbers<[1], [0], [0], [1], [0, 0, 1, 1], [], []>} : vector<8x512xbf16>, vector<512x512xbf16>, vector<8x512xf32> -> vector<8x512xf32>
    %c0_41 = arith.constant 0 : index
    %c0_42 = arith.constant 0 : index
    %55 = vector.load %arg16[%c0_41, %c0_42] : memref<128x512xbf16, #tpu.memory_space<vmem>>, vector<128x512xbf16>
    %cst_43 = arith.constant dense<0.000000e+00> : vector<8x512xf32>
    %56 = tpu.matmul %52, %55, %cst_43 {dimension_numbers = #tpu.dot_dimension_numbers<[1], [0], [0], [1], [0, 0, 1, 1], [], []>} : vector<8x128xbf16>, vector<128x512xbf16>, vector<8x512xf32> -> vector<8x512xf32>
    %57 = arith.addf %54, %56 : vector<8x512xf32>
    %c0_44 = arith.constant 0 : index
    %c0_45 = arith.constant 0 : index
    %58 = vector.load %arg17[%c0_44, %c0_45] : memref<1x512xf32, #tpu.memory_space<vmem>>, vector<1x512xf32>
    %59 = vector.broadcast %58 : vector<1x512xf32> to vector<8x512xf32>
    %60 = arith.addf %57, %59 : vector<8x512xf32>
    %61 = arith.truncf %60 : vector<8x512xf32> to vector<8x512xbf16>
    %cst_46 = arith.constant 0.000000e+00 : bf16
    %62 = vector.broadcast %cst_46 : bf16 to vector<8x512xbf16>
    %63 = arith.maximumf %61, %62 : vector<8x512xbf16>
    %c0_47 = arith.constant 0 : index
    %c0_48 = arith.constant 0 : index
    %64 = vector.load %arg18[%c0_47, %c0_48] : memref<512x512xbf16, #tpu.memory_space<vmem>>, vector<512x512xbf16>
    %cst_49 = arith.constant dense<0.000000e+00> : vector<8x512xf32>
    %65 = tpu.matmul %63, %64, %cst_49 {dimension_numbers = #tpu.dot_dimension_numbers<[1], [0], [0], [1], [0, 0, 1, 1], [], []>} : vector<8x512xbf16>, vector<512x512xbf16>, vector<8x512xf32> -> vector<8x512xf32>
    %c0_50 = arith.constant 0 : index
    %c0_51 = arith.constant 0 : index
    %66 = vector.load %arg19[%c0_50, %c0_51] : memref<1x512xf32, #tpu.memory_space<vmem>>, vector<1x512xf32>
    %67 = vector.broadcast %66 : vector<1x512xf32> to vector<8x512xf32>
    %68 = arith.addf %65, %67 : vector<8x512xf32>
    %69 = arith.truncf %68 : vector<8x512xf32> to vector<8x512xbf16>
    %cst_52 = arith.constant 0.000000e+00 : bf16
    %70 = vector.broadcast %cst_52 : bf16 to vector<8x512xbf16>
    %71 = arith.maximumf %69, %70 : vector<8x512xbf16>
    %c0_53 = arith.constant 0 : index
    %c0_54 = arith.constant 0 : index
    %72 = vector.load %arg20[%c0_53, %c0_54] : memref<512x512xbf16, #tpu.memory_space<vmem>>, vector<512x512xbf16>
    %cst_55 = arith.constant dense<0.000000e+00> : vector<8x512xf32>
    %73 = tpu.matmul %71, %72, %cst_55 {dimension_numbers = #tpu.dot_dimension_numbers<[1], [0], [0], [1], [0, 0, 1, 1], [], []>} : vector<8x512xbf16>, vector<512x512xbf16>, vector<8x512xf32> -> vector<8x512xf32>
    %c0_56 = arith.constant 0 : index
    %c0_57 = arith.constant 0 : index
    %74 = vector.load %arg21[%c0_56, %c0_57] : memref<1x512xf32, #tpu.memory_space<vmem>>, vector<1x512xf32>
    %75 = vector.broadcast %74 : vector<1x512xf32> to vector<8x512xf32>
    %76 = arith.addf %73, %75 : vector<8x512xf32>
    %77 = arith.truncf %76 : vector<8x512xf32> to vector<8x512xbf16>
    %cst_58 = arith.constant 0.000000e+00 : bf16
    %78 = vector.broadcast %cst_58 : bf16 to vector<8x512xbf16>
    %79 = arith.maximumf %77, %78 : vector<8x512xbf16>
    %c0_59 = arith.constant 0 : index
    %c0_60 = arith.constant 0 : index
    %80 = vector.load %arg22[%c0_59, %c0_60] : memref<512x512xbf16, #tpu.memory_space<vmem>>, vector<512x512xbf16>
    %cst_61 = arith.constant dense<0.000000e+00> : vector<8x512xf32>
    %81 = tpu.matmul %79, %80, %cst_61 {dimension_numbers = #tpu.dot_dimension_numbers<[1], [0], [0], [1], [0, 0, 1, 1], [], []>} : vector<8x512xbf16>, vector<512x512xbf16>, vector<8x512xf32> -> vector<8x512xf32>
    %c0_62 = arith.constant 0 : index
    %c0_63 = arith.constant 0 : index
    %82 = vector.load %arg23[%c0_62, %c0_63] : memref<1x512xf32, #tpu.memory_space<vmem>>, vector<1x512xf32>
    %83 = vector.broadcast %82 : vector<1x512xf32> to vector<8x512xf32>
    %84 = arith.addf %81, %83 : vector<8x512xf32>
    %85 = arith.truncf %84 : vector<8x512xf32> to vector<8x512xbf16>
    %cst_64 = arith.constant 0.000000e+00 : bf16
    %86 = vector.broadcast %cst_64 : bf16 to vector<8x512xbf16>
    %87 = arith.maximumf %85, %86 : vector<8x512xbf16>
    %88 = arith.addf %87, %63 : vector<8x512xbf16>
    %c0_65 = arith.constant 0 : index
    %c0_66 = arith.constant 0 : index
    %89 = vector.load %arg24[%c0_65, %c0_66] : memref<512x512xbf16, #tpu.memory_space<vmem>>, vector<512x512xbf16>
    %cst_67 = arith.constant dense<0.000000e+00> : vector<8x512xf32>
    %90 = tpu.matmul %88, %89, %cst_67 {dimension_numbers = #tpu.dot_dimension_numbers<[1], [0], [0], [1], [0, 0, 1, 1], [], []>} : vector<8x512xbf16>, vector<512x512xbf16>, vector<8x512xf32> -> vector<8x512xf32>
    %c0_68 = arith.constant 0 : index
    %c0_69 = arith.constant 0 : index
    %91 = vector.load %arg25[%c0_68, %c0_69] : memref<1x512xf32, #tpu.memory_space<vmem>>, vector<1x512xf32>
    %92 = vector.broadcast %91 : vector<1x512xf32> to vector<8x512xf32>
    %93 = arith.addf %90, %92 : vector<8x512xf32>
    %94 = arith.truncf %93 : vector<8x512xf32> to vector<8x512xbf16>
    %cst_70 = arith.constant 0.000000e+00 : bf16
    %95 = vector.broadcast %cst_70 : bf16 to vector<8x512xbf16>
    %96 = arith.maximumf %94, %95 : vector<8x512xbf16>
    %97 = arith.extf %96 : vector<8x512xbf16> to vector<8x512xf32>
    %c0_71 = arith.constant 0 : index
    %c0_72 = arith.constant 0 : index
    %98 = vector.load %arg26[%c0_71, %c0_72] : memref<1x512xf32, #tpu.memory_space<vmem>>, vector<1x512xf32>
    %99 = vector.broadcast %98 : vector<1x512xf32> to vector<8x512xf32>
    %100 = arith.mulf %97, %99 : vector<8x512xf32>
    %cst_73 = arith.constant dense<0.000000e+00> : vector<8xf32>
    %101 = vector.multi_reduction <add>, %100, %cst_73 [1] : vector<8x512xf32> to vector<8xf32>
    %102 = vector.shape_cast %101 : vector<8xf32> to vector<8x1xf32>
    %c0_74 = arith.constant 0 : index
    %c0_75 = arith.constant 0 : index
    %103 = vector.load %arg27[%c0_74, %c0_75] : memref<1x1xf32, #tpu.memory_space<vmem>>, vector<1x1xf32>
    %104 = vector.broadcast %103 : vector<1x1xf32> to vector<8x1xf32>
    %105 = arith.addf %102, %104 : vector<8x1xf32>
    %c0_76 = arith.constant 0 : index
    %c0_77 = arith.constant 0 : index
    %106 = vector.load %arg28[%c0_76, %c0_77] : memref<8x1xf32, #tpu.memory_space<vmem>>, vector<8x1xf32>
    tpu.vector_store %arg28[%c0_76, %c0_77], %105 {strides = array<i32>} : memref<8x1xf32, #tpu.memory_space<vmem>>, vector<8x1xf32>,
    return
  }
  func.func @transform_0(%arg0: i32) -> (i32, i32) {
    %c0_i32 = arith.constant 0 : i32
    %c0_i32_0 = arith.constant 0 : i32
    return %arg0, %c0_i32 : i32, i32
  }
  func.func @transform_1(%arg0: i32) -> (i32, i32) {
    %c0_i32 = arith.constant 0 : i32
    %c0_i32_0 = arith.constant 0 : i32
    return %arg0, %c0_i32 : i32, i32
  }
  func.func @transform_2(%arg0: i32) -> (i32, i32) {
    %c0_i32 = arith.constant 0 : i32
    %c0_i32_0 = arith.constant 0 : i32
    %c0_i32_1 = arith.constant 0 : i32
    return %c0_i32, %c0_i32_0 : i32, i32
  }
  func.func @transform_3(%arg0: i32) -> (i32, i32) {
    %c0_i32 = arith.constant 0 : i32
    %c0_i32_0 = arith.constant 0 : i32
    %c0_i32_1 = arith.constant 0 : i32
    return %c0_i32, %c0_i32_0 : i32, i32
  }
  func.func @transform_4(%arg0: i32) -> (i32, i32) {
    %c0_i32 = arith.constant 0 : i32
    %c0_i32_0 = arith.constant 0 : i32
    %c0_i32_1 = arith.constant 0 : i32
    return %c0_i32, %c0_i32_0 : i32, i32
  }
  func.func @transform_5(%arg0: i32) -> (i32, i32) {
    %c0_i32 = arith.constant 0 : i32
    %c0_i32_0 = arith.constant 0 : i32
    %c0_i32_1 = arith.constant 0 : i32
    return %c0_i32, %c0_i32_0 : i32, i32
  }
  func.func @transform_6(%arg0: i32) -> (i32, i32) {
    %c0_i32 = arith.constant 0 : i32
    %c0_i32_0 = arith.constant 0 : i32
    %c0_i32_1 = arith.constant 0 : i32
    return %c0_i32, %c0_i32_0 : i32, i32
  }
  func.func @transform_7(%arg0: i32) -> (i32, i32) {
    %c0_i32 = arith.constant 0 : i32
    %c0_i32_0 = arith.constant 0 : i32
    %c0_i32_1 = arith.constant 0 : i32
    return %c0_i32, %c0_i32_0 : i32, i32
  }
  func.func @transform_8(%arg0: i32) -> (i32, i32) {
    %c0_i32 = arith.constant 0 : i32
    %c0_i32_0 = arith.constant 0 : i32
    %c0_i32_1 = arith.constant 0 : i32
    return %c0_i32, %c0_i32_0 : i32, i32
  }
  func.func @transform_9(%arg0: i32) -> (i32, i32) {
    %c0_i32 = arith.constant 0 : i32
    %c0_i32_0 = arith.constant 0 : i32
    %c0_i32_1 = arith.constant 0 : i32
    return %c0_i32, %c0_i32_0 : i32, i32
  }
  func.func @transform_10(%arg0: i32) -> (i32, i32) {
    %c0_i32 = arith.constant 0 : i32
    %c0_i32_0 = arith.constant 0 : i32
    %c0_i32_1 = arith.constant 0 : i32
    return %c0_i32, %c0_i32_0 : i32, i32
  }
  func.func @transform_11(%arg0: i32) -> (i32, i32) {
    %c0_i32 = arith.constant 0 : i32
    %c0_i32_0 = arith.constant 0 : i32
    %c0_i32_1 = arith.constant 0 : i32
    return %c0_i32, %c0_i32_0 : i32, i32
  }
  func.func @transform_12(%arg0: i32) -> (i32, i32) {
    %c0_i32 = arith.constant 0 : i32
    %c0_i32_0 = arith.constant 0 : i32
    %c0_i32_1 = arith.constant 0 : i32
    return %c0_i32, %c0_i32_0 : i32, i32
  }
  func.func @transform_13(%arg0: i32) -> (i32, i32) {
    %c0_i32 = arith.constant 0 : i32
    %c0_i32_0 = arith.constant 0 : i32
    %c0_i32_1 = arith.constant 0 : i32
    return %c0_i32, %c0_i32_0 : i32, i32
  }
  func.func @transform_14(%arg0: i32) -> (i32, i32) {
    %c0_i32 = arith.constant 0 : i32
    %c0_i32_0 = arith.constant 0 : i32
    %c0_i32_1 = arith.constant 0 : i32
    return %c0_i32, %c0_i32_0 : i32, i32
  }
  func.func @transform_15(%arg0: i32) -> (i32, i32) {
    %c0_i32 = arith.constant 0 : i32
    %c0_i32_0 = arith.constant 0 : i32
    %c0_i32_1 = arith.constant 0 : i32
    return %c0_i32, %c0_i32_0 : i32, i32
  }
  func.func @transform_16(%arg0: i32) -> (i32, i32) {
    %c0_i32 = arith.constant 0 : i32
    %c0_i32_0 = arith.constant 0 : i32
    %c0_i32_1 = arith.constant 0 : i32
    return %c0_i32, %c0_i32_0 : i32, i32
  }
  func.func @transform_17(%arg0: i32) -> (i32, i32) {
    %c0_i32 = arith.constant 0 : i32
    %c0_i32_0 = arith.constant 0 : i32
    %c0_i32_1 = arith.constant 0 : i32
    return %c0_i32, %c0_i32_0 : i32, i32
  }
  func.func @transform_18(%arg0: i32) -> (i32, i32) {
    %c0_i32 = arith.constant 0 : i32
    %c0_i32_0 = arith.constant 0 : i32
    %c0_i32_1 = arith.constant 0 : i32
    return %c0_i32, %c0_i32_0 : i32, i32
  }
  func.func @transform_19(%arg0: i32) -> (i32, i32) {
    %c0_i32 = arith.constant 0 : i32
    %c0_i32_0 = arith.constant 0 : i32
    %c0_i32_1 = arith.constant 0 : i32
    return %c0_i32, %c0_i32_0 : i32, i32
  }
  func.func @transform_20(%arg0: i32) -> (i32, i32) {
    %c0_i32 = arith.constant 0 : i32
    %c0_i32_0 = arith.constant 0 : i32
    %c0_i32_1 = arith.constant 0 : i32
    return %c0_i32, %c0_i32_0 : i32, i32
  }
  func.func @transform_21(%arg0: i32) -> (i32, i32) {
    %c0_i32 = arith.constant 0 : i32
    %c0_i32_0 = arith.constant 0 : i32
    %c0_i32_1 = arith.constant 0 : i32
    return %c0_i32, %c0_i32_0 : i32, i32
  }
  func.func @transform_22(%arg0: i32) -> (i32, i32) {
    %c0_i32 = arith.constant 0 : i32
    %c0_i32_0 = arith.constant 0 : i32
    %c0_i32_1 = arith.constant 0 : i32
    return %c0_i32, %c0_i32_0 : i32, i32
  }
  func.func @transform_23(%arg0: i32) -> (i32, i32) {
    %c0_i32 = arith.constant 0 : i32
    %c0_i32_0 = arith.constant 0 : i32
    %c0_i32_1 = arith.constant 0 : i32
    return %c0_i32, %c0_i32_0 : i32, i32
  }
  func.func @transform_24(%arg0: i32) -> (i32, i32) {
    %c0_i32 = arith.constant 0 : i32
    %c0_i32_0 = arith.constant 0 : i32
    %c0_i32_1 = arith.constant 0 : i32
    return %c0_i32, %c0_i32_0 : i32, i32
  }
  func.func @transform_25(%arg0: i32) -> (i32, i32) {
    %c0_i32 = arith.constant 0 : i32
    %c0_i32_0 = arith.constant 0 : i32
    %c0_i32_1 = arith.constant 0 : i32
    return %c0_i32, %c0_i32_0 : i32, i32
  }
  func.func @transform_26(%arg0: i32) -> (i32, i32) {
    %c0_i32 = arith.constant 0 : i32
    %c0_i32_0 = arith.constant 0 : i32
    %c0_i32_1 = arith.constant 0 : i32
    return %c0_i32, %c0_i32_0 : i32, i32
  }
  func.func @transform_27(%arg0: i32) -> (i32, i32) {
    %c0_i32 = arith.constant 0 : i32
    %c0_i32_0 = arith.constant 0 : i32
    return %arg0, %c0_i32 : i32, i32
  }
}

</mosaic_0001>

<llo_original>
// kernel: tpu_custom_call.1
$region0: #{tpu_custom_call.1}
  #allocation0 [shape = 'u32[]', space=smem, size = 0x4, offset = 0x4, fixed_abs, tag = 'smem constant byte address 0x4 - core index']
  #allocation1 [shape = 'u32[144,128]{1,0:T(1,128)}', space=vmem, size = 0x12000, scoped, tag = 'internal scratch']
  #allocation2 [shape = 'f32[1,1]{1,0:T(1,128)S(1)}', space=vmem, size = 0x200, scoped, tag = 'scoped memory for tpu_custom_call.1']
  %s0 = inlined_call_operand.hbm [shape: bf16[8,1024], index: 0, kind: input, shape index: {}]
  %s1 = inlined_call_operand.hbm [shape: f32[8,128], index: 1, kind: input, shape index: {}]
  %s2 = inlined_call_operand.hbm [shape: bf16[1024,512], index: 2, kind: input, shape index: {}]
  %s3 = inlined_call_operand.vmem [shape: f32[1,512], index: 3, kind: input, shape index: {}]
  %s4 = inlined_call_operand.hbm [shape: bf16[512,512], index: 4, kind: input, shape index: {}]
  %s5 = inlined_call_operand.vmem [shape: f32[1,512], index: 5, kind: input, shape index: {}]
  %s6 = inlined_call_operand.hbm [shape: bf16[512,512], index: 6, kind: input, shape index: {}]
  %s7 = inlined_call_operand.vmem [shape: f32[1,512], index: 7, kind: input, shape index: {}]
  %s8 = inlined_call_operand.hbm [shape: bf16[512,512], index: 8, kind: input, shape index: {}]
  %s9 = inlined_call_operand.vmem [shape: f32[1,512], index: 9, kind: input, shape index: {}]
  %s10 = inlined_call_operand.hbm [shape: bf16[512,512], index: 10, kind: input, shape index: {}]
  %s11 = inlined_call_operand.vmem [shape: f32[1,512], index: 11, kind: input, shape index: {}]
  %s12 = inlined_call_operand.hbm [shape: bf16[512,512], index: 12, kind: input, shape index: {}]
  %s13 = inlined_call_operand.vmem [shape: f32[1,512], index: 13, kind: input, shape index: {}]
  %s14 = inlined_call_operand.hbm [shape: bf16[512,512], index: 14, kind: input, shape index: {}]
  %s15 = inlined_call_operand.hbm [shape: bf16[128,512], index: 15, kind: input, shape index: {}]
  %s16 = inlined_call_operand.vmem [shape: f32[1,512], index: 16, kind: input, shape index: {}]
  %s17 = inlined_call_operand.hbm [shape: bf16[512,512], index: 17, kind: input, shape index: {}]
  %s18 = inlined_call_operand.vmem [shape: f32[1,512], index: 18, kind: input, shape index: {}]
  %s19 = inlined_call_operand.hbm [shape: bf16[512,512], index: 19, kind: input, shape index: {}]
  %s20 = inlined_call_operand.vmem [shape: f32[1,512], index: 20, kind: input, shape index: {}]
  %s21 = inlined_call_operand.hbm [shape: bf16[512,512], index: 21, kind: input, shape index: {}]
  %s22 = inlined_call_operand.vmem [shape: f32[1,512], index: 22, kind: input, shape index: {}]
  %s23 = inlined_call_operand.hbm [shape: bf16[512,512], index: 23, kind: input, shape index: {}]
  %s24 = inlined_call_operand.vmem [shape: f32[1,512], index: 24, kind: input, shape index: {}]
  %s25 = inlined_call_operand.vmem [shape: f32[1,512], index: 25, kind: input, shape index: {}]
  %s26 = inlined_call_operand.<no memory space> [shape: f32[1,1], index: 26, kind: input, shape index: {}]
  %s27 = inlined_call_operand.vmem [shape: f32[8,1], index: 27, kind: output, shape index: {}]
  %s28 = sld [smem:[#allocation0]]
  $region174: #{tpu_custom_call.1} parent=0
    _
  %s30 = ssub.s32 1, %s28
  %s31 = scalar_select 0, %s30, %s28
  %v32 = vstv %s26
  %33 = vst [vmem:[#allocation2] sm:$0x1] %v32
  $region1: #{tpu_custom_call.1} parent=0
    #allocation3 [shape = 'u8[16384]{0}', space=vmem, size = 0x4000, scoped, tag = 'input window, operand 0, single buffered']
    #allocation4 [shape = 's32[1]{0}', space=sflag, size = 0x4, scoped, tag = 'scoped memory for tpu_custom_call.1']
    #allocation5 [shape = 'u8[4096]{0}', space=vmem, size = 0x1000, scoped, tag = 'input window, operand 1, single buffered']
    #allocation6 [shape = 's32[1]{0}', space=sflag, size = 0x4, scoped, tag = 'scoped memory for tpu_custom_call.1']
    #allocation7 [shape = 'u8[1048576]{0}', space=vmem, size = 0x100000, scoped, tag = 'input window, operand 2, single buffered']
    #allocation8 [shape = 'u8[524288]{0}', space=vmem, size = 0x80000, scoped, tag = 'input window, operand 4, single buffered']
    #allocation9 [shape = 's32[1]{0}', space=sflag, size = 0x4, scoped, tag = 'scoped memory for tpu_custom_call.1']
    #allocation10 [shape = 'u8[524288]{0}', space=vmem, size = 0x80000, scoped, tag = 'input window, operand 6, single buffered']
    #allocation11 [shape = 'u8[524288]{0}', space=vmem, size = 0x80000, scoped, tag = 'input window, operand 8, single buffered']
    #allocation12 [shape = 's32[1]{0}', space=sflag, size = 0x4, scoped, tag = 'scoped memory for tpu_custom_call.1']
    #allocation13 [shape = 'u8[524288]{0}', space=vmem, size = 0x80000, scoped, tag = 'input window, operand 10, single buffered']
    #allocation14 [shape = 'u8[524288]{0}', space=vmem, size = 0x80000, scoped, tag = 'input window, operand 12, single buffered']
    #allocation15 [shape = 's32[1]{0}', space=sflag, size = 0x4, scoped, tag = 'scoped memory for tpu_custom_call.1']
    #allocation16 [shape = 'u8[524288]{0}', space=vmem, size = 0x80000, scoped, tag = 'input window, operand 14, single buffered']
    #allocation17 [shape = 'u8[131072]{0}', space=vmem, size = 0x20000, scoped, tag = 'input window, operand 15, single buffered']
    #allocation18 [shape = 's32[1]{0}', space=sflag, size = 0x4, scoped, tag = 'scoped memory for tpu_custom_call.1']
    #allocation19 [shape = 'u8[524288]{0}', space=vmem, size = 0x80000, scoped, tag = 'input window, operand 17, single buffered']
    #allocation20 [shape = 'u8[524288]{0}', space=vmem, size = 0x80000, scoped, tag = 'input window, operand 19, single buffered']
    #allocation21 [shape = 's32[1]{0}', space=sflag, size = 0x4, scoped, tag = 'scoped memory for tpu_custom_call.1']
    #allocation22 [shape = 'u8[524288]{0}', space=vmem, size = 0x80000, scoped, tag = 'input window, operand 21, single buffered']
    #allocation23 [shape = 'u8[524288]{0}', space=vmem, size = 0x80000, scoped, tag = 'input window, operand 23, single buffered']
    #allocation24 [shape = 's32[1]{0}', space=sflag, size = 0x4, scoped, tag = 'scoped memory for tpu_custom_call.1']
    %34 = vsyncpa [#allocation4], 0
    %35 = vsyncpa [#allocation6], 0
    %36 = vsyncpa [#allocation9], 0
    %37 = vsyncpa [#allocation12], 0
    %38 = vsyncpa [#allocation15], 0
    %39 = vsyncpa [#allocation18], 0
    %40 = vsyncpa [#allocation21], 0
    %41 = vsyncpa [#allocation24], 0
    // Predicated region
    $region2: #{tpu_custom_call.1} parent=1 // pred_check
      _
    $region3: #{tpu_custom_call.1} parent=1 // pred_check_branch
      %43 = sbr.rel (0) target = $region5
    $region4: #{tpu_custom_call.1} parent=1 // pred_region
      %s45 = ssub.s32 512, 512
      %46 = vsyncadd [#allocation4], %s45
      %s48 = sshll.u32 [#allocation3], 4
      %s49 = int_to_ptr.vmem [resolvable:$true] %s48
      %51 = dma.hbm_to_vmem [thread:$0]  %s0, 512, %s49, [#allocation4]
    $region5: #{tpu_custom_call.1} parent=1 // pred_fallthru
      _
    // Predicated region
    $region6: #{tpu_custom_call.1} parent=1 // pred_check
      _
    $region7: #{tpu_custom_call.1} parent=1 // pred_check_branch
      %53 = sbr.rel (0) target = $region9
    $region8: #{tpu_custom_call.1} parent=1 // pred_region
      %s55 = ssub.s32 128, 128
      %56 = vsyncadd [#allocation6], %s55
      %s58 = sshll.u32 [#allocation5], 4
      %s59 = int_to_ptr.vmem [resolvable:$true] %s58
      %61 = dma.hbm_to_vmem [thread:$0]  %s1, 128, %s59, [#allocation6]
    $region9: #{tpu_custom_call.1} parent=1 // pred_fallthru
      _
    // Predicated region
    $region10: #{tpu_custom_call.1} parent=1 // pred_check
      _
    $region11: #{tpu_custom_call.1} parent=1 // pred_check_branch
      %63 = sbr.rel (0) target = $region13
    $region12: #{tpu_custom_call.1} parent=1 // pred_region
      %s65 = ssub.s32 32768, 32768
      %66 = vsyncadd [#allocation6], %s65
      %s67 = sshll.u32 [#allocation7], 4
      %s68 = int_to_ptr.vmem [resolvable:$true] %s67
      %73 = dma.hbm_to_vmem [thread:$0]  %s2, 32768, %s68, [#allocation6], 256, 256, 16
    $region13: #{tpu_custom_call.1} parent=1 // pred_fallthru
      _
    // Predicated region
    $region14: #{tpu_custom_call.1} parent=1 // pred_check
      _
    $region15: #{tpu_custom_call.1} parent=1 // pred_check_branch
      %75 = sbr.rel (0) target = $region17
    $region16: #{tpu_custom_call.1} parent=1 // pred_region
      _
    $region17: #{tpu_custom_call.1} parent=1 // pred_fallthru
      _
    // Predicated region
    $region18: #{tpu_custom_call.1} parent=1 // pred_check
      _
    $region19: #{tpu_custom_call.1} parent=1 // pred_check_branch
      %77 = sbr.rel (0) target = $region21
    $region20: #{tpu_custom_call.1} parent=1 // pred_region
      %s79 = ssub.s32 16384, 16384
      %80 = vsyncadd [#allocation9], %s79
      %s81 = sshll.u32 [#allocation8], 4
      %s82 = int_to_ptr.vmem [resolvable:$true] %s81
      %87 = dma.hbm_to_vmem [thread:$0]  %s4, 16384, %s82, [#allocation9], 256, 256, 16
    $region21: #{tpu_custom_call.1} parent=1 // pred_fallthru
      _
    // Predicated region
    $region22: #{tpu_custom_call.1} parent=1 // pred_check
      _
    $region23: #{tpu_custom_call.1} parent=1 // pred_check_branch
      %89 = sbr.rel (0) target = $region25
    $region24: #{tpu_custom_call.1} parent=1 // pred_region
      _
    $region25: #{tpu_custom_call.1} parent=1 // pred_fallthru
      _
    // Predicated region
    $region26: #{tpu_custom_call.1} parent=1 // pred_check
      _
    $region27: #{tpu_custom_call.1} parent=1 // pred_check_branch
      %91 = sbr.rel (0) target = $region29
    $region28: #{tpu_custom_call.1} parent=1 // pred_region
      %s93 = ssub.s32 16384, 16384
      %94 = vsyncadd [#allocation9], %s93
      %s95 = sshll.u32 [#allocation10], 4
      %s96 = int_to_ptr.vmem [resolvable:$true] %s95
      %101 = dma.hbm_to_vmem [thread:$0]  %s6, 16384, %s96, [#allocation9], 256, 256, 16
    $region29: #{tpu_custom_call.1} parent=1 // pred_fallthru
      _
    // Predicated region
    $region30: #{tpu_custom_call.1} parent=1 // pred_check
      _
    $region31: #{tpu_custom_call.1} parent=1 // pred_check_branch
      %103 = sbr.rel (0) target = $region33
    $region32: #{tpu_custom_call.1} parent=1 // pred_region
      _
    $region33: #{tpu_custom_call.1} parent=1 // pred_fallthru
      _
    // Predicated region
    $region34: #{tpu_custom_call.1} parent=1 // pred_check
      _
    $region35: #{tpu_custom_call.1} parent=1 // pred_check_branch
      %105 = sbr.rel (0) target = $region37
    $region36: #{tpu_custom_call.1} parent=1 // pred_region
      %s107 = ssub.s32 16384, 16384
      %108 = vsyncadd [#allocation12], %s107
      %s109 = sshll.u32 [#allocation11], 4
      %s110 = int_to_ptr.vmem [resolvable:$true] %s109
      %115 = dma.hbm_to_vmem [thread:$0]  %s8, 16384, %s110, [#allocation12], 256, 256, 16
    $region37: #{tpu_custom_call.1} parent=1 // pred_fallthru
      _
    // Predicated region
    $region38: #{tpu_custom_call.1} parent=1 // pred_check
      _
    $region39: #{tpu_custom_call.1} parent=1 // pred_check_branch
      %117 = sbr.rel (0) target = $region41
    $region40: #{tpu_custom_call.1} parent=1 // pred_region
      _
    $region41: #{tpu_custom_call.1} parent=1 // pred_fallthru
      _
    // Predicated region
    $region42: #{tpu_custom_call.1} parent=1 // pred_check
      _
    $region43: #{tpu_custom_call.1} parent=1 // pred_check_branch
      %119 = sbr.rel (0) target = $region45
    $region44: #{tpu_custom_call.1} parent=1 // pred_region
      %s121 = ssub.s32 16384, 16384
      %122 = vsyncadd [#allocation12], %s121
      %s123 = sshll.u32 [#allocation13], 4
      %s124 = int_to_ptr.vmem [resolvable:$true] %s123
      %129 = dma.hbm_to_vmem [thread:$0]  %s10, 16384, %s124, [#allocation12], 256, 256, 16
    $region45: #{tpu_custom_call.1} parent=1 // pred_fallthru
      _
    // Predicated region
    $region46: #{tpu_custom_call.1} parent=1 // pred_check
      _
    $region47: #{tpu_custom_call.1} parent=1 // pred_check_branch
      %131 = sbr.rel (0) target = $region49
    $region48: #{tpu_custom_call.1} parent=1 // pred_region
      _
    $region49: #{tpu_custom_call.1} parent=1 // pred_fallthru
      _
    // Predicated region
    $region50: #{tpu_custom_call.1} parent=1 // pred_check
      _
    $region51: #{tpu_custom_call.1} parent=1 // pred_check_branch
      %133 = sbr.rel (0) target = $region53
    $region52: #{tpu_custom_call.1} parent=1 // pred_region
      %s135 = ssub.s32 16384, 16384
      %136 = vsyncadd [#allocation15], %s135
      %s137 = sshll.u32 [#allocation14], 4
      %s138 = int_to_ptr.vmem [resolvable:$true] %s137
      %143 = dma.hbm_to_vmem [thread:$0]  %s12, 16384, %s138, [#allocation15], 256, 256, 16
    $region53: #{tpu_custom_call.1} parent=1 // pred_fallthru
      _
    // Predicated region
    $region54: #{tpu_custom_call.1} parent=1 // pred_check
      _
    $region55: #{tpu_custom_call.1} parent=1 // pred_check_branch
      %145 = sbr.rel (0) target = $region57
    $region56: #{tpu_custom_call.1} parent=1 // pred_region
      _
    $region57: #{tpu_custom_call.1} parent=1 // pred_fallthru
      _
    // Predicated region
    $region58: #{tpu_custom_call.1} parent=1 // pred_check
      _
    $region59: #{tpu_custom_call.1} parent=1 // pred_check_branch
      %147 = sbr.rel (0) target = $region61
    $region60: #{tpu_custom_call.1} parent=1 // pred_region
      %s149 = ssub.s32 16384, 16384
      %150 = vsyncadd [#allocation15], %s149
      %s151 = sshll.u32 [#allocation16], 4
      %s152 = int_to_ptr.vmem [resolvable:$true] %s151
      %157 = dma.hbm_to_vmem [thread:$0]  %s14, 16384, %s152, [#allocation15], 256, 256, 16
    $region61: #{tpu_custom_call.1} parent=1 // pred_fallthru
      _
    // Predicated region
    $region62: #{tpu_custom_call.1} parent=1 // pred_check
      _
    $region63: #{tpu_custom_call.1} parent=1 // pred_check_branch
      %159 = sbr.rel (0) target = $region65
    $region64: #{tpu_custom_call.1} parent=1 // pred_region
      %s161 = ssub.s32 4096, 4096
      %162 = vsyncadd [#allocation18], %s161
      %s163 = sshll.u32 [#allocation17], 4
      %s164 = int_to_ptr.vmem [resolvable:$true] %s163
      %169 = dma.hbm_to_vmem [thread:$0]  %s15, 4096, %s164, [#allocation18], 256, 256, 16
    $region65: #{tpu_custom_call.1} parent=1 // pred_fallthru
      _
    // Predicated region
    $region66: #{tpu_custom_call.1} parent=1 // pred_check
      _
    $region67: #{tpu_custom_call.1} parent=1 // pred_check_branch
      %171 = sbr.rel (0) target = $region69
    $region68: #{tpu_custom_call.1} parent=1 // pred_region
      _
    $region69: #{tpu_custom_call.1} parent=1 // pred_fallthru
      _
    // Predicated region
    $region70: #{tpu_custom_call.1} parent=1 // pred_check
      _
    $region71: #{tpu_custom_call.1} parent=1 // pred_check_branch
      %173 = sbr.rel (0) target = $region73
    $region72: #{tpu_custom_call.1} parent=1 // pred_region
      %s175 = ssub.s32 16384, 16384
      %176 = vsyncadd [#allocation18], %s175
      %s177 = sshll.u32 [#allocation19], 4
      %s178 = int_to_ptr.vmem [resolvable:$true] %s177
      %183 = dma.hbm_to_vmem [thread:$0]  %s17, 16384, %s178, [#allocation18], 256, 256, 16
    $region73: #{tpu_custom_call.1} parent=1 // pred_fallthru
      _
    // Predicated region
    $region74: #{tpu_custom_call.1} parent=1 // pred_check
      _
    $region75: #{tpu_custom_call.1} parent=1 // pred_check_branch
      %185 = sbr.rel (0) target = $region77
    $region76: #{tpu_custom_call.1} parent=1 // pred_region
      _
    $region77: #{tpu_custom_call.1} parent=1 // pred_fallthru
      _
    // Predicated region
    $region78: #{tpu_custom_call.1} parent=1 // pred_check
      _
    $region79: #{tpu_custom_call.1} parent=1 // pred_check_branch
      %187 = sbr.rel (0) target = $region81
    $region80: #{tpu_custom_call.1} parent=1 // pred_region
      %s189 = ssub.s32 16384, 16384
      %190 = vsyncadd [#allocation21], %s189
      %s191 = sshll.u32 [#allocation20], 4
      %s192 = int_to_ptr.vmem [resolvable:$true] %s191
      %197 = dma.hbm_to_vmem [thread:$0]  %s19, 16384, %s192, [#allocation21], 256, 256, 16
    $region81: #{tpu_custom_call.1} parent=1 // pred_fallthru
      _
    // Predicated region
    $region82: #{tpu_custom_call.1} parent=1 // pred_check
      _
    $region83: #{tpu_custom_call.1} parent=1 // pred_check_branch
      %199 = sbr.rel (0) target = $region85
    $region84: #{tpu_custom_call.1} parent=1 // pred_region
      _
    $region85: #{tpu_custom_call.1} parent=1 // pred_fallthru
      _
    // Predicated region
    $region86: #{tpu_custom_call.1} parent=1 // pred_check
      _
    $region87: #{tpu_custom_call.1} parent=1 // pred_check_branch
      %201 = sbr.rel (0) target = $region89
    $region88: #{tpu_custom_call.1} parent=1 // pred_region
      %s203 = ssub.s32 16384, 16384
      %204 = vsyncadd [#allocation21], %s203
      %s205 = sshll.u32 [#allocation22], 4
      %s206 = int_to_ptr.vmem [resolvable:$true] %s205
      %211 = dma.hbm_to_vmem [thread:$0]  %s21, 16384, %s206, [#allocation21], 256, 256, 16
    $region89: #{tpu_custom_call.1} parent=1 // pred_fallthru
      _
    // Predicated region
    $region90: #{tpu_custom_call.1} parent=1 // pred_check
      _
    $region91: #{tpu_custom_call.1} parent=1 // pred_check_branch
      %213 = sbr.rel (0) target = $region93
    $region92: #{tpu_custom_call.1} parent=1 // pred_region
      _
    $region93: #{tpu_custom_call.1} parent=1 // pred_fallthru
      _
    // Predicated region
    $region94: #{tpu_custom_call.1} parent=1 // pred_check
      _
    $region95: #{tpu_custom_call.1} parent=1 // pred_check_branch
      %215 = sbr.rel (0) target = $region97
    $region96: #{tpu_custom_call.1} parent=1 // pred_region
      %s217 = ssub.s32 16384, 16384
      %218 = vsyncadd [#allocation24], %s217
      %s219 = sshll.u32 [#allocation23], 4
      %s220 = int_to_ptr.vmem [resolvable:$true] %s219
      %225 = dma.hbm_to_vmem [thread:$0]  %s23, 16384, %s220, [#allocation24], 256, 256, 16
    $region97: #{tpu_custom_call.1} parent=1 // pred_fallthru
      _
    // Predicated region
    $region98: #{tpu_custom_call.1} parent=1 // pred_check
      _
    $region99: #{tpu_custom_call.1} parent=1 // pred_check_branch
      %227 = sbr.rel (0) target = $region101
    $region100: #{tpu_custom_call.1} parent=1 // pred_region
      _
    $region101: #{tpu_custom_call.1} parent=1 // pred_fallthru
      _
    // Predicated region
    $region102: #{tpu_custom_call.1} parent=1 // pred_check
      _
    $region103: #{tpu_custom_call.1} parent=1 // pred_check_branch
      %229 = sbr.rel (0) target = $region105
    $region104: #{tpu_custom_call.1} parent=1 // pred_region
      _
    $region105: #{tpu_custom_call.1} parent=1 // pred_fallthru
      _
    // Predicated region
    $region106: #{tpu_custom_call.1} parent=1 // pred_check
      _
    $region107: #{tpu_custom_call.1} parent=1 // pred_check_branch
      %231 = sbr.rel (0) target = $region109
    $region108: #{tpu_custom_call.1} parent=1 // pred_region
      _
    $region109: #{tpu_custom_call.1} parent=1 // pred_fallthru
      _
    // Predicated region
    $region110: #{tpu_custom_call.1} parent=1 // pred_check
      _
    $region111: #{tpu_custom_call.1} parent=1 // pred_check_branch
      %233 = sbr.rel (0) target = $region113
    $region112: #{tpu_custom_call.1} parent=1 // pred_region
      %234 = dma.done [#allocation4], 512
    $region113: #{tpu_custom_call.1} parent=1 // pred_fallthru
      _
    // Predicated region
    $region114: #{tpu_custom_call.1} parent=1 // pred_check
      _
    $region115: #{tpu_custom_call.1} parent=1 // pred_check_branch
      %236 = sbr.rel (0) target = $region117
    $region116: #{tpu_custom_call.1} parent=1 // pred_region
      %237 = dma.done [#allocation6], 128
    $region117: #{tpu_custom_call.1} parent=1 // pred_fallthru
      _
    // Predicated region
    $region118: #{tpu_custom_call.1} parent=1 // pred_check
      _
    $region119: #{tpu_custom_call.1} parent=1 // pred_check_branch
      %239 = sbr.rel (0) target = $region121
    $region120: #{tpu_custom_call.1} parent=1 // pred_region
      %240 = dma.done [#allocation6], 32768
    $region121: #{tpu_custom_call.1} parent=1 // pred_fallthru
      _
    // Predicated region
    $region122: #{tpu_custom_call.1} parent=1 // pred_check
      _
    $region123: #{tpu_custom_call.1} parent=1 // pred_check_branch
      %242 = sbr.rel (0) target = $region125
    $region124: #{tpu_custom_call.1} parent=1 // pred_region
      %243 = dma.done [#allocation9], 16384
    $region125: #{tpu_custom_call.1} parent=1 // pred_fallthru
      _
    // Predicated region
    $region126: #{tpu_custom_call.1} parent=1 // pred_check
      _
    $region127: #{tpu_custom_call.1} parent=1 // pred_check_branch
      %245 = sbr.rel (0) target = $region129
    $region128: #{tpu_custom_call.1} parent=1 // pred_region
      %246 = dma.done [#allocation9], 16384
    $region129: #{tpu_custom_call.1} parent=1 // pred_fallthru
      _
    // Predicated region
    $region130: #{tpu_custom_call.1} parent=1 // pred_check
      _
    $region131: #{tpu_custom_call.1} parent=1 // pred_check_branch
      %248 = sbr.rel (0) target = $region133
    $region132: #{tpu_custom_call.1} parent=1 // pred_region
      %249 = dma.done [#allocation12], 16384
    $region133: #{tpu_custom_call.1} parent=1 // pred_fallthru
      _
    // Predicated region
    $region134: #{tpu_custom_call.1} parent=1 // pred_check
      _
    $region135: #{tpu_custom_call.1} parent=1 // pred_check_branch
      %251 = sbr.rel (0) target = $region137
    $region136: #{tpu_custom_call.1} parent=1 // pred_region
      %252 = dma.done [#allocation12], 16384
    $region137: #{tpu_custom_call.1} parent=1 // pred_fallthru
      _
    // Predicated region
    $region138: #{tpu_custom_call.1} parent=1 // pred_check
      _
    $region139: #{tpu_custom_call.1} parent=1 // pred_check_branch
      %254 = sbr.rel (0) target = $region141
    $region140: #{tpu_custom_call.1} parent=1 // pred_region
      %255 = dma.done [#allocation15], 16384
    $region141: #{tpu_custom_call.1} parent=1 // pred_fallthru
      _
    // Predicated region
    $region142: #{tpu_custom_call.1} parent=1 // pred_check
      _
    $region143: #{tpu_custom_call.1} parent=1 // pred_check_branch
      %257 = sbr.rel (0) target = $region145
    $region144: #{tpu_custom_call.1} parent=1 // pred_region
      %258 = dma.done [#allocation15], 16384
    $region145: #{tpu_custom_call.1} parent=1 // pred_fallthru
      _
    // Predicated region
    $region146: #{tpu_custom_call.1} parent=1 // pred_check
      _
    $region147: #{tpu_custom_call.1} parent=1 // pred_check_branch
      %260 = sbr.rel (0) target = $region149
    $region148: #{tpu_custom_call.1} parent=1 // pred_region
      %261 = dma.done [#allocation18], 4096
    $region149: #{tpu_custom_call.1} parent=1 // pred_fallthru
      _
    // Predicated region
    $region150: #{tpu_custom_call.1} parent=1 // pred_check
      _
    $region151: #{tpu_custom_call.1} parent=1 // pred_check_branch
      %263 = sbr.rel (0) target = $region153
    $region152: #{tpu_custom_call.1} parent=1 // pred_region
      %264 = dma.done [#allocation18], 16384
    $region153: #{tpu_custom_call.1} parent=1 // pred_fallthru
      _
    // Predicated region
    $region154: #{tpu_custom_call.1} parent=1 // pred_check
      _
    $region155: #{tpu_custom_call.1} parent=1 // pred_check_branch
      %266 = sbr.rel (0) target = $region157
    $region156: #{tpu_custom_call.1} parent=1 // pred_region
      %267 = dma.done [#allocation21], 16384
    $region157: #{tpu_custom_call.1} parent=1 // pred_fallthru
      _
    // Predicated region
    $region158: #{tpu_custom_call.1} parent=1 // pred_check
      _
    $region159: #{tpu_custom_call.1} parent=1 // pred_check_branch
      %269 = sbr.rel (0) target = $region161
    $region160: #{tpu_custom_call.1} parent=1 // pred_region
      %270 = dma.done [#allocation21], 16384
    $region161: #{tpu_custom_call.1} parent=1 // pred_fallthru
      _
    // Predicated region
    $region162: #{tpu_custom_call.1} parent=1 // pred_check
      _
    $region163: #{tpu_custom_call.1} parent=1 // pred_check_branch
      %272 = sbr.rel (0) target = $region165
    $region164: #{tpu_custom_call.1} parent=1 // pred_region
      %273 = dma.done [#allocation24], 16384
    $region165: #{tpu_custom_call.1} parent=1 // pred_fallthru
      _
    %v275 = vld [vmem:[#allocation3] sm:$0xff]
    %v276 = vld [vmem:[#allocation3 + $0x8] sm:$0xff]
    %v277 = vld [vmem:[#allocation3 + $0x10] sm:$0xff]
    %v278 = vld [vmem:[#allocation3 + $0x18] sm:$0xff]
    %v279 = vld [vmem:[#allocation7] sm:$0xff]
    %v280 = vld [vmem:[#allocation7 + $0x8] sm:$0xff]
    %v281 = vld [vmem:[#allocation7 + $0x10] sm:$0xff]
    %v282 = vld [vmem:[#allocation7 + $0x18] sm:$0xff]
    %v283 = vld [vmem:[#allocation7 + $0x20] sm:$0xff]
    %v284 = vld [vmem:[#allocation7 + $0x28] sm:$0xff]
    %v285 = vld [vmem:[#allocation7 + $0x30] sm:$0xff]
    %v286 = vld [vmem:[#allocation7 + $0x38] sm:$0xff]
    %v287 = vld [vmem:[#allocation7 + $0x40] sm:$0xff]
    %v288 = vld [vmem:[#allocation7 + $0x48] sm:$0xff]
    %v289 = vld [vmem:[#allocation7 + $0x50] sm:$0xff]
    %v290 = vld [vmem:[#allocation7 + $0x58] sm:$0xff]
    %v291 = vld [vmem:[#allocation7 + $0x60] sm:$0xff]
    %v292 = vld [vmem:[#allocation7 + $0x68] sm:$0xff]
    %v293 = vld [vmem:[#allocation7 + $0x70] sm:$0xff]
    %v294 = vld [vmem:[#allocation7 + $0x78] sm:$0xff]
    %v295 = vld [vmem:[#allocation7 + $0x80] sm:$0xff]
    %v296 = vld [vmem:[#allocation7 + $0x88] sm:$0xff]
    %v297 = vld [vmem:[#allocation7 + $0x90] sm:$0xff]
    %v298 = vld [vmem:[#allocation7 + $0x98] sm:$0xff]
    %v299 = vld [vmem:[#allocation7 + $0xa0] sm:$0xff]
    %v300 = vld [vmem:[#allocation7 + $0xa8] sm:$0xff]
    %v301 = vld [vmem:[#allocation7 + $0xb0] sm:$0xff]
    %v302 = vld [vmem:[#allocation7 + $0xb8] sm:$0xff]
    %v303 = vld [vmem:[#allocation7 + $0xc0] sm:$0xff]
    %v304 = vld [vmem:[#allocation7 + $0xc8] sm:$0xff]
    %v305 = vld [vmem:[#allocation7 + $0xd0] sm:$0xff]
    %v306 = vld [vmem:[#allocation7 + $0xd8] sm:$0xff]
    %v307 = vld [vmem:[#allocation7 + $0xe0] sm:$0xff]
    %v308 = vld [vmem:[#allocation7 + $0xe8] sm:$0xff]
    %v309 = vld [vmem:[#allocation7 + $0xf0] sm:$0xff]
    %v310 = vld [vmem:[#allocation7 + $0xf8] sm:$0xff]
    %v311 = vld [vmem:[#allocation7 + $0x100] sm:$0xff]
    %v312 = vld [vmem:[#allocation7 + $0x108] sm:$0xff]
    %v313 = vld [vmem:[#allocation7 + $0x110] sm:$0xff]
    %v314 = vld [vmem:[#allocation7 + $0x118] sm:$0xff]
    %v315 = vld [vmem:[#allocation7 + $0x120] sm:$0xff]
    %v316 = vld [vmem:[#allocation7 + $0x128] sm:$0xff]
    %v317 = vld [vmem:[#allocation7 + $0x130] sm:$0xff]
    %v318 = vld [vmem:[#allocation7 + $0x138] sm:$0xff]
    %v319 = vld [vmem:[#allocation7 + $0x140] sm:$0xff]
    %v320 = vld [vmem:[#allocation7 + $0x148] sm:$0xff]
    %v321 = vld [vmem:[#allocation7 + $0x150] sm:$0xff]
    %v322 = vld [vmem:[#allocation7 + $0x158] sm:$0xff]
    %v323 = vld [vmem:[#allocation7 + $0x160] sm:$0xff]
    %v324 = vld [vmem:[#allocation7 + $0x168] sm:$0xff]
    %v325 = vld [vmem:[#allocation7 + $0x170] sm:$0xff]
    %v326 = vld [vmem:[#allocation7 + $0x178] sm:$0xff]
    %v327 = vld [vmem:[#allocation7 + $0x180] sm:$0xff]
    %v328 = vld [vmem:[#allocation7 + $0x188] sm:$0xff]
    %v329 = vld [vmem:[#allocation7 + $0x190] sm:$0xff]
    %v330 = vld [vmem:[#allocation7 + $0x198] sm:$0xff]
    %v331 = vld [vmem:[#allocation7 + $0x1a0] sm:$0xff]
    %v332 = vld [vmem:[#allocation7 + $0x1a8] sm:$0xff]
    %v333 = vld [vmem:[#allocation7 + $0x1b0] sm:$0xff]
    %v334 = vld [vmem:[#allocation7 + $0x1b8] sm:$0xff]
    %v335 = vld [vmem:[#allocation7 + $0x1c0] sm:$0xff]
    %v336 = vld [vmem:[#allocation7 + $0x1c8] sm:$0xff]
    %v337 = vld [vmem:[#allocation7 + $0x1d0] sm:$0xff]
    %v338 = vld [vmem:[#allocation7 + $0x1d8] sm:$0xff]
    %v339 = vld [vmem:[#allocation7 + $0x1e0] sm:$0xff]
    %v340 = vld [vmem:[#allocation7 + $0x1e8] sm:$0xff]
    %v341 = vld [vmem:[#allocation7 + $0x1f0] sm:$0xff]
    %v342 = vld [vmem:[#allocation7 + $0x1f8] sm:$0xff]
    %v343 = vld [vmem:[#allocation7 + $0x200] sm:$0xff]
    %v344 = vld [vmem:[#allocation7 + $0x208] sm:$0xff]
    %v345 = vld [vmem:[#allocation7 + $0x210] sm:$0xff]
    %v346 = vld [vmem:[#allocation7 + $0x218] sm:$0xff]
    %v347 = vld [vmem:[#allocation7 + $0x220] sm:$0xff]
    %v348 = vld [vmem:[#allocation7 + $0x228] sm:$0xff]
    %v349 = vld [vmem:[#allocation7 + $0x230] sm:$0xff]
    %v350 = vld [vmem:[#allocation7 + $0x238] sm:$0xff]
    %v351 = vld [vmem:[#allocation7 + $0x240] sm:$0xff]
    %v352 = vld [vmem:[#allocation7 + $0x248] sm:$0xff]
    %v353 = vld [vmem:[#allocation7 + $0x250] sm:$0xff]
    %v354 = vld [vmem:[#allocation7 + $0x258] sm:$0xff]
    %v355 = vld [vmem:[#allocation7 + $0x260] sm:$0xff]
    %v356 = vld [vmem:[#allocation7 + $0x268] sm:$0xff]
    %v357 = vld [vmem:[#allocation7 + $0x270] sm:$0xff]
    %v358 = vld [vmem:[#allocation7 + $0x278] sm:$0xff]
    %v359 = vld [vmem:[#allocation7 + $0x280] sm:$0xff]
    %v360 = vld [vmem:[#allocation7 + $0x288] sm:$0xff]
    %v361 = vld [vmem:[#allocation7 + $0x290] sm:$0xff]
    %v362 = vld [vmem:[#allocation7 + $0x298] sm:$0xff]
    %v363 = vld [vmem:[#allocation7 + $0x2a0] sm:$0xff]
    %v364 = vld [vmem:[#allocation7 + $0x2a8] sm:$0xff]
    %v365 = vld [vmem:[#allocation7 + $0x2b0] sm:$0xff]
    %v366 = vld [vmem:[#allocation7 + $0x2b8] sm:$0xff]
    %v367 = vld [vmem:[#allocation7 + $0x2c0] sm:$0xff]
    %v368 = vld [vmem:[#allocation7 + $0x2c8] sm:$0xff]
    %v369 = vld [vmem:[#allocation7 + $0x2d0] sm:$0xff]
    %v370 = vld [vmem:[#allocation7 + $0x2d8] sm:$0xff]
    %v371 = vld [vmem:[#allocation7 + $0x2e0] sm:$0xff]
    %v372 = vld [vmem:[#allocation7 + $0x2e8] sm:$0xff]
    %v373 = vld [vmem:[#allocation7 + $0x2f0] sm:$0xff]
    %v374 = vld [vmem:[#allocation7 + $0x2f8] sm:$0xff]
    %v375 = vld [vmem:[#allocation7 + $0x300] sm:$0xff]
    %v376 = vld [vmem:[#allocation7 + $0x308] sm:$0xff]
    %v377 = vld [vmem:[#allocation7 + $0x310] sm:$0xff]
    %v378 = vld [vmem:[#allocation7 + $0x318] sm:$0xff]
    %v379 = vld [vmem:[#allocation7 + $0x320] sm:$0xff]
    %v380 = vld [vmem:[#allocation7 + $0x328] sm:$0xff]
    %v381 = vld [vmem:[#allocation7 + $0x330] sm:$0xff]
    %v382 = vld [vmem:[#allocation7 + $0x338] sm:$0xff]
    %v383 = vld [vmem:[#allocation7 + $0x340] sm:$0xff]
    %v384 = vld [vmem:[#allocation7 + $0x348] sm:$0xff]
    %v385 = vld [vmem:[#allocation7 + $0x350] sm:$0xff]
    %v386 = vld [vmem:[#allocation7 + $0x358] sm:$0xff]
    %v387 = vld [vmem:[#allocation7 + $0x360] sm:$0xff]
    %v388 = vld [vmem:[#allocation7 + $0x368] sm:$0xff]
    %v389 = vld [vmem:[#allocation7 + $0x370] sm:$0xff]
    %v390 = vld [vmem:[#allocation7 + $0x378] sm:$0xff]
    %v391 = vld [vmem:[#allocation7 + $0x380] sm:$0xff]
    %v392 = vld [vmem:[#allocation7 + $0x388] sm:$0xff]
    %v393 = vld [vmem:[#allocation7 + $0x390] sm:$0xff]
    %v394 = vld [vmem:[#allocation7 + $0x398] sm:$0xff]
    %v395 = vld [vmem:[#allocation7 + $0x3a0] sm:$0xff]
    %v396 = vld [vmem:[#allocation7 + $0x3a8] sm:$0xff]
    %v397 = vld [vmem:[#allocation7 + $0x3b0] sm:$0xff]
    %v398 = vld [vmem:[#allocation7 + $0x3b8] sm:$0xff]
    %v399 = vld [vmem:[#allocation7 + $0x3c0] sm:$0xff]
    %v400 = vld [vmem:[#allocation7 + $0x3c8] sm:$0xff]
    %v401 = vld [vmem:[#allocation7 + $0x3d0] sm:$0xff]
    %v402 = vld [vmem:[#allocation7 + $0x3d8] sm:$0xff]
    %v403 = vld [vmem:[#allocation7 + $0x3e0] sm:$0xff]
    %v404 = vld [vmem:[#allocation7 + $0x3e8] sm:$0xff]
    %v405 = vld [vmem:[#allocation7 + $0x3f0] sm:$0xff]
    %v406 = vld [vmem:[#allocation7 + $0x3f8] sm:$0xff]
    %v407 = vld [vmem:[#allocation7 + $0x400] sm:$0xff]
    %v408 = vld [vmem:[#allocation7 + $0x408] sm:$0xff]
    %v409 = vld [vmem:[#allocation7 + $0x410] sm:$0xff]
    %v410 = vld [vmem:[#allocation7 + $0x418] sm:$0xff]
    %v411 = vld [vmem:[#allocation7 + $0x420] sm:$0xff]
    %v412 = vld [vmem:[#allocation7 + $0x428] sm:$0xff]
    %v413 = vld [vmem:[#allocation7 + $0x430] sm:$0xff]
    %v414 = vld [vmem:[#allocation7 + $0x438] sm:$0xff]
    %v415 = vld [vmem:[#allocation7 + $0x440] sm:$0xff]
    %v416 = vld [vmem:[#allocation7 + $0x448] sm:$0xff]
    %v417 = vld [vmem:[#allocation7 + $0x450] sm:$0xff]
    %v418 = vld [vmem:[#allocation7 + $0x458] sm:$0xff]
    %v419 = vld [vmem:[#allocation7 + $0x460] sm:$0xff]
    %v420 = vld [vmem:[#allocation7 + $0x468] sm:$0xff]
    %v421 = vld [vmem:[#allocation7 + $0x470] sm:$0xff]
    %v422 = vld [vmem:[#allocation7 + $0x478] sm:$0xff]
    %v423 = vld [vmem:[#allocation7 + $0x480] sm:$0xff]
    %v424 = vld [vmem:[#allocation7 + $0x488] sm:$0xff]
    %v425 = vld [vmem:[#allocation7 + $0x490] sm:$0xff]
    %v426 = vld [vmem:[#allocation7 + $0x498] sm:$0xff]
    %v427 = vld [vmem:[#allocation7 + $0x4a0] sm:$0xff]
    %v428 = vld [vmem:[#allocation7 + $0x4a8] sm:$0xff]
    %v429 = vld [vmem:[#allocation7 + $0x4b0] sm:$0xff]
    %v430 = vld [vmem:[#allocation7 + $0x4b8] sm:$0xff]
    %v431 = vld [vmem:[#allocation7 + $0x4c0] sm:$0xff]
    %v432 = vld [vmem:[#allocation7 + $0x4c8] sm:$0xff]
    %v433 = vld [vmem:[#allocation7 + $0x4d0] sm:$0xff]
    %v434 = vld [vmem:[#allocation7 + $0x4d8] sm:$0xff]
    %v435 = vld [vmem:[#allocation7 + $0x4e0] sm:$0xff]
    %v436 = vld [vmem:[#allocation7 + $0x4e8] sm:$0xff]
    %v437 = vld [vmem:[#allocation7 + $0x4f0] sm:$0xff]
    %v438 = vld [vmem:[#allocation7 + $0x4f8] sm:$0xff]
    %v439 = vld [vmem:[#allocation7 + $0x500] sm:$0xff]
    %v440 = vld [vmem:[#allocation7 + $0x508] sm:$0xff]
    %v441 = vld [vmem:[#allocation7 + $0x510] sm:$0xff]
    %v442 = vld [vmem:[#allocation7 + $0x518] sm:$0xff]
    %v443 = vld [vmem:[#allocation7 + $0x520] sm:$0xff]
    %v444 = vld [vmem:[#allocation7 + $0x528] sm:$0xff]
    %v445 = vld [vmem:[#allocation7 + $0x530] sm:$0xff]
    %v446 = vld [vmem:[#allocation7 + $0x538] sm:$0xff]
    %v447 = vld [vmem:[#allocation7 + $0x540] sm:$0xff]
    %v448 = vld [vmem:[#allocation7 + $0x548] sm:$0xff]
    %v449 = vld [vmem:[#allocation7 + $0x550] sm:$0xff]
    %v450 = vld [vmem:[#allocation7 + $0x558] sm:$0xff]
    %v451 = vld [vmem:[#allocation7 + $0x560] sm:$0xff]
    %v452 = vld [vmem:[#allocation7 + $0x568] sm:$0xff]
    %v453 = vld [vmem:[#allocation7 + $0x570] sm:$0xff]
    %v454 = vld [vmem:[#allocation7 + $0x578] sm:$0xff]
    %v455 = vld [vmem:[#allocation7 + $0x580] sm:$0xff]
    %v456 = vld [vmem:[#allocation7 + $0x588] sm:$0xff]
    %v457 = vld [vmem:[#allocation7 + $0x590] sm:$0xff]
    %v458 = vld [vmem:[#allocation7 + $0x598] sm:$0xff]
    %v459 = vld [vmem:[#allocation7 + $0x5a0] sm:$0xff]
    %v460 = vld [vmem:[#allocation7 + $0x5a8] sm:$0xff]
    %v461 = vld [vmem:[#allocation7 + $0x5b0] sm:$0xff]
    %v462 = vld [vmem:[#allocation7 + $0x5b8] sm:$0xff]
    %v463 = vld [vmem:[#allocation7 + $0x5c0] sm:$0xff]
    %v464 = vld [vmem:[#allocation7 + $0x5c8] sm:$0xff]
    %v465 = vld [vmem:[#allocation7 + $0x5d0] sm:$0xff]
    %v466 = vld [vmem:[#allocation7 + $0x5d8] sm:$0xff]
    %v467 = vld [vmem:[#allocation7 + $0x5e0] sm:$0xff]
    %v468 = vld [vmem:[#allocation7 + $0x5e8] sm:$0xff]
    %v469 = vld [vmem:[#allocation7 + $0x5f0] sm:$0xff]
    %v470 = vld [vmem:[#allocation7 + $0x5f8] sm:$0xff]
    %v471 = vld [vmem:[#allocation7 + $0x600] sm:$0xff]
    %v472 = vld [vmem:[#allocation7 + $0x608] sm:$0xff]
    %v473 = vld [vmem:[#allocation7 + $0x610] sm:$0xff]
    %v474 = vld [vmem:[#allocation7 + $0x618] sm:$0xff]
    %v475 = vld [vmem:[#allocation7 + $0x620] sm:$0xff]
    %v476 = vld [vmem:[#allocation7 + $0x628] sm:$0xff]
    %v477 = vld [vmem:[#allocation7 + $0x630] sm:$0xff]
    %v478 = vld [vmem:[#allocation7 + $0x638] sm:$0xff]
    %v479 = vld [vmem:[#allocation7 + $0x640] sm:$0xff]
    %v480 = vld [vmem:[#allocation7 + $0x648] sm:$0xff]
    %v481 = vld [vmem:[#allocation7 + $0x650] sm:$0xff]
    %v482 = vld [vmem:[#allocation7 + $0x658] sm:$0xff]
    %v483 = vld [vmem:[#allocation7 + $0x660] sm:$0xff]
    %v484 = vld [vmem:[#allocation7 + $0x668] sm:$0xff]
    %v485 = vld [vmem:[#allocation7 + $0x670] sm:$0xff]
    %v486 = vld [vmem:[#allocation7 + $0x678] sm:$0xff]
    %v487 = vld [vmem:[#allocation7 + $0x680] sm:$0xff]
    %v488 = vld [vmem:[#allocation7 + $0x688] sm:$0xff]
    %v489 = vld [vmem:[#allocation7 + $0x690] sm:$0xff]
    %v490 = vld [vmem:[#allocation7 + $0x698] sm:$0xff]
    %v491 = vld [vmem:[#allocation7 + $0x6a0] sm:$0xff]
    %v492 = vld [vmem:[#allocation7 + $0x6a8] sm:$0xff]
    %v493 = vld [vmem:[#allocation7 + $0x6b0] sm:$0xff]
    %v494 = vld [vmem:[#allocation7 + $0x6b8] sm:$0xff]
    %v495 = vld [vmem:[#allocation7 + $0x6c0] sm:$0xff]
    %v496 = vld [vmem:[#allocation7 + $0x6c8] sm:$0xff]
    %v497 = vld [vmem:[#allocation7 + $0x6d0] sm:$0xff]
    %v498 = vld [vmem:[#allocation7 + $0x6d8] sm:$0xff]
    %v499 = vld [vmem:[#allocation7 + $0x6e0] sm:$0xff]
    %v500 = vld [vmem:[#allocation7 + $0x6e8] sm:$0xff]
    %v501 = vld [vmem:[#allocation7 + $0x6f0] sm:$0xff]
    %v502 = vld [vmem:[#allocation7 + $0x6f8] sm:$0xff]
    %v503 = vld [vmem:[#allocation7 + $0x700] sm:$0xff]
    %v504 = vld [vmem:[#allocation7 + $0x708] sm:$0xff]
    %v505 = vld [vmem:[#allocation7 + $0x710] sm:$0xff]
    %v506 = vld [vmem:[#allocation7 + $0x718] sm:$0xff]
    %v507 = vld [vmem:[#allocation7 + $0x720] sm:$0xff]
    %v508 = vld [vmem:[#allocation7 + $0x728] sm:$0xff]
    %v509 = vld [vmem:[#allocation7 + $0x730] sm:$0xff]
    %v510 = vld [vmem:[#allocation7 + $0x738] sm:$0xff]
    %v511 = vld [vmem:[#allocation7 + $0x740] sm:$0xff]
    %v512 = vld [vmem:[#allocation7 + $0x748] sm:$0xff]
    %v513 = vld [vmem:[#allocation7 + $0x750] sm:$0xff]
    %v514 = vld [vmem:[#allocation7 + $0x758] sm:$0xff]
    %v515 = vld [vmem:[#allocation7 + $0x760] sm:$0xff]
    %v516 = vld [vmem:[#allocation7 + $0x768] sm:$0xff]
    %v517 = vld [vmem:[#allocation7 + $0x770] sm:$0xff]
    %v518 = vld [vmem:[#allocation7 + $0x778] sm:$0xff]
    %v519 = vld [vmem:[#allocation7 + $0x780] sm:$0xff]
    %v520 = vld [vmem:[#allocation7 + $0x788] sm:$0xff]
    %v521 = vld [vmem:[#allocation7 + $0x790] sm:$0xff]
    %v522 = vld [vmem:[#allocation7 + $0x798] sm:$0xff]
    %v523 = vld [vmem:[#allocation7 + $0x7a0] sm:$0xff]
    %v524 = vld [vmem:[#allocation7 + $0x7a8] sm:$0xff]
    %v525 = vld [vmem:[#allocation7 + $0x7b0] sm:$0xff]
    %v526 = vld [vmem:[#allocation7 + $0x7b8] sm:$0xff]
    %v527 = vld [vmem:[#allocation7 + $0x7c0] sm:$0xff]
    %v528 = vld [vmem:[#allocation7 + $0x7c8] sm:$0xff]
    %v529 = vld [vmem:[#allocation7 + $0x7d0] sm:$0xff]
    %v530 = vld [vmem:[#allocation7 + $0x7d8] sm:$0xff]
    %v531 = vld [vmem:[#allocation7 + $0x7e0] sm:$0xff]
    %v532 = vld [vmem:[#allocation7 + $0x7e8] sm:$0xff]
    %v533 = vld [vmem:[#allocation7 + $0x7f0] sm:$0xff]
    %v534 = vld [vmem:[#allocation7 + $0x7f8] sm:$0xff]
    %v535 = vld [vmem:[%s3] sm:$0xf]
    %v537 = vlaneseq
    %v538 = vshrl.u32 %v537, 7
    %v539 = vsub.s32 0, %v538
    %v540 = vrot.slane %v535, %v539
    %v541 = vlaneseq
    %v542 = vshrl.u32 %v541, 7
    %v543 = vsub.s32 1, %v542
    %v544 = vrot.slane %v535, %v543
    %v545 = vlaneseq
    %v546 = vshrl.u32 %v545, 7
    %v547 = vsub.s32 2, %v546
    %v548 = vrot.slane %v535, %v547
    %v549 = vlaneseq
    %v550 = vshrl.u32 %v549, 7
    %v551 = vsub.s32 3, %v550
    %v552 = vrot.slane %v535, %v551
    %v561 = vunpack.c.l.b16 %v275
    %v562 = vunpack.c.h.b16 %v275
    %v563 = vunpack.c.l.b16 %v276
    %v564 = vunpack.c.h.b16 %v276
    %v565 = vunpack.c.l.b16 %v277
    %v566 = vunpack.c.h.b16 %v277
    %v567 = vunpack.c.l.b16 %v278
    %v568 = vunpack.c.h.b16 %v278
    %v569 = vpack.c.b16 %v561, %v561
    %v570 = vpack.c.b16 %v562, %v562
    %v571 = vpack.c.b16 %v563, %v563
    %v572 = vpack.c.b16 %v564, %v564
    %v573 = vpack.c.b16 %v565, %v565
    %v574 = vpack.c.b16 %v566, %v566
    %v575 = vpack.c.b16 %v567, %v567
    %v576 = vpack.c.b16 %v568, %v568
    %v841 = vunpack.c.l.b16 %v279
    %v842 = vunpack.c.h.b16 %v279
    %v843 = vunpack.c.l.b16 %v280
    %v844 = vunpack.c.h.b16 %v280
    %v845 = vunpack.c.l.b16 %v281
    %v846 = vunpack.c.h.b16 %v281
    %v847 = vunpack.c.l.b16 %v282
    %v848 = vunpack.c.h.b16 %v282
    %v849 = vunpack.c.l.b16 %v283
    %v850 = vunpack.c.h.b16 %v283
    %v851 = vunpack.c.l.b16 %v284
    %v852 = vunpack.c.h.b16 %v284
    %v853 = vunpack.c.l.b16 %v285
    %v854 = vunpack.c.h.b16 %v285
    %v855 = vunpack.c.l.b16 %v286
    %v856 = vunpack.c.h.b16 %v286
    %v857 = vunpack.c.l.b16 %v287
    %v858 = vunpack.c.h.b16 %v287
    %v859 = vunpack.c.l.b16 %v288
    %v860 = vunpack.c.h.b16 %v288
    %v861 = vunpack.c.l.b16 %v289
    %v862 = vunpack.c.h.b16 %v289
    %v863 = vunpack.c.l.b16 %v290
    %v864 = vunpack.c.h.b16 %v290
    %v865 = vunpack.c.l.b16 %v291
    %v866 = vunpack.c.h.b16 %v291
    %v867 = vunpack.c.l.b16 %v292
    %v868 = vunpack.c.h.b16 %v292
    %v869 = vunpack.c.l.b16 %v293
    %v870 = vunpack.c.h.b16 %v293
    %v871 = vunpack.c.l.b16 %v294
    %v872 = vunpack.c.h.b16 %v294
    %v873 = vunpack.c.l.b16 %v295
    %v874 = vunpack.c.h.b16 %v295
    %v875 = vunpack.c.l.b16 %v296
    %v876 = vunpack.c.h.b16 %v296
    %v877 = vunpack.c.l.b16 %v297
    %v878 = vunpack.c.h.b16 %v297
    %v879 = vunpack.c.l.b16 %v298
    %v880 = vunpack.c.h.b16 %v298
    %v881 = vunpack.c.l.b16 %v299
    %v882 = vunpack.c.h.b16 %v299
    %v883 = vunpack.c.l.b16 %v300
    %v884 = vunpack.c.h.b16 %v300
    %v885 = vunpack.c.l.b16 %v301
    %v886 = vunpack.c.h.b16 %v301
    %v887 = vunpack.c.l.b16 %v302
    %v888 = vunpack.c.h.b16 %v302
    %v889 = vunpack.c.l.b16 %v303
    %v890 = vunpack.c.h.b16 %v303
    %v891 = vunpack.c.l.b16 %v304
    %v892 = vunpack.c.h.b16 %v304
    %v893 = vunpack.c.l.b16 %v305
    %v894 = vunpack.c.h.b16 %v305
    %v895 = vunpack.c.l.b16 %v306
    %v896 = vunpack.c.h.b16 %v306
    %v897 = vunpack.c.l.b16 %v307
    %v898 = vunpack.c.h.b16 %v307
    %v899 = vunpack.c.l.b16 %v308
    %v900 = vunpack.c.h.b16 %v308
    %v901 = vunpack.c.l.b16 %v309
    %v902 = vunpack.c.h.b16 %v309
    %v903 = vunpack.c.l.b16 %v310
    %v904 = vunpack.c.h.b16 %v310
    %v905 = vunpack.c.l.b16 %v311
    %v906 = vunpack.c.h.b16 %v311
    %v907 = vunpack.c.l.b16 %v312
    %v908 = vunpack.c.h.b16 %v312
    %v909 = vunpack.c.l.b16 %v313
    %v910 = vunpack.c.h.b16 %v313
    %v911 = vunpack.c.l.b16 %v314
    %v912 = vunpack.c.h.b16 %v314
    %v913 = vunpack.c.l.b16 %v315
    %v914 = vunpack.c.h.b16 %v315
    %v915 = vunpack.c.l.b16 %v316
    %v916 = vunpack.c.h.b16 %v316
    %v917 = vunpack.c.l.b16 %v317
    %v918 = vunpack.c.h.b16 %v317
    %v919 = vunpack.c.l.b16 %v318
    %v920 = vunpack.c.h.b16 %v318
    %v921 = vunpack.c.l.b16 %v319
    %v922 = vunpack.c.h.b16 %v319
    %v923 = vunpack.c.l.b16 %v320
    %v924 = vunpack.c.h.b16 %v320
    %v925 = vunpack.c.l.b16 %v321
    %v926 = vunpack.c.h.b16 %v321
    %v927 = vunpack.c.l.b16 %v322
    %v928 = vunpack.c.h.b16 %v322
    %v929 = vunpack.c.l.b16 %v323
    %v930 = vunpack.c.h.b16 %v323
    %v931 = vunpack.c.l.b16 %v324
    %v932 = vunpack.c.h.b16 %v324
    %v933 = vunpack.c.l.b16 %v325
    %v934 = vunpack.c.h.b16 %v325
    %v935 = vunpack.c.l.b16 %v326
    %v936 = vunpack.c.h.b16 %v326
    %v937 = vunpack.c.l.b16 %v327
    %v938 = vunpack.c.h.b16 %v327
    %v939 = vunpack.c.l.b16 %v328
    %v940 = vunpack.c.h.b16 %v328
    %v941 = vunpack.c.l.b16 %v329
    %v942 = vunpack.c.h.b16 %v329
    %v943 = vunpack.c.l.b16 %v330
    %v944 = vunpack.c.h.b16 %v330
    %v945 = vunpack.c.l.b16 %v331
    %v946 = vunpack.c.h.b16 %v331
    %v947 = vunpack.c.l.b16 %v332
    %v948 = vunpack.c.h.b16 %v332
    %v949 = vunpack.c.l.b16 %v333
    %v950 = vunpack.c.h.b16 %v333
    %v951 = vunpack.c.l.b16 %v334
    %v952 = vunpack.c.h.b16 %v334
    %v953 = vunpack.c.l.b16 %v335
    %v954 = vunpack.c.h.b16 %v335
    %v955 = vunpack.c.l.b16 %v336
    %v956 = vunpack.c.h.b16 %v336
    %v957 = vunpack.c.l.b16 %v337
    %v958 = vunpack.c.h.b16 %v337
    %v959 = vunpack.c.l.b16 %v338
    %v960 = vunpack.c.h.b16 %v338
    %v961 = vunpack.c.l.b16 %v339
    %v962 = vunpack.c.h.b16 %v339
    %v963 = vunpack.c.l.b16 %v340
    %v964 = vunpack.c.h.b16 %v340
    %v965 = vunpack.c.l.b16 %v341
    %v966 = vunpack.c.h.b16 %v341
    %v967 = vunpack.c.l.b16 %v342
    %v968 = vunpack.c.h.b16 %v342
    %v969 = vunpack.c.l.b16 %v343
    %v970 = vunpack.c.h.b16 %v343
    %v971 = vunpack.c.l.b16 %v344
    %v972 = vunpack.c.h.b16 %v344
    %v973 = vunpack.c.l.b16 %v345
    %v974 = vunpack.c.h.b16 %v345
    %v975 = vunpack.c.l.b16 %v346
    %v976 = vunpack.c.h.b16 %v346
    %v977 = vunpack.c.l.b16 %v347
    %v978 = vunpack.c.h.b16 %v347
    %v979 = vunpack.c.l.b16 %v348
    %v980 = vunpack.c.h.b16 %v348
    %v981 = vunpack.c.l.b16 %v349
    %v982 = vunpack.c.h.b16 %v349
    %v983 = vunpack.c.l.b16 %v350
    %v984 = vunpack.c.h.b16 %v350
    %v985 = vunpack.c.l.b16 %v351
    %v986 = vunpack.c.h.b16 %v351
    %v987 = vunpack.c.l.b16 %v352
    %v988 = vunpack.c.h.b16 %v352
    %v989 = vunpack.c.l.b16 %v353
    %v990 = vunpack.c.h.b16 %v353
    %v991 = vunpack.c.l.b16 %v354
    %v992 = vunpack.c.h.b16 %v354
    %v993 = vunpack.c.l.b16 %v355
    %v994 = vunpack.c.h.b16 %v355
    %v995 = vunpack.c.l.b16 %v356
    %v996 = vunpack.c.h.b16 %v356
    %v997 = vunpack.c.l.b16 %v357
    %v998 = vunpack.c.h.b16 %v357
    %v999 = vunpack.c.l.b16 %v358
    %v1000 = vunpack.c.h.b16 %v358
    %v1001 = vunpack.c.l.b16 %v359
    %v1002 = vunpack.c.h.b16 %v359
    %v1003 = vunpack.c.l.b16 %v360
    %v1004 = vunpack.c.h.b16 %v360
    %v1005 = vunpack.c.l.b16 %v361
    %v1006 = vunpack.c.h.b16 %v361
    %v1007 = vunpack.c.l.b16 %v362
    %v1008 = vunpack.c.h.b16 %v362
    %v1009 = vunpack.c.l.b16 %v363
    %v1010 = vunpack.c.h.b16 %v363
    %v1011 = vunpack.c.l.b16 %v364
    %v1012 = vunpack.c.h.b16 %v364
    %v1013 = vunpack.c.l.b16 %v365
    %v1014 = vunpack.c.h.b16 %v365
    %v1015 = vunpack.c.l.b16 %v366
    %v1016 = vunpack.c.h.b16 %v366
    %v1017 = vunpack.c.l.b16 %v367
    %v1018 = vunpack.c.h.b16 %v367
    %v1019 = vunpack.c.l.b16 %v368
    %v1020 = vunpack.c.h.b16 %v368
    %v1021 = vunpack.c.l.b16 %v369
    %v1022 = vunpack.c.h.b16 %v369
    %v1023 = vunpack.c.l.b16 %v370
    %v1024 = vunpack.c.h.b16 %v370
    %v1025 = vunpack.c.l.b16 %v371
    %v1026 = vunpack.c.h.b16 %v371
    %v1027 = vunpack.c.l.b16 %v372
    %v1028 = vunpack.c.h.b16 %v372
    %v1029 = vunpack.c.l.b16 %v373
    %v1030 = vunpack.c.h.b16 %v373
    %v1031 = vunpack.c.l.b16 %v374
    %v1032 = vunpack.c.h.b16 %v374
    %v1033 = vunpack.c.l.b16 %v375
    %v1034 = vunpack.c.h.b16 %v375
    %v1035 = vunpack.c.l.b16 %v376
    %v1036 = vunpack.c.h.b16 %v376
    %v1037 = vunpack.c.l.b16 %v377
    %v1038 = vunpack.c.h.b16 %v377
    %v1039 = vunpack.c.l.b16 %v378
    %v1040 = vunpack.c.h.b16 %v378
    %v1041 = vunpack.c.l.b16 %v379
    %v1042 = vunpack.c.h.b16 %v379
    %v1043 = vunpack.c.l.b16 %v380
    %v1044 = vunpack.c.h.b16 %v380
    %v1045 = vunpack.c.l.b16 %v381
    %v1046 = vunpack.c.h.b16 %v381
    %v1047 = vunpack.c.l.b16 %v382
    %v1048 = vunpack.c.h.b16 %v382
    %v1049 = vunpack.c.l.b16 %v383
    %v1050 = vunpack.c.h.b16 %v383
    %v1051 = vunpack.c.l.b16 %v384
    %v1052 = vunpack.c.h.b16 %v384
    %v1053 = vunpack.c.l.b16 %v385
    %v1054 = vunpack.c.h.b16 %v385
    %v1055 = vunpack.c.l.b16 %v386
    %v1056 = vunpack.c.h.b16 %v386
    %v1057 = vunpack.c.l.b16 %v387
    %v1058 = vunpack.c.h.b16 %v387
    %v1059 = vunpack.c.l.b16 %v388
    %v1060 = vunpack.c.h.b16 %v388
    %v1061 = vunpack.c.l.b16 %v389
    %v1062 = vunpack.c.h.b16 %v389
    %v1063 = vunpack.c.l.b16 %v390
    %v1064 = vunpack.c.h.b16 %v390
    %v1065 = vunpack.c.l.b16 %v391
    %v1066 = vunpack.c.h.b16 %v391
    %v1067 = vunpack.c.l.b16 %v392
    %v1068 = vunpack.c.h.b16 %v392
    %v1069 = vunpack.c.l.b16 %v393
    %v1070 = vunpack.c.h.b16 %v393
    %v1071 = vunpack.c.l.b16 %v394
    %v1072 = vunpack.c.h.b16 %v394
    %v1073 = vunpack.c.l.b16 %v395
    %v1074 = vunpack.c.h.b16 %v395
    %v1075 = vunpack.c.l.b16 %v396
    %v1076 = vunpack.c.h.b16 %v396
    %v1077 = vunpack.c.l.b16 %v397
    %v1078 = vunpack.c.h.b16 %v397
    %v1079 = vunpack.c.l.b16 %v398
    %v1080 = vunpack.c.h.b16 %v398
    %v1081 = vunpack.c.l.b16 %v399
    %v1082 = vunpack.c.h.b16 %v399
    %v1083 = vunpack.c.l.b16 %v400
    %v1084 = vunpack.c.h.b16 %v400
    %v1085 = vunpack.c.l.b16 %v401
    %v1086 = vunpack.c.h.b16 %v401
    %v1087 = vunpack.c.l.b16 %v402
    %v1088 = vunpack.c.h.b16 %v402
    %v1089 = vunpack.c.l.b16 %v403
    %v1090 = vunpack.c.h.b16 %v403
    %v1091 = vunpack.c.l.b16 %v404
    %v1092 = vunpack.c.h.b16 %v404
    %v1093 = vunpack.c.l.b16 %v405
    %v1094 = vunpack.c.h.b16 %v405
    %v1095 = vunpack.c.l.b16 %v406
    %v1096 = vunpack.c.h.b16 %v406
    %v1097 = vunpack.c.l.b16 %v407
    %v1098 = vunpack.c.h.b16 %v407
    %v1099 = vunpack.c.l.b16 %v408
    %v1100 = vunpack.c.h.b16 %v408
    %v1101 = vunpack.c.l.b16 %v409
    %v1102 = vunpack.c.h.b16 %v409
    %v1103 = vunpack.c.l.b16 %v410
    %v1104 = vunpack.c.h.b16 %v410
    %v1105 = vunpack.c.l.b16 %v411
    %v1106 = vunpack.c.h.b16 %v411
    %v1107 = vunpack.c.l.b16 %v412
    %v1108 = vunpack.c.h.b16 %v412
    %v1109 = vunpack.c.l.b16 %v413
    %v1110 = vunpack.c.h.b16 %v413
    %v1111 = vunpack.c.l.b16 %v414
    %v1112 = vunpack.c.h.b16 %v414
    %v1113 = vunpack.c.l.b16 %v415
    %v1114 = vunpack.c.h.b16 %v415
    %v1115 = vunpack.c.l.b16 %v416
    %v1116 = vunpack.c.h.b16 %v416
    %v1117 = vunpack.c.l.b16 %v417
    %v1118 = vunpack.c.h.b16 %v417
    %v1119 = vunpack.c.l.b16 %v418
    %v1120 = vunpack.c.h.b16 %v418
    %v1121 = vunpack.c.l.b16 %v419
    %v1122 = vunpack.c.h.b16 %v419
    %v1123 = vunpack.c.l.b16 %v420
    %v1124 = vunpack.c.h.b16 %v420
    %v1125 = vunpack.c.l.b16 %v421
    %v1126 = vunpack.c.h.b16 %v421
    %v1127 = vunpack.c.l.b16 %v422
    %v1128 = vunpack.c.h.b16 %v422
    %v1129 = vunpack.c.l.b16 %v423
    %v1130 = vunpack.c.h.b16 %v423
    %v1131 = vunpack.c.l.b16 %v424
    %v1132 = vunpack.c.h.b16 %v424
    %v1133 = vunpack.c.l.b16 %v425
    %v1134 = vunpack.c.h.b16 %v425
    %v1135 = vunpack.c.l.b16 %v426
    %v1136 = vunpack.c.h.b16 %v426
    %v1137 = vunpack.c.l.b16 %v427
    %v1138 = vunpack.c.h.b16 %v427
    %v1139 = vunpack.c.l.b16 %v428
    %v1140 = vunpack.c.h.b16 %v428
    %v1141 = vunpack.c.l.b16 %v429
    %v1142 = vunpack.c.h.b16 %v429
    %v1143 = vunpack.c.l.b16 %v430
    %v1144 = vunpack.c.h.b16 %v430
    %v1145 = vunpack.c.l.b16 %v431
    %v1146 = vunpack.c.h.b16 %v431
    %v1147 = vunpack.c.l.b16 %v432
    %v1148 = vunpack.c.h.b16 %v432
    %v1149 = vunpack.c.l.b16 %v433
    %v1150 = vunpack.c.h.b16 %v433
    %v1151 = vunpack.c.l.b16 %v434
    %v1152 = vunpack.c.h.b16 %v434
    %v1153 = vunpack.c.l.b16 %v435
    %v1154 = vunpack.c.h.b16 %v435
    %v1155 = vunpack.c.l.b16 %v436
    %v1156 = vunpack.c.h.b16 %v436
    %v1157 = vunpack.c.l.b16 %v437
    %v1158 = vunpack.c.h.b16 %v437
    %v1159 = vunpack.c.l.b16 %v438
    %v1160 = vunpack.c.h.b16 %v438
    %v1161 = vunpack.c.l.b16 %v439
    %v1162 = vunpack.c.h.b16 %v439
    %v1163 = vunpack.c.l.b16 %v440
    %v1164 = vunpack.c.h.b16 %v440
    %v1165 = vunpack.c.l.b16 %v441
    %v1166 = vunpack.c.h.b16 %v441
    %v1167 = vunpack.c.l.b16 %v442
    %v1168 = vunpack.c.h.b16 %v442
    %v1169 = vunpack.c.l.b16 %v443
    %v1170 = vunpack.c.h.b16 %v443
    %v1171 = vunpack.c.l.b16 %v444
    %v1172 = vunpack.c.h.b16 %v444
    %v1173 = vunpack.c.l.b16 %v445
    %v1174 = vunpack.c.h.b16 %v445
    %v1175 = vunpack.c.l.b16 %v446
    %v1176 = vunpack.c.h.b16 %v446
    %v1177 = vunpack.c.l.b16 %v447
    %v1178 = vunpack.c.h.b16 %v447
    %v1179 = vunpack.c.l.b16 %v448
    %v1180 = vunpack.c.h.b16 %v448
    %v1181 = vunpack.c.l.b16 %v449
    %v1182 = vunpack.c.h.b16 %v449
    %v1183 = vunpack.c.l.b16 %v450
    %v1184 = vunpack.c.h.b16 %v450
    %v1185 = vunpack.c.l.b16 %v451
    %v1186 = vunpack.c.h.b16 %v451
    %v1187 = vunpack.c.l.b16 %v452
    %v1188 = vunpack.c.h.b16 %v452
    %v1189 = vunpack.c.l.b16 %v453
    %v1190 = vunpack.c.h.b16 %v453
    %v1191 = vunpack.c.l.b16 %v454
    %v1192 = vunpack.c.h.b16 %v454
    %v1193 = vunpack.c.l.b16 %v455
    %v1194 = vunpack.c.h.b16 %v455
    %v1195 = vunpack.c.l.b16 %v456
    %v1196 = vunpack.c.h.b16 %v456
    %v1197 = vunpack.c.l.b16 %v457
    %v1198 = vunpack.c.h.b16 %v457
    %v1199 = vunpack.c.l.b16 %v458
    %v1200 = vunpack.c.h.b16 %v458
    %v1201 = vunpack.c.l.b16 %v459
    %v1202 = vunpack.c.h.b16 %v459
    %v1203 = vunpack.c.l.b16 %v460
    %v1204 = vunpack.c.h.b16 %v460
    %v1205 = vunpack.c.l.b16 %v461
    %v1206 = vunpack.c.h.b16 %v461
    %v1207 = vunpack.c.l.b16 %v462
    %v1208 = vunpack.c.h.b16 %v462
    %v1209 = vunpack.c.l.b16 %v463
    %v1210 = vunpack.c.h.b16 %v463
    %v1211 = vunpack.c.l.b16 %v464
    %v1212 = vunpack.c.h.b16 %v464
    %v1213 = vunpack.c.l.b16 %v465
    %v1214 = vunpack.c.h.b16 %v465
    %v1215 = vunpack.c.l.b16 %v466
    %v1216 = vunpack.c.h.b16 %v466
    %v1217 = vunpack.c.l.b16 %v467
    %v1218 = vunpack.c.h.b16 %v467
    %v1219 = vunpack.c.l.b16 %v468
    %v1220 = vunpack.c.h.b16 %v468
    %v1221 = vunpack.c.l.b16 %v469
    %v1222 = vunpack.c.h.b16 %v469
    %v1223 = vunpack.c.l.b16 %v470
    %v1224 = vunpack.c.h.b16 %v470
    %v1225 = vunpack.c.l.b16 %v471
    %v1226 = vunpack.c.h.b16 %v471
    %v1227 = vunpack.c.l.b16 %v472
    %v1228 = vunpack.c.h.b16 %v472
    %v1229 = vunpack.c.l.b16 %v473
    %v1230 = vunpack.c.h.b16 %v473
    %v1231 = vunpack.c.l.b16 %v474
    %v1232 = vunpack.c.h.b16 %v474
    %v1233 = vunpack.c.l.b16 %v475
    %v1234 = vunpack.c.h.b16 %v475
    %v1235 = vunpack.c.l.b16 %v476
    %v1236 = vunpack.c.h.b16 %v476
    %v1237 = vunpack.c.l.b16 %v477
    %v1238 = vunpack.c.h.b16 %v477
    %v1239 = vunpack.c.l.b16 %v478
    %v1240 = vunpack.c.h.b16 %v478
    %v1241 = vunpack.c.l.b16 %v479
    %v1242 = vunpack.c.h.b16 %v479
    %v1243 = vunpack.c.l.b16 %v480
    %v1244 = vunpack.c.h.b16 %v480
    %v1245 = vunpack.c.l.b16 %v481
    %v1246 = vunpack.c.h.b16 %v481
    %v1247 = vunpack.c.l.b16 %v482
    %v1248 = vunpack.c.h.b16 %v482
    %v1249 = vunpack.c.l.b16 %v483
    %v1250 = vunpack.c.h.b16 %v483
    %v1251 = vunpack.c.l.b16 %v484
    %v1252 = vunpack.c.h.b16 %v484
    %v1253 = vunpack.c.l.b16 %v485
    %v1254 = vunpack.c.h.b16 %v485
    %v1255 = vunpack.c.l.b16 %v486
    %v1256 = vunpack.c.h.b16 %v486
    %v1257 = vunpack.c.l.b16 %v487
    %v1258 = vunpack.c.h.b16 %v487
    %v1259 = vunpack.c.l.b16 %v488
    %v1260 = vunpack.c.h.b16 %v488
    %v1261 = vunpack.c.l.b16 %v489
    %v1262 = vunpack.c.h.b16 %v489
    %v1263 = vunpack.c.l.b16 %v490
    %v1264 = vunpack.c.h.b16 %v490
    %v1265 = vunpack.c.l.b16 %v491
    %v1266 = vunpack.c.h.b16 %v491
    %v1267 = vunpack.c.l.b16 %v492
    %v1268 = vunpack.c.h.b16 %v492
    %v1269 = vunpack.c.l.b16 %v493
    %v1270 = vunpack.c.h.b16 %v493
    %v1271 = vunpack.c.l.b16 %v494
    %v1272 = vunpack.c.h.b16 %v494
    %v1273 = vunpack.c.l.b16 %v495
    %v1274 = vunpack.c.h.b16 %v495
    %v1275 = vunpack.c.l.b16 %v496
    %v1276 = vunpack.c.h.b16 %v496
    %v1277 = vunpack.c.l.b16 %v497
    %v1278 = vunpack.c.h.b16 %v497
    %v1279 = vunpack.c.l.b16 %v498
    %v1280 = vunpack.c.h.b16 %v498
    %v1281 = vunpack.c.l.b16 %v499
    %v1282 = vunpack.c.h.b16 %v499
    %v1283 = vunpack.c.l.b16 %v500
    %v1284 = vunpack.c.h.b16 %v500
    %v1285 = vunpack.c.l.b16 %v501
    %v1286 = vunpack.c.h.b16 %v501
    %v1287 = vunpack.c.l.b16 %v502
    %v1288 = vunpack.c.h.b16 %v502
    %v1289 = vunpack.c.l.b16 %v503
    %v1290 = vunpack.c.h.b16 %v503
    %v1291 = vunpack.c.l.b16 %v504
    %v1292 = vunpack.c.h.b16 %v504
    %v1293 = vunpack.c.l.b16 %v505
    %v1294 = vunpack.c.h.b16 %v505
    %v1295 = vunpack.c.l.b16 %v506
    %v1296 = vunpack.c.h.b16 %v506
    %v1297 = vunpack.c.l.b16 %v507
    %v1298 = vunpack.c.h.b16 %v507
    %v1299 = vunpack.c.l.b16 %v508
    %v1300 = vunpack.c.h.b16 %v508
    %v1301 = vunpack.c.l.b16 %v509
    %v1302 = vunpack.c.h.b16 %v509
    %v1303 = vunpack.c.l.b16 %v510
    %v1304 = vunpack.c.h.b16 %v510
    %v1305 = vunpack.c.l.b16 %v511
    %v1306 = vunpack.c.h.b16 %v511
    %v1307 = vunpack.c.l.b16 %v512
    %v1308 = vunpack.c.h.b16 %v512
    %v1309 = vunpack.c.l.b16 %v513
    %v1310 = vunpack.c.h.b16 %v513
    %v1311 = vunpack.c.l.b16 %v514
    %v1312 = vunpack.c.h.b16 %v514
    %v1313 = vunpack.c.l.b16 %v515
    %v1314 = vunpack.c.h.b16 %v515
    %v1315 = vunpack.c.l.b16 %v516
    %v1316 = vunpack.c.h.b16 %v516
    %v1317 = vunpack.c.l.b16 %v517
    %v1318 = vunpack.c.h.b16 %v517
    %v1319 = vunpack.c.l.b16 %v518
    %v1320 = vunpack.c.h.b16 %v518
    %v1321 = vunpack.c.l.b16 %v519
    %v1322 = vunpack.c.h.b16 %v519
    %v1323 = vunpack.c.l.b16 %v520
    %v1324 = vunpack.c.h.b16 %v520
    %v1325 = vunpack.c.l.b16 %v521
    %v1326 = vunpack.c.h.b16 %v521
    %v1327 = vunpack.c.l.b16 %v522
    %v1328 = vunpack.c.h.b16 %v522
    %v1329 = vunpack.c.l.b16 %v523
    %v1330 = vunpack.c.h.b16 %v523
    %v1331 = vunpack.c.l.b16 %v524
    %v1332 = vunpack.c.h.b16 %v524
    %v1333 = vunpack.c.l.b16 %v525
    %v1334 = vunpack.c.h.b16 %v525
    %v1335 = vunpack.c.l.b16 %v526
    %v1336 = vunpack.c.h.b16 %v526
    %v1337 = vunpack.c.l.b16 %v527
    %v1338 = vunpack.c.h.b16 %v527
    %v1339 = vunpack.c.l.b16 %v528
    %v1340 = vunpack.c.h.b16 %v528
    %v1341 = vunpack.c.l.b16 %v529
    %v1342 = vunpack.c.h.b16 %v529
    %v1343 = vunpack.c.l.b16 %v530
    %v1344 = vunpack.c.h.b16 %v530
    %v1345 = vunpack.c.l.b16 %v531
    %v1346 = vunpack.c.h.b16 %v531
    %v1347 = vunpack.c.l.b16 %v532
    %v1348 = vunpack.c.h.b16 %v532
    %v1349 = vunpack.c.l.b16 %v533
    %v1350 = vunpack.c.h.b16 %v533
    %v1351 = vunpack.c.l.b16 %v534
    %v1352 = vunpack.c.h.b16 %v534
    %v1353 = vpack.c.b16 %v845, %v841
    %v1354 = vpack.c.b16 %v846, %v842
    %v1355 = vpack.c.b16 %v847, %v843
    %v1356 = vpack.c.b16 %v848, %v844
    %v1357 = vpack.c.b16 %v853, %v849
    %v1358 = vpack.c.b16 %v854, %v850
    %v1359 = vpack.c.b16 %v855, %v851
    %v1360 = vpack.c.b16 %v856, %v852
    %v1361 = vpack.c.b16 %v861, %v857
    %v1362 = vpack.c.b16 %v862, %v858
    %v1363 = vpack.c.b16 %v863, %v859
    %v1364 = vpack.c.b16 %v864, %v860
    %v1365 = vpack.c.b16 %v869, %v865
    %v1366 = vpack.c.b16 %v870, %v866
    %v1367 = vpack.c.b16 %v871, %v867
    %v1368 = vpack.c.b16 %v872, %v868
    %v1369 = vpack.c.b16 %v877, %v873
    %v1370 = vpack.c.b16 %v878, %v874
    %v1371 = vpack.c.b16 %v879, %v875
    %v1372 = vpack.c.b16 %v880, %v876
    %v1373 = vpack.c.b16 %v885, %v881
    %v1374 = vpack.c.b16 %v886, %v882
    %v1375 = vpack.c.b16 %v887, %v883
    %v1376 = vpack.c.b16 %v888, %v884
    %v1377 = vpack.c.b16 %v893, %v889
    %v1378 = vpack.c.b16 %v894, %v890
    %v1379 = vpack.c.b16 %v895, %v891
    %v1380 = vpack.c.b16 %v896, %v892
    %v1381 = vpack.c.b16 %v901, %v897
    %v1382 = vpack.c.b16 %v902, %v898
    %v1383 = vpack.c.b16 %v903, %v899
    %v1384 = vpack.c.b16 %v904, %v900
    %v1385 = vpack.c.b16 %v909, %v905
    %v1386 = vpack.c.b16 %v910, %v906
    %v1387 = vpack.c.b16 %v911, %v907
    %v1388 = vpack.c.b16 %v912, %v908
    %v1389 = vpack.c.b16 %v917, %v913
    %v1390 = vpack.c.b16 %v918, %v914
    %v1391 = vpack.c.b16 %v919, %v915
    %v1392 = vpack.c.b16 %v920, %v916
    %v1393 = vpack.c.b16 %v925, %v921
    %v1394 = vpack.c.b16 %v926, %v922
    %v1395 = vpack.c.b16 %v927, %v923
    %v1396 = vpack.c.b16 %v928, %v924
    %v1397 = vpack.c.b16 %v933, %v929
    %v1398 = vpack.c.b16 %v934, %v930
    %v1399 = vpack.c.b16 %v935, %v931
    %v1400 = vpack.c.b16 %v936, %v932
    %v1401 = vpack.c.b16 %v941, %v937
    %v1402 = vpack.c.b16 %v942, %v938
    %v1403 = vpack.c.b16 %v943, %v939
    %v1404 = vpack.c.b16 %v944, %v940
    %v1405 = vpack.c.b16 %v949, %v945
    %v1406 = vpack.c.b16 %v950, %v946
    %v1407 = vpack.c.b16 %v951, %v947
    %v1408 = vpack.c.b16 %v952, %v948
    %v1409 = vpack.c.b16 %v957, %v953
    %v1410 = vpack.c.b16 %v958, %v954
    %v1411 = vpack.c.b16 %v959, %v955
    %v1412 = vpack.c.b16 %v960, %v956
    %v1413 = vpack.c.b16 %v965, %v961
    %v1414 = vpack.c.b16 %v966, %v962
    %v1415 = vpack.c.b16 %v967, %v963
    %v1416 = vpack.c.b16 %v968, %v964
    %v1417 = vpack.c.b16 %v973, %v969
    %v1418 = vpack.c.b16 %v974, %v970
    %v1419 = vpack.c.b16 %v975, %v971
    %v1420 = vpack.c.b16 %v976, %v972
    %v1421 = vpack.c.b16 %v981, %v977
    %v1422 = vpack.c.b16 %v982, %v978
    %v1423 = vpack.c.b16 %v983, %v979
    %v1424 = vpack.c.b16 %v984, %v980
    %v1425 = vpack.c.b16 %v989, %v985
    %v1426 = vpack.c.b16 %v990, %v986
    %v1427 = vpack.c.b16 %v991, %v987
    %v1428 = vpack.c.b16 %v992, %v988
    %v1429 = vpack.c.b16 %v997, %v993
    %v1430 = vpack.c.b16 %v998, %v994
    %v1431 = vpack.c.b16 %v999, %v995
    %v1432 = vpack.c.b16 %v1000, %v996
    %v1433 = vpack.c.b16 %v1005, %v1001
    %v1434 = vpack.c.b16 %v1006, %v1002
    %v1435 = vpack.c.b16 %v1007, %v1003
    %v1436 = vpack.c.b16 %v1008, %v1004
    %v1437 = vpack.c.b16 %v1013, %v1009
    %v1438 = vpack.c.b16 %v1014, %v1010
    %v1439 = vpack.c.b16 %v1015, %v1011
    %v1440 = vpack.c.b16 %v1016, %v1012
    %v1441 = vpack.c.b16 %v1021, %v1017
    %v1442 = vpack.c.b16 %v1022, %v1018
    %v1443 = vpack.c.b16 %v1023, %v1019
    %v1444 = vpack.c.b16 %v1024, %v1020
    %v1445 = vpack.c.b16 %v1029, %v1025
    %v1446 = vpack.c.b16 %v1030, %v1026
    %v1447 = vpack.c.b16 %v1031, %v1027
    %v1448 = vpack.c.b16 %v1032, %v1028
    %v1449 = vpack.c.b16 %v1037, %v1033
    %v1450 = vpack.c.b16 %v1038, %v1034
    %v1451 = vpack.c.b16 %v1039, %v1035
    %v1452 = vpack.c.b16 %v1040, %v1036
    %v1453 = vpack.c.b16 %v1045, %v1041
    %v1454 = vpack.c.b16 %v1046, %v1042
    %v1455 = vpack.c.b16 %v1047, %v1043
    %v1456 = vpack.c.b16 %v1048, %v1044
    %v1457 = vpack.c.b16 %v1053, %v1049
    %v1458 = vpack.c.b16 %v1054, %v1050
    %v1459 = vpack.c.b16 %v1055, %v1051
    %v1460 = vpack.c.b16 %v1056, %v1052
    %v1461 = vpack.c.b16 %v1061, %v1057
    %v1462 = vpack.c.b16 %v1062, %v1058
    %v1463 = vpack.c.b16 %v1063, %v1059
    %v1464 = vpack.c.b16 %v1064, %v1060
    %v1465 = vpack.c.b16 %v1069, %v1065
    %v1466 = vpack.c.b16 %v1070, %v1066
    %v1467 = vpack.c.b16 %v1071, %v1067
    %v1468 = vpack.c.b16 %v1072, %v1068
    %v1469 = vpack.c.b16 %v1077, %v1073
    %v1470 = vpack.c.b16 %v1078, %v1074
    %v1471 = vpack.c.b16 %v1079, %v1075
    %v1472 = vpack.c.b16 %v1080, %v1076
    %v1473 = vpack.c.b16 %v1085, %v1081
    %v1474 = vpack.c.b16 %v1086, %v1082
    %v1475 = vpack.c.b16 %v1087, %v1083
    %v1476 = vpack.c.b16 %v1088, %v1084
    %v1477 = vpack.c.b16 %v1093, %v1089
    %v1478 = vpack.c.b16 %v1094, %v1090
    %v1479 = vpack.c.b16 %v1095, %v1091
    %v1480 = vpack.c.b16 %v1096, %v1092
    %v1481 = vpack.c.b16 %v1101, %v1097
    %v1482 = vpack.c.b16 %v1102, %v1098
    %v1483 = vpack.c.b16 %v1103, %v1099
    %v1484 = vpack.c.b16 %v1104, %v1100
    %v1485 = vpack.c.b16 %v1109, %v1105
    %v1486 = vpack.c.b16 %v1110, %v1106
    %v1487 = vpack.c.b16 %v1111, %v1107
    %v1488 = vpack.c.b16 %v1112, %v1108
    %v1489 = vpack.c.b16 %v1117, %v1113
    %v1490 = vpack.c.b16 %v1118, %v1114
    %v1491 = vpack.c.b16 %v1119, %v1115
    %v1492 = vpack.c.b16 %v1120, %v1116
    %v1493 = vpack.c.b16 %v1125, %v1121
    %v1494 = vpack.c.b16 %v1126, %v1122
    %v1495 = vpack.c.b16 %v1127, %v1123
    %v1496 = vpack.c.b16 %v1128, %v1124
    %v1497 = vpack.c.b16 %v1133, %v1129
    %v1498 = vpack.c.b16 %v1134, %v1130
    %v1499 = vpack.c.b16 %v1135, %v1131
    %v1500 = vpack.c.b16 %v1136, %v1132
    %v1501 = vpack.c.b16 %v1141, %v1137
    %v1502 = vpack.c.b16 %v1142, %v1138
    %v1503 = vpack.c.b16 %v1143, %v1139
    %v1504 = vpack.c.b16 %v1144, %v1140
    %v1505 = vpack.c.b16 %v1149, %v1145
    %v1506 = vpack.c.b16 %v1150, %v1146
    %v1507 = vpack.c.b16 %v1151, %v1147
    %v1508 = vpack.c.b16 %v1152, %v1148
    %v1509 = vpack.c.b16 %v1157, %v1153
    %v1510 = vpack.c.b16 %v1158, %v1154
    %v1511 = vpack.c.b16 %v1159, %v1155
    %v1512 = vpack.c.b16 %v1160, %v1156
    %v1513 = vpack.c.b16 %v1165, %v1161
    %v1514 = vpack.c.b16 %v1166, %v1162
    %v1515 = vpack.c.b16 %v1167, %v1163
    %v1516 = vpack.c.b16 %v1168, %v1164
    %v1517 = vpack.c.b16 %v1173, %v1169
    %v1518 = vpack.c.b16 %v1174, %v1170
    %v1519 = vpack.c.b16 %v1175, %v1171
    %v1520 = vpack.c.b16 %v1176, %v1172
    %v1521 = vpack.c.b16 %v1181, %v1177
    %v1522 = vpack.c.b16 %v1182, %v1178
    %v1523 = vpack.c.b16 %v1183, %v1179
    %v1524 = vpack.c.b16 %v1184, %v1180
    %v1525 = vpack.c.b16 %v1189, %v1185
    %v1526 = vpack.c.b16 %v1190, %v1186
    %v1527 = vpack.c.b16 %v1191, %v1187
    %v1528 = vpack.c.b16 %v1192, %v1188
    %v1529 = vpack.c.b16 %v1197, %v1193
    %v1530 = vpack.c.b16 %v1198, %v1194
    %v1531 = vpack.c.b16 %v1199, %v1195
    %v1532 = vpack.c.b16 %v1200, %v1196
    %v1533 = vpack.c.b16 %v1205, %v1201
    %v1534 = vpack.c.b16 %v1206, %v1202
    %v1535 = vpack.c.b16 %v1207, %v1203
    %v1536 = vpack.c.b16 %v1208, %v1204
    %v1537 = vpack.c.b16 %v1213, %v1209
    %v1538 = vpack.c.b16 %v1214, %v1210
    %v1539 = vpack.c.b16 %v1215, %v1211
    %v1540 = vpack.c.b16 %v1216, %v1212
    %v1541 = vpack.c.b16 %v1221, %v1217
    %v1542 = vpack.c.b16 %v1222, %v1218
    %v1543 = vpack.c.b16 %v1223, %v1219
    %v1544 = vpack.c.b16 %v1224, %v1220
    %v1545 = vpack.c.b16 %v1229, %v1225
    %v1546 = vpack.c.b16 %v1230, %v1226
    %v1547 = vpack.c.b16 %v1231, %v1227
    %v1548 = vpack.c.b16 %v1232, %v1228
    %v1549 = vpack.c.b16 %v1237, %v1233
    %v1550 = vpack.c.b16 %v1238, %v1234
    %v1551 = vpack.c.b16 %v1239, %v1235
    %v1552 = vpack.c.b16 %v1240, %v1236
    %v1553 = vpack.c.b16 %v1245, %v1241
    %v1554 = vpack.c.b16 %v1246, %v1242
    %v1555 = vpack.c.b16 %v1247, %v1243
    %v1556 = vpack.c.b16 %v1248, %v1244
    %v1557 = vpack.c.b16 %v1253, %v1249
    %v1558 = vpack.c.b16 %v1254, %v1250
    %v1559 = vpack.c.b16 %v1255, %v1251
    %v1560 = vpack.c.b16 %v1256, %v1252
    %v1561 = vpack.c.b16 %v1261, %v1257
    %v1562 = vpack.c.b16 %v1262, %v1258
    %v1563 = vpack.c.b16 %v1263, %v1259
    %v1564 = vpack.c.b16 %v1264, %v1260
    %v1565 = vpack.c.b16 %v1269, %v1265
    %v1566 = vpack.c.b16 %v1270, %v1266
    %v1567 = vpack.c.b16 %v1271, %v1267
    %v1568 = vpack.c.b16 %v1272, %v1268
    %v1569 = vpack.c.b16 %v1277, %v1273
    %v1570 = vpack.c.b16 %v1278, %v1274
    %v1571 = vpack.c.b16 %v1279, %v1275
    %v1572 = vpack.c.b16 %v1280, %v1276
    %v1573 = vpack.c.b16 %v1285, %v1281
    %v1574 = vpack.c.b16 %v1286, %v1282
    %v1575 = vpack.c.b16 %v1287, %v1283
    %v1576 = vpack.c.b16 %v1288, %v1284
    %v1577 = vpack.c.b16 %v1293, %v1289
    %v1578 = vpack.c.b16 %v1294, %v1290
    %v1579 = vpack.c.b16 %v1295, %v1291
    %v1580 = vpack.c.b16 %v1296, %v1292
    %v1581 = vpack.c.b16 %v1301, %v1297
    %v1582 = vpack.c.b16 %v1302, %v1298
    %v1583 = vpack.c.b16 %v1303, %v1299
    %v1584 = vpack.c.b16 %v1304, %v1300
    %v1585 = vpack.c.b16 %v1309, %v1305
    %v1586 = vpack.c.b16 %v1310, %v1306
    %v1587 = vpack.c.b16 %v1311, %v1307
    %v1588 = vpack.c.b16 %v1312, %v1308
    %v1589 = vpack.c.b16 %v1317, %v1313
    %v1590 = vpack.c.b16 %v1318, %v1314
    %v1591 = vpack.c.b16 %v1319, %v1315
    %v1592 = vpack.c.b16 %v1320, %v1316
    %v1593 = vpack.c.b16 %v1325, %v1321
    %v1594 = vpack.c.b16 %v1326, %v1322
    %v1595 = vpack.c.b16 %v1327, %v1323
    %v1596 = vpack.c.b16 %v1328, %v1324
    %v1597 = vpack.c.b16 %v1333, %v1329
    %v1598 = vpack.c.b16 %v1334, %v1330
    %v1599 = vpack.c.b16 %v1335, %v1331
    %v1600 = vpack.c.b16 %v1336, %v1332
    %v1601 = vpack.c.b16 %v1341, %v1337
    %v1602 = vpack.c.b16 %v1342, %v1338
    %v1603 = vpack.c.b16 %v1343, %v1339
    %v1604 = vpack.c.b16 %v1344, %v1340
    %v1605 = vpack.c.b16 %v1349, %v1345
    %v1606 = vpack.c.b16 %v1350, %v1346
    %v1607 = vpack.c.b16 %v1351, %v1347
    %v1608 = vpack.c.b16 %v1352, %v1348
    %1865 = vmatprep.subr.bf16.mxu0 %v1354
    %1866 = vmatpush1.bf16.msra.mxu0 %v1353
    %1867 = vmatprep.subr.bf16.mxu0 %v1358
    %1868 = vmatpush1.bf16.msra.mxu0 %v1357
    %1869 = vmatprep.subr.bf16.mxu0 %v1362
    %1870 = vmatpush1.bf16.msra.mxu0 %v1361
    %1871 = vmatprep.subr.bf16.mxu0 %v1366
    %1872 = vmatpush1.bf16.msra.mxu0 %v1365
    %1873 = vmatprep.subr.bf16.mxu0 %v1370
    %1874 = vmatpush1.bf16.msra.mxu0 %v1369
    %1875 = vmatprep.subr.bf16.mxu0 %v1374
    %1876 = vmatpush1.bf16.msra.mxu0 %v1373
    %1877 = vmatprep.subr.bf16.mxu0 %v1378
    %1878 = vmatpush1.bf16.msra.mxu0 %v1377
    %1879 = vmatprep.subr.bf16.mxu0 %v1382
    %1880 = vmatpush1.bf16.msra.mxu0 %v1381
    %1881 = vmatprep.subr.bf16.mxu0 %v1386
    %1882 = vmatpush1.bf16.msra.mxu0 %v1385
    %1883 = vmatprep.subr.bf16.mxu0 %v1390
    %1884 = vmatpush1.bf16.msra.mxu0 %v1389
    %1885 = vmatprep.subr.bf16.mxu0 %v1394
    %1886 = vmatpush1.bf16.msra.mxu0 %v1393
    %1887 = vmatprep.subr.bf16.mxu0 %v1398
    %1888 = vmatpush1.bf16.msra.mxu0 %v1397
    %1889 = vmatprep.subr.bf16.mxu0 %v1402
    %1890 = vmatpush1.bf16.msra.mxu0 %v1401
    %1891 = vmatprep.subr.bf16.mxu0 %v1406
    %1892 = vmatpush1.bf16.msra.mxu0 %v1405
    %1893 = vmatprep.subr.bf16.mxu0 %v1410
    %1894 = vmatpush1.bf16.msra.mxu0 %v1409
    %1895 = vmatprep.subr.bf16.mxu0 %v1414
    %1896 = vmatpush1.bf16.msra.mxu0 %v1413
    %1897 = vmatprep.mubr.bf16.mxu0 %v570
    %1898 = vmatmul.mubr.bf16.gmra.mrb[0].mxu0 %v569
    %v1899 = vpop.f32.mrb[0].mxu0
    %v1900 = vadd.f32 %v540, %v1899
    %v1901 = vpop.f32.mrb[0].mxu0
    %v1902 = vadd.f32 %v544, %v1901
    %v1903 = vpop.f32.mrb[0].mxu0
    %v1904 = vpop.f32.mrb[0].mxu0
    %1905 = vdwg.mxu0
    %1906 = vmatprep.subr.bf16.mxu0 %v1418
    %1907 = vmatpush1.bf16.msra.mxu0 %v1417
    %1908 = vmatprep.subr.bf16.mxu0 %v1422
    %1909 = vmatpush1.bf16.msra.mxu0 %v1421
    %1910 = vmatprep.subr.bf16.mxu0 %v1426
    %1911 = vmatpush1.bf16.msra.mxu0 %v1425
    %1912 = vmatprep.subr.bf16.mxu0 %v1430
    %1913 = vmatpush1.bf16.msra.mxu0 %v1429
    %1914 = vmatprep.subr.bf16.mxu0 %v1434
    %1915 = vmatpush1.bf16.msra.mxu0 %v1433
    %1916 = vmatprep.subr.bf16.mxu0 %v1438
    %1917 = vmatpush1.bf16.msra.mxu0 %v1437
    %1918 = vmatprep.subr.bf16.mxu0 %v1442
    %1919 = vmatpush1.bf16.msra.mxu0 %v1441
    %1920 = vmatprep.subr.bf16.mxu0 %v1446
    %1921 = vmatpush1.bf16.msra.mxu0 %v1445
    %1922 = vmatprep.subr.bf16.mxu0 %v1450
    %1923 = vmatpush1.bf16.msra.mxu0 %v1449
    %1924 = vmatprep.subr.bf16.mxu0 %v1454
    %1925 = vmatpush1.bf16.msra.mxu0 %v1453
    %1926 = vmatprep.subr.bf16.mxu0 %v1458
    %1927 = vmatpush1.bf16.msra.mxu0 %v1457
    %1928 = vmatprep.subr.bf16.mxu0 %v1462
    %1929 = vmatpush1.bf16.msra.mxu0 %v1461
    %1930 = vmatprep.subr.bf16.mxu0 %v1466
    %1931 = vmatpush1.bf16.msra.mxu0 %v1465
    %1932 = vmatprep.subr.bf16.mxu0 %v1470
    %1933 = vmatpush1.bf16.msra.mxu0 %v1469
    %1934 = vmatprep.subr.bf16.mxu0 %v1474
    %1935 = vmatpush1.bf16.msra.mxu0 %v1473
    %1936 = vmatprep.subr.bf16.mxu0 %v1478
    %1937 = vmatpush1.bf16.msra.mxu0 %v1477
    %1938 = vmatprep.mubr.bf16.mxu0 %v572
    %1939 = vmatmul.mubr.bf16.gmra.mrb[0].mxu0 %v571
    %v1940 = vpop.f32.mrb[0].mxu0
    %v1941 = vadd.f32 %v1900, %v1940
    %v1942 = vpop.f32.mrb[0].mxu0
    %v1943 = vadd.f32 %v1902, %v1942
    %v1944 = vpop.f32.mrb[0].mxu0
    %v1945 = vpop.f32.mrb[0].mxu0
    %1946 = vdwg.mxu0
    %1947 = vmatprep.subr.bf16.mxu0 %v1482
    %1948 = vmatpush1.bf16.msra.mxu0 %v1481
    %1949 = vmatprep.subr.bf16.mxu0 %v1486
    %1950 = vmatpush1.bf16.msra.mxu0 %v1485
    %1951 = vmatprep.subr.bf16.mxu0 %v1490
    %1952 = vmatpush1.bf16.msra.mxu0 %v1489
    %1953 = vmatprep.subr.bf16.mxu0 %v1494
    %1954 = vmatpush1.bf16.msra.mxu0 %v1493
    %1955 = vmatprep.subr.bf16.mxu0 %v1498
    %1956 = vmatpush1.bf16.msra.mxu0 %v1497
    %1957 = vmatprep.subr.bf16.mxu0 %v1502
    %1958 = vmatpush1.bf16.msra.mxu0 %v1501
    %1959 = vmatprep.subr.bf16.mxu0 %v1506
    %1960 = vmatpush1.bf16.msra.mxu0 %v1505
    %1961 = vmatprep.subr.bf16.mxu0 %v1510
    %1962 = vmatpush1.bf16.msra.mxu0 %v1509
    %1963 = vmatprep.subr.bf16.mxu0 %v1514
    %1964 = vmatpush1.bf16.msra.mxu0 %v1513
    %1965 = vmatprep.subr.bf16.mxu0 %v1518
    %1966 = vmatpush1.bf16.msra.mxu0 %v1517
    %1967 = vmatprep.subr.bf16.mxu0 %v1522
    %1968 = vmatpush1.bf16.msra.mxu0 %v1521
    %1969 = vmatprep.subr.bf16.mxu0 %v1526
    %1970 = vmatpush1.bf16.msra.mxu0 %v1525
    %1971 = vmatprep.subr.bf16.mxu0 %v1530
    %1972 = vmatpush1.bf16.msra.mxu0 %v1529
    %1973 = vmatprep.subr.bf16.mxu0 %v1534
    %1974 = vmatpush1.bf16.msra.mxu0 %v1533
    %1975 = vmatprep.subr.bf16.mxu0 %v1538
    %1976 = vmatpush1.bf16.msra.mxu0 %v1537
    %1977 = vmatprep.subr.bf16.mxu0 %v1542
    %1978 = vmatpush1.bf16.msra.mxu0 %v1541
    %1979 = vmatprep.mubr.bf16.mxu0 %v574
    %1980 = vmatmul.mubr.bf16.gmra.mrb[0].mxu0 %v573
    %v1981 = vpop.f32.mrb[0].mxu0
    %v1982 = vadd.f32 %v1941, %v1981
    %v1983 = vpop.f32.mrb[0].mxu0
    %v1984 = vadd.f32 %v1943, %v1983
    %v1985 = vpop.f32.mrb[0].mxu0
    %v1986 = vpop.f32.mrb[0].mxu0
    %1987 = vdwg.mxu0
    %1988 = vmatprep.subr.bf16.mxu0 %v1546
    %1989 = vmatpush1.bf16.msra.mxu0 %v1545
    %1990 = vmatprep.subr.bf16.mxu0 %v1550
    %1991 = vmatpush1.bf16.msra.mxu0 %v1549
    %1992 = vmatprep.subr.bf16.mxu0 %v1554
    %1993 = vmatpush1.bf16.msra.mxu0 %v1553
    %1994 = vmatprep.subr.bf16.mxu0 %v1558
    %1995 = vmatpush1.bf16.msra.mxu0 %v1557
    %1996 = vmatprep.subr.bf16.mxu0 %v1562
    %1997 = vmatpush1.bf16.msra.mxu0 %v1561
    %1998 = vmatprep.subr.bf16.mxu0 %v1566
    %1999 = vmatpush1.bf16.msra.mxu0 %v1565
    %2000 = vmatprep.subr.bf16.mxu0 %v1570
    %2001 = vmatpush1.bf16.msra.mxu0 %v1569
    %2002 = vmatprep.subr.bf16.mxu0 %v1574
    %2003 = vmatpush1.bf16.msra.mxu0 %v1573
    %2004 = vmatprep.subr.bf16.mxu0 %v1578
    %2005 = vmatpush1.bf16.msra.mxu0 %v1577
    %2006 = vmatprep.subr.bf16.mxu0 %v1582
    %2007 = vmatpush1.bf16.msra.mxu0 %v1581
    %2008 = vmatprep.subr.bf16.mxu0 %v1586
    %2009 = vmatpush1.bf16.msra.mxu0 %v1585
    %2010 = vmatprep.subr.bf16.mxu0 %v1590
    %2011 = vmatpush1.bf16.msra.mxu0 %v1589
    %2012 = vmatprep.subr.bf16.mxu0 %v1594
    %2013 = vmatpush1.bf16.msra.mxu0 %v1593
    %2014 = vmatprep.subr.bf16.mxu0 %v1598
    %2015 = vmatpush1.bf16.msra.mxu0 %v1597
    %2016 = vmatprep.subr.bf16.mxu0 %v1602
    %2017 = vmatpush1.bf16.msra.mxu0 %v1601
    %2018 = vmatprep.subr.bf16.mxu0 %v1606
    %2019 = vmatpush1.bf16.msra.mxu0 %v1605
    %2020 = vmatprep.mubr.bf16.mxu0 %v576
    %2021 = vmatmul.mubr.bf16.gmra.mrb[0].mxu0 %v575
    %v2022 = vpop.f32.mrb[0].mxu0
    %v2023 = vadd.f32 %v1982, %v2022
    %v2024 = vpop.f32.mrb[0].mxu0
    %v2025 = vadd.f32 %v1984, %v2024
    %v2026 = vpop.f32.mrb[0].mxu0
    %v2027 = vpop.f32.mrb[0].mxu0
    %2028 = vdwg.mxu0
    %2029 = vmatprep.subr.bf16.mxu0 %v1356
    %2030 = vmatpush1.bf16.msra.mxu0 %v1355
    %2031 = vmatprep.subr.bf16.mxu0 %v1360
    %2032 = vmatpush1.bf16.msra.mxu0 %v1359
    %2033 = vmatprep.subr.bf16.mxu0 %v1364
    %2034 = vmatpush1.bf16.msra.mxu0 %v1363
    %2035 = vmatprep.subr.bf16.mxu0 %v1368
    %2036 = vmatpush1.bf16.msra.mxu0 %v1367
    %2037 = vmatprep.subr.bf16.mxu0 %v1372
    %2038 = vmatpush1.bf16.msra.mxu0 %v1371
    %2039 = vmatprep.subr.bf16.mxu0 %v1376
    %2040 = vmatpush1.bf16.msra.mxu0 %v1375
    %2041 = vmatprep.subr.bf16.mxu0 %v1380
    %2042 = vmatpush1.bf16.msra.mxu0 %v1379
    %2043 = vmatprep.subr.bf16.mxu0 %v1384
    %2044 = vmatpush1.bf16.msra.mxu0 %v1383
    %2045 = vmatprep.subr.bf16.mxu0 %v1388
    %2046 = vmatpush1.bf16.msra.mxu0 %v1387
    %2047 = vmatprep.subr.bf16.mxu0 %v1392
    %2048 = vmatpush1.bf16.msra.mxu0 %v1391
    %2049 = vmatprep.subr.bf16.mxu0 %v1396
    %2050 = vmatpush1.bf16.msra.mxu0 %v1395
    %2051 = vmatprep.subr.bf16.mxu0 %v1400
    %2052 = vmatpush1.bf16.msra.mxu0 %v1399
    %2053 = vmatprep.subr.bf16.mxu0 %v1404
    %2054 = vmatpush1.bf16.msra.mxu0 %v1403
    %2055 = vmatprep.subr.bf16.mxu0 %v1408
    %2056 = vmatpush1.bf16.msra.mxu0 %v1407
    %2057 = vmatprep.subr.bf16.mxu0 %v1412
    %2058 = vmatpush1.bf16.msra.mxu0 %v1411
    %2059 = vmatprep.subr.bf16.mxu0 %v1416
    %2060 = vmatpush1.bf16.msra.mxu0 %v1415
    %2061 = vmatprep.mubr.bf16.mxu0 %v570
    %2062 = vmatmul.mubr.bf16.gmra.mrb[0].mxu0 %v569
    %v2063 = vpop.f32.mrb[0].mxu0
    %v2064 = vadd.f32 %v548, %v2063
    %v2065 = vpop.f32.mrb[0].mxu0
    %v2066 = vadd.f32 %v552, %v2065
    %v2067 = vpop.f32.mrb[0].mxu0
    %v2068 = vpop.f32.mrb[0].mxu0
    %2069 = vdwg.mxu0
    %2070 = vmatprep.subr.bf16.mxu0 %v1420
    %2071 = vmatpush1.bf16.msra.mxu0 %v1419
    %2072 = vmatprep.subr.bf16.mxu0 %v1424
    %2073 = vmatpush1.bf16.msra.mxu0 %v1423
    %2074 = vmatprep.subr.bf16.mxu0 %v1428
    %2075 = vmatpush1.bf16.msra.mxu0 %v1427
    %2076 = vmatprep.subr.bf16.mxu0 %v1432
    %2077 = vmatpush1.bf16.msra.mxu0 %v1431
    %2078 = vmatprep.subr.bf16.mxu0 %v1436
    %2079 = vmatpush1.bf16.msra.mxu0 %v1435
    %2080 = vmatprep.subr.bf16.mxu0 %v1440
    %2081 = vmatpush1.bf16.msra.mxu0 %v1439
    %2082 = vmatprep.subr.bf16.mxu0 %v1444
    %2083 = vmatpush1.bf16.msra.mxu0 %v1443
    %2084 = vmatprep.subr.bf16.mxu0 %v1448
    %2085 = vmatpush1.bf16.msra.mxu0 %v1447
    %2086 = vmatprep.subr.bf16.mxu0 %v1452
    %2087 = vmatpush1.bf16.msra.mxu0 %v1451
    %2088 = vmatprep.subr.bf16.mxu0 %v1456
    %2089 = vmatpush1.bf16.msra.mxu0 %v1455
    %2090 = vmatprep.subr.bf16.mxu0 %v1460
    %2091 = vmatpush1.bf16.msra.mxu0 %v1459
    %2092 = vmatprep.subr.bf16.mxu0 %v1464
    %2093 = vmatpush1.bf16.msra.mxu0 %v1463
    %2094 = vmatprep.subr.bf16.mxu0 %v1468
    %2095 = vmatpush1.bf16.msra.mxu0 %v1467
    %2096 = vmatprep.subr.bf16.mxu0 %v1472
    %2097 = vmatpush1.bf16.msra.mxu0 %v1471
    %2098 = vmatprep.subr.bf16.mxu0 %v1476
    %2099 = vmatpush1.bf16.msra.mxu0 %v1475
    %2100 = vmatprep.subr.bf16.mxu0 %v1480
    %2101 = vmatpush1.bf16.msra.mxu0 %v1479
    %2102 = vmatprep.mubr.bf16.mxu0 %v572
    %2103 = vmatmul.mubr.bf16.gmra.mrb[0].mxu0 %v571
    %v2104 = vpop.f32.mrb[0].mxu0
    %v2105 = vadd.f32 %v2064, %v2104
    %v2106 = vpop.f32.mrb[0].mxu0
    %v2107 = vadd.f32 %v2066, %v2106
    %v2108 = vpop.f32.mrb[0].mxu0
    %v2109 = vpop.f32.mrb[0].mxu0
    %2110 = vdwg.mxu0
    %2111 = vmatprep.subr.bf16.mxu0 %v1484
    %2112 = vmatpush1.bf16.msra.mxu0 %v1483
    %2113 = vmatprep.subr.bf16.mxu0 %v1488
    %2114 = vmatpush1.bf16.msra.mxu0 %v1487
    %2115 = vmatprep.subr.bf16.mxu0 %v1492
    %2116 = vmatpush1.bf16.msra.mxu0 %v1491
    %2117 = vmatprep.subr.bf16.mxu0 %v1496
    %2118 = vmatpush1.bf16.msra.mxu0 %v1495
    %2119 = vmatprep.subr.bf16.mxu0 %v1500
    %2120 = vmatpush1.bf16.msra.mxu0 %v1499
    %2121 = vmatprep.subr.bf16.mxu0 %v1504
    %2122 = vmatpush1.bf16.msra.mxu0 %v1503
    %2123 = vmatprep.subr.bf16.mxu0 %v1508
    %2124 = vmatpush1.bf16.msra.mxu0 %v1507
    %2125 = vmatprep.subr.bf16.mxu0 %v1512
    %2126 = vmatpush1.bf16.msra.mxu0 %v1511
    %2127 = vmatprep.subr.bf16.mxu0 %v1516
    %2128 = vmatpush1.bf16.msra.mxu0 %v1515
    %2129 = vmatprep.subr.bf16.mxu0 %v1520
    %2130 = vmatpush1.bf16.msra.mxu0 %v1519
    %2131 = vmatprep.subr.bf16.mxu0 %v1524
    %2132 = vmatpush1.bf16.msra.mxu0 %v1523
    %2133 = vmatprep.subr.bf16.mxu0 %v1528
    %2134 = vmatpush1.bf16.msra.mxu0 %v1527
    %2135 = vmatprep.subr.bf16.mxu0 %v1532
    %2136 = vmatpush1.bf16.msra.mxu0 %v1531
    %2137 = vmatprep.subr.bf16.mxu0 %v1536
    %2138 = vmatpush1.bf16.msra.mxu0 %v1535
    %2139 = vmatprep.subr.bf16.mxu0 %v1540
    %2140 = vmatpush1.bf16.msra.mxu0 %v1539
    %2141 = vmatprep.subr.bf16.mxu0 %v1544
    %2142 = vmatpush1.bf16.msra.mxu0 %v1543
    %2143 = vmatprep.mubr.bf16.mxu0 %v574
    %2144 = vmatmul.mubr.bf16.gmra.mrb[0].mxu0 %v573
    %v2145 = vpop.f32.mrb[0].mxu0
    %v2146 = vadd.f32 %v2105, %v2145
    %v2147 = vpop.f32.mrb[0].mxu0
    %v2148 = vadd.f32 %v2107, %v2147
    %v2149 = vpop.f32.mrb[0].mxu0
    %v2150 = vpop.f32.mrb[0].mxu0
    %2151 = vdwg.mxu0
    %2152 = vmatprep.subr.bf16.mxu0 %v1548
    %2153 = vmatpush1.bf16.msra.mxu0 %v1547
    %2154 = vmatprep.subr.bf16.mxu0 %v1552
    %2155 = vmatpush1.bf16.msra.mxu0 %v1551
    %2156 = vmatprep.subr.bf16.mxu0 %v1556
    %2157 = vmatpush1.bf16.msra.mxu0 %v1555
    %2158 = vmatprep.subr.bf16.mxu0 %v1560
    %2159 = vmatpush1.bf16.msra.mxu0 %v1559
    %2160 = vmatprep.subr.bf16.mxu0 %v1564
    %2161 = vmatpush1.bf16.msra.mxu0 %v1563
    %2162 = vmatprep.subr.bf16.mxu0 %v1568
    %2163 = vmatpush1.bf16.msra.mxu0 %v1567
    %2164 = vmatprep.subr.bf16.mxu0 %v1572
    %2165 = vmatpush1.bf16.msra.mxu0 %v1571
    %2166 = vmatprep.subr.bf16.mxu0 %v1576
    %2167 = vmatpush1.bf16.msra.mxu0 %v1575
    %2168 = vmatprep.subr.bf16.mxu0 %v1580
    %2169 = vmatpush1.bf16.msra.mxu0 %v1579
    %2170 = vmatprep.subr.bf16.mxu0 %v1584
    %2171 = vmatpush1.bf16.msra.mxu0 %v1583
    %2172 = vmatprep.subr.bf16.mxu0 %v1588
    %2173 = vmatpush1.bf16.msra.mxu0 %v1587
    %2174 = vmatprep.subr.bf16.mxu0 %v1592
    %2175 = vmatpush1.bf16.msra.mxu0 %v1591
    %2176 = vmatprep.subr.bf16.mxu0 %v1596
    %2177 = vmatpush1.bf16.msra.mxu0 %v1595
    %2178 = vmatprep.subr.bf16.mxu0 %v1600
    %2179 = vmatpush1.bf16.msra.mxu0 %v1599
    %2180 = vmatprep.subr.bf16.mxu0 %v1604
    %2181 = vmatpush1.bf16.msra.mxu0 %v1603
    %2182 = vmatprep.subr.bf16.mxu0 %v1608
    %2183 = vmatpush1.bf16.msra.mxu0 %v1607
    %2184 = vmatprep.mubr.bf16.mxu0 %v576
    %2185 = vmatmul.mubr.bf16.gmra.mrb[0].mxu0 %v575
    %v2186 = vpop.f32.mrb[0].mxu0
    %v2187 = vadd.f32 %v2146, %v2186
    %v2188 = vpop.f32.mrb[0].mxu0
    %v2189 = vadd.f32 %v2148, %v2188
    %v2190 = vpop.f32.mrb[0].mxu0
    %v2191 = vpop.f32.mrb[0].mxu0
    %2192 = vdwg.mxu0
    %v2193 = vpack.c.bf16 %v2023, %v2023
    %v2194 = vpack.c.bf16 %v2025, %v2025
    %v2195 = vpack.c.bf16 %v2187, %v2187
    %v2196 = vpack.c.bf16 %v2189, %v2189
    %v2197 = vmax.bf16 %v2193, 0
    %v2198 = vmax.bf16 %v2194, 0
    %v2199 = vmax.bf16 %v2195, 0
    %v2200 = vmax.bf16 %v2196, 0
    %v2201 = vld [vmem:[#allocation8] sm:$0xff]
    %v2202 = vld [vmem:[#allocation8 + $0x8] sm:$0xff]
    %v2203 = vld [vmem:[#allocation8 + $0x10] sm:$0xff]
    %v2204 = vld [vmem:[#allocation8 + $0x18] sm:$0xff]
    %v2205 = vld [vmem:[#allocation8 + $0x20] sm:$0xff]
    %v2206 = vld [vmem:[#allocation8 + $0x28] sm:$0xff]
    %v2207 = vld [vmem:[#allocation8 + $0x30] sm:$0xff]
    %v2208 = vld [vmem:[#allocation8 + $0x38] sm:$0xff]
    %v2209 = vld [vmem:[#allocation8 + $0x40] sm:$0xff]
    %v2210 = vld [vmem:[#allocation8 + $0x48] sm:$0xff]
    %v2211 = vld [vmem:[#allocation8 + $0x50] sm:$0xff]
    %v2212 = vld [vmem:[#allocation8 + $0x58] sm:$0xff]
    %v2213 = vld [vmem:[#allocation8 + $0x60] sm:$0xff]
    %v2214 = vld [vmem:[#allocation8 + $0x68] sm:$0xff]
    %v2215 = vld [vmem:[#allocation8 + $0x70] sm:$0xff]
    %v2216 = vld [vmem:[#allocation8 + $0x78] sm:$0xff]
    %v2217 = vld [vmem:[#allocation8 + $0x80] sm:$0xff]
    %v2218 = vld [vmem:[#allocation8 + $0x88] sm:$0xff]
    %v2219 = vld [vmem:[#allocation8 + $0x90] sm:$0xff]
    %v2220 = vld [vmem:[#allocation8 + $0x98] sm:$0xff]
    %v2221 = vld [vmem:[#allocation8 + $0xa0] sm:$0xff]
    %v2222 = vld [vmem:[#allocation8 + $0xa8] sm:$0xff]
    %v2223 = vld [vmem:[#allocation8 + $0xb0] sm:$0xff]
    %v2224 = vld [vmem:[#allocation8 + $0xb8] sm:$0xff]
    %v2225 = vld [vmem:[#allocation8 + $0xc0] sm:$0xff]
    %v2226 = vld [vmem:[#allocation8 + $0xc8] sm:$0xff]
    %v2227 = vld [vmem:[#allocation8 + $0xd0] sm:$0xff]
    %v2228 = vld [vmem:[#allocation8 + $0xd8] sm:$0xff]
    %v2229 = vld [vmem:[#allocation8 + $0xe0] sm:$0xff]
    %v2230 = vld [vmem:[#allocation8 + $0xe8] sm:$0xff]
    %v2231 = vld [vmem:[#allocation8 + $0xf0] sm:$0xff]
    %v2232 = vld [vmem:[#allocation8 + $0xf8] sm:$0xff]
    %v2233 = vld [vmem:[#allocation8 + $0x100] sm:$0xff]
    %v2234 = vld [vmem:[#allocation8 + $0x108] sm:$0xff]
    %v2235 = vld [vmem:[#allocation8 + $0x110] sm:$0xff]
    %v2236 = vld [vmem:[#allocation8 + $0x118] sm:$0xff]
    %v2237 = vld [vmem:[#allocation8 + $0x120] sm:$0xff]
    %v2238 = vld [vmem:[#allocation8 + $0x128] sm:$0xff]
    %v2239 = vld [vmem:[#allocation8 + $0x130] sm:$0xff]
    %v2240 = vld [vmem:[#allocation8 + $0x138] sm:$0xff]
    %v2241 = vld [vmem:[#allocation8 + $0x140] sm:$0xff]
    %v2242 = vld [vmem:[#allocation8 + $0x148] sm:$0xff]
    %v2243 = vld [vmem:[#allocation8 + $0x150] sm:$0xff]
    %v2244 = vld [vmem:[#allocation8 + $0x158] sm:$0xff]
    %v2245 = vld [vmem:[#allocation8 + $0x160] sm:$0xff]
    %v2246 = vld [vmem:[#allocation8 + $0x168] sm:$0xff]
    %v2247 = vld [vmem:[#allocation8 + $0x170] sm:$0xff]
    %v2248 = vld [vmem:[#allocation8 + $0x178] sm:$0xff]
    %v2249 = vld [vmem:[#allocation8 + $0x180] sm:$0xff]
    %v2250 = vld [vmem:[#allocation8 + $0x188] sm:$0xff]
    %v2251 = vld [vmem:[#allocation8 + $0x190] sm:$0xff]
    %v2252 = vld [vmem:[#allocation8 + $0x198] sm:$0xff]
    %v2253 = vld [vmem:[#allocation8 + $0x1a0] sm:$0xff]
    %v2254 = vld [vmem:[#allocation8 + $0x1a8] sm:$0xff]
    %v2255 = vld [vmem:[#allocation8 + $0x1b0] sm:$0xff]
    %v2256 = vld [vmem:[#allocation8 + $0x1b8] sm:$0xff]
    %v2257 = vld [vmem:[#allocation8 + $0x1c0] sm:$0xff]
    %v2258 = vld [vmem:[#allocation8 + $0x1c8] sm:$0xff]
    %v2259 = vld [vmem:[#allocation8 + $0x1d0] sm:$0xff]
    %v2260 = vld [vmem:[#allocation8 + $0x1d8] sm:$0xff]
    %v2261 = vld [vmem:[#allocation8 + $0x1e0] sm:$0xff]
    %v2262 = vld [vmem:[#allocation8 + $0x1e8] sm:$0xff]
    %v2263 = vld [vmem:[#allocation8 + $0x1f0] sm:$0xff]
    %v2264 = vld [vmem:[#allocation8 + $0x1f8] sm:$0xff]
    %v2265 = vld [vmem:[#allocation8 + $0x200] sm:$0xff]
    %v2266 = vld [vmem:[#allocation8 + $0x208] sm:$0xff]
    %v2267 = vld [vmem:[#allocation8 + $0x210] sm:$0xff]
    %v2268 = vld [vmem:[#allocation8 + $0x218] sm:$0xff]
    %v2269 = vld [vmem:[#allocation8 + $0x220] sm:$0xff]
    %v2270 = vld [vmem:[#allocation8 + $0x228] sm:$0xff]
    %v2271 = vld [vmem:[#allocation8 + $0x230] sm:$0xff]
    %v2272 = vld [vmem:[#allocation8 + $0x238] sm:$0xff]
    %v2273 = vld [vmem:[#allocation8 + $0x240] sm:$0xff]
    %v2274 = vld [vmem:[#allocation8 + $0x248] sm:$0xff]
    %v2275 = vld [vmem:[#allocation8 + $0x250] sm:$0xff]
    %v2276 = vld [vmem:[#allocation8 + $0x258] sm:$0xff]
    %v2277 = vld [vmem:[#allocation8 + $0x260] sm:$0xff]
    %v2278 = vld [vmem:[#allocation8 + $0x268] sm:$0xff]
    %v2279 = vld [vmem:[#allocation8 + $0x270] sm:$0xff]
    %v2280 = vld [vmem:[#allocation8 + $0x278] sm:$0xff]
    %v2281 = vld [vmem:[#allocation8 + $0x280] sm:$0xff]
    %v2282 = vld [vmem:[#allocation8 + $0x288] sm:$0xff]
    %v2283 = vld [vmem:[#allocation8 + $0x290] sm:$0xff]
    %v2284 = vld [vmem:[#allocation8 + $0x298] sm:$0xff]
    %v2285 = vld [vmem:[#allocation8 + $0x2a0] sm:$0xff]
    %v2286 = vld [vmem:[#allocation8 + $0x2a8] sm:$0xff]
    %v2287 = vld [vmem:[#allocation8 + $0x2b0] sm:$0xff]
    %v2288 = vld [vmem:[#allocation8 + $0x2b8] sm:$0xff]
    %v2289 = vld [vmem:[#allocation8 + $0x2c0] sm:$0xff]
    %v2290 = vld [vmem:[#allocation8 + $0x2c8] sm:$0xff]
    %v2291 = vld [vmem:[#allocation8 + $0x2d0] sm:$0xff]
    %v2292 = vld [vmem:[#allocation8 + $0x2d8] sm:$0xff]
    %v2293 = vld [vmem:[#allocation8 + $0x2e0] sm:$0xff]
    %v2294 = vld [vmem:[#allocation8 + $0x2e8] sm:$0xff]
    %v2295 = vld [vmem:[#allocation8 + $0x2f0] sm:$0xff]
    %v2296 = vld [vmem:[#allocation8 + $0x2f8] sm:$0xff]
    %v2297 = vld [vmem:[#allocation8 + $0x300] sm:$0xff]
    %v2298 = vld [vmem:[#allocation8 + $0x308] sm:$0xff]
    %v2299 = vld [vmem:[#allocation8 + $0x310] sm:$0xff]
    %v2300 = vld [vmem:[#allocation8 + $0x318] sm:$0xff]
    %v2301 = vld [vmem:[#allocation8 + $0x320] sm:$0xff]
    %v2302 = vld [vmem:[#allocation8 + $0x328] sm:$0xff]
    %v2303 = vld [vmem:[#allocation8 + $0x330] sm:$0xff]
    %v2304 = vld [vmem:[#allocation8 + $0x338] sm:$0xff]
    %v2305 = vld [vmem:[#allocation8 + $0x340] sm:$0xff]
    %v2306 = vld [vmem:[#allocation8 + $0x348] sm:$0xff]
    %v2307 = vld [vmem:[#allocation8 + $0x350] sm:$0xff]
    %v2308 = vld [vmem:[#allocation8 + $0x358] sm:$0xff]
    %v2309 = vld [vmem:[#allocation8 + $0x360] sm:$0xff]
    %v2310 = vld [vmem:[#allocation8 + $0x368] sm:$0xff]
    %v2311 = vld [vmem:[#allocation8 + $0x370] sm:$0xff]
    %v2312 = vld [vmem:[#allocation8 + $0x378] sm:$0xff]
    %v2313 = vld [vmem:[#allocation8 + $0x380] sm:$0xff]
    %v2314 = vld [vmem:[#allocation8 + $0x388] sm:$0xff]
    %v2315 = vld [vmem:[#allocation8 + $0x390] sm:$0xff]
    %v2316 = vld [vmem:[#allocation8 + $0x398] sm:$0xff]
    %v2317 = vld [vmem:[#allocation8 + $0x3a0] sm:$0xff]
    %v2318 = vld [vmem:[#allocation8 + $0x3a8] sm:$0xff]
    %v2319 = vld [vmem:[#allocation8 + $0x3b0] sm:$0xff]
    %v2320 = vld [vmem:[#allocation8 + $0x3b8] sm:$0xff]
    %v2321 = vld [vmem:[#allocation8 + $0x3c0] sm:$0xff]
    %v2322 = vld [vmem:[#allocation8 + $0x3c8] sm:$0xff]
    %v2323 = vld [vmem:[#allocation8 + $0x3d0] sm:$0xff]
    %v2324 = vld [vmem:[#allocation8 + $0x3d8] sm:$0xff]
    %v2325 = vld [vmem:[#allocation8 + $0x3e0] sm:$0xff]
    %v2326 = vld [vmem:[#allocation8 + $0x3e8] sm:$0xff]
    %v2327 = vld [vmem:[#allocation8 + $0x3f0] sm:$0xff]
    %v2328 = vld [vmem:[#allocation8 + $0x3f8] sm:$0xff]
    %v2329 = vld [vmem:[%s5] sm:$0xf]
    %v2331 = vlaneseq
    %v2332 = vshrl.u32 %v2331, 7
    %v2333 = vsub.s32 0, %v2332
    %v2334 = vrot.slane %v2329, %v2333
    %v2335 = vlaneseq
    %v2336 = vshrl.u32 %v2335, 7
    %v2337 = vsub.s32 1, %v2336
    %v2338 = vrot.slane %v2329, %v2337
    %v2339 = vlaneseq
    %v2340 = vshrl.u32 %v2339, 7
    %v2341 = vsub.s32 2, %v2340
    %v2342 = vrot.slane %v2329, %v2341
    %v2343 = vlaneseq
    %v2344 = vshrl.u32 %v2343, 7
    %v2345 = vsub.s32 3, %v2344
    %v2346 = vrot.slane %v2329, %v2345
    %v2479 = vunpack.c.l.b16 %v2201
    %v2480 = vunpack.c.h.b16 %v2201
    %v2481 = vunpack.c.l.b16 %v2202
    %v2482 = vunpack.c.h.b16 %v2202
    %v2483 = vunpack.c.l.b16 %v2203
    %v2484 = vunpack.c.h.b16 %v2203
    %v2485 = vunpack.c.l.b16 %v2204
    %v2486 = vunpack.c.h.b16 %v2204
    %v2487 = vunpack.c.l.b16 %v2205
    %v2488 = vunpack.c.h.b16 %v2205
    %v2489 = vunpack.c.l.b16 %v2206
    %v2490 = vunpack.c.h.b16 %v2206
    %v2491 = vunpack.c.l.b16 %v2207
    %v2492 = vunpack.c.h.b16 %v2207
    %v2493 = vunpack.c.l.b16 %v2208
    %v2494 = vunpack.c.h.b16 %v2208
    %v2495 = vunpack.c.l.b16 %v2209
    %v2496 = vunpack.c.h.b16 %v2209
    %v2497 = vunpack.c.l.b16 %v2210
    %v2498 = vunpack.c.h.b16 %v2210
    %v2499 = vunpack.c.l.b16 %v2211
    %v2500 = vunpack.c.h.b16 %v2211
    %v2501 = vunpack.c.l.b16 %v2212
    %v2502 = vunpack.c.h.b16 %v2212
    %v2503 = vunpack.c.l.b16 %v2213
    %v2504 = vunpack.c.h.b16 %v2213
    %v2505 = vunpack.c.l.b16 %v2214
    %v2506 = vunpack.c.h.b16 %v2214
    %v2507 = vunpack.c.l.b16 %v2215
    %v2508 = vunpack.c.h.b16 %v2215
    %v2509 = vunpack.c.l.b16 %v2216
    %v2510 = vunpack.c.h.b16 %v2216
    %v2511 = vunpack.c.l.b16 %v2217
    %v2512 = vunpack.c.h.b16 %v2217
    %v2513 = vunpack.c.l.b16 %v2218
    %v2514 = vunpack.c.h.b16 %v2218
    %v2515 = vunpack.c.l.b16 %v2219
    %v2516 = vunpack.c.h.b16 %v2219
    %v2517 = vunpack.c.l.b16 %v2220
    %v2518 = vunpack.c.h.b16 %v2220
    %v2519 = vunpack.c.l.b16 %v2221
    %v2520 = vunpack.c.h.b16 %v2221
    %v2521 = vunpack.c.l.b16 %v2222
    %v2522 = vunpack.c.h.b16 %v2222
    %v2523 = vunpack.c.l.b16 %v2223
    %v2524 = vunpack.c.h.b16 %v2223
    %v2525 = vunpack.c.l.b16 %v2224
    %v2526 = vunpack.c.h.b16 %v2224
    %v2527 = vunpack.c.l.b16 %v2225
    %v2528 = vunpack.c.h.b16 %v2225
    %v2529 = vunpack.c.l.b16 %v2226
    %v2530 = vunpack.c.h.b16 %v2226
    %v2531 = vunpack.c.l.b16 %v2227
    %v2532 = vunpack.c.h.b16 %v2227
    %v2533 = vunpack.c.l.b16 %v2228
    %v2534 = vunpack.c.h.b16 %v2228
    %v2535 = vunpack.c.l.b16 %v2229
    %v2536 = vunpack.c.h.b16 %v2229
    %v2537 = vunpack.c.l.b16 %v2230
    %v2538 = vunpack.c.h.b16 %v2230
    %v2539 = vunpack.c.l.b16 %v2231
    %v2540 = vunpack.c.h.b16 %v2231
    %v2541 = vunpack.c.l.b16 %v2232
    %v2542 = vunpack.c.h.b16 %v2232
    %v2543 = vunpack.c.l.b16 %v2233
    %v2544 = vunpack.c.h.b16 %v2233
    %v2545 = vunpack.c.l.b16 %v2234
    %v2546 = vunpack.c.h.b16 %v2234
    %v2547 = vunpack.c.l.b16 %v2235
    %v2548 = vunpack.c.h.b16 %v2235
    %v2549 = vunpack.c.l.b16 %v2236
    %v2550 = vunpack.c.h.b16 %v2236
    %v2551 = vunpack.c.l.b16 %v2237
    %v2552 = vunpack.c.h.b16 %v2237
    %v2553 = vunpack.c.l.b16 %v2238
    %v2554 = vunpack.c.h.b16 %v2238
    %v2555 = vunpack.c.l.b16 %v2239
    %v2556 = vunpack.c.h.b16 %v2239
    %v2557 = vunpack.c.l.b16 %v2240
    %v2558 = vunpack.c.h.b16 %v2240
    %v2559 = vunpack.c.l.b16 %v2241
    %v2560 = vunpack.c.h.b16 %v2241
    %v2561 = vunpack.c.l.b16 %v2242
    %v2562 = vunpack.c.h.b16 %v2242
    %v2563 = vunpack.c.l.b16 %v2243
    %v2564 = vunpack.c.h.b16 %v2243
    %v2565 = vunpack.c.l.b16 %v2244
    %v2566 = vunpack.c.h.b16 %v2244
    %v2567 = vunpack.c.l.b16 %v2245
    %v2568 = vunpack.c.h.b16 %v2245
    %v2569 = vunpack.c.l.b16 %v2246
    %v2570 = vunpack.c.h.b16 %v2246
    %v2571 = vunpack.c.l.b16 %v2247
    %v2572 = vunpack.c.h.b16 %v2247
    %v2573 = vunpack.c.l.b16 %v2248
    %v2574 = vunpack.c.h.b16 %v2248
    %v2575 = vunpack.c.l.b16 %v2249
    %v2576 = vunpack.c.h.b16 %v2249
    %v2577 = vunpack.c.l.b16 %v2250
    %v2578 = vunpack.c.h.b16 %v2250
    %v2579 = vunpack.c.l.b16 %v2251
    %v2580 = vunpack.c.h.b16 %v2251
    %v2581 = vunpack.c.l.b16 %v2252
    %v2582 = vunpack.c.h.b16 %v2252
    %v2583 = vunpack.c.l.b16 %v2253
    %v2584 = vunpack.c.h.b16 %v2253
    %v2585 = vunpack.c.l.b16 %v2254
    %v2586 = vunpack.c.h.b16 %v2254
    %v2587 = vunpack.c.l.b16 %v2255
    %v2588 = vunpack.c.h.b16 %v2255
    %v2589 = vunpack.c.l.b16 %v2256
    %v2590 = vunpack.c.h.b16 %v2256
    %v2591 = vunpack.c.l.b16 %v2257
    %v2592 = vunpack.c.h.b16 %v2257
    %v2593 = vunpack.c.l.b16 %v2258
    %v2594 = vunpack.c.h.b16 %v2258
    %v2595 = vunpack.c.l.b16 %v2259
    %v2596 = vunpack.c.h.b16 %v2259
    %v2597 = vunpack.c.l.b16 %v2260
    %v2598 = vunpack.c.h.b16 %v2260
    %v2599 = vunpack.c.l.b16 %v2261
    %v2600 = vunpack.c.h.b16 %v2261
    %v2601 = vunpack.c.l.b16 %v2262
    %v2602 = vunpack.c.h.b16 %v2262
    %v2603 = vunpack.c.l.b16 %v2263
    %v2604 = vunpack.c.h.b16 %v2263
    %v2605 = vunpack.c.l.b16 %v2264
    %v2606 = vunpack.c.h.b16 %v2264
    %v2607 = vunpack.c.l.b16 %v2265
    %v2608 = vunpack.c.h.b16 %v2265
    %v2609 = vunpack.c.l.b16 %v2266
    %v2610 = vunpack.c.h.b16 %v2266
    %v2611 = vunpack.c.l.b16 %v2267
    %v2612 = vunpack.c.h.b16 %v2267
    %v2613 = vunpack.c.l.b16 %v2268
    %v2614 = vunpack.c.h.b16 %v2268
    %v2615 = vunpack.c.l.b16 %v2269
    %v2616 = vunpack.c.h.b16 %v2269
    %v2617 = vunpack.c.l.b16 %v2270
    %v2618 = vunpack.c.h.b16 %v2270
    %v2619 = vunpack.c.l.b16 %v2271
    %v2620 = vunpack.c.h.b16 %v2271
    %v2621 = vunpack.c.l.b16 %v2272
    %v2622 = vunpack.c.h.b16 %v2272
    %v2623 = vunpack.c.l.b16 %v2273
    %v2624 = vunpack.c.h.b16 %v2273
    %v2625 = vunpack.c.l.b16 %v2274
    %v2626 = vunpack.c.h.b16 %v2274
    %v2627 = vunpack.c.l.b16 %v2275
    %v2628 = vunpack.c.h.b16 %v2275
    %v2629 = vunpack.c.l.b16 %v2276
    %v2630 = vunpack.c.h.b16 %v2276
    %v2631 = vunpack.c.l.b16 %v2277
    %v2632 = vunpack.c.h.b16 %v2277
    %v2633 = vunpack.c.l.b16 %v2278
    %v2634 = vunpack.c.h.b16 %v2278
    %v2635 = vunpack.c.l.b16 %v2279
    %v2636 = vunpack.c.h.b16 %v2279
    %v2637 = vunpack.c.l.b16 %v2280
    %v2638 = vunpack.c.h.b16 %v2280
    %v2639 = vunpack.c.l.b16 %v2281
    %v2640 = vunpack.c.h.b16 %v2281
    %v2641 = vunpack.c.l.b16 %v2282
    %v2642 = vunpack.c.h.b16 %v2282
    %v2643 = vunpack.c.l.b16 %v2283
    %v2644 = vunpack.c.h.b16 %v2283
    %v2645 = vunpack.c.l.b16 %v2284
    %v2646 = vunpack.c.h.b16 %v2284
    %v2647 = vunpack.c.l.b16 %v2285
    %v2648 = vunpack.c.h.b16 %v2285
    %v2649 = vunpack.c.l.b16 %v2286
    %v2650 = vunpack.c.h.b16 %v2286
    %v2651 = vunpack.c.l.b16 %v2287
    %v2652 = vunpack.c.h.b16 %v2287
    %v2653 = vunpack.c.l.b16 %v2288
    %v2654 = vunpack.c.h.b16 %v2288
    %v2655 = vunpack.c.l.b16 %v2289
    %v2656 = vunpack.c.h.b16 %v2289
    %v2657 = vunpack.c.l.b16 %v2290
    %v2658 = vunpack.c.h.b16 %v2290
    %v2659 = vunpack.c.l.b16 %v2291
    %v2660 = vunpack.c.h.b16 %v2291
    %v2661 = vunpack.c.l.b16 %v2292
    %v2662 = vunpack.c.h.b16 %v2292
    %v2663 = vunpack.c.l.b16 %v2293
    %v2664 = vunpack.c.h.b16 %v2293
    %v2665 = vunpack.c.l.b16 %v2294
    %v2666 = vunpack.c.h.b16 %v2294
    %v2667 = vunpack.c.l.b16 %v2295
    %v2668 = vunpack.c.h.b16 %v2295
    %v2669 = vunpack.c.l.b16 %v2296
    %v2670 = vunpack.c.h.b16 %v2296
    %v2671 = vunpack.c.l.b16 %v2297
    %v2672 = vunpack.c.h.b16 %v2297
    %v2673 = vunpack.c.l.b16 %v2298
    %v2674 = vunpack.c.h.b16 %v2298
    %v2675 = vunpack.c.l.b16 %v2299
    %v2676 = vunpack.c.h.b16 %v2299
    %v2677 = vunpack.c.l.b16 %v2300
    %v2678 = vunpack.c.h.b16 %v2300
    %v2679 = vunpack.c.l.b16 %v2301
    %v2680 = vunpack.c.h.b16 %v2301
    %v2681 = vunpack.c.l.b16 %v2302
    %v2682 = vunpack.c.h.b16 %v2302
    %v2683 = vunpack.c.l.b16 %v2303
    %v2684 = vunpack.c.h.b16 %v2303
    %v2685 = vunpack.c.l.b16 %v2304
    %v2686 = vunpack.c.h.b16 %v2304
    %v2687 = vunpack.c.l.b16 %v2305
    %v2688 = vunpack.c.h.b16 %v2305
    %v2689 = vunpack.c.l.b16 %v2306
    %v2690 = vunpack.c.h.b16 %v2306
    %v2691 = vunpack.c.l.b16 %v2307
    %v2692 = vunpack.c.h.b16 %v2307
    %v2693 = vunpack.c.l.b16 %v2308
    %v2694 = vunpack.c.h.b16 %v2308
    %v2695 = vunpack.c.l.b16 %v2309
    %v2696 = vunpack.c.h.b16 %v2309
    %v2697 = vunpack.c.l.b16 %v2310
    %v2698 = vunpack.c.h.b16 %v2310
    %v2699 = vunpack.c.l.b16 %v2311
    %v2700 = vunpack.c.h.b16 %v2311
    %v2701 = vunpack.c.l.b16 %v2312
    %v2702 = vunpack.c.h.b16 %v2312
    %v2703 = vunpack.c.l.b16 %v2313
    %v2704 = vunpack.c.h.b16 %v2313
    %v2705 = vunpack.c.l.b16 %v2314
    %v2706 = vunpack.c.h.b16 %v2314
    %v2707 = vunpack.c.l.b16 %v2315
    %v2708 = vunpack.c.h.b16 %v2315
    %v2709 = vunpack.c.l.b16 %v2316
    %v2710 = vunpack.c.h.b16 %v2316
    %v2711 = vunpack.c.l.b16 %v2317
    %v2712 = vunpack.c.h.b16 %v2317
    %v2713 = vunpack.c.l.b16 %v2318
    %v2714 = vunpack.c.h.b16 %v2318
    %v2715 = vunpack.c.l.b16 %v2319
    %v2716 = vunpack.c.h.b16 %v2319
    %v2717 = vunpack.c.l.b16 %v2320
    %v2718 = vunpack.c.h.b16 %v2320
    %v2719 = vunpack.c.l.b16 %v2321
    %v2720 = vunpack.c.h.b16 %v2321
    %v2721 = vunpack.c.l.b16 %v2322
    %v2722 = vunpack.c.h.b16 %v2322
    %v2723 = vunpack.c.l.b16 %v2323
    %v2724 = vunpack.c.h.b16 %v2323
    %v2725 = vunpack.c.l.b16 %v2324
    %v2726 = vunpack.c.h.b16 %v2324
    %v2727 = vunpack.c.l.b16 %v2325
    %v2728 = vunpack.c.h.b16 %v2325
    %v2729 = vunpack.c.l.b16 %v2326
    %v2730 = vunpack.c.h.b16 %v2326
    %v2731 = vunpack.c.l.b16 %v2327
    %v2732 = vunpack.c.h.b16 %v2327
    %v2733 = vunpack.c.l.b16 %v2328
    %v2734 = vunpack.c.h.b16 %v2328
    %v2735 = vpack.c.b16 %v2483, %v2479
    %v2736 = vpack.c.b16 %v2484, %v2480
    %v2737 = vpack.c.b16 %v2485, %v2481
    %v2738 = vpack.c.b16 %v2486, %v2482
    %v2739 = vpack.c.b16 %v2491, %v2487
    %v2740 = vpack.c.b16 %v2492, %v2488
    %v2741 = vpack.c.b16 %v2493, %v2489
    %v2742 = vpack.c.b16 %v2494, %v2490
    %v2743 = vpack.c.b16 %v2499, %v2495
    %v2744 = vpack.c.b16 %v2500, %v2496
    %v2745 = vpack.c.b16 %v2501, %v2497
    %v2746 = vpack.c.b16 %v2502, %v2498
    %v2747 = vpack.c.b16 %v2507, %v2503
    %v2748 = vpack.c.b16 %v2508, %v2504
    %v2749 = vpack.c.b16 %v2509, %v2505
    %v2750 = vpack.c.b16 %v2510, %v2506
    %v2751 = vpack.c.b16 %v2515, %v2511
    %v2752 = vpack.c.b16 %v2516, %v2512
    %v2753 = vpack.c.b16 %v2517, %v2513
    %v2754 = vpack.c.b16 %v2518, %v2514
    %v2755 = vpack.c.b16 %v2523, %v2519
    %v2756 = vpack.c.b16 %v2524, %v2520
    %v2757 = vpack.c.b16 %v2525, %v2521
    %v2758 = vpack.c.b16 %v2526, %v2522
    %v2759 = vpack.c.b16 %v2531, %v2527
    %v2760 = vpack.c.b16 %v2532, %v2528
    %v2761 = vpack.c.b16 %v2533, %v2529
    %v2762 = vpack.c.b16 %v2534, %v2530
    %v2763 = vpack.c.b16 %v2539, %v2535
    %v2764 = vpack.c.b16 %v2540, %v2536
    %v2765 = vpack.c.b16 %v2541, %v2537
    %v2766 = vpack.c.b16 %v2542, %v2538
    %v2767 = vpack.c.b16 %v2547, %v2543
    %v2768 = vpack.c.b16 %v2548, %v2544
    %v2769 = vpack.c.b16 %v2549, %v2545
    %v2770 = vpack.c.b16 %v2550, %v2546
    %v2771 = vpack.c.b16 %v2555, %v2551
    %v2772 = vpack.c.b16 %v2556, %v2552
    %v2773 = vpack.c.b16 %v2557, %v2553
    %v2774 = vpack.c.b16 %v2558, %v2554
    %v2775 = vpack.c.b16 %v2563, %v2559
    %v2776 = vpack.c.b16 %v2564, %v2560
    %v2777 = vpack.c.b16 %v2565, %v2561
    %v2778 = vpack.c.b16 %v2566, %v2562
    %v2779 = vpack.c.b16 %v2571, %v2567
    %v2780 = vpack.c.b16 %v2572, %v2568
    %v2781 = vpack.c.b16 %v2573, %v2569
    %v2782 = vpack.c.b16 %v2574, %v2570
    %v2783 = vpack.c.b16 %v2579, %v2575
    %v2784 = vpack.c.b16 %v2580, %v2576
    %v2785 = vpack.c.b16 %v2581, %v2577
    %v2786 = vpack.c.b16 %v2582, %v2578
    %v2787 = vpack.c.b16 %v2587, %v2583
    %v2788 = vpack.c.b16 %v2588, %v2584
    %v2789 = vpack.c.b16 %v2589, %v2585
    %v2790 = vpack.c.b16 %v2590, %v2586
    %v2791 = vpack.c.b16 %v2595, %v2591
    %v2792 = vpack.c.b16 %v2596, %v2592
    %v2793 = vpack.c.b16 %v2597, %v2593
    %v2794 = vpack.c.b16 %v2598, %v2594
    %v2795 = vpack.c.b16 %v2603, %v2599
    %v2796 = vpack.c.b16 %v2604, %v2600
    %v2797 = vpack.c.b16 %v2605, %v2601
    %v2798 = vpack.c.b16 %v2606, %v2602
    %v2799 = vpack.c.b16 %v2611, %v2607
    %v2800 = vpack.c.b16 %v2612, %v2608
    %v2801 = vpack.c.b16 %v2613, %v2609
    %v2802 = vpack.c.b16 %v2614, %v2610
    %v2803 = vpack.c.b16 %v2619, %v2615
    %v2804 = vpack.c.b16 %v2620, %v2616
    %v2805 = vpack.c.b16 %v2621, %v2617
    %v2806 = vpack.c.b16 %v2622, %v2618
    %v2807 = vpack.c.b16 %v2627, %v2623
    %v2808 = vpack.c.b16 %v2628, %v2624
    %v2809 = vpack.c.b16 %v2629, %v2625
    %v2810 = vpack.c.b16 %v2630, %v2626
    %v2811 = vpack.c.b16 %v2635, %v2631
    %v2812 = vpack.c.b16 %v2636, %v2632
    %v2813 = vpack.c.b16 %v2637, %v2633
    %v2814 = vpack.c.b16 %v2638, %v2634
    %v2815 = vpack.c.b16 %v2643, %v2639
    %v2816 = vpack.c.b16 %v2644, %v2640
    %v2817 = vpack.c.b16 %v2645, %v2641
    %v2818 = vpack.c.b16 %v2646, %v2642
    %v2819 = vpack.c.b16 %v2651, %v2647
    %v2820 = vpack.c.b16 %v2652, %v2648
    %v2821 = vpack.c.b16 %v2653, %v2649
    %v2822 = vpack.c.b16 %v2654, %v2650
    %v2823 = vpack.c.b16 %v2659, %v2655
    %v2824 = vpack.c.b16 %v2660, %v2656
    %v2825 = vpack.c.b16 %v2661, %v2657
    %v2826 = vpack.c.b16 %v2662, %v2658
    %v2827 = vpack.c.b16 %v2667, %v2663
    %v2828 = vpack.c.b16 %v2668, %v2664
    %v2829 = vpack.c.b16 %v2669, %v2665
    %v2830 = vpack.c.b16 %v2670, %v2666
    %v2831 = vpack.c.b16 %v2675, %v2671
    %v2832 = vpack.c.b16 %v2676, %v2672
    %v2833 = vpack.c.b16 %v2677, %v2673
    %v2834 = vpack.c.b16 %v2678, %v2674
    %v2835 = vpack.c.b16 %v2683, %v2679
    %v2836 = vpack.c.b16 %v2684, %v2680
    %v2837 = vpack.c.b16 %v2685, %v2681
    %v2838 = vpack.c.b16 %v2686, %v2682
    %v2839 = vpack.c.b16 %v2691, %v2687
    %v2840 = vpack.c.b16 %v2692, %v2688
    %v2841 = vpack.c.b16 %v2693, %v2689
    %v2842 = vpack.c.b16 %v2694, %v2690
    %v2843 = vpack.c.b16 %v2699, %v2695
    %v2844 = vpack.c.b16 %v2700, %v2696
    %v2845 = vpack.c.b16 %v2701, %v2697
    %v2846 = vpack.c.b16 %v2702, %v2698
    %v2847 = vpack.c.b16 %v2707, %v2703
    %v2848 = vpack.c.b16 %v2708, %v2704
    %v2849 = vpack.c.b16 %v2709, %v2705
    %v2850 = vpack.c.b16 %v2710, %v2706
    %v2851 = vpack.c.b16 %v2715, %v2711
    %v2852 = vpack.c.b16 %v2716, %v2712
    %v2853 = vpack.c.b16 %v2717, %v2713
    %v2854 = vpack.c.b16 %v2718, %v2714
    %v2855 = vpack.c.b16 %v2723, %v2719
    %v2856 = vpack.c.b16 %v2724, %v2720
    %v2857 = vpack.c.b16 %v2725, %v2721
    %v2858 = vpack.c.b16 %v2726, %v2722
    %v2859 = vpack.c.b16 %v2731, %v2727
    %v2860 = vpack.c.b16 %v2732, %v2728
    %v2861 = vpack.c.b16 %v2733, %v2729
    %v2862 = vpack.c.b16 %v2734, %v2730
    %2991 = vmatprep.subr.bf16.mxu0 %v2736
    %2992 = vmatpush1.bf16.msra.mxu0 %v2735
    %2993 = vmatprep.subr.bf16.mxu0 %v2740
    %2994 = vmatpush1.bf16.msra.mxu0 %v2739
    %2995 = vmatprep.subr.bf16.mxu0 %v2744
    %2996 = vmatpush1.bf16.msra.mxu0 %v2743
    %2997 = vmatprep.subr.bf16.mxu0 %v2748
    %2998 = vmatpush1.bf16.msra.mxu0 %v2747
    %2999 = vmatprep.subr.bf16.mxu0 %v2752
    %3000 = vmatpush1.bf16.msra.mxu0 %v2751
    %3001 = vmatprep.subr.bf16.mxu0 %v2756
    %3002 = vmatpush1.bf16.msra.mxu0 %v2755
    %3003 = vmatprep.subr.bf16.mxu0 %v2760
    %3004 = vmatpush1.bf16.msra.mxu0 %v2759
    %3005 = vmatprep.subr.bf16.mxu0 %v2764
    %3006 = vmatpush1.bf16.msra.mxu0 %v2763
    %3007 = vmatprep.subr.bf16.mxu0 %v2768
    %3008 = vmatpush1.bf16.msra.mxu0 %v2767
    %3009 = vmatprep.subr.bf16.mxu0 %v2772
    %3010 = vmatpush1.bf16.msra.mxu0 %v2771
    %3011 = vmatprep.subr.bf16.mxu0 %v2776
    %3012 = vmatpush1.bf16.msra.mxu0 %v2775
    %3013 = vmatprep.subr.bf16.mxu0 %v2780
    %3014 = vmatpush1.bf16.msra.mxu0 %v2779
    %3015 = vmatprep.subr.bf16.mxu0 %v2784
    %3016 = vmatpush1.bf16.msra.mxu0 %v2783
    %3017 = vmatprep.subr.bf16.mxu0 %v2788
    %3018 = vmatpush1.bf16.msra.mxu0 %v2787
    %3019 = vmatprep.subr.bf16.mxu0 %v2792
    %3020 = vmatpush1.bf16.msra.mxu0 %v2791
    %3021 = vmatprep.subr.bf16.mxu0 %v2796
    %3022 = vmatpush1.bf16.msra.mxu0 %v2795
    %3023 = vmatprep.mubr.bf16.mxu0 %v2198
    %3024 = vmatmul.mubr.bf16.gmra.mrb[0].mxu0 %v2197
    %v3025 = vpop.f32.mrb[0].mxu0
    %v3026 = vadd.f32 %v2334, %v3025
    %v3027 = vpop.f32.mrb[0].mxu0
    %v3028 = vadd.f32 %v2338, %v3027
    %v3029 = vpop.f32.mrb[0].mxu0
    %v3030 = vpop.f32.mrb[0].mxu0
    %3031 = vdwg.mxu0
    %3032 = vmatprep.subr.bf16.mxu0 %v2800
    %3033 = vmatpush1.bf16.msra.mxu0 %v2799
    %3034 = vmatprep.subr.bf16.mxu0 %v2804
    %3035 = vmatpush1.bf16.msra.mxu0 %v2803
    %3036 = vmatprep.subr.bf16.mxu0 %v2808
    %3037 = vmatpush1.bf16.msra.mxu0 %v2807
    %3038 = vmatprep.subr.bf16.mxu0 %v2812
    %3039 = vmatpush1.bf16.msra.mxu0 %v2811
    %3040 = vmatprep.subr.bf16.mxu0 %v2816
    %3041 = vmatpush1.bf16.msra.mxu0 %v2815
    %3042 = vmatprep.subr.bf16.mxu0 %v2820
    %3043 = vmatpush1.bf16.msra.mxu0 %v2819
    %3044 = vmatprep.subr.bf16.mxu0 %v2824
    %3045 = vmatpush1.bf16.msra.mxu0 %v2823
    %3046 = vmatprep.subr.bf16.mxu0 %v2828
    %3047 = vmatpush1.bf16.msra.mxu0 %v2827
    %3048 = vmatprep.subr.bf16.mxu0 %v2832
    %3049 = vmatpush1.bf16.msra.mxu0 %v2831
    %3050 = vmatprep.subr.bf16.mxu0 %v2836
    %3051 = vmatpush1.bf16.msra.mxu0 %v2835
    %3052 = vmatprep.subr.bf16.mxu0 %v2840
    %3053 = vmatpush1.bf16.msra.mxu0 %v2839
    %3054 = vmatprep.subr.bf16.mxu0 %v2844
    %3055 = vmatpush1.bf16.msra.mxu0 %v2843
    %3056 = vmatprep.subr.bf16.mxu0 %v2848
    %3057 = vmatpush1.bf16.msra.mxu0 %v2847
    %3058 = vmatprep.subr.bf16.mxu0 %v2852
    %3059 = vmatpush1.bf16.msra.mxu0 %v2851
    %3060 = vmatprep.subr.bf16.mxu0 %v2856
    %3061 = vmatpush1.bf16.msra.mxu0 %v2855
    %3062 = vmatprep.subr.bf16.mxu0 %v2860
    %3063 = vmatpush1.bf16.msra.mxu0 %v2859
    %3064 = vmatprep.mubr.bf16.mxu0 %v2200
    %3065 = vmatmul.mubr.bf16.gmra.mrb[0].mxu0 %v2199
    %v3066 = vpop.f32.mrb[0].mxu0
    %v3067 = vadd.f32 %v3026, %v3066
    %v3068 = vpop.f32.mrb[0].mxu0
    %v3069 = vadd.f32 %v3028, %v3068
    %v3070 = vpop.f32.mrb[0].mxu0
    %v3071 = vpop.f32.mrb[0].mxu0
    %3072 = vdwg.mxu0
    %3073 = vmatprep.subr.bf16.mxu0 %v2738
    %3074 = vmatpush1.bf16.msra.mxu0 %v2737
    %3075 = vmatprep.subr.bf16.mxu0 %v2742
    %3076 = vmatpush1.bf16.msra.mxu0 %v2741
    %3077 = vmatprep.subr.bf16.mxu0 %v2746
    %3078 = vmatpush1.bf16.msra.mxu0 %v2745
    %3079 = vmatprep.subr.bf16.mxu0 %v2750
    %3080 = vmatpush1.bf16.msra.mxu0 %v2749
    %3081 = vmatprep.subr.bf16.mxu0 %v2754
    %3082 = vmatpush1.bf16.msra.mxu0 %v2753
    %3083 = vmatprep.subr.bf16.mxu0 %v2758
    %3084 = vmatpush1.bf16.msra.mxu0 %v2757
    %3085 = vmatprep.subr.bf16.mxu0 %v2762
    %3086 = vmatpush1.bf16.msra.mxu0 %v2761
    %3087 = vmatprep.subr.bf16.mxu0 %v2766
    %3088 = vmatpush1.bf16.msra.mxu0 %v2765
    %3089 = vmatprep.subr.bf16.mxu0 %v2770
    %3090 = vmatpush1.bf16.msra.mxu0 %v2769
    %3091 = vmatprep.subr.bf16.mxu0 %v2774
    %3092 = vmatpush1.bf16.msra.mxu0 %v2773
    %3093 = vmatprep.subr.bf16.mxu0 %v2778
    %3094 = vmatpush1.bf16.msra.mxu0 %v2777
    %3095 = vmatprep.subr.bf16.mxu0 %v2782
    %3096 = vmatpush1.bf16.msra.mxu0 %v2781
    %3097 = vmatprep.subr.bf16.mxu0 %v2786
    %3098 = vmatpush1.bf16.msra.mxu0 %v2785
    %3099 = vmatprep.subr.bf16.mxu0 %v2790
    %3100 = vmatpush1.bf16.msra.mxu0 %v2789
    %3101 = vmatprep.subr.bf16.mxu0 %v2794
    %3102 = vmatpush1.bf16.msra.mxu0 %v2793
    %3103 = vmatprep.subr.bf16.mxu0 %v2798
    %3104 = vmatpush1.bf16.msra.mxu0 %v2797
    %3105 = vmatprep.mubr.bf16.mxu0 %v2198
    %3106 = vmatmul.mubr.bf16.gmra.mrb[0].mxu0 %v2197
    %v3107 = vpop.f32.mrb[0].mxu0
    %v3108 = vadd.f32 %v2342, %v3107
    %v3109 = vpop.f32.mrb[0].mxu0
    %v3110 = vadd.f32 %v2346, %v3109
    %v3111 = vpop.f32.mrb[0].mxu0
    %v3112 = vpop.f32.mrb[0].mxu0
    %3113 = vdwg.mxu0
    %3114 = vmatprep.subr.bf16.mxu0 %v2802
    %3115 = vmatpush1.bf16.msra.mxu0 %v2801
    %3116 = vmatprep.subr.bf16.mxu0 %v2806
    %3117 = vmatpush1.bf16.msra.mxu0 %v2805
    %3118 = vmatprep.subr.bf16.mxu0 %v2810
    %3119 = vmatpush1.bf16.msra.mxu0 %v2809
    %3120 = vmatprep.subr.bf16.mxu0 %v2814
    %3121 = vmatpush1.bf16.msra.mxu0 %v2813
    %3122 = vmatprep.subr.bf16.mxu0 %v2818
    %3123 = vmatpush1.bf16.msra.mxu0 %v2817
    %3124 = vmatprep.subr.bf16.mxu0 %v2822
    %3125 = vmatpush1.bf16.msra.mxu0 %v2821
    %3126 = vmatprep.subr.bf16.mxu0 %v2826
    %3127 = vmatpush1.bf16.msra.mxu0 %v2825
    %3128 = vmatprep.subr.bf16.mxu0 %v2830
    %3129 = vmatpush1.bf16.msra.mxu0 %v2829
    %3130 = vmatprep.subr.bf16.mxu0 %v2834
    %3131 = vmatpush1.bf16.msra.mxu0 %v2833
    %3132 = vmatprep.subr.bf16.mxu0 %v2838
    %3133 = vmatpush1.bf16.msra.mxu0 %v2837
    %3134 = vmatprep.subr.bf16.mxu0 %v2842
    %3135 = vmatpush1.bf16.msra.mxu0 %v2841
    %3136 = vmatprep.subr.bf16.mxu0 %v2846
    %3137 = vmatpush1.bf16.msra.mxu0 %v2845
    %3138 = vmatprep.subr.bf16.mxu0 %v2850
    %3139 = vmatpush1.bf16.msra.mxu0 %v2849
    %3140 = vmatprep.subr.bf16.mxu0 %v2854
    %3141 = vmatpush1.bf16.msra.mxu0 %v2853
    %3142 = vmatprep.subr.bf16.mxu0 %v2858
    %3143 = vmatpush1.bf16.msra.mxu0 %v2857
    %3144 = vmatprep.subr.bf16.mxu0 %v2862
    %3145 = vmatpush1.bf16.msra.mxu0 %v2861
    %3146 = vmatprep.mubr.bf16.mxu0 %v2200
    %3147 = vmatmul.mubr.bf16.gmra.mrb[0].mxu0 %v2199
    %v3148 = vpop.f32.mrb[0].mxu0
    %v3149 = vadd.f32 %v3108, %v3148
    %v3150 = vpop.f32.mrb[0].mxu0
    %v3151 = vadd.f32 %v3110, %v3150
    %v3152 = vpop.f32.mrb[0].mxu0
    %v3153 = vpop.f32.mrb[0].mxu0
    %3154 = vdwg.mxu0
    %v3155 = vpack.c.bf16 %v3067, %v3067
    %v3156 = vpack.c.bf16 %v3069, %v3069
    %v3157 = vpack.c.bf16 %v3149, %v3149
    %v3158 = vpack.c.bf16 %v3151, %v3151
    %v3159 = vmax.bf16 %v3155, 0
    %v3160 = vmax.bf16 %v3156, 0
    %v3161 = vmax.bf16 %v3157, 0
    %v3162 = vmax.bf16 %v3158, 0
    %v3163 = vld [vmem:[#allocation10] sm:$0xff]
    %v3164 = vld [vmem:[#allocation10 + $0x8] sm:$0xff]
    %v3165 = vld [vmem:[#allocation10 + $0x10] sm:$0xff]
    %v3166 = vld [vmem:[#allocation10 + $0x18] sm:$0xff]
    %v3167 = vld [vmem:[#allocation10 + $0x20] sm:$0xff]
    %v3168 = vld [vmem:[#allocation10 + $0x28] sm:$0xff]
    %v3169 = vld [vmem:[#allocation10 + $0x30] sm:$0xff]
    %v3170 = vld [vmem:[#allocation10 + $0x38] sm:$0xff]
    %v3171 = vld [vmem:[#allocation10 + $0x40] sm:$0xff]
    %v3172 = vld [vmem:[#allocation10 + $0x48] sm:$0xff]
    %v3173 = vld [vmem:[#allocation10 + $0x50] sm:$0xff]
    %v3174 = vld [vmem:[#allocation10 + $0x58] sm:$0xff]
    %v3175 = vld [vmem:[#allocation10 + $0x60] sm:$0xff]
    %v3176 = vld [vmem:[#allocation10 + $0x68] sm:$0xff]
    %v3177 = vld [vmem:[#allocation10 + $0x70] sm:$0xff]
    %v3178 = vld [vmem:[#allocation10 + $0x78] sm:$0xff]
    %v3179 = vld [vmem:[#allocation10 + $0x80] sm:$0xff]
    %v3180 = vld [vmem:[#allocation10 + $0x88] sm:$0xff]
    %v3181 = vld [vmem:[#allocation10 + $0x90] sm:$0xff]
    %v3182 = vld [vmem:[#allocation10 + $0x98] sm:$0xff]
    %v3183 = vld [vmem:[#allocation10 + $0xa0] sm:$0xff]
    %v3184 = vld [vmem:[#allocation10 + $0xa8] sm:$0xff]
    %v3185 = vld [vmem:[#allocation10 + $0xb0] sm:$0xff]
    %v3186 = vld [vmem:[#allocation10 + $0xb8] sm:$0xff]
    %v3187 = vld [vmem:[#allocation10 + $0xc0] sm:$0xff]
    %v3188 = vld [vmem:[#allocation10 + $0xc8] sm:$0xff]
    %v3189 = vld [vmem:[#allocation10 + $0xd0] sm:$0xff]
    %v3190 = vld [vmem:[#allocation10 + $0xd8] sm:$0xff]
    %v3191 = vld [vmem:[#allocation10 + $0xe0] sm:$0xff]
    %v3192 = vld [vmem:[#allocation10 + $0xe8] sm:$0xff]
    %v3193 = vld [vmem:[#allocation10 + $0xf0] sm:$0xff]
    %v3194 = vld [vmem:[#allocation10 + $0xf8] sm:$0xff]
    %v3195 = vld [vmem:[#allocation10 + $0x100] sm:$0xff]
    %v3196 = vld [vmem:[#allocation10 + $0x108] sm:$0xff]
    %v3197 = vld [vmem:[#allocation10 + $0x110] sm:$0xff]
    %v3198 = vld [vmem:[#allocation10 + $0x118] sm:$0xff]
    %v3199 = vld [vmem:[#allocation10 + $0x120] sm:$0xff]
    %v3200 = vld [vmem:[#allocation10 + $0x128] sm:$0xff]
    %v3201 = vld [vmem:[#allocation10 + $0x130] sm:$0xff]
    %v3202 = vld [vmem:[#allocation10 + $0x138] sm:$0xff]
    %v3203 = vld [vmem:[#allocation10 + $0x140] sm:$0xff]
    %v3204 = vld [vmem:[#allocation10 + $0x148] sm:$0xff]
    %v3205 = vld [vmem:[#allocation10 + $0x150] sm:$0xff]
    %v3206 = vld [vmem:[#allocation10 + $0x158] sm:$0xff]
    %v3207 = vld [vmem:[#allocation10 + $0x160] sm:$0xff]
    %v3208 = vld [vmem:[#allocation10 + $0x168] sm:$0xff]
    %v3209 = vld [vmem:[#allocation10 + $0x170] sm:$0xff]
    %v3210 = vld [vmem:[#allocation10 + $0x178] sm:$0xff]
    %v3211 = vld [vmem:[#allocation10 + $0x180] sm:$0xff]
    %v3212 = vld [vmem:[#allocation10 + $0x188] sm:$0xff]
    %v3213 = vld [vmem:[#allocation10 + $0x190] sm:$0xff]
    %v3214 = vld [vmem:[#allocation10 + $0x198] sm:$0xff]
    %v3215 = vld [vmem:[#allocation10 + $0x1a0] sm:$0xff]
    %v3216 = vld [vmem:[#allocation10 + $0x1a8] sm:$0xff]
    %v3217 = vld [vmem:[#allocation10 + $0x1b0] sm:$0xff]
    %v3218 = vld [vmem:[#allocation10 + $0x1b8] sm:$0xff]
    %v3219 = vld [vmem:[#allocation10 + $0x1c0] sm:$0xff]
    %v3220 = vld [vmem:[#allocation10 + $0x1c8] sm:$0xff]
    %v3221 = vld [vmem:[#allocation10 + $0x1d0] sm:$0xff]
    %v3222 = vld [vmem:[#allocation10 + $0x1d8] sm:$0xff]
    %v3223 = vld [vmem:[#allocation10 + $0x1e0] sm:$0xff]
    %v3224 = vld [vmem:[#allocation10 + $0x1e8] sm:$0xff]
    %v3225 = vld [vmem:[#allocation10 + $0x1f0] sm:$0xff]
    %v3226 = vld [vmem:[#allocation10 + $0x1f8] sm:$0xff]
    %v3227 = vld [vmem:[#allocation10 + $0x200] sm:$0xff]
    %v3228 = vld [vmem:[#allocation10 + $0x208] sm:$0xff]
    %v3229 = vld [vmem:[#allocation10 + $0x210] sm:$0xff]
    %v3230 = vld [vmem:[#allocation10 + $0x218] sm:$0xff]
    %v3231 = vld [vmem:[#allocation10 + $0x220] sm:$0xff]
    %v3232 = vld [vmem:[#allocation10 + $0x228] sm:$0xff]
    %v3233 = vld [vmem:[#allocation10 + $0x230] sm:$0xff]
    %v3234 = vld [vmem:[#allocation10 + $0x238] sm:$0xff]
    %v3235 = vld [vmem:[#allocation10 + $0x240] sm:$0xff]
    %v3236 = vld [vmem:[#allocation10 + $0x248] sm:$0xff]
    %v3237 = vld [vmem:[#allocation10 + $0x250] sm:$0xff]
    %v3238 = vld [vmem:[#allocation10 + $0x258] sm:$0xff]
    %v3239 = vld [vmem:[#allocation10 + $0x260] sm:$0xff]
    %v3240 = vld [vmem:[#allocation10 + $0x268] sm:$0xff]
    %v3241 = vld [vmem:[#allocation10 + $0x270] sm:$0xff]
    %v3242 = vld [vmem:[#allocation10 + $0x278] sm:$0xff]
    %v3243 = vld [vmem:[#allocation10 + $0x280] sm:$0xff]
    %v3244 = vld [vmem:[#allocation10 + $0x288] sm:$0xff]
    %v3245 = vld [vmem:[#allocation10 + $0x290] sm:$0xff]
    %v3246 = vld [vmem:[#allocation10 + $0x298] sm:$0xff]
    %v3247 = vld [vmem:[#allocation10 + $0x2a0] sm:$0xff]
    %v3248 = vld [vmem:[#allocation10 + $0x2a8] sm:$0xff]
    %v3249 = vld [vmem:[#allocation10 + $0x2b0] sm:$0xff]
    %v3250 = vld [vmem:[#allocation10 + $0x2b8] sm:$0xff]
    %v3251 = vld [vmem:[#allocation10 + $0x2c0] sm:$0xff]
    %v3252 = vld [vmem:[#allocation10 + $0x2c8] sm:$0xff]
    %v3253 = vld [vmem:[#allocation10 + $0x2d0] sm:$0xff]
    %v3254 = vld [vmem:[#allocation10 + $0x2d8] sm:$0xff]
    %v3255 = vld [vmem:[#allocation10 + $0x2e0] sm:$0xff]
    %v3256 = vld [vmem:[#allocation10 + $0x2e8] sm:$0xff]
    %v3257 = vld [vmem:[#allocation10 + $0x2f0] sm:$0xff]
    %v3258 = vld [vmem:[#allocation10 + $0x2f8] sm:$0xff]
    %v3259 = vld [vmem:[#allocation10 + $0x300] sm:$0xff]
    %v3260 = vld [vmem:[#allocation10 + $0x308] sm:$0xff]
    %v3261 = vld [vmem:[#allocation10 + $0x310] sm:$0xff]
    %v3262 = vld [vmem:[#allocation10 + $0x318] sm:$0xff]
    %v3263 = vld [vmem:[#allocation10 + $0x320] sm:$0xff]
    %v3264 = vld [vmem:[#allocation10 + $0x328] sm:$0xff]
    %v3265 = vld [vmem:[#allocation10 + $0x330] sm:$0xff]
    %v3266 = vld [vmem:[#allocation10 + $0x338] sm:$0xff]
    %v3267 = vld [vmem:[#allocation10 + $0x340] sm:$0xff]
    %v3268 = vld [vmem:[#allocation10 + $0x348] sm:$0xff]
    %v3269 = vld [vmem:[#allocation10 + $0x350] sm:$0xff]
    %v3270 = vld [vmem:[#allocation10 + $0x358] sm:$0xff]
    %v3271 = vld [vmem:[#allocation10 + $0x360] sm:$0xff]
    %v3272 = vld [vmem:[#allocation10 + $0x368] sm:$0xff]
    %v3273 = vld [vmem:[#allocation10 + $0x370] sm:$0xff]
    %v3274 = vld [vmem:[#allocation10 + $0x378] sm:$0xff]
    %v3275 = vld [vmem:[#allocation10 + $0x380] sm:$0xff]
    %v3276 = vld [vmem:[#allocation10 + $0x388] sm:$0xff]
    %v3277 = vld [vmem:[#allocation10 + $0x390] sm:$0xff]
    %v3278 = vld [vmem:[#allocation10 + $0x398] sm:$0xff]
    %v3279 = vld [vmem:[#allocation10 + $0x3a0] sm:$0xff]
    %v3280 = vld [vmem:[#allocation10 + $0x3a8] sm:$0xff]
    %v3281 = vld [vmem:[#allocation10 + $0x3b0] sm:$0xff]
    %v3282 = vld [vmem:[#allocation10 + $0x3b8] sm:$0xff]
    %v3283 = vld [vmem:[#allocation10 + $0x3c0] sm:$0xff]
    %v3284 = vld [vmem:[#allocation10 + $0x3c8] sm:$0xff]
    %v3285 = vld [vmem:[#allocation10 + $0x3d0] sm:$0xff]
    %v3286 = vld [vmem:[#allocation10 + $0x3d8] sm:$0xff]
    %v3287 = vld [vmem:[#allocation10 + $0x3e0] sm:$0xff]
    %v3288 = vld [vmem:[#allocation10 + $0x3e8] sm:$0xff]
    %v3289 = vld [vmem:[#allocation10 + $0x3f0] sm:$0xff]
    %v3290 = vld [vmem:[#allocation10 + $0x3f8] sm:$0xff]
    %v3291 = vld [vmem:[%s7] sm:$0xf]
    %v3293 = vlaneseq
    %v3294 = vshrl.u32 %v3293, 7
    %v3295 = vsub.s32 0, %v3294
    %v3296 = vrot.slane %v3291, %v3295
    %v3297 = vlaneseq
    %v3298 = vshrl.u32 %v3297, 7
    %v3299 = vsub.s32 1, %v3298
    %v3300 = vrot.slane %v3291, %v3299
    %v3301 = vlaneseq
    %v3302 = vshrl.u32 %v3301, 7
    %v3303 = vsub.s32 2, %v3302
    %v3304 = vrot.slane %v3291, %v3303
    %v3305 = vlaneseq
    %v3306 = vshrl.u32 %v3305, 7
    %v3307 = vsub.s32 3, %v3306
    %v3308 = vrot.slane %v3291, %v3307
    %v3441 = vunpack.c.l.b16 %v3163
    %v3442 = vunpack.c.h.b16 %v3163
    %v3443 = vunpack.c.l.b16 %v3164
    %v3444 = vunpack.c.h.b16 %v3164
    %v3445 = vunpack.c.l.b16 %v3165
    %v3446 = vunpack.c.h.b16 %v3165
    %v3447 = vunpack.c.l.b16 %v3166
    %v3448 = vunpack.c.h.b16 %v3166
    %v3449 = vunpack.c.l.b16 %v3167
    %v3450 = vunpack.c.h.b16 %v3167
    %v3451 = vunpack.c.l.b16 %v3168
    %v3452 = vunpack.c.h.b16 %v3168
    %v3453 = vunpack.c.l.b16 %v3169
    %v3454 = vunpack.c.h.b16 %v3169
    %v3455 = vunpack.c.l.b16 %v3170
    %v3456 = vunpack.c.h.b16 %v3170
    %v3457 = vunpack.c.l.b16 %v3171
    %v3458 = vunpack.c.h.b16 %v3171
    %v3459 = vunpack.c.l.b16 %v3172
    %v3460 = vunpack.c.h.b16 %v3172
    %v3461 = vunpack.c.l.b16 %v3173
    %v3462 = vunpack.c.h.b16 %v3173
    %v3463 = vunpack.c.l.b16 %v3174
    %v3464 = vunpack.c.h.b16 %v3174
    %v3465 = vunpack.c.l.b16 %v3175
    %v3466 = vunpack.c.h.b16 %v3175
    %v3467 = vunpack.c.l.b16 %v3176
    %v3468 = vunpack.c.h.b16 %v3176
    %v3469 = vunpack.c.l.b16 %v3177
    %v3470 = vunpack.c.h.b16 %v3177
    %v3471 = vunpack.c.l.b16 %v3178
    %v3472 = vunpack.c.h.b16 %v3178
    %v3473 = vunpack.c.l.b16 %v3179
    %v3474 = vunpack.c.h.b16 %v3179
    %v3475 = vunpack.c.l.b16 %v3180
    %v3476 = vunpack.c.h.b16 %v3180
    %v3477 = vunpack.c.l.b16 %v3181
    %v3478 = vunpack.c.h.b16 %v3181
    %v3479 = vunpack.c.l.b16 %v3182
    %v3480 = vunpack.c.h.b16 %v3182
    %v3481 = vunpack.c.l.b16 %v3183
    %v3482 = vunpack.c.h.b16 %v3183
    %v3483 = vunpack.c.l.b16 %v3184
    %v3484 = vunpack.c.h.b16 %v3184
    %v3485 = vunpack.c.l.b16 %v3185
    %v3486 = vunpack.c.h.b16 %v3185
    %v3487 = vunpack.c.l.b16 %v3186
    %v3488 = vunpack.c.h.b16 %v3186
    %v3489 = vunpack.c.l.b16 %v3187
    %v3490 = vunpack.c.h.b16 %v3187
    %v3491 = vunpack.c.l.b16 %v3188
    %v3492 = vunpack.c.h.b16 %v3188
    %v3493 = vunpack.c.l.b16 %v3189
    %v3494 = vunpack.c.h.b16 %v3189
    %v3495 = vunpack.c.l.b16 %v3190
    %v3496 = vunpack.c.h.b16 %v3190
    %v3497 = vunpack.c.l.b16 %v3191
    %v3498 = vunpack.c.h.b16 %v3191
    %v3499 = vunpack.c.l.b16 %v3192
    %v3500 = vunpack.c.h.b16 %v3192
    %v3501 = vunpack.c.l.b16 %v3193
    %v3502 = vunpack.c.h.b16 %v3193
    %v3503 = vunpack.c.l.b16 %v3194
    %v3504 = vunpack.c.h.b16 %v3194
    %v3505 = vunpack.c.l.b16 %v3195
    %v3506 = vunpack.c.h.b16 %v3195
    %v3507 = vunpack.c.l.b16 %v3196
    %v3508 = vunpack.c.h.b16 %v3196
    %v3509 = vunpack.c.l.b16 %v3197
    %v3510 = vunpack.c.h.b16 %v3197
    %v3511 = vunpack.c.l.b16 %v3198
    %v3512 = vunpack.c.h.b16 %v3198
    %v3513 = vunpack.c.l.b16 %v3199
    %v3514 = vunpack.c.h.b16 %v3199
    %v3515 = vunpack.c.l.b16 %v3200
    %v3516 = vunpack.c.h.b16 %v3200
    %v3517 = vunpack.c.l.b16 %v3201
    %v3518 = vunpack.c.h.b16 %v3201
    %v3519 = vunpack.c.l.b16 %v3202
    %v3520 = vunpack.c.h.b16 %v3202
    %v3521 = vunpack.c.l.b16 %v3203
    %v3522 = vunpack.c.h.b16 %v3203
    %v3523 = vunpack.c.l.b16 %v3204
    %v3524 = vunpack.c.h.b16 %v3204
    %v3525 = vunpack.c.l.b16 %v3205
    %v3526 = vunpack.c.h.b16 %v3205
    %v3527 = vunpack.c.l.b16 %v3206
    %v3528 = vunpack.c.h.b16 %v3206
    %v3529 = vunpack.c.l.b16 %v3207
    %v3530 = vunpack.c.h.b16 %v3207
    %v3531 = vunpack.c.l.b16 %v3208
    %v3532 = vunpack.c.h.b16 %v3208
    %v3533 = vunpack.c.l.b16 %v3209
    %v3534 = vunpack.c.h.b16 %v3209
    %v3535 = vunpack.c.l.b16 %v3210
    %v3536 = vunpack.c.h.b16 %v3210
    %v3537 = vunpack.c.l.b16 %v3211
    %v3538 = vunpack.c.h.b16 %v3211
    %v3539 = vunpack.c.l.b16 %v3212
    %v3540 = vunpack.c.h.b16 %v3212
    %v3541 = vunpack.c.l.b16 %v3213
    %v3542 = vunpack.c.h.b16 %v3213
    %v3543 = vunpack.c.l.b16 %v3214
    %v3544 = vunpack.c.h.b16 %v3214
    %v3545 = vunpack.c.l.b16 %v3215
    %v3546 = vunpack.c.h.b16 %v3215
    %v3547 = vunpack.c.l.b16 %v3216
    %v3548 = vunpack.c.h.b16 %v3216
    %v3549 = vunpack.c.l.b16 %v3217
    %v3550 = vunpack.c.h.b16 %v3217
    %v3551 = vunpack.c.l.b16 %v3218
    %v3552 = vunpack.c.h.b16 %v3218
    %v3553 = vunpack.c.l.b16 %v3219
    %v3554 = vunpack.c.h.b16 %v3219
    %v3555 = vunpack.c.l.b16 %v3220
    %v3556 = vunpack.c.h.b16 %v3220
    %v3557 = vunpack.c.l.b16 %v3221
    %v3558 = vunpack.c.h.b16 %v3221
    %v3559 = vunpack.c.l.b16 %v3222
    %v3560 = vunpack.c.h.b16 %v3222
    %v3561 = vunpack.c.l.b16 %v3223
    %v3562 = vunpack.c.h.b16 %v3223
    %v3563 = vunpack.c.l.b16 %v3224
    %v3564 = vunpack.c.h.b16 %v3224
    %v3565 = vunpack.c.l.b16 %v3225
    %v3566 = vunpack.c.h.b16 %v3225
    %v3567 = vunpack.c.l.b16 %v3226
    %v3568 = vunpack.c.h.b16 %v3226
    %v3569 = vunpack.c.l.b16 %v3227
    %v3570 = vunpack.c.h.b16 %v3227
    %v3571 = vunpack.c.l.b16 %v3228
    %v3572 = vunpack.c.h.b16 %v3228
    %v3573 = vunpack.c.l.b16 %v3229
    %v3574 = vunpack.c.h.b16 %v3229
    %v3575 = vunpack.c.l.b16 %v3230
    %v3576 = vunpack.c.h.b16 %v3230
    %v3577 = vunpack.c.l.b16 %v3231
    %v3578 = vunpack.c.h.b16 %v3231
    %v3579 = vunpack.c.l.b16 %v3232
    %v3580 = vunpack.c.h.b16 %v3232
    %v3581 = vunpack.c.l.b16 %v3233
    %v3582 = vunpack.c.h.b16 %v3233
    %v3583 = vunpack.c.l.b16 %v3234
    %v3584 = vunpack.c.h.b16 %v3234
    %v3585 = vunpack.c.l.b16 %v3235
    %v3586 = vunpack.c.h.b16 %v3235
    %v3587 = vunpack.c.l.b16 %v3236
    %v3588 = vunpack.c.h.b16 %v3236
    %v3589 = vunpack.c.l.b16 %v3237
    %v3590 = vunpack.c.h.b16 %v3237
    %v3591 = vunpack.c.l.b16 %v3238
    %v3592 = vunpack.c.h.b16 %v3238
    %v3593 = vunpack.c.l.b16 %v3239
    %v3594 = vunpack.c.h.b16 %v3239
    %v3595 = vunpack.c.l.b16 %v3240
    %v3596 = vunpack.c.h.b16 %v3240
    %v3597 = vunpack.c.l.b16 %v3241
    %v3598 = vunpack.c.h.b16 %v3241
    %v3599 = vunpack.c.l.b16 %v3242
    %v3600 = vunpack.c.h.b16 %v3242
    %v3601 = vunpack.c.l.b16 %v3243
    %v3602 = vunpack.c.h.b16 %v3243
    %v3603 = vunpack.c.l.b16 %v3244
    %v3604 = vunpack.c.h.b16 %v3244
    %v3605 = vunpack.c.l.b16 %v3245
    %v3606 = vunpack.c.h.b16 %v3245
    %v3607 = vunpack.c.l.b16 %v3246
    %v3608 = vunpack.c.h.b16 %v3246
    %v3609 = vunpack.c.l.b16 %v3247
    %v3610 = vunpack.c.h.b16 %v3247
    %v3611 = vunpack.c.l.b16 %v3248
    %v3612 = vunpack.c.h.b16 %v3248
    %v3613 = vunpack.c.l.b16 %v3249
    %v3614 = vunpack.c.h.b16 %v3249
    %v3615 = vunpack.c.l.b16 %v3250
    %v3616 = vunpack.c.h.b16 %v3250
    %v3617 = vunpack.c.l.b16 %v3251
    %v3618 = vunpack.c.h.b16 %v3251
    %v3619 = vunpack.c.l.b16 %v3252
    %v3620 = vunpack.c.h.b16 %v3252
    %v3621 = vunpack.c.l.b16 %v3253
    %v3622 = vunpack.c.h.b16 %v3253
    %v3623 = vunpack.c.l.b16 %v3254
    %v3624 = vunpack.c.h.b16 %v3254
    %v3625 = vunpack.c.l.b16 %v3255
    %v3626 = vunpack.c.h.b16 %v3255
    %v3627 = vunpack.c.l.b16 %v3256
    %v3628 = vunpack.c.h.b16 %v3256
    %v3629 = vunpack.c.l.b16 %v3257
    %v3630 = vunpack.c.h.b16 %v3257
    %v3631 = vunpack.c.l.b16 %v3258
    %v3632 = vunpack.c.h.b16 %v3258
    %v3633 = vunpack.c.l.b16 %v3259
    %v3634 = vunpack.c.h.b16 %v3259
    %v3635 = vunpack.c.l.b16 %v3260
    %v3636 = vunpack.c.h.b16 %v3260
    %v3637 = vunpack.c.l.b16 %v3261
    %v3638 = vunpack.c.h.b16 %v3261
    %v3639 = vunpack.c.l.b16 %v3262
    %v3640 = vunpack.c.h.b16 %v3262
    %v3641 = vunpack.c.l.b16 %v3263
    %v3642 = vunpack.c.h.b16 %v3263
    %v3643 = vunpack.c.l.b16 %v3264
    %v3644 = vunpack.c.h.b16 %v3264
    %v3645 = vunpack.c.l.b16 %v3265
    %v3646 = vunpack.c.h.b16 %v3265
    %v3647 = vunpack.c.l.b16 %v3266
    %v3648 = vunpack.c.h.b16 %v3266
    %v3649 = vunpack.c.l.b16 %v3267
    %v3650 = vunpack.c.h.b16 %v3267
    %v3651 = vunpack.c.l.b16 %v3268
    %v3652 = vunpack.c.h.b16 %v3268
    %v3653 = vunpack.c.l.b16 %v3269
    %v3654 = vunpack.c.h.b16 %v3269
    %v3655 = vunpack.c.l.b16 %v3270
    %v3656 = vunpack.c.h.b16 %v3270
    %v3657 = vunpack.c.l.b16 %v3271
    %v3658 = vunpack.c.h.b16 %v3271
    %v3659 = vunpack.c.l.b16 %v3272
    %v3660 = vunpack.c.h.b16 %v3272
    %v3661 = vunpack.c.l.b16 %v3273
    %v3662 = vunpack.c.h.b16 %v3273
    %v3663 = vunpack.c.l.b16 %v3274
    %v3664 = vunpack.c.h.b16 %v3274
    %v3665 = vunpack.c.l.b16 %v3275
    %v3666 = vunpack.c.h.b16 %v3275
    %v3667 = vunpack.c.l.b16 %v3276
    %v3668 = vunpack.c.h.b16 %v3276
    %v3669 = vunpack.c.l.b16 %v3277
    %v3670 = vunpack.c.h.b16 %v3277
    %v3671 = vunpack.c.l.b16 %v3278
    %v3672 = vunpack.c.h.b16 %v3278
    %v3673 = vunpack.c.l.b16 %v3279
    %v3674 = vunpack.c.h.b16 %v3279
    %v3675 = vunpack.c.l.b16 %v3280
    %v3676 = vunpack.c.h.b16 %v3280
    %v3677 = vunpack.c.l.b16 %v3281
    %v3678 = vunpack.c.h.b16 %v3281
    %v3679 = vunpack.c.l.b16 %v3282
    %v3680 = vunpack.c.h.b16 %v3282
    %v3681 = vunpack.c.l.b16 %v3283
    %v3682 = vunpack.c.h.b16 %v3283
    %v3683 = vunpack.c.l.b16 %v3284
    %v3684 = vunpack.c.h.b16 %v3284
    %v3685 = vunpack.c.l.b16 %v3285
    %v3686 = vunpack.c.h.b16 %v3285
    %v3687 = vunpack.c.l.b16 %v3286
    %v3688 = vunpack.c.h.b16 %v3286
    %v3689 = vunpack.c.l.b16 %v3287
    %v3690 = vunpack.c.h.b16 %v3287
    %v3691 = vunpack.c.l.b16 %v3288
    %v3692 = vunpack.c.h.b16 %v3288
    %v3693 = vunpack.c.l.b16 %v3289
    %v3694 = vunpack.c.h.b16 %v3289
    %v3695 = vunpack.c.l.b16 %v3290
    %v3696 = vunpack.c.h.b16 %v3290
    %v3697 = vpack.c.b16 %v3445, %v3441
    %v3698 = vpack.c.b16 %v3446, %v3442
    %v3699 = vpack.c.b16 %v3447, %v3443
    %v3700 = vpack.c.b16 %v3448, %v3444
    %v3701 = vpack.c.b16 %v3453, %v3449
    %v3702 = vpack.c.b16 %v3454, %v3450
    %v3703 = vpack.c.b16 %v3455, %v3451
    %v3704 = vpack.c.b16 %v3456, %v3452
    %v3705 = vpack.c.b16 %v3461, %v3457
    %v3706 = vpack.c.b16 %v3462, %v3458
    %v3707 = vpack.c.b16 %v3463, %v3459
    %v3708 = vpack.c.b16 %v3464, %v3460
    %v3709 = vpack.c.b16 %v3469, %v3465
    %v3710 = vpack.c.b16 %v3470, %v3466
    %v3711 = vpack.c.b16 %v3471, %v3467
    %v3712 = vpack.c.b16 %v3472, %v3468
    %v3713 = vpack.c.b16 %v3477, %v3473
    %v3714 = vpack.c.b16 %v3478, %v3474
    %v3715 = vpack.c.b16 %v3479, %v3475
    %v3716 = vpack.c.b16 %v3480, %v3476
    %v3717 = vpack.c.b16 %v3485, %v3481
    %v3718 = vpack.c.b16 %v3486, %v3482
    %v3719 = vpack.c.b16 %v3487, %v3483
    %v3720 = vpack.c.b16 %v3488, %v3484
    %v3721 = vpack.c.b16 %v3493, %v3489
    %v3722 = vpack.c.b16 %v3494, %v3490
    %v3723 = vpack.c.b16 %v3495, %v3491
    %v3724 = vpack.c.b16 %v3496, %v3492
    %v3725 = vpack.c.b16 %v3501, %v3497
    %v3726 = vpack.c.b16 %v3502, %v3498
    %v3727 = vpack.c.b16 %v3503, %v3499
    %v3728 = vpack.c.b16 %v3504, %v3500
    %v3729 = vpack.c.b16 %v3509, %v3505
    %v3730 = vpack.c.b16 %v3510, %v3506
    %v3731 = vpack.c.b16 %v3511, %v3507
    %v3732 = vpack.c.b16 %v3512, %v3508
    %v3733 = vpack.c.b16 %v3517, %v3513
    %v3734 = vpack.c.b16 %v3518, %v3514
    %v3735 = vpack.c.b16 %v3519, %v3515
    %v3736 = vpack.c.b16 %v3520, %v3516
    %v3737 = vpack.c.b16 %v3525, %v3521
    %v3738 = vpack.c.b16 %v3526, %v3522
    %v3739 = vpack.c.b16 %v3527, %v3523
    %v3740 = vpack.c.b16 %v3528, %v3524
    %v3741 = vpack.c.b16 %v3533, %v3529
    %v3742 = vpack.c.b16 %v3534, %v3530
    %v3743 = vpack.c.b16 %v3535, %v3531
    %v3744 = vpack.c.b16 %v3536, %v3532
    %v3745 = vpack.c.b16 %v3541, %v3537
    %v3746 = vpack.c.b16 %v3542, %v3538
    %v3747 = vpack.c.b16 %v3543, %v3539
    %v3748 = vpack.c.b16 %v3544, %v3540
    %v3749 = vpack.c.b16 %v3549, %v3545
    %v3750 = vpack.c.b16 %v3550, %v3546
    %v3751 = vpack.c.b16 %v3551, %v3547
    %v3752 = vpack.c.b16 %v3552, %v3548
    %v3753 = vpack.c.b16 %v3557, %v3553
    %v3754 = vpack.c.b16 %v3558, %v3554
    %v3755 = vpack.c.b16 %v3559, %v3555
    %v3756 = vpack.c.b16 %v3560, %v3556
    %v3757 = vpack.c.b16 %v3565, %v3561
    %v3758 = vpack.c.b16 %v3566, %v3562
    %v3759 = vpack.c.b16 %v3567, %v3563
    %v3760 = vpack.c.b16 %v3568, %v3564
    %v3761 = vpack.c.b16 %v3573, %v3569
    %v3762 = vpack.c.b16 %v3574, %v3570
    %v3763 = vpack.c.b16 %v3575, %v3571
    %v3764 = vpack.c.b16 %v3576, %v3572
    %v3765 = vpack.c.b16 %v3581, %v3577
    %v3766 = vpack.c.b16 %v3582, %v3578
    %v3767 = vpack.c.b16 %v3583, %v3579
    %v3768 = vpack.c.b16 %v3584, %v3580
    %v3769 = vpack.c.b16 %v3589, %v3585
    %v3770 = vpack.c.b16 %v3590, %v3586
    %v3771 = vpack.c.b16 %v3591, %v3587
    %v3772 = vpack.c.b16 %v3592, %v3588
    %v3773 = vpack.c.b16 %v3597, %v3593
    %v3774 = vpack.c.b16 %v3598, %v3594
    %v3775 = vpack.c.b16 %v3599, %v3595
    %v3776 = vpack.c.b16 %v3600, %v3596
    %v3777 = vpack.c.b16 %v3605, %v3601
    %v3778 = vpack.c.b16 %v3606, %v3602
    %v3779 = vpack.c.b16 %v3607, %v3603
    %v3780 = vpack.c.b16 %v3608, %v3604
    %v3781 = vpack.c.b16 %v3613, %v3609
    %v3782 = vpack.c.b16 %v3614, %v3610
    %v3783 = vpack.c.b16 %v3615, %v3611
    %v3784 = vpack.c.b16 %v3616, %v3612
    %v3785 = vpack.c.b16 %v3621, %v3617
    %v3786 = vpack.c.b16 %v3622, %v3618
    %v3787 = vpack.c.b16 %v3623, %v3619
    %v3788 = vpack.c.b16 %v3624, %v3620
    %v3789 = vpack.c.b16 %v3629, %v3625
    %v3790 = vpack.c.b16 %v3630, %v3626
    %v3791 = vpack.c.b16 %v3631, %v3627
    %v3792 = vpack.c.b16 %v3632, %v3628
    %v3793 = vpack.c.b16 %v3637, %v3633
    %v3794 = vpack.c.b16 %v3638, %v3634
    %v3795 = vpack.c.b16 %v3639, %v3635
    %v3796 = vpack.c.b16 %v3640, %v3636
    %v3797 = vpack.c.b16 %v3645, %v3641
    %v3798 = vpack.c.b16 %v3646, %v3642
    %v3799 = vpack.c.b16 %v3647, %v3643
    %v3800 = vpack.c.b16 %v3648, %v3644
    %v3801 = vpack.c.b16 %v3653, %v3649
    %v3802 = vpack.c.b16 %v3654, %v3650
    %v3803 = vpack.c.b16 %v3655, %v3651
    %v3804 = vpack.c.b16 %v3656, %v3652
    %v3805 = vpack.c.b16 %v3661, %v3657
    %v3806 = vpack.c.b16 %v3662, %v3658
    %v3807 = vpack.c.b16 %v3663, %v3659
    %v3808 = vpack.c.b16 %v3664, %v3660
    %v3809 = vpack.c.b16 %v3669, %v3665
    %v3810 = vpack.c.b16 %v3670, %v3666
    %v3811 = vpack.c.b16 %v3671, %v3667
    %v3812 = vpack.c.b16 %v3672, %v3668
    %v3813 = vpack.c.b16 %v3677, %v3673
    %v3814 = vpack.c.b16 %v3678, %v3674
    %v3815 = vpack.c.b16 %v3679, %v3675
    %v3816 = vpack.c.b16 %v3680, %v3676
    %v3817 = vpack.c.b16 %v3685, %v3681
    %v3818 = vpack.c.b16 %v3686, %v3682
    %v3819 = vpack.c.b16 %v3687, %v3683
    %v3820 = vpack.c.b16 %v3688, %v3684
    %v3821 = vpack.c.b16 %v3693, %v3689
    %v3822 = vpack.c.b16 %v3694, %v3690
    %v3823 = vpack.c.b16 %v3695, %v3691
    %v3824 = vpack.c.b16 %v3696, %v3692
    %3953 = vmatprep.subr.bf16.mxu0 %v3698
    %3954 = vmatpush1.bf16.msra.mxu0 %v3697
    %3955 = vmatprep.subr.bf16.mxu0 %v3702
    %3956 = vmatpush1.bf16.msra.mxu0 %v3701
    %3957 = vmatprep.subr.bf16.mxu0 %v3706
    %3958 = vmatpush1.bf16.msra.mxu0 %v3705
    %3959 = vmatprep.subr.bf16.mxu0 %v3710
    %3960 = vmatpush1.bf16.msra.mxu0 %v3709
    %3961 = vmatprep.subr.bf16.mxu0 %v3714
    %3962 = vmatpush1.bf16.msra.mxu0 %v3713
    %3963 = vmatprep.subr.bf16.mxu0 %v3718
    %3964 = vmatpush1.bf16.msra.mxu0 %v3717
    %3965 = vmatprep.subr.bf16.mxu0 %v3722
    %3966 = vmatpush1.bf16.msra.mxu0 %v3721
    %3967 = vmatprep.subr.bf16.mxu0 %v3726
    %3968 = vmatpush1.bf16.msra.mxu0 %v3725
    %3969 = vmatprep.subr.bf16.mxu0 %v3730
    %3970 = vmatpush1.bf16.msra.mxu0 %v3729
    %3971 = vmatprep.subr.bf16.mxu0 %v3734
    %3972 = vmatpush1.bf16.msra.mxu0 %v3733
    %3973 = vmatprep.subr.bf16.mxu0 %v3738
    %3974 = vmatpush1.bf16.msra.mxu0 %v3737
    %3975 = vmatprep.subr.bf16.mxu0 %v3742
    %3976 = vmatpush1.bf16.msra.mxu0 %v3741
    %3977 = vmatprep.subr.bf16.mxu0 %v3746
    %3978 = vmatpush1.bf16.msra.mxu0 %v3745
    %3979 = vmatprep.subr.bf16.mxu0 %v3750
    %3980 = vmatpush1.bf16.msra.mxu0 %v3749
    %3981 = vmatprep.subr.bf16.mxu0 %v3754
    %3982 = vmatpush1.bf16.msra.mxu0 %v3753
    %3983 = vmatprep.subr.bf16.mxu0 %v3758
    %3984 = vmatpush1.bf16.msra.mxu0 %v3757
    %3985 = vmatprep.mubr.bf16.mxu0 %v3160
    %3986 = vmatmul.mubr.bf16.gmra.mrb[0].mxu0 %v3159
    %v3987 = vpop.f32.mrb[0].mxu0
    %v3988 = vadd.f32 %v3296, %v3987
    %v3989 = vpop.f32.mrb[0].mxu0
    %v3990 = vadd.f32 %v3300, %v3989
    %v3991 = vpop.f32.mrb[0].mxu0
    %v3992 = vpop.f32.mrb[0].mxu0
    %3993 = vdwg.mxu0
    %3994 = vmatprep.subr.bf16.mxu0 %v3762
    %3995 = vmatpush1.bf16.msra.mxu0 %v3761
    %3996 = vmatprep.subr.bf16.mxu0 %v3766
    %3997 = vmatpush1.bf16.msra.mxu0 %v3765
    %3998 = vmatprep.subr.bf16.mxu0 %v3770
    %3999 = vmatpush1.bf16.msra.mxu0 %v3769
    %4000 = vmatprep.subr.bf16.mxu0 %v3774
    %4001 = vmatpush1.bf16.msra.mxu0 %v3773
    %4002 = vmatprep.subr.bf16.mxu0 %v3778
    %4003 = vmatpush1.bf16.msra.mxu0 %v3777
    %4004 = vmatprep.subr.bf16.mxu0 %v3782
    %4005 = vmatpush1.bf16.msra.mxu0 %v3781
    %4006 = vmatprep.subr.bf16.mxu0 %v3786
    %4007 = vmatpush1.bf16.msra.mxu0 %v3785
    %4008 = vmatprep.subr.bf16.mxu0 %v3790
    %4009 = vmatpush1.bf16.msra.mxu0 %v3789
    %4010 = vmatprep.subr.bf16.mxu0 %v3794
    %4011 = vmatpush1.bf16.msra.mxu0 %v3793
    %4012 = vmatprep.subr.bf16.mxu0 %v3798
    %4013 = vmatpush1.bf16.msra.mxu0 %v3797
    %4014 = vmatprep.subr.bf16.mxu0 %v3802
    %4015 = vmatpush1.bf16.msra.mxu0 %v3801
    %4016 = vmatprep.subr.bf16.mxu0 %v3806
    %4017 = vmatpush1.bf16.msra.mxu0 %v3805
    %4018 = vmatprep.subr.bf16.mxu0 %v3810
    %4019 = vmatpush1.bf16.msra.mxu0 %v3809
    %4020 = vmatprep.subr.bf16.mxu0 %v3814
    %4021 = vmatpush1.bf16.msra.mxu0 %v3813
    %4022 = vmatprep.subr.bf16.mxu0 %v3818
    %4023 = vmatpush1.bf16.msra.mxu0 %v3817
    %4024 = vmatprep.subr.bf16.mxu0 %v3822
    %4025 = vmatpush1.bf16.msra.mxu0 %v3821
    %4026 = vmatprep.mubr.bf16.mxu0 %v3162
    %4027 = vmatmul.mubr.bf16.gmra.mrb[0].mxu0 %v3161
    %v4028 = vpop.f32.mrb[0].mxu0
    %v4029 = vadd.f32 %v3988, %v4028
    %v4030 = vpop.f32.mrb[0].mxu0
    %v4031 = vadd.f32 %v3990, %v4030
    %v4032 = vpop.f32.mrb[0].mxu0
    %v4033 = vpop.f32.mrb[0].mxu0
    %4034 = vdwg.mxu0
    %4035 = vmatprep.subr.bf16.mxu0 %v3700
    %4036 = vmatpush1.bf16.msra.mxu0 %v3699
    %4037 = vmatprep.subr.bf16.mxu0 %v3704
    %4038 = vmatpush1.bf16.msra.mxu0 %v3703
    %4039 = vmatprep.subr.bf16.mxu0 %v3708
    %4040 = vmatpush1.bf16.msra.mxu0 %v3707
    %4041 = vmatprep.subr.bf16.mxu0 %v3712
    %4042 = vmatpush1.bf16.msra.mxu0 %v3711
    %4043 = vmatprep.subr.bf16.mxu0 %v3716
    %4044 = vmatpush1.bf16.msra.mxu0 %v3715
    %4045 = vmatprep.subr.bf16.mxu0 %v3720
    %4046 = vmatpush1.bf16.msra.mxu0 %v3719
    %4047 = vmatprep.subr.bf16.mxu0 %v3724
    %4048 = vmatpush1.bf16.msra.mxu0 %v3723
    %4049 = vmatprep.subr.bf16.mxu0 %v3728
    %4050 = vmatpush1.bf16.msra.mxu0 %v3727
    %4051 = vmatprep.subr.bf16.mxu0 %v3732
    %4052 = vmatpush1.bf16.msra.mxu0 %v3731
    %4053 = vmatprep.subr.bf16.mxu0 %v3736
    %4054 = vmatpush1.bf16.msra.mxu0 %v3735
    %4055 = vmatprep.subr.bf16.mxu0 %v3740
    %4056 = vmatpush1.bf16.msra.mxu0 %v3739
    %4057 = vmatprep.subr.bf16.mxu0 %v3744
    %4058 = vmatpush1.bf16.msra.mxu0 %v3743
    %4059 = vmatprep.subr.bf16.mxu0 %v3748
    %4060 = vmatpush1.bf16.msra.mxu0 %v3747
    %4061 = vmatprep.subr.bf16.mxu0 %v3752
    %4062 = vmatpush1.bf16.msra.mxu0 %v3751
    %4063 = vmatprep.subr.bf16.mxu0 %v3756
    %4064 = vmatpush1.bf16.msra.mxu0 %v3755
    %4065 = vmatprep.subr.bf16.mxu0 %v3760
    %4066 = vmatpush1.bf16.msra.mxu0 %v3759
    %4067 = vmatprep.mubr.bf16.mxu0 %v3160
    %4068 = vmatmul.mubr.bf16.gmra.mrb[0].mxu0 %v3159
    %v4069 = vpop.f32.mrb[0].mxu0
    %v4070 = vadd.f32 %v3304, %v4069
    %v4071 = vpop.f32.mrb[0].mxu0
    %v4072 = vadd.f32 %v3308, %v4071
    %v4073 = vpop.f32.mrb[0].mxu0
    %v4074 = vpop.f32.mrb[0].mxu0
    %4075 = vdwg.mxu0
    %4076 = vmatprep.subr.bf16.mxu0 %v3764
    %4077 = vmatpush1.bf16.msra.mxu0 %v3763
    %4078 = vmatprep.subr.bf16.mxu0 %v3768
    %4079 = vmatpush1.bf16.msra.mxu0 %v3767
    %4080 = vmatprep.subr.bf16.mxu0 %v3772
    %4081 = vmatpush1.bf16.msra.mxu0 %v3771
    %4082 = vmatprep.subr.bf16.mxu0 %v3776
    %4083 = vmatpush1.bf16.msra.mxu0 %v3775
    %4084 = vmatprep.subr.bf16.mxu0 %v3780
    %4085 = vmatpush1.bf16.msra.mxu0 %v3779
    %4086 = vmatprep.subr.bf16.mxu0 %v3784
    %4087 = vmatpush1.bf16.msra.mxu0 %v3783
    %4088 = vmatprep.subr.bf16.mxu0 %v3788
    %4089 = vmatpush1.bf16.msra.mxu0 %v3787
    %4090 = vmatprep.subr.bf16.mxu0 %v3792
    %4091 = vmatpush1.bf16.msra.mxu0 %v3791
    %4092 = vmatprep.subr.bf16.mxu0 %v3796
    %4093 = vmatpush1.bf16.msra.mxu0 %v3795
    %4094 = vmatprep.subr.bf16.mxu0 %v3800
    %4095 = vmatpush1.bf16.msra.mxu0 %v3799
    %4096 = vmatprep.subr.bf16.mxu0 %v3804
    %4097 = vmatpush1.bf16.msra.mxu0 %v3803
    %4098 = vmatprep.subr.bf16.mxu0 %v3808
    %4099 = vmatpush1.bf16.msra.mxu0 %v3807
    %4100 = vmatprep.subr.bf16.mxu0 %v3812
    %4101 = vmatpush1.bf16.msra.mxu0 %v3811
    %4102 = vmatprep.subr.bf16.mxu0 %v3816
    %4103 = vmatpush1.bf16.msra.mxu0 %v3815
    %4104 = vmatprep.subr.bf16.mxu0 %v3820
    %4105 = vmatpush1.bf16.msra.mxu0 %v3819
    %4106 = vmatprep.subr.bf16.mxu0 %v3824
    %4107 = vmatpush1.bf16.msra.mxu0 %v3823
    %4108 = vmatprep.mubr.bf16.mxu0 %v3162
    %4109 = vmatmul.mubr.bf16.gmra.mrb[0].mxu0 %v3161
    %v4110 = vpop.f32.mrb[0].mxu0
    %v4111 = vadd.f32 %v4070, %v4110
    %v4112 = vpop.f32.mrb[0].mxu0
    %v4113 = vadd.f32 %v4072, %v4112
    %v4114 = vpop.f32.mrb[0].mxu0
    %v4115 = vpop.f32.mrb[0].mxu0
    %4116 = vdwg.mxu0
    %v4117 = vpack.c.bf16 %v4029, %v4029
    %v4118 = vpack.c.bf16 %v4031, %v4031
    %v4119 = vpack.c.bf16 %v4111, %v4111
    %v4120 = vpack.c.bf16 %v4113, %v4113
    %v4121 = vmax.bf16 %v4117, 0
    %v4122 = vmax.bf16 %v4118, 0
    %v4123 = vmax.bf16 %v4119, 0
    %v4124 = vmax.bf16 %v4120, 0
    %v4125 = vld [vmem:[#allocation11] sm:$0xff]
    %v4126 = vld [vmem:[#allocation11 + $0x8] sm:$0xff]
    %v4127 = vld [vmem:[#allocation11 + $0x10] sm:$0xff]
    %v4128 = vld [vmem:[#allocation11 + $0x18] sm:$0xff]
    %v4129 = vld [vmem:[#allocation11 + $0x20] sm:$0xff]
    %v4130 = vld [vmem:[#allocation11 + $0x28] sm:$0xff]
    %v4131 = vld [vmem:[#allocation11 + $0x30] sm:$0xff]
    %v4132 = vld [vmem:[#allocation11 + $0x38] sm:$0xff]
    %v4133 = vld [vmem:[#allocation11 + $0x40] sm:$0xff]
    %v4134 = vld [vmem:[#allocation11 + $0x48] sm:$0xff]
    %v4135 = vld [vmem:[#allocation11 + $0x50] sm:$0xff]
    %v4136 = vld [vmem:[#allocation11 + $0x58] sm:$0xff]
    %v4137 = vld [vmem:[#allocation11 + $0x60] sm:$0xff]
    %v4138 = vld [vmem:[#allocation11 + $0x68] sm:$0xff]
    %v4139 = vld [vmem:[#allocation11 + $0x70] sm:$0xff]
    %v4140 = vld [vmem:[#allocation11 + $0x78] sm:$0xff]
    %v4141 = vld [vmem:[#allocation11 + $0x80] sm:$0xff]
    %v4142 = vld [vmem:[#allocation11 + $0x88] sm:$0xff]
    %v4143 = vld [vmem:[#allocation11 + $0x90] sm:$0xff]
    %v4144 = vld [vmem:[#allocation11 + $0x98] sm:$0xff]
    %v4145 = vld [vmem:[#allocation11 + $0xa0] sm:$0xff]
    %v4146 = vld [vmem:[#allocation11 + $0xa8] sm:$0xff]
    %v4147 = vld [vmem:[#allocation11 + $0xb0] sm:$0xff]
    %v4148 = vld [vmem:[#allocation11 + $0xb8] sm:$0xff]
    %v4149 = vld [vmem:[#allocation11 + $0xc0] sm:$0xff]
    %v4150 = vld [vmem:[#allocation11 + $0xc8] sm:$0xff]
    %v4151 = vld [vmem:[#allocation11 + $0xd0] sm:$0xff]
    %v4152 = vld [vmem:[#allocation11 + $0xd8] sm:$0xff]
    %v4153 = vld [vmem:[#allocation11 + $0xe0] sm:$0xff]
    %v4154 = vld [vmem:[#allocation11 + $0xe8] sm:$0xff]
    %v4155 = vld [vmem:[#allocation11 + $0xf0] sm:$0xff]
    %v4156 = vld [vmem:[#allocation11 + $0xf8] sm:$0xff]
    %v4157 = vld [vmem:[#allocation11 + $0x100] sm:$0xff]
    %v4158 = vld [vmem:[#allocation11 + $0x108] sm:$0xff]
    %v4159 = vld [vmem:[#allocation11 + $0x110] sm:$0xff]
    %v4160 = vld [vmem:[#allocation11 + $0x118] sm:$0xff]
    %v4161 = vld [vmem:[#allocation11 + $0x120] sm:$0xff]
    %v4162 = vld [vmem:[#allocation11 + $0x128] sm:$0xff]
    %v4163 = vld [vmem:[#allocation11 + $0x130] sm:$0xff]
    %v4164 = vld [vmem:[#allocation11 + $0x138] sm:$0xff]
    %v4165 = vld [vmem:[#allocation11 + $0x140] sm:$0xff]
    %v4166 = vld [vmem:[#allocation11 + $0x148] sm:$0xff]
    %v4167 = vld [vmem:[#allocation11 + $0x150] sm:$0xff]
    %v4168 = vld [vmem:[#allocation11 + $0x158] sm:$0xff]
    %v4169 = vld [vmem:[#allocation11 + $0x160] sm:$0xff]
    %v4170 = vld [vmem:[#allocation11 + $0x168] sm:$0xff]
    %v4171 = vld [vmem:[#allocation11 + $0x170] sm:$0xff]
    %v4172 = vld [vmem:[#allocation11 + $0x178] sm:$0xff]
    %v4173 = vld [vmem:[#allocation11 + $0x180] sm:$0xff]
    %v4174 = vld [vmem:[#allocation11 + $0x188] sm:$0xff]
    %v4175 = vld [vmem:[#allocation11 + $0x190] sm:$0xff]
    %v4176 = vld [vmem:[#allocation11 + $0x198] sm:$0xff]
    %v4177 = vld [vmem:[#allocation11 + $0x1a0] sm:$0xff]
    %v4178 = vld [vmem:[#allocation11 + $0x1a8] sm:$0xff]
    %v4179 = vld [vmem:[#allocation11 + $0x1b0] sm:$0xff]
    %v4180 = vld [vmem:[#allocation11 + $0x1b8] sm:$0xff]
    %v4181 = vld [vmem:[#allocation11 + $0x1c0] sm:$0xff]
    %v4182 = vld [vmem:[#allocation11 + $0x1c8] sm:$0xff]
    %v4183 = vld [vmem:[#allocation11 + $0x1d0] sm:$0xff]
    %v4184 = vld [vmem:[#allocation11 + $0x1d8] sm:$0xff]
    %v4185 = vld [vmem:[#allocation11 + $0x1e0] sm:$0xff]
    %v4186 = vld [vmem:[#allocation11 + $0x1e8] sm:$0xff]
    %v4187 = vld [vmem:[#allocation11 + $0x1f0] sm:$0xff]
    %v4188 = vld [vmem:[#allocation11 + $0x1f8] sm:$0xff]
    %v4189 = vld [vmem:[#allocation11 + $0x200] sm:$0xff]
    %v4190 = vld [vmem:[#allocation11 + $0x208] sm:$0xff]
    %v4191 = vld [vmem:[#allocation11 + $0x210] sm:$0xff]
    %v4192 = vld [vmem:[#allocation11 + $0x218] sm:$0xff]
    %v4193 = vld [vmem:[#allocation11 + $0x220] sm:$0xff]
    %v4194 = vld [vmem:[#allocation11 + $0x228] sm:$0xff]
    %v4195 = vld [vmem:[#allocation11 + $0x230] sm:$0xff]
    %v4196 = vld [vmem:[#allocation11 + $0x238] sm:$0xff]
    %v4197 = vld [vmem:[#allocation11 + $0x240] sm:$0xff]
    %v4198 = vld [vmem:[#allocation11 + $0x248] sm:$0xff]
    %v4199 = vld [vmem:[#allocation11 + $0x250] sm:$0xff]
    %v4200 = vld [vmem:[#allocation11 + $0x258] sm:$0xff]
    %v4201 = vld [vmem:[#allocation11 + $0x260] sm:$0xff]
    %v4202 = vld [vmem:[#allocation11 + $0x268] sm:$0xff]
    %v4203 = vld [vmem:[#allocation11 + $0x270] sm:$0xff]
    %v4204 = vld [vmem:[#allocation11 + $0x278] sm:$0xff]
    %v4205 = vld [vmem:[#allocation11 + $0x280] sm:$0xff]
    %v4206 = vld [vmem:[#allocation11 + $0x288] sm:$0xff]
    %v4207 = vld [vmem:[#allocation11 + $0x290] sm:$0xff]
    %v4208 = vld [vmem:[#allocation11 + $0x298] sm:$0xff]
    %v4209 = vld [vmem:[#allocation11 + $0x2a0] sm:$0xff]
    %v4210 = vld [vmem:[#allocation11 + $0x2a8] sm:$0xff]
    %v4211 = vld [vmem:[#allocation11 + $0x2b0] sm:$0xff]
    %v4212 = vld [vmem:[#allocation11 + $0x2b8] sm:$0xff]
    %v4213 = vld [vmem:[#allocation11 + $0x2c0] sm:$0xff]
    %v4214 = vld [vmem:[#allocation11 + $0x2c8] sm:$0xff]
    %v4215 = vld [vmem:[#allocation11 + $0x2d0] sm:$0xff]
    %v4216 = vld [vmem:[#allocation11 + $0x2d8] sm:$0xff]
    %v4217 = vld [vmem:[#allocation11 + $0x2e0] sm:$0xff]
    %v4218 = vld [vmem:[#allocation11 + $0x2e8] sm:$0xff]
    %v4219 = vld [vmem:[#allocation11 + $0x2f0] sm:$0xff]
    %v4220 = vld [vmem:[#allocation11 + $0x2f8] sm:$0xff]
    %v4221 = vld [vmem:[#allocation11 + $0x300] sm:$0xff]
    %v4222 = vld [vmem:[#allocation11 + $0x308] sm:$0xff]
    %v4223 = vld [vmem:[#allocation11 + $0x310] sm:$0xff]
    %v4224 = vld [vmem:[#allocation11 + $0x318] sm:$0xff]
    %v4225 = vld [vmem:[#allocation11 + $0x320] sm:$0xff]
    %v4226 = vld [vmem:[#allocation11 + $0x328] sm:$0xff]
    %v4227 = vld [vmem:[#allocation11 + $0x330] sm:$0xff]
    %v4228 = vld [vmem:[#allocation11 + $0x338] sm:$0xff]
    %v4229 = vld [vmem:[#allocation11 + $0x340] sm:$0xff]
    %v4230 = vld [vmem:[#allocation11 + $0x348] sm:$0xff]
    %v4231 = vld [vmem:[#allocation11 + $0x350] sm:$0xff]
    %v4232 = vld [vmem:[#allocation11 + $0x358] sm:$0xff]
    %v4233 = vld [vmem:[#allocation11 + $0x360] sm:$0xff]
    %v4234 = vld [vmem:[#allocation11 + $0x368] sm:$0xff]
    %v4235 = vld [vmem:[#allocation11 + $0x370] sm:$0xff]
    %v4236 = vld [vmem:[#allocation11 + $0x378] sm:$0xff]
    %v4237 = vld [vmem:[#allocation11 + $0x380] sm:$0xff]
    %v4238 = vld [vmem:[#allocation11 + $0x388] sm:$0xff]
    %v4239 = vld [vmem:[#allocation11 + $0x390] sm:$0xff]
    %v4240 = vld [vmem:[#allocation11 + $0x398] sm:$0xff]
    %v4241 = vld [vmem:[#allocation11 + $0x3a0] sm:$0xff]
    %v4242 = vld [vmem:[#allocation11 + $0x3a8] sm:$0xff]
    %v4243 = vld [vmem:[#allocation11 + $0x3b0] sm:$0xff]
    %v4244 = vld [vmem:[#allocation11 + $0x3b8] sm:$0xff]
    %v4245 = vld [vmem:[#allocation11 + $0x3c0] sm:$0xff]
    %v4246 = vld [vmem:[#allocation11 + $0x3c8] sm:$0xff]
    %v4247 = vld [vmem:[#allocation11 + $0x3d0] sm:$0xff]
    %v4248 = vld [vmem:[#allocation11 + $0x3d8] sm:$0xff]
    %v4249 = vld [vmem:[#allocation11 + $0x3e0] sm:$0xff]
    %v4250 = vld [vmem:[#allocation11 + $0x3e8] sm:$0xff]
    %v4251 = vld [vmem:[#allocation11 + $0x3f0] sm:$0xff]
    %v4252 = vld [vmem:[#allocation11 + $0x3f8] sm:$0xff]
    %v4253 = vld [vmem:[%s9] sm:$0xf]
    %v4255 = vlaneseq
    %v4256 = vshrl.u32 %v4255, 7
    %v4257 = vsub.s32 0, %v4256
    %v4258 = vrot.slane %v4253, %v4257
    %v4259 = vlaneseq
    %v4260 = vshrl.u32 %v4259, 7
    %v4261 = vsub.s32 1, %v4260
    %v4262 = vrot.slane %v4253, %v4261
    %v4263 = vlaneseq
    %v4264 = vshrl.u32 %v4263, 7
    %v4265 = vsub.s32 2, %v4264
    %v4266 = vrot.slane %v4253, %v4265
    %v4267 = vlaneseq
    %v4268 = vshrl.u32 %v4267, 7
    %v4269 = vsub.s32 3, %v4268
    %v4270 = vrot.slane %v4253, %v4269
    %v4403 = vunpack.c.l.b16 %v4125
    %v4404 = vunpack.c.h.b16 %v4125
    %v4405 = vunpack.c.l.b16 %v4126
    %v4406 = vunpack.c.h.b16 %v4126
    %v4407 = vunpack.c.l.b16 %v4127
    %v4408 = vunpack.c.h.b16 %v4127
    %v4409 = vunpack.c.l.b16 %v4128
    %v4410 = vunpack.c.h.b16 %v4128
    %v4411 = vunpack.c.l.b16 %v4129
    %v4412 = vunpack.c.h.b16 %v4129
    %v4413 = vunpack.c.l.b16 %v4130
    %v4414 = vunpack.c.h.b16 %v4130
    %v4415 = vunpack.c.l.b16 %v4131
    %v4416 = vunpack.c.h.b16 %v4131
    %v4417 = vunpack.c.l.b16 %v4132
    %v4418 = vunpack.c.h.b16 %v4132
    %v4419 = vunpack.c.l.b16 %v4133
    %v4420 = vunpack.c.h.b16 %v4133
    %v4421 = vunpack.c.l.b16 %v4134
    %v4422 = vunpack.c.h.b16 %v4134
    %v4423 = vunpack.c.l.b16 %v4135
    %v4424 = vunpack.c.h.b16 %v4135
    %v4425 = vunpack.c.l.b16 %v4136
    %v4426 = vunpack.c.h.b16 %v4136
    %v4427 = vunpack.c.l.b16 %v4137
    %v4428 = vunpack.c.h.b16 %v4137
    %v4429 = vunpack.c.l.b16 %v4138
    %v4430 = vunpack.c.h.b16 %v4138
    %v4431 = vunpack.c.l.b16 %v4139
    %v4432 = vunpack.c.h.b16 %v4139
    %v4433 = vunpack.c.l.b16 %v4140
    %v4434 = vunpack.c.h.b16 %v4140
    %v4435 = vunpack.c.l.b16 %v4141
    %v4436 = vunpack.c.h.b16 %v4141
    %v4437 = vunpack.c.l.b16 %v4142
    %v4438 = vunpack.c.h.b16 %v4142
    %v4439 = vunpack.c.l.b16 %v4143
    %v4440 = vunpack.c.h.b16 %v4143
    %v4441 = vunpack.c.l.b16 %v4144
    %v4442 = vunpack.c.h.b16 %v4144
    %v4443 = vunpack.c.l.b16 %v4145
    %v4444 = vunpack.c.h.b16 %v4145
    %v4445 = vunpack.c.l.b16 %v4146
    %v4446 = vunpack.c.h.b16 %v4146
    %v4447 = vunpack.c.l.b16 %v4147
    %v4448 = vunpack.c.h.b16 %v4147
    %v4449 = vunpack.c.l.b16 %v4148
    %v4450 = vunpack.c.h.b16 %v4148
    %v4451 = vunpack.c.l.b16 %v4149
    %v4452 = vunpack.c.h.b16 %v4149
    %v4453 = vunpack.c.l.b16 %v4150
    %v4454 = vunpack.c.h.b16 %v4150
    %v4455 = vunpack.c.l.b16 %v4151
    %v4456 = vunpack.c.h.b16 %v4151
    %v4457 = vunpack.c.l.b16 %v4152
    %v4458 = vunpack.c.h.b16 %v4152
    %v4459 = vunpack.c.l.b16 %v4153
    %v4460 = vunpack.c.h.b16 %v4153
    %v4461 = vunpack.c.l.b16 %v4154
    %v4462 = vunpack.c.h.b16 %v4154
    %v4463 = vunpack.c.l.b16 %v4155
    %v4464 = vunpack.c.h.b16 %v4155
    %v4465 = vunpack.c.l.b16 %v4156
    %v4466 = vunpack.c.h.b16 %v4156
    %v4467 = vunpack.c.l.b16 %v4157
    %v4468 = vunpack.c.h.b16 %v4157
    %v4469 = vunpack.c.l.b16 %v4158
    %v4470 = vunpack.c.h.b16 %v4158
    %v4471 = vunpack.c.l.b16 %v4159
    %v4472 = vunpack.c.h.b16 %v4159
    %v4473 = vunpack.c.l.b16 %v4160
    %v4474 = vunpack.c.h.b16 %v4160
    %v4475 = vunpack.c.l.b16 %v4161
    %v4476 = vunpack.c.h.b16 %v4161
    %v4477 = vunpack.c.l.b16 %v4162
    %v4478 = vunpack.c.h.b16 %v4162
    %v4479 = vunpack.c.l.b16 %v4163
    %v4480 = vunpack.c.h.b16 %v4163
    %v4481 = vunpack.c.l.b16 %v4164
    %v4482 = vunpack.c.h.b16 %v4164
    %v4483 = vunpack.c.l.b16 %v4165
    %v4484 = vunpack.c.h.b16 %v4165
    %v4485 = vunpack.c.l.b16 %v4166
    %v4486 = vunpack.c.h.b16 %v4166
    %v4487 = vunpack.c.l.b16 %v4167
    %v4488 = vunpack.c.h.b16 %v4167
    %v4489 = vunpack.c.l.b16 %v4168
    %v4490 = vunpack.c.h.b16 %v4168
    %v4491 = vunpack.c.l.b16 %v4169
    %v4492 = vunpack.c.h.b16 %v4169
    %v4493 = vunpack.c.l.b16 %v4170
    %v4494 = vunpack.c.h.b16 %v4170
    %v4495 = vunpack.c.l.b16 %v4171
    %v4496 = vunpack.c.h.b16 %v4171
    %v4497 = vunpack.c.l.b16 %v4172
    %v4498 = vunpack.c.h.b16 %v4172
    %v4499 = vunpack.c.l.b16 %v4173
    %v4500 = vunpack.c.h.b16 %v4173
    %v4501 = vunpack.c.l.b16 %v4174
    %v4502 = vunpack.c.h.b16 %v4174
    %v4503 = vunpack.c.l.b16 %v4175
    %v4504 = vunpack.c.h.b16 %v4175
    %v4505 = vunpack.c.l.b16 %v4176
    %v4506 = vunpack.c.h.b16 %v4176
    %v4507 = vunpack.c.l.b16 %v4177
    %v4508 = vunpack.c.h.b16 %v4177
    %v4509 = vunpack.c.l.b16 %v4178
    %v4510 = vunpack.c.h.b16 %v4178
    %v4511 = vunpack.c.l.b16 %v4179
    %v4512 = vunpack.c.h.b16 %v4179
    %v4513 = vunpack.c.l.b16 %v4180
    %v4514 = vunpack.c.h.b16 %v4180
    %v4515 = vunpack.c.l.b16 %v4181
    %v4516 = vunpack.c.h.b16 %v4181
    %v4517 = vunpack.c.l.b16 %v4182
    %v4518 = vunpack.c.h.b16 %v4182
    %v4519 = vunpack.c.l.b16 %v4183
    %v4520 = vunpack.c.h.b16 %v4183
    %v4521 = vunpack.c.l.b16 %v4184
    %v4522 = vunpack.c.h.b16 %v4184
    %v4523 = vunpack.c.l.b16 %v4185
    %v4524 = vunpack.c.h.b16 %v4185
    %v4525 = vunpack.c.l.b16 %v4186
    %v4526 = vunpack.c.h.b16 %v4186
    %v4527 = vunpack.c.l.b16 %v4187
    %v4528 = vunpack.c.h.b16 %v4187
    %v4529 = vunpack.c.l.b16 %v4188
    %v4530 = vunpack.c.h.b16 %v4188
    %v4531 = vunpack.c.l.b16 %v4189
    %v4532 = vunpack.c.h.b16 %v4189
    %v4533 = vunpack.c.l.b16 %v4190
    %v4534 = vunpack.c.h.b16 %v4190
    %v4535 = vunpack.c.l.b16 %v4191
    %v4536 = vunpack.c.h.b16 %v4191
    %v4537 = vunpack.c.l.b16 %v4192
    %v4538 = vunpack.c.h.b16 %v4192
    %v4539 = vunpack.c.l.b16 %v4193
    %v4540 = vunpack.c.h.b16 %v4193
    %v4541 = vunpack.c.l.b16 %v4194
    %v4542 = vunpack.c.h.b16 %v4194
    %v4543 = vunpack.c.l.b16 %v4195
    %v4544 = vunpack.c.h.b16 %v4195
    %v4545 = vunpack.c.l.b16 %v4196
    %v4546 = vunpack.c.h.b16 %v4196
    %v4547 = vunpack.c.l.b16 %v4197
    %v4548 = vunpack.c.h.b16 %v4197
    %v4549 = vunpack.c.l.b16 %v4198
    %v4550 = vunpack.c.h.b16 %v4198
    %v4551 = vunpack.c.l.b16 %v4199
    %v4552 = vunpack.c.h.b16 %v4199
    %v4553 = vunpack.c.l.b16 %v4200
    %v4554 = vunpack.c.h.b16 %v4200
    %v4555 = vunpack.c.l.b16 %v4201
    %v4556 = vunpack.c.h.b16 %v4201
    %v4557 = vunpack.c.l.b16 %v4202
    %v4558 = vunpack.c.h.b16 %v4202
    %v4559 = vunpack.c.l.b16 %v4203
    %v4560 = vunpack.c.h.b16 %v4203
    %v4561 = vunpack.c.l.b16 %v4204
    %v4562 = vunpack.c.h.b16 %v4204
    %v4563 = vunpack.c.l.b16 %v4205
    %v4564 = vunpack.c.h.b16 %v4205
    %v4565 = vunpack.c.l.b16 %v4206
    %v4566 = vunpack.c.h.b16 %v4206
    %v4567 = vunpack.c.l.b16 %v4207
    %v4568 = vunpack.c.h.b16 %v4207
    %v4569 = vunpack.c.l.b16 %v4208
    %v4570 = vunpack.c.h.b16 %v4208
    %v4571 = vunpack.c.l.b16 %v4209
    %v4572 = vunpack.c.h.b16 %v4209
    %v4573 = vunpack.c.l.b16 %v4210
    %v4574 = vunpack.c.h.b16 %v4210
    %v4575 = vunpack.c.l.b16 %v4211
    %v4576 = vunpack.c.h.b16 %v4211
    %v4577 = vunpack.c.l.b16 %v4212
    %v4578 = vunpack.c.h.b16 %v4212
    %v4579 = vunpack.c.l.b16 %v4213
    %v4580 = vunpack.c.h.b16 %v4213
    %v4581 = vunpack.c.l.b16 %v4214
    %v4582 = vunpack.c.h.b16 %v4214
    %v4583 = vunpack.c.l.b16 %v4215
    %v4584 = vunpack.c.h.b16 %v4215
    %v4585 = vunpack.c.l.b16 %v4216
    %v4586 = vunpack.c.h.b16 %v4216
    %v4587 = vunpack.c.l.b16 %v4217
    %v4588 = vunpack.c.h.b16 %v4217
    %v4589 = vunpack.c.l.b16 %v4218
    %v4590 = vunpack.c.h.b16 %v4218
    %v4591 = vunpack.c.l.b16 %v4219
    %v4592 = vunpack.c.h.b16 %v4219
    %v4593 = vunpack.c.l.b16 %v4220
    %v4594 = vunpack.c.h.b16 %v4220
    %v4595 = vunpack.c.l.b16 %v4221
    %v4596 = vunpack.c.h.b16 %v4221
    %v4597 = vunpack.c.l.b16 %v4222
    %v4598 = vunpack.c.h.b16 %v4222
    %v4599 = vunpack.c.l.b16 %v4223
    %v4600 = vunpack.c.h.b16 %v4223
    %v4601 = vunpack.c.l.b16 %v4224
    %v4602 = vunpack.c.h.b16 %v4224
    %v4603 = vunpack.c.l.b16 %v4225
    %v4604 = vunpack.c.h.b16 %v4225
    %v4605 = vunpack.c.l.b16 %v4226
    %v4606 = vunpack.c.h.b16 %v4226
    %v4607 = vunpack.c.l.b16 %v4227
    %v4608 = vunpack.c.h.b16 %v4227
    %v4609 = vunpack.c.l.b16 %v4228
    %v4610 = vunpack.c.h.b16 %v4228
    %v4611 = vunpack.c.l.b16 %v4229
    %v4612 = vunpack.c.h.b16 %v4229
    %v4613 = vunpack.c.l.b16 %v4230
    %v4614 = vunpack.c.h.b16 %v4230
    %v4615 = vunpack.c.l.b16 %v4231
    %v4616 = vunpack.c.h.b16 %v4231
    %v4617 = vunpack.c.l.b16 %v4232
    %v4618 = vunpack.c.h.b16 %v4232
    %v4619 = vunpack.c.l.b16 %v4233
    %v4620 = vunpack.c.h.b16 %v4233
    %v4621 = vunpack.c.l.b16 %v4234
    %v4622 = vunpack.c.h.b16 %v4234
    %v4623 = vunpack.c.l.b16 %v4235
    %v4624 = vunpack.c.h.b16 %v4235
    %v4625 = vunpack.c.l.b16 %v4236
    %v4626 = vunpack.c.h.b16 %v4236
    %v4627 = vunpack.c.l.b16 %v4237
    %v4628 = vunpack.c.h.b16 %v4237
    %v4629 = vunpack.c.l.b16 %v4238
    %v4630 = vunpack.c.h.b16 %v4238
    %v4631 = vunpack.c.l.b16 %v4239
    %v4632 = vunpack.c.h.b16 %v4239
    %v4633 = vunpack.c.l.b16 %v4240
    %v4634 = vunpack.c.h.b16 %v4240
    %v4635 = vunpack.c.l.b16 %v4241
    %v4636 = vunpack.c.h.b16 %v4241
    %v4637 = vunpack.c.l.b16 %v4242
    %v4638 = vunpack.c.h.b16 %v4242
    %v4639 = vunpack.c.l.b16 %v4243
    %v4640 = vunpack.c.h.b16 %v4243
    %v4641 = vunpack.c.l.b16 %v4244
    %v4642 = vunpack.c.h.b16 %v4244
    %v4643 = vunpack.c.l.b16 %v4245
    %v4644 = vunpack.c.h.b16 %v4245
    %v4645 = vunpack.c.l.b16 %v4246
    %v4646 = vunpack.c.h.b16 %v4246
    %v4647 = vunpack.c.l.b16 %v4247
    %v4648 = vunpack.c.h.b16 %v4247
    %v4649 = vunpack.c.l.b16 %v4248
    %v4650 = vunpack.c.h.b16 %v4248
    %v4651 = vunpack.c.l.b16 %v4249
    %v4652 = vunpack.c.h.b16 %v4249
    %v4653 = vunpack.c.l.b16 %v4250
    %v4654 = vunpack.c.h.b16 %v4250
    %v4655 = vunpack.c.l.b16 %v4251
    %v4656 = vunpack.c.h.b16 %v4251
    %v4657 = vunpack.c.l.b16 %v4252
    %v4658 = vunpack.c.h.b16 %v4252
    %v4659 = vpack.c.b16 %v4407, %v4403
    %v4660 = vpack.c.b16 %v4408, %v4404
    %v4661 = vpack.c.b16 %v4409, %v4405
    %v4662 = vpack.c.b16 %v4410, %v4406
    %v4663 = vpack.c.b16 %v4415, %v4411
    %v4664 = vpack.c.b16 %v4416, %v4412
    %v4665 = vpack.c.b16 %v4417, %v4413
    %v4666 = vpack.c.b16 %v4418, %v4414
    %v4667 = vpack.c.b16 %v4423, %v4419
    %v4668 = vpack.c.b16 %v4424, %v4420
    %v4669 = vpack.c.b16 %v4425, %v4421
    %v4670 = vpack.c.b16 %v4426, %v4422
    %v4671 = vpack.c.b16 %v4431, %v4427
    %v4672 = vpack.c.b16 %v4432, %v4428
    %v4673 = vpack.c.b16 %v4433, %v4429
    %v4674 = vpack.c.b16 %v4434, %v4430
    %v4675 = vpack.c.b16 %v4439, %v4435
    %v4676 = vpack.c.b16 %v4440, %v4436
    %v4677 = vpack.c.b16 %v4441, %v4437
    %v4678 = vpack.c.b16 %v4442, %v4438
    %v4679 = vpack.c.b16 %v4447, %v4443
    %v4680 = vpack.c.b16 %v4448, %v4444
    %v4681 = vpack.c.b16 %v4449, %v4445
    %v4682 = vpack.c.b16 %v4450, %v4446
    %v4683 = vpack.c.b16 %v4455, %v4451
    %v4684 = vpack.c.b16 %v4456, %v4452
    %v4685 = vpack.c.b16 %v4457, %v4453
    %v4686 = vpack.c.b16 %v4458, %v4454
    %v4687 = vpack.c.b16 %v4463, %v4459
    %v4688 = vpack.c.b16 %v4464, %v4460
    %v4689 = vpack.c.b16 %v4465, %v4461
    %v4690 = vpack.c.b16 %v4466, %v4462
    %v4691 = vpack.c.b16 %v4471, %v4467
    %v4692 = vpack.c.b16 %v4472, %v4468
    %v4693 = vpack.c.b16 %v4473, %v4469
    %v4694 = vpack.c.b16 %v4474, %v4470
    %v4695 = vpack.c.b16 %v4479, %v4475
    %v4696 = vpack.c.b16 %v4480, %v4476
    %v4697 = vpack.c.b16 %v4481, %v4477
    %v4698 = vpack.c.b16 %v4482, %v4478
    %v4699 = vpack.c.b16 %v4487, %v4483
    %v4700 = vpack.c.b16 %v4488, %v4484
    %v4701 = vpack.c.b16 %v4489, %v4485
    %v4702 = vpack.c.b16 %v4490, %v4486
    %v4703 = vpack.c.b16 %v4495, %v4491
    %v4704 = vpack.c.b16 %v4496, %v4492
    %v4705 = vpack.c.b16 %v4497, %v4493
    %v4706 = vpack.c.b16 %v4498, %v4494
    %v4707 = vpack.c.b16 %v4503, %v4499
    %v4708 = vpack.c.b16 %v4504, %v4500
    %v4709 = vpack.c.b16 %v4505, %v4501
    %v4710 = vpack.c.b16 %v4506, %v4502
    %v4711 = vpack.c.b16 %v4511, %v4507
    %v4712 = vpack.c.b16 %v4512, %v4508
    %v4713 = vpack.c.b16 %v4513, %v4509
    %v4714 = vpack.c.b16 %v4514, %v4510
    %v4715 = vpack.c.b16 %v4519, %v4515
    %v4716 = vpack.c.b16 %v4520, %v4516
    %v4717 = vpack.c.b16 %v4521, %v4517
    %v4718 = vpack.c.b16 %v4522, %v4518
    %v4719 = vpack.c.b16 %v4527, %v4523
    %v4720 = vpack.c.b16 %v4528, %v4524
    %v4721 = vpack.c.b16 %v4529, %v4525
    %v4722 = vpack.c.b16 %v4530, %v4526
    %v4723 = vpack.c.b16 %v4535, %v4531
    %v4724 = vpack.c.b16 %v4536, %v4532
    %v4725 = vpack.c.b16 %v4537, %v4533
    %v4726 = vpack.c.b16 %v4538, %v4534
    %v4727 = vpack.c.b16 %v4543, %v4539
    %v4728 = vpack.c.b16 %v4544, %v4540
    %v4729 = vpack.c.b16 %v4545, %v4541
    %v4730 = vpack.c.b16 %v4546, %v4542
    %v4731 = vpack.c.b16 %v4551, %v4547
    %v4732 = vpack.c.b16 %v4552, %v4548
    %v4733 = vpack.c.b16 %v4553, %v4549
    %v4734 = vpack.c.b16 %v4554, %v4550
    %v4735 = vpack.c.b16 %v4559, %v4555
    %v4736 = vpack.c.b16 %v4560, %v4556
    %v4737 = vpack.c.b16 %v4561, %v4557
    %v4738 = vpack.c.b16 %v4562, %v4558
    %v4739 = vpack.c.b16 %v4567, %v4563
    %v4740 = vpack.c.b16 %v4568, %v4564
    %v4741 = vpack.c.b16 %v4569, %v4565
    %v4742 = vpack.c.b16 %v4570, %v4566
    %v4743 = vpack.c.b16 %v4575, %v4571
    %v4744 = vpack.c.b16 %v4576, %v4572
    %v4745 = vpack.c.b16 %v4577, %v4573
    %v4746 = vpack.c.b16 %v4578, %v4574
    %v4747 = vpack.c.b16 %v4583, %v4579
    %v4748 = vpack.c.b16 %v4584, %v4580
    %v4749 = vpack.c.b16 %v4585, %v4581
    %v4750 = vpack.c.b16 %v4586, %v4582
    %v4751 = vpack.c.b16 %v4591, %v4587
    %v4752 = vpack.c.b16 %v4592, %v4588
    %v4753 = vpack.c.b16 %v4593, %v4589
    %v4754 = vpack.c.b16 %v4594, %v4590
    %v4755 = vpack.c.b16 %v4599, %v4595
    %v4756 = vpack.c.b16 %v4600, %v4596
    %v4757 = vpack.c.b16 %v4601, %v4597
    %v4758 = vpack.c.b16 %v4602, %v4598
    %v4759 = vpack.c.b16 %v4607, %v4603
    %v4760 = vpack.c.b16 %v4608, %v4604
    %v4761 = vpack.c.b16 %v4609, %v4605
    %v4762 = vpack.c.b16 %v4610, %v4606
    %v4763 = vpack.c.b16 %v4615, %v4611
    %v4764 = vpack.c.b16 %v4616, %v4612
    %v4765 = vpack.c.b16 %v4617, %v4613
    %v4766 = vpack.c.b16 %v4618, %v4614
    %v4767 = vpack.c.b16 %v4623, %v4619
    %v4768 = vpack.c.b16 %v4624, %v4620
    %v4769 = vpack.c.b16 %v4625, %v4621
    %v4770 = vpack.c.b16 %v4626, %v4622
    %v4771 = vpack.c.b16 %v4631, %v4627
    %v4772 = vpack.c.b16 %v4632, %v4628
    %v4773 = vpack.c.b16 %v4633, %v4629
    %v4774 = vpack.c.b16 %v4634, %v4630
    %v4775 = vpack.c.b16 %v4639, %v4635
    %v4776 = vpack.c.b16 %v4640, %v4636
    %v4777 = vpack.c.b16 %v4641, %v4637
    %v4778 = vpack.c.b16 %v4642, %v4638
    %v4779 = vpack.c.b16 %v4647, %v4643
    %v4780 = vpack.c.b16 %v4648, %v4644
    %v4781 = vpack.c.b16 %v4649, %v4645
    %v4782 = vpack.c.b16 %v4650, %v4646
    %v4783 = vpack.c.b16 %v4655, %v4651
    %v4784 = vpack.c.b16 %v4656, %v4652
    %v4785 = vpack.c.b16 %v4657, %v4653
    %v4786 = vpack.c.b16 %v4658, %v4654
    %4915 = vmatprep.subr.bf16.mxu0 %v4660
    %4916 = vmatpush1.bf16.msra.mxu0 %v4659
    %4917 = vmatprep.subr.bf16.mxu0 %v4664
    %4918 = vmatpush1.bf16.msra.mxu0 %v4663
    %4919 = vmatprep.subr.bf16.mxu0 %v4668
    %4920 = vmatpush1.bf16.msra.mxu0 %v4667
    %4921 = vmatprep.subr.bf16.mxu0 %v4672
    %4922 = vmatpush1.bf16.msra.mxu0 %v4671
    %4923 = vmatprep.subr.bf16.mxu0 %v4676
    %4924 = vmatpush1.bf16.msra.mxu0 %v4675
    %4925 = vmatprep.subr.bf16.mxu0 %v4680
    %4926 = vmatpush1.bf16.msra.mxu0 %v4679
    %4927 = vmatprep.subr.bf16.mxu0 %v4684
    %4928 = vmatpush1.bf16.msra.mxu0 %v4683
    %4929 = vmatprep.subr.bf16.mxu0 %v4688
    %4930 = vmatpush1.bf16.msra.mxu0 %v4687
    %4931 = vmatprep.subr.bf16.mxu0 %v4692
    %4932 = vmatpush1.bf16.msra.mxu0 %v4691
    %4933 = vmatprep.subr.bf16.mxu0 %v4696
    %4934 = vmatpush1.bf16.msra.mxu0 %v4695
    %4935 = vmatprep.subr.bf16.mxu0 %v4700
    %4936 = vmatpush1.bf16.msra.mxu0 %v4699
    %4937 = vmatprep.subr.bf16.mxu0 %v4704
    %4938 = vmatpush1.bf16.msra.mxu0 %v4703
    %4939 = vmatprep.subr.bf16.mxu0 %v4708
    %4940 = vmatpush1.bf16.msra.mxu0 %v4707
    %4941 = vmatprep.subr.bf16.mxu0 %v4712
    %4942 = vmatpush1.bf16.msra.mxu0 %v4711
    %4943 = vmatprep.subr.bf16.mxu0 %v4716
    %4944 = vmatpush1.bf16.msra.mxu0 %v4715
    %4945 = vmatprep.subr.bf16.mxu0 %v4720
    %4946 = vmatpush1.bf16.msra.mxu0 %v4719
    %4947 = vmatprep.mubr.bf16.mxu0 %v4122
    %4948 = vmatmul.mubr.bf16.gmra.mrb[0].mxu0 %v4121
    %v4949 = vpop.f32.mrb[0].mxu0
    %v4950 = vadd.f32 %v4258, %v4949
    %v4951 = vpop.f32.mrb[0].mxu0
    %v4952 = vadd.f32 %v4262, %v4951
    %v4953 = vpop.f32.mrb[0].mxu0
    %v4954 = vpop.f32.mrb[0].mxu0
    %4955 = vdwg.mxu0
    %4956 = vmatprep.subr.bf16.mxu0 %v4724
    %4957 = vmatpush1.bf16.msra.mxu0 %v4723
    %4958 = vmatprep.subr.bf16.mxu0 %v4728
    %4959 = vmatpush1.bf16.msra.mxu0 %v4727
    %4960 = vmatprep.subr.bf16.mxu0 %v4732
    %4961 = vmatpush1.bf16.msra.mxu0 %v4731
    %4962 = vmatprep.subr.bf16.mxu0 %v4736
    %4963 = vmatpush1.bf16.msra.mxu0 %v4735
    %4964 = vmatprep.subr.bf16.mxu0 %v4740
    %4965 = vmatpush1.bf16.msra.mxu0 %v4739
    %4966 = vmatprep.subr.bf16.mxu0 %v4744
    %4967 = vmatpush1.bf16.msra.mxu0 %v4743
    %4968 = vmatprep.subr.bf16.mxu0 %v4748
    %4969 = vmatpush1.bf16.msra.mxu0 %v4747
    %4970 = vmatprep.subr.bf16.mxu0 %v4752
    %4971 = vmatpush1.bf16.msra.mxu0 %v4751
    %4972 = vmatprep.subr.bf16.mxu0 %v4756
    %4973 = vmatpush1.bf16.msra.mxu0 %v4755
    %4974 = vmatprep.subr.bf16.mxu0 %v4760
    %4975 = vmatpush1.bf16.msra.mxu0 %v4759
    %4976 = vmatprep.subr.bf16.mxu0 %v4764
    %4977 = vmatpush1.bf16.msra.mxu0 %v4763
    %4978 = vmatprep.subr.bf16.mxu0 %v4768
    %4979 = vmatpush1.bf16.msra.mxu0 %v4767
    %4980 = vmatprep.subr.bf16.mxu0 %v4772
    %4981 = vmatpush1.bf16.msra.mxu0 %v4771
    %4982 = vmatprep.subr.bf16.mxu0 %v4776
    %4983 = vmatpush1.bf16.msra.mxu0 %v4775
    %4984 = vmatprep.subr.bf16.mxu0 %v4780
    %4985 = vmatpush1.bf16.msra.mxu0 %v4779
    %4986 = vmatprep.subr.bf16.mxu0 %v4784
    %4987 = vmatpush1.bf16.msra.mxu0 %v4783
    %4988 = vmatprep.mubr.bf16.mxu0 %v4124
    %4989 = vmatmul.mubr.bf16.gmra.mrb[0].mxu0 %v4123
    %v4990 = vpop.f32.mrb[0].mxu0
    %v4991 = vadd.f32 %v4950, %v4990
    %v4992 = vpop.f32.mrb[0].mxu0
    %v4993 = vadd.f32 %v4952, %v4992
    %v4994 = vpop.f32.mrb[0].mxu0
    %v4995 = vpop.f32.mrb[0].mxu0
    %4996 = vdwg.mxu0
    %4997 = vmatprep.subr.bf16.mxu0 %v4662
    %4998 = vmatpush1.bf16.msra.mxu0 %v4661
    %4999 = vmatprep.subr.bf16.mxu0 %v4666
    %5000 = vmatpush1.bf16.msra.mxu0 %v4665
    %5001 = vmatprep.subr.bf16.mxu0 %v4670
    %5002 = vmatpush1.bf16.msra.mxu0 %v4669
    %5003 = vmatprep.subr.bf16.mxu0 %v4674
    %5004 = vmatpush1.bf16.msra.mxu0 %v4673
    %5005 = vmatprep.subr.bf16.mxu0 %v4678
    %5006 = vmatpush1.bf16.msra.mxu0 %v4677
    %5007 = vmatprep.subr.bf16.mxu0 %v4682
    %5008 = vmatpush1.bf16.msra.mxu0 %v4681
    %5009 = vmatprep.subr.bf16.mxu0 %v4686
    %5010 = vmatpush1.bf16.msra.mxu0 %v4685
    %5011 = vmatprep.subr.bf16.mxu0 %v4690
    %5012 = vmatpush1.bf16.msra.mxu0 %v4689
    %5013 = vmatprep.subr.bf16.mxu0 %v4694
    %5014 = vmatpush1.bf16.msra.mxu0 %v4693
    %5015 = vmatprep.subr.bf16.mxu0 %v4698
    %5016 = vmatpush1.bf16.msra.mxu0 %v4697
    %5017 = vmatprep.subr.bf16.mxu0 %v4702
    %5018 = vmatpush1.bf16.msra.mxu0 %v4701
    %5019 = vmatprep.subr.bf16.mxu0 %v4706
    %5020 = vmatpush1.bf16.msra.mxu0 %v4705
    %5021 = vmatprep.subr.bf16.mxu0 %v4710
    %5022 = vmatpush1.bf16.msra.mxu0 %v4709
    %5023 = vmatprep.subr.bf16.mxu0 %v4714
    %5024 = vmatpush1.bf16.msra.mxu0 %v4713
    %5025 = vmatprep.subr.bf16.mxu0 %v4718
    %5026 = vmatpush1.bf16.msra.mxu0 %v4717
    %5027 = vmatprep.subr.bf16.mxu0 %v4722
    %5028 = vmatpush1.bf16.msra.mxu0 %v4721
    %5029 = vmatprep.mubr.bf16.mxu0 %v4122
    %5030 = vmatmul.mubr.bf16.gmra.mrb[0].mxu0 %v4121
    %v5031 = vpop.f32.mrb[0].mxu0
    %v5032 = vadd.f32 %v4266, %v5031
    %v5033 = vpop.f32.mrb[0].mxu0
    %v5034 = vadd.f32 %v4270, %v5033
    %v5035 = vpop.f32.mrb[0].mxu0
    %v5036 = vpop.f32.mrb[0].mxu0
    %5037 = vdwg.mxu0
    %5038 = vmatprep.subr.bf16.mxu0 %v4726
    %5039 = vmatpush1.bf16.msra.mxu0 %v4725
    %5040 = vmatprep.subr.bf16.mxu0 %v4730
    %5041 = vmatpush1.bf16.msra.mxu0 %v4729
    %5042 = vmatprep.subr.bf16.mxu0 %v4734
    %5043 = vmatpush1.bf16.msra.mxu0 %v4733
    %5044 = vmatprep.subr.bf16.mxu0 %v4738
    %5045 = vmatpush1.bf16.msra.mxu0 %v4737
    %5046 = vmatprep.subr.bf16.mxu0 %v4742
    %5047 = vmatpush1.bf16.msra.mxu0 %v4741
    %5048 = vmatprep.subr.bf16.mxu0 %v4746
    %5049 = vmatpush1.bf16.msra.mxu0 %v4745
    %5050 = vmatprep.subr.bf16.mxu0 %v4750
    %5051 = vmatpush1.bf16.msra.mxu0 %v4749
    %5052 = vmatprep.subr.bf16.mxu0 %v4754
    %5053 = vmatpush1.bf16.msra.mxu0 %v4753
    %5054 = vmatprep.subr.bf16.mxu0 %v4758
    %5055 = vmatpush1.bf16.msra.mxu0 %v4757
    %5056 = vmatprep.subr.bf16.mxu0 %v4762
    %5057 = vmatpush1.bf16.msra.mxu0 %v4761
    %5058 = vmatprep.subr.bf16.mxu0 %v4766
    %5059 = vmatpush1.bf16.msra.mxu0 %v4765
    %5060 = vmatprep.subr.bf16.mxu0 %v4770
    %5061 = vmatpush1.bf16.msra.mxu0 %v4769
    %5062 = vmatprep.subr.bf16.mxu0 %v4774
    %5063 = vmatpush1.bf16.msra.mxu0 %v4773
    %5064 = vmatprep.subr.bf16.mxu0 %v4778
    %5065 = vmatpush1.bf16.msra.mxu0 %v4777
    %5066 = vmatprep.subr.bf16.mxu0 %v4782
    %5067 = vmatpush1.bf16.msra.mxu0 %v4781
    %5068 = vmatprep.subr.bf16.mxu0 %v4786
    %5069 = vmatpush1.bf16.msra.mxu0 %v4785
    %5070 = vmatprep.mubr.bf16.mxu0 %v4124
    %5071 = vmatmul.mubr.bf16.gmra.mrb[0].mxu0 %v4123
    %v5072 = vpop.f32.mrb[0].mxu0
    %v5073 = vadd.f32 %v5032, %v5072
    %v5074 = vpop.f32.mrb[0].mxu0
    %v5075 = vadd.f32 %v5034, %v5074
    %v5076 = vpop.f32.mrb[0].mxu0
    %v5077 = vpop.f32.mrb[0].mxu0
    %5078 = vdwg.mxu0
    %v5079 = vpack.c.bf16 %v4991, %v4991
    %v5080 = vpack.c.bf16 %v4993, %v4993
    %v5081 = vpack.c.bf16 %v5073, %v5073
    %v5082 = vpack.c.bf16 %v5075, %v5075
    %v5083 = vmax.bf16 %v5079, 0
    %v5084 = vmax.bf16 %v5080, 0
    %v5085 = vmax.bf16 %v5081, 0
    %v5086 = vmax.bf16 %v5082, 0
    %v5087 = vadd.bf16 %v5083, %v2197
    %v5088 = vadd.bf16 %v5084, %v2198
    %v5089 = vadd.bf16 %v5085, %v2199
    %v5090 = vadd.bf16 %v5086, %v2200
    %v5091 = vld [vmem:[#allocation13] sm:$0xff]
    %v5092 = vld [vmem:[#allocation13 + $0x8] sm:$0xff]
    %v5093 = vld [vmem:[#allocation13 + $0x10] sm:$0xff]
    %v5094 = vld [vmem:[#allocation13 + $0x18] sm:$0xff]
    %v5095 = vld [vmem:[#allocation13 + $0x20] sm:$0xff]
    %v5096 = vld [vmem:[#allocation13 + $0x28] sm:$0xff]
    %v5097 = vld [vmem:[#allocation13 + $0x30] sm:$0xff]
    %v5098 = vld [vmem:[#allocation13 + $0x38] sm:$0xff]
    %v5099 = vld [vmem:[#allocation13 + $0x40] sm:$0xff]
    %v5100 = vld [vmem:[#allocation13 + $0x48] sm:$0xff]
    %v5101 = vld [vmem:[#allocation13 + $0x50] sm:$0xff]
    %v5102 = vld [vmem:[#allocation13 + $0x58] sm:$0xff]
    %v5103 = vld [vmem:[#allocation13 + $0x60] sm:$0xff]
    %v5104 = vld [vmem:[#allocation13 + $0x68] sm:$0xff]
    %v5105 = vld [vmem:[#allocation13 + $0x70] sm:$0xff]
    %v5106 = vld [vmem:[#allocation13 + $0x78] sm:$0xff]
    %v5107 = vld [vmem:[#allocation13 + $0x80] sm:$0xff]
    %v5108 = vld [vmem:[#allocation13 + $0x88] sm:$0xff]
    %v5109 = vld [vmem:[#allocation13 + $0x90] sm:$0xff]
    %v5110 = vld [vmem:[#allocation13 + $0x98] sm:$0xff]
    %v5111 = vld [vmem:[#allocation13 + $0xa0] sm:$0xff]
    %v5112 = vld [vmem:[#allocation13 + $0xa8] sm:$0xff]
    %v5113 = vld [vmem:[#allocation13 + $0xb0] sm:$0xff]
    %v5114 = vld [vmem:[#allocation13 + $0xb8] sm:$0xff]
    %v5115 = vld [vmem:[#allocation13 + $0xc0] sm:$0xff]
    %v5116 = vld [vmem:[#allocation13 + $0xc8] sm:$0xff]
    %v5117 = vld [vmem:[#allocation13 + $0xd0] sm:$0xff]
    %v5118 = vld [vmem:[#allocation13 + $0xd8] sm:$0xff]
    %v5119 = vld [vmem:[#allocation13 + $0xe0] sm:$0xff]
    %v5120 = vld [vmem:[#allocation13 + $0xe8] sm:$0xff]
    %v5121 = vld [vmem:[#allocation13 + $0xf0] sm:$0xff]
    %v5122 = vld [vmem:[#allocation13 + $0xf8] sm:$0xff]
    %v5123 = vld [vmem:[#allocation13 + $0x100] sm:$0xff]
    %v5124 = vld [vmem:[#allocation13 + $0x108] sm:$0xff]
    %v5125 = vld [vmem:[#allocation13 + $0x110] sm:$0xff]
    %v5126 = vld [vmem:[#allocation13 + $0x118] sm:$0xff]
    %v5127 = vld [vmem:[#allocation13 + $0x120] sm:$0xff]
    %v5128 = vld [vmem:[#allocation13 + $0x128] sm:$0xff]
    %v5129 = vld [vmem:[#allocation13 + $0x130] sm:$0xff]
    %v5130 = vld [vmem:[#allocation13 + $0x138] sm:$0xff]
    %v5131 = vld [vmem:[#allocation13 + $0x140] sm:$0xff]
    %v5132 = vld [vmem:[#allocation13 + $0x148] sm:$0xff]
    %v5133 = vld [vmem:[#allocation13 + $0x150] sm:$0xff]
    %v5134 = vld [vmem:[#allocation13 + $0x158] sm:$0xff]
    %v5135 = vld [vmem:[#allocation13 + $0x160] sm:$0xff]
    %v5136 = vld [vmem:[#allocation13 + $0x168] sm:$0xff]
    %v5137 = vld [vmem:[#allocation13 + $0x170] sm:$0xff]
    %v5138 = vld [vmem:[#allocation13 + $0x178] sm:$0xff]
    %v5139 = vld [vmem:[#allocation13 + $0x180] sm:$0xff]
    %v5140 = vld [vmem:[#allocation13 + $0x188] sm:$0xff]
    %v5141 = vld [vmem:[#allocation13 + $0x190] sm:$0xff]
    %v5142 = vld [vmem:[#allocation13 + $0x198] sm:$0xff]
    %v5143 = vld [vmem:[#allocation13 + $0x1a0] sm:$0xff]
    %v5144 = vld [vmem:[#allocation13 + $0x1a8] sm:$0xff]
    %v5145 = vld [vmem:[#allocation13 + $0x1b0] sm:$0xff]
    %v5146 = vld [vmem:[#allocation13 + $0x1b8] sm:$0xff]
    %v5147 = vld [vmem:[#allocation13 + $0x1c0] sm:$0xff]
    %v5148 = vld [vmem:[#allocation13 + $0x1c8] sm:$0xff]
    %v5149 = vld [vmem:[#allocation13 + $0x1d0] sm:$0xff]
    %v5150 = vld [vmem:[#allocation13 + $0x1d8] sm:$0xff]
    %v5151 = vld [vmem:[#allocation13 + $0x1e0] sm:$0xff]
    %v5152 = vld [vmem:[#allocation13 + $0x1e8] sm:$0xff]
    %v5153 = vld [vmem:[#allocation13 + $0x1f0] sm:$0xff]
    %v5154 = vld [vmem:[#allocation13 + $0x1f8] sm:$0xff]
    %v5155 = vld [vmem:[#allocation13 + $0x200] sm:$0xff]
    %v5156 = vld [vmem:[#allocation13 + $0x208] sm:$0xff]
    %v5157 = vld [vmem:[#allocation13 + $0x210] sm:$0xff]
    %v5158 = vld [vmem:[#allocation13 + $0x218] sm:$0xff]
    %v5159 = vld [vmem:[#allocation13 + $0x220] sm:$0xff]
    %v5160 = vld [vmem:[#allocation13 + $0x228] sm:$0xff]
    %v5161 = vld [vmem:[#allocation13 + $0x230] sm:$0xff]
    %v5162 = vld [vmem:[#allocation13 + $0x238] sm:$0xff]
    %v5163 = vld [vmem:[#allocation13 + $0x240] sm:$0xff]
    %v5164 = vld [vmem:[#allocation13 + $0x248] sm:$0xff]
    %v5165 = vld [vmem:[#allocation13 + $0x250] sm:$0xff]
    %v5166 = vld [vmem:[#allocation13 + $0x258] sm:$0xff]
    %v5167 = vld [vmem:[#allocation13 + $0x260] sm:$0xff]
    %v5168 = vld [vmem:[#allocation13 + $0x268] sm:$0xff]
    %v5169 = vld [vmem:[#allocation13 + $0x270] sm:$0xff]
    %v5170 = vld [vmem:[#allocation13 + $0x278] sm:$0xff]
    %v5171 = vld [vmem:[#allocation13 + $0x280] sm:$0xff]
    %v5172 = vld [vmem:[#allocation13 + $0x288] sm:$0xff]
    %v5173 = vld [vmem:[#allocation13 + $0x290] sm:$0xff]
    %v5174 = vld [vmem:[#allocation13 + $0x298] sm:$0xff]
    %v5175 = vld [vmem:[#allocation13 + $0x2a0] sm:$0xff]
    %v5176 = vld [vmem:[#allocation13 + $0x2a8] sm:$0xff]
    %v5177 = vld [vmem:[#allocation13 + $0x2b0] sm:$0xff]
    %v5178 = vld [vmem:[#allocation13 + $0x2b8] sm:$0xff]
    %v5179 = vld [vmem:[#allocation13 + $0x2c0] sm:$0xff]
    %v5180 = vld [vmem:[#allocation13 + $0x2c8] sm:$0xff]
    %v5181 = vld [vmem:[#allocation13 + $0x2d0] sm:$0xff]
    %v5182 = vld [vmem:[#allocation13 + $0x2d8] sm:$0xff]
    %v5183 = vld [vmem:[#allocation13 + $0x2e0] sm:$0xff]
    %v5184 = vld [vmem:[#allocation13 + $0x2e8] sm:$0xff]
    %v5185 = vld [vmem:[#allocation13 + $0x2f0] sm:$0xff]
    %v5186 = vld [vmem:[#allocation13 + $0x2f8] sm:$0xff]
    %v5187 = vld [vmem:[#allocation13 + $0x300] sm:$0xff]
    %v5188 = vld [vmem:[#allocation13 + $0x308] sm:$0xff]
    %v5189 = vld [vmem:[#allocation13 + $0x310] sm:$0xff]
    %v5190 = vld [vmem:[#allocation13 + $0x318] sm:$0xff]
    %v5191 = vld [vmem:[#allocation13 + $0x320] sm:$0xff]
    %v5192 = vld [vmem:[#allocation13 + $0x328] sm:$0xff]
    %v5193 = vld [vmem:[#allocation13 + $0x330] sm:$0xff]
    %v5194 = vld [vmem:[#allocation13 + $0x338] sm:$0xff]
    %v5195 = vld [vmem:[#allocation13 + $0x340] sm:$0xff]
    %v5196 = vld [vmem:[#allocation13 + $0x348] sm:$0xff]
    %v5197 = vld [vmem:[#allocation13 + $0x350] sm:$0xff]
    %v5198 = vld [vmem:[#allocation13 + $0x358] sm:$0xff]
    %v5199 = vld [vmem:[#allocation13 + $0x360] sm:$0xff]
    %v5200 = vld [vmem:[#allocation13 + $0x368] sm:$0xff]
    %v5201 = vld [vmem:[#allocation13 + $0x370] sm:$0xff]
    %v5202 = vld [vmem:[#allocation13 + $0x378] sm:$0xff]
    %v5203 = vld [vmem:[#allocation13 + $0x380] sm:$0xff]
    %v5204 = vld [vmem:[#allocation13 + $0x388] sm:$0xff]
    %v5205 = vld [vmem:[#allocation13 + $0x390] sm:$0xff]
    %v5206 = vld [vmem:[#allocation13 + $0x398] sm:$0xff]
    %v5207 = vld [vmem:[#allocation13 + $0x3a0] sm:$0xff]
    %v5208 = vld [vmem:[#allocation13 + $0x3a8] sm:$0xff]
    %v5209 = vld [vmem:[#allocation13 + $0x3b0] sm:$0xff]
    %v5210 = vld [vmem:[#allocation13 + $0x3b8] sm:$0xff]
    %v5211 = vld [vmem:[#allocation13 + $0x3c0] sm:$0xff]
    %v5212 = vld [vmem:[#allocation13 + $0x3c8] sm:$0xff]
    %v5213 = vld [vmem:[#allocation13 + $0x3d0] sm:$0xff]
    %v5214 = vld [vmem:[#allocation13 + $0x3d8] sm:$0xff]
    %v5215 = vld [vmem:[#allocation13 + $0x3e0] sm:$0xff]
    %v5216 = vld [vmem:[#allocation13 + $0x3e8] sm:$0xff]
    %v5217 = vld [vmem:[#allocation13 + $0x3f0] sm:$0xff]
    %v5218 = vld [vmem:[#allocation13 + $0x3f8] sm:$0xff]
    %v5219 = vld [vmem:[%s11] sm:$0xf]
    %v5221 = vlaneseq
    %v5222 = vshrl.u32 %v5221, 7
    %v5223 = vsub.s32 0, %v5222
    %v5224 = vrot.slane %v5219, %v5223
    %v5225 = vlaneseq
    %v5226 = vshrl.u32 %v5225, 7
    %v5227 = vsub.s32 1, %v5226
    %v5228 = vrot.slane %v5219, %v5227
    %v5229 = vlaneseq
    %v5230 = vshrl.u32 %v5229, 7
    %v5231 = vsub.s32 2, %v5230
    %v5232 = vrot.slane %v5219, %v5231
    %v5233 = vlaneseq
    %v5234 = vshrl.u32 %v5233, 7
    %v5235 = vsub.s32 3, %v5234
    %v5236 = vrot.slane %v5219, %v5235
    %v5369 = vunpack.c.l.b16 %v5091
    %v5370 = vunpack.c.h.b16 %v5091
    %v5371 = vunpack.c.l.b16 %v5092
    %v5372 = vunpack.c.h.b16 %v5092
    %v5373 = vunpack.c.l.b16 %v5093
    %v5374 = vunpack.c.h.b16 %v5093
    %v5375 = vunpack.c.l.b16 %v5094
    %v5376 = vunpack.c.h.b16 %v5094
    %v5377 = vunpack.c.l.b16 %v5095
    %v5378 = vunpack.c.h.b16 %v5095
    %v5379 = vunpack.c.l.b16 %v5096
    %v5380 = vunpack.c.h.b16 %v5096
    %v5381 = vunpack.c.l.b16 %v5097
    %v5382 = vunpack.c.h.b16 %v5097
    %v5383 = vunpack.c.l.b16 %v5098
    %v5384 = vunpack.c.h.b16 %v5098
    %v5385 = vunpack.c.l.b16 %v5099
    %v5386 = vunpack.c.h.b16 %v5099
    %v5387 = vunpack.c.l.b16 %v5100
    %v5388 = vunpack.c.h.b16 %v5100
    %v5389 = vunpack.c.l.b16 %v5101
    %v5390 = vunpack.c.h.b16 %v5101
    %v5391 = vunpack.c.l.b16 %v5102
    %v5392 = vunpack.c.h.b16 %v5102
    %v5393 = vunpack.c.l.b16 %v5103
    %v5394 = vunpack.c.h.b16 %v5103
    %v5395 = vunpack.c.l.b16 %v5104
    %v5396 = vunpack.c.h.b16 %v5104
    %v5397 = vunpack.c.l.b16 %v5105
    %v5398 = vunpack.c.h.b16 %v5105
    %v5399 = vunpack.c.l.b16 %v5106
    %v5400 = vunpack.c.h.b16 %v5106
    %v5401 = vunpack.c.l.b16 %v5107
    %v5402 = vunpack.c.h.b16 %v5107
    %v5403 = vunpack.c.l.b16 %v5108
    %v5404 = vunpack.c.h.b16 %v5108
    %v5405 = vunpack.c.l.b16 %v5109
    %v5406 = vunpack.c.h.b16 %v5109
    %v5407 = vunpack.c.l.b16 %v5110
    %v5408 = vunpack.c.h.b16 %v5110
    %v5409 = vunpack.c.l.b16 %v5111
    %v5410 = vunpack.c.h.b16 %v5111
    %v5411 = vunpack.c.l.b16 %v5112
    %v5412 = vunpack.c.h.b16 %v5112
    %v5413 = vunpack.c.l.b16 %v5113
    %v5414 = vunpack.c.h.b16 %v5113
    %v5415 = vunpack.c.l.b16 %v5114
    %v5416 = vunpack.c.h.b16 %v5114
    %v5417 = vunpack.c.l.b16 %v5115
    %v5418 = vunpack.c.h.b16 %v5115
    %v5419 = vunpack.c.l.b16 %v5116
    %v5420 = vunpack.c.h.b16 %v5116
    %v5421 = vunpack.c.l.b16 %v5117
    %v5422 = vunpack.c.h.b16 %v5117
    %v5423 = vunpack.c.l.b16 %v5118
    %v5424 = vunpack.c.h.b16 %v5118
    %v5425 = vunpack.c.l.b16 %v5119
    %v5426 = vunpack.c.h.b16 %v5119
    %v5427 = vunpack.c.l.b16 %v5120
    %v5428 = vunpack.c.h.b16 %v5120
    %v5429 = vunpack.c.l.b16 %v5121
    %v5430 = vunpack.c.h.b16 %v5121
    %v5431 = vunpack.c.l.b16 %v5122
    %v5432 = vunpack.c.h.b16 %v5122
    %v5433 = vunpack.c.l.b16 %v5123
    %v5434 = vunpack.c.h.b16 %v5123
    %v5435 = vunpack.c.l.b16 %v5124
    %v5436 = vunpack.c.h.b16 %v5124
    %v5437 = vunpack.c.l.b16 %v5125
    %v5438 = vunpack.c.h.b16 %v5125
    %v5439 = vunpack.c.l.b16 %v5126
    %v5440 = vunpack.c.h.b16 %v5126
    %v5441 = vunpack.c.l.b16 %v5127
    %v5442 = vunpack.c.h.b16 %v5127
    %v5443 = vunpack.c.l.b16 %v5128
    %v5444 = vunpack.c.h.b16 %v5128
    %v5445 = vunpack.c.l.b16 %v5129
    %v5446 = vunpack.c.h.b16 %v5129
    %v5447 = vunpack.c.l.b16 %v5130
    %v5448 = vunpack.c.h.b16 %v5130
    %v5449 = vunpack.c.l.b16 %v5131
    %v5450 = vunpack.c.h.b16 %v5131
    %v5451 = vunpack.c.l.b16 %v5132
    %v5452 = vunpack.c.h.b16 %v5132
    %v5453 = vunpack.c.l.b16 %v5133
    %v5454 = vunpack.c.h.b16 %v5133
    %v5455 = vunpack.c.l.b16 %v5134
    %v5456 = vunpack.c.h.b16 %v5134
    %v5457 = vunpack.c.l.b16 %v5135
    %v5458 = vunpack.c.h.b16 %v5135
    %v5459 = vunpack.c.l.b16 %v5136
    %v5460 = vunpack.c.h.b16 %v5136
    %v5461 = vunpack.c.l.b16 %v5137
    %v5462 = vunpack.c.h.b16 %v5137
    %v5463 = vunpack.c.l.b16 %v5138
    %v5464 = vunpack.c.h.b16 %v5138
    %v5465 = vunpack.c.l.b16 %v5139
    %v5466 = vunpack.c.h.b16 %v5139
    %v5467 = vunpack.c.l.b16 %v5140
    %v5468 = vunpack.c.h.b16 %v5140
    %v5469 = vunpack.c.l.b16 %v5141
    %v5470 = vunpack.c.h.b16 %v5141
    %v5471 = vunpack.c.l.b16 %v5142
    %v5472 = vunpack.c.h.b16 %v5142
    %v5473 = vunpack.c.l.b16 %v5143
    %v5474 = vunpack.c.h.b16 %v5143
    %v5475 = vunpack.c.l.b16 %v5144
    %v5476 = vunpack.c.h.b16 %v5144
    %v5477 = vunpack.c.l.b16 %v5145
    %v5478 = vunpack.c.h.b16 %v5145
    %v5479 = vunpack.c.l.b16 %v5146
    %v5480 = vunpack.c.h.b16 %v5146
    %v5481 = vunpack.c.l.b16 %v5147
    %v5482 = vunpack.c.h.b16 %v5147
    %v5483 = vunpack.c.l.b16 %v5148
    %v5484 = vunpack.c.h.b16 %v5148
    %v5485 = vunpack.c.l.b16 %v5149
    %v5486 = vunpack.c.h.b16 %v5149
    %v5487 = vunpack.c.l.b16 %v5150
    %v5488 = vunpack.c.h.b16 %v5150
    %v5489 = vunpack.c.l.b16 %v5151
    %v5490 = vunpack.c.h.b16 %v5151
    %v5491 = vunpack.c.l.b16 %v5152
    %v5492 = vunpack.c.h.b16 %v5152
    %v5493 = vunpack.c.l.b16 %v5153
    %v5494 = vunpack.c.h.b16 %v5153
    %v5495 = vunpack.c.l.b16 %v5154
    %v5496 = vunpack.c.h.b16 %v5154
    %v5497 = vunpack.c.l.b16 %v5155
    %v5498 = vunpack.c.h.b16 %v5155
    %v5499 = vunpack.c.l.b16 %v5156
    %v5500 = vunpack.c.h.b16 %v5156
    %v5501 = vunpack.c.l.b16 %v5157
    %v5502 = vunpack.c.h.b16 %v5157
    %v5503 = vunpack.c.l.b16 %v5158
    %v5504 = vunpack.c.h.b16 %v5158
    %v5505 = vunpack.c.l.b16 %v5159
    %v5506 = vunpack.c.h.b16 %v5159
    %v5507 = vunpack.c.l.b16 %v5160
    %v5508 = vunpack.c.h.b16 %v5160
    %v5509 = vunpack.c.l.b16 %v5161
    %v5510 = vunpack.c.h.b16 %v5161
    %v5511 = vunpack.c.l.b16 %v5162
    %v5512 = vunpack.c.h.b16 %v5162
    %v5513 = vunpack.c.l.b16 %v5163
    %v5514 = vunpack.c.h.b16 %v5163
    %v5515 = vunpack.c.l.b16 %v5164
    %v5516 = vunpack.c.h.b16 %v5164
    %v5517 = vunpack.c.l.b16 %v5165
    %v5518 = vunpack.c.h.b16 %v5165
    %v5519 = vunpack.c.l.b16 %v5166
    %v5520 = vunpack.c.h.b16 %v5166
    %v5521 = vunpack.c.l.b16 %v5167
    %v5522 = vunpack.c.h.b16 %v5167
    %v5523 = vunpack.c.l.b16 %v5168
    %v5524 = vunpack.c.h.b16 %v5168
    %v5525 = vunpack.c.l.b16 %v5169
    %v5526 = vunpack.c.h.b16 %v5169
    %v5527 = vunpack.c.l.b16 %v5170
    %v5528 = vunpack.c.h.b16 %v5170
    %v5529 = vunpack.c.l.b16 %v5171
    %v5530 = vunpack.c.h.b16 %v5171
    %v5531 = vunpack.c.l.b16 %v5172
    %v5532 = vunpack.c.h.b16 %v5172
    %v5533 = vunpack.c.l.b16 %v5173
    %v5534 = vunpack.c.h.b16 %v5173
    %v5535 = vunpack.c.l.b16 %v5174
    %v5536 = vunpack.c.h.b16 %v5174
    %v5537 = vunpack.c.l.b16 %v5175
    %v5538 = vunpack.c.h.b16 %v5175
    %v5539 = vunpack.c.l.b16 %v5176
    %v5540 = vunpack.c.h.b16 %v5176
    %v5541 = vunpack.c.l.b16 %v5177
    %v5542 = vunpack.c.h.b16 %v5177
    %v5543 = vunpack.c.l.b16 %v5178
    %v5544 = vunpack.c.h.b16 %v5178
    %v5545 = vunpack.c.l.b16 %v5179
    %v5546 = vunpack.c.h.b16 %v5179
    %v5547 = vunpack.c.l.b16 %v5180
    %v5548 = vunpack.c.h.b16 %v5180
    %v5549 = vunpack.c.l.b16 %v5181
    %v5550 = vunpack.c.h.b16 %v5181
    %v5551 = vunpack.c.l.b16 %v5182
    %v5552 = vunpack.c.h.b16 %v5182
    %v5553 = vunpack.c.l.b16 %v5183
    %v5554 = vunpack.c.h.b16 %v5183
    %v5555 = vunpack.c.l.b16 %v5184
    %v5556 = vunpack.c.h.b16 %v5184
    %v5557 = vunpack.c.l.b16 %v5185
    %v5558 = vunpack.c.h.b16 %v5185
    %v5559 = vunpack.c.l.b16 %v5186
    %v5560 = vunpack.c.h.b16 %v5186
    %v5561 = vunpack.c.l.b16 %v5187
    %v5562 = vunpack.c.h.b16 %v5187
    %v5563 = vunpack.c.l.b16 %v5188
    %v5564 = vunpack.c.h.b16 %v5188
    %v5565 = vunpack.c.l.b16 %v5189
    %v5566 = vunpack.c.h.b16 %v5189
    %v5567 = vunpack.c.l.b16 %v5190
    %v5568 = vunpack.c.h.b16 %v5190
    %v5569 = vunpack.c.l.b16 %v5191
    %v5570 = vunpack.c.h.b16 %v5191
    %v5571 = vunpack.c.l.b16 %v5192
    %v5572 = vunpack.c.h.b16 %v5192
    %v5573 = vunpack.c.l.b16 %v5193
    %v5574 = vunpack.c.h.b16 %v5193
    %v5575 = vunpack.c.l.b16 %v5194
    %v5576 = vunpack.c.h.b16 %v5194
    %v5577 = vunpack.c.l.b16 %v5195
    %v5578 = vunpack.c.h.b16 %v5195
    %v5579 = vunpack.c.l.b16 %v5196
    %v5580 = vunpack.c.h.b16 %v5196
    %v5581 = vunpack.c.l.b16 %v5197
    %v5582 = vunpack.c.h.b16 %v5197
    %v5583 = vunpack.c.l.b16 %v5198
    %v5584 = vunpack.c.h.b16 %v5198
    %v5585 = vunpack.c.l.b16 %v5199
    %v5586 = vunpack.c.h.b16 %v5199
    %v5587 = vunpack.c.l.b16 %v5200
    %v5588 = vunpack.c.h.b16 %v5200
    %v5589 = vunpack.c.l.b16 %v5201
    %v5590 = vunpack.c.h.b16 %v5201
    %v5591 = vunpack.c.l.b16 %v5202
    %v5592 = vunpack.c.h.b16 %v5202
    %v5593 = vunpack.c.l.b16 %v5203
    %v5594 = vunpack.c.h.b16 %v5203
    %v5595 = vunpack.c.l.b16 %v5204
    %v5596 = vunpack.c.h.b16 %v5204
    %v5597 = vunpack.c.l.b16 %v5205
    %v5598 = vunpack.c.h.b16 %v5205
    %v5599 = vunpack.c.l.b16 %v5206
    %v5600 = vunpack.c.h.b16 %v5206
    %v5601 = vunpack.c.l.b16 %v5207
    %v5602 = vunpack.c.h.b16 %v5207
    %v5603 = vunpack.c.l.b16 %v5208
    %v5604 = vunpack.c.h.b16 %v5208
    %v5605 = vunpack.c.l.b16 %v5209
    %v5606 = vunpack.c.h.b16 %v5209
    %v5607 = vunpack.c.l.b16 %v5210
    %v5608 = vunpack.c.h.b16 %v5210
    %v5609 = vunpack.c.l.b16 %v5211
    %v5610 = vunpack.c.h.b16 %v5211
    %v5611 = vunpack.c.l.b16 %v5212
    %v5612 = vunpack.c.h.b16 %v5212
    %v5613 = vunpack.c.l.b16 %v5213
    %v5614 = vunpack.c.h.b16 %v5213
    %v5615 = vunpack.c.l.b16 %v5214
    %v5616 = vunpack.c.h.b16 %v5214
    %v5617 = vunpack.c.l.b16 %v5215
    %v5618 = vunpack.c.h.b16 %v5215
    %v5619 = vunpack.c.l.b16 %v5216
    %v5620 = vunpack.c.h.b16 %v5216
    %v5621 = vunpack.c.l.b16 %v5217
    %v5622 = vunpack.c.h.b16 %v5217
    %v5623 = vunpack.c.l.b16 %v5218
    %v5624 = vunpack.c.h.b16 %v5218
    %v5625 = vpack.c.b16 %v5373, %v5369
    %v5626 = vpack.c.b16 %v5374, %v5370
    %v5627 = vpack.c.b16 %v5375, %v5371
    %v5628 = vpack.c.b16 %v5376, %v5372
    %v5629 = vpack.c.b16 %v5381, %v5377
    %v5630 = vpack.c.b16 %v5382, %v5378
    %v5631 = vpack.c.b16 %v5383, %v5379
    %v5632 = vpack.c.b16 %v5384, %v5380
    %v5633 = vpack.c.b16 %v5389, %v5385
    %v5634 = vpack.c.b16 %v5390, %v5386
    %v5635 = vpack.c.b16 %v5391, %v5387
    %v5636 = vpack.c.b16 %v5392, %v5388
    %v5637 = vpack.c.b16 %v5397, %v5393
    %v5638 = vpack.c.b16 %v5398, %v5394
    %v5639 = vpack.c.b16 %v5399, %v5395
    %v5640 = vpack.c.b16 %v5400, %v5396
    %v5641 = vpack.c.b16 %v5405, %v5401
    %v5642 = vpack.c.b16 %v5406, %v5402
    %v5643 = vpack.c.b16 %v5407, %v5403
    %v5644 = vpack.c.b16 %v5408, %v5404
    %v5645 = vpack.c.b16 %v5413, %v5409
    %v5646 = vpack.c.b16 %v5414, %v5410
    %v5647 = vpack.c.b16 %v5415, %v5411
    %v5648 = vpack.c.b16 %v5416, %v5412
    %v5649 = vpack.c.b16 %v5421, %v5417
    %v5650 = vpack.c.b16 %v5422, %v5418
    %v5651 = vpack.c.b16 %v5423, %v5419
    %v5652 = vpack.c.b16 %v5424, %v5420
    %v5653 = vpack.c.b16 %v5429, %v5425
    %v5654 = vpack.c.b16 %v5430, %v5426
    %v5655 = vpack.c.b16 %v5431, %v5427
    %v5656 = vpack.c.b16 %v5432, %v5428
    %v5657 = vpack.c.b16 %v5437, %v5433
    %v5658 = vpack.c.b16 %v5438, %v5434
    %v5659 = vpack.c.b16 %v5439, %v5435
    %v5660 = vpack.c.b16 %v5440, %v5436
    %v5661 = vpack.c.b16 %v5445, %v5441
    %v5662 = vpack.c.b16 %v5446, %v5442
    %v5663 = vpack.c.b16 %v5447, %v5443
    %v5664 = vpack.c.b16 %v5448, %v5444
    %v5665 = vpack.c.b16 %v5453, %v5449
    %v5666 = vpack.c.b16 %v5454, %v5450
    %v5667 = vpack.c.b16 %v5455, %v5451
    %v5668 = vpack.c.b16 %v5456, %v5452
    %v5669 = vpack.c.b16 %v5461, %v5457
    %v5670 = vpack.c.b16 %v5462, %v5458
    %v5671 = vpack.c.b16 %v5463, %v5459
    %v5672 = vpack.c.b16 %v5464, %v5460
    %v5673 = vpack.c.b16 %v5469, %v5465
    %v5674 = vpack.c.b16 %v5470, %v5466
    %v5675 = vpack.c.b16 %v5471, %v5467
    %v5676 = vpack.c.b16 %v5472, %v5468
    %v5677 = vpack.c.b16 %v5477, %v5473
    %v5678 = vpack.c.b16 %v5478, %v5474
    %v5679 = vpack.c.b16 %v5479, %v5475
    %v5680 = vpack.c.b16 %v5480, %v5476
    %v5681 = vpack.c.b16 %v5485, %v5481
    %v5682 = vpack.c.b16 %v5486, %v5482
    %v5683 = vpack.c.b16 %v5487, %v5483
    %v5684 = vpack.c.b16 %v5488, %v5484
    %v5685 = vpack.c.b16 %v5493, %v5489
    %v5686 = vpack.c.b16 %v5494, %v5490
    %v5687 = vpack.c.b16 %v5495, %v5491
    %v5688 = vpack.c.b16 %v5496, %v5492
    %v5689 = vpack.c.b16 %v5501, %v5497
    %v5690 = vpack.c.b16 %v5502, %v5498
    %v5691 = vpack.c.b16 %v5503, %v5499
    %v5692 = vpack.c.b16 %v5504, %v5500
    %v5693 = vpack.c.b16 %v5509, %v5505
    %v5694 = vpack.c.b16 %v5510, %v5506
    %v5695 = vpack.c.b16 %v5511, %v5507
    %v5696 = vpack.c.b16 %v5512, %v5508
    %v5697 = vpack.c.b16 %v5517, %v5513
    %v5698 = vpack.c.b16 %v5518, %v5514
    %v5699 = vpack.c.b16 %v5519, %v5515
    %v5700 = vpack.c.b16 %v5520, %v5516
    %v5701 = vpack.c.b16 %v5525, %v5521
    %v5702 = vpack.c.b16 %v5526, %v5522
    %v5703 = vpack.c.b16 %v5527, %v5523
    %v5704 = vpack.c.b16 %v5528, %v5524
    %v5705 = vpack.c.b16 %v5533, %v5529
    %v5706 = vpack.c.b16 %v5534, %v5530
    %v5707 = vpack.c.b16 %v5535, %v5531
    %v5708 = vpack.c.b16 %v5536, %v5532
    %v5709 = vpack.c.b16 %v5541, %v5537
    %v5710 = vpack.c.b16 %v5542, %v5538
    %v5711 = vpack.c.b16 %v5543, %v5539
    %v5712 = vpack.c.b16 %v5544, %v5540
    %v5713 = vpack.c.b16 %v5549, %v5545
    %v5714 = vpack.c.b16 %v5550, %v5546
    %v5715 = vpack.c.b16 %v5551, %v5547
    %v5716 = vpack.c.b16 %v5552, %v5548
    %v5717 = vpack.c.b16 %v5557, %v5553
    %v5718 = vpack.c.b16 %v5558, %v5554
    %v5719 = vpack.c.b16 %v5559, %v5555
    %v5720 = vpack.c.b16 %v5560, %v5556
    %v5721 = vpack.c.b16 %v5565, %v5561
    %v5722 = vpack.c.b16 %v5566, %v5562
    %v5723 = vpack.c.b16 %v5567, %v5563
    %v5724 = vpack.c.b16 %v5568, %v5564
    %v5725 = vpack.c.b16 %v5573, %v5569
    %v5726 = vpack.c.b16 %v5574, %v5570
    %v5727 = vpack.c.b16 %v5575, %v5571
    %v5728 = vpack.c.b16 %v5576, %v5572
    %v5729 = vpack.c.b16 %v5581, %v5577
    %v5730 = vpack.c.b16 %v5582, %v5578
    %v5731 = vpack.c.b16 %v5583, %v5579
    %v5732 = vpack.c.b16 %v5584, %v5580
    %v5733 = vpack.c.b16 %v5589, %v5585
    %v5734 = vpack.c.b16 %v5590, %v5586
    %v5735 = vpack.c.b16 %v5591, %v5587
    %v5736 = vpack.c.b16 %v5592, %v5588
    %v5737 = vpack.c.b16 %v5597, %v5593
    %v5738 = vpack.c.b16 %v5598, %v5594
    %v5739 = vpack.c.b16 %v5599, %v5595
    %v5740 = vpack.c.b16 %v5600, %v5596
    %v5741 = vpack.c.b16 %v5605, %v5601
    %v5742 = vpack.c.b16 %v5606, %v5602
    %v5743 = vpack.c.b16 %v5607, %v5603
    %v5744 = vpack.c.b16 %v5608, %v5604
    %v5745 = vpack.c.b16 %v5613, %v5609
    %v5746 = vpack.c.b16 %v5614, %v5610
    %v5747 = vpack.c.b16 %v5615, %v5611
    %v5748 = vpack.c.b16 %v5616, %v5612
    %v5749 = vpack.c.b16 %v5621, %v5617
    %v5750 = vpack.c.b16 %v5622, %v5618
    %v5751 = vpack.c.b16 %v5623, %v5619
    %v5752 = vpack.c.b16 %v5624, %v5620
    %5881 = vmatprep.subr.bf16.mxu0 %v5626
    %5882 = vmatpush1.bf16.msra.mxu0 %v5625
    %5883 = vmatprep.subr.bf16.mxu0 %v5630
    %5884 = vmatpush1.bf16.msra.mxu0 %v5629
    %5885 = vmatprep.subr.bf16.mxu0 %v5634
    %5886 = vmatpush1.bf16.msra.mxu0 %v5633
    %5887 = vmatprep.subr.bf16.mxu0 %v5638
    %5888 = vmatpush1.bf16.msra.mxu0 %v5637
    %5889 = vmatprep.subr.bf16.mxu0 %v5642
    %5890 = vmatpush1.bf16.msra.mxu0 %v5641
    %5891 = vmatprep.subr.bf16.mxu0 %v5646
    %5892 = vmatpush1.bf16.msra.mxu0 %v5645
    %5893 = vmatprep.subr.bf16.mxu0 %v5650
    %5894 = vmatpush1.bf16.msra.mxu0 %v5649
    %5895 = vmatprep.subr.bf16.mxu0 %v5654
    %5896 = vmatpush1.bf16.msra.mxu0 %v5653
    %5897 = vmatprep.subr.bf16.mxu0 %v5658
    %5898 = vmatpush1.bf16.msra.mxu0 %v5657
    %5899 = vmatprep.subr.bf16.mxu0 %v5662
    %5900 = vmatpush1.bf16.msra.mxu0 %v5661
    %5901 = vmatprep.subr.bf16.mxu0 %v5666
    %5902 = vmatpush1.bf16.msra.mxu0 %v5665
    %5903 = vmatprep.subr.bf16.mxu0 %v5670
    %5904 = vmatpush1.bf16.msra.mxu0 %v5669
    %5905 = vmatprep.subr.bf16.mxu0 %v5674
    %5906 = vmatpush1.bf16.msra.mxu0 %v5673
    %5907 = vmatprep.subr.bf16.mxu0 %v5678
    %5908 = vmatpush1.bf16.msra.mxu0 %v5677
    %5909 = vmatprep.subr.bf16.mxu0 %v5682
    %5910 = vmatpush1.bf16.msra.mxu0 %v5681
    %5911 = vmatprep.subr.bf16.mxu0 %v5686
    %5912 = vmatpush1.bf16.msra.mxu0 %v5685
    %5913 = vmatprep.mubr.bf16.mxu0 %v5088
    %5914 = vmatmul.mubr.bf16.gmra.mrb[0].mxu0 %v5087
    %v5915 = vpop.f32.mrb[0].mxu0
    %v5916 = vadd.f32 %v5224, %v5915
    %v5917 = vpop.f32.mrb[0].mxu0
    %v5918 = vadd.f32 %v5228, %v5917
    %v5919 = vpop.f32.mrb[0].mxu0
    %v5920 = vpop.f32.mrb[0].mxu0
    %5921 = vdwg.mxu0
    %5922 = vmatprep.subr.bf16.mxu0 %v5690
    %5923 = vmatpush1.bf16.msra.mxu0 %v5689
    %5924 = vmatprep.subr.bf16.mxu0 %v5694
    %5925 = vmatpush1.bf16.msra.mxu0 %v5693
    %5926 = vmatprep.subr.bf16.mxu0 %v5698
    %5927 = vmatpush1.bf16.msra.mxu0 %v5697
    %5928 = vmatprep.subr.bf16.mxu0 %v5702
    %5929 = vmatpush1.bf16.msra.mxu0 %v5701
    %5930 = vmatprep.subr.bf16.mxu0 %v5706
    %5931 = vmatpush1.bf16.msra.mxu0 %v5705
    %5932 = vmatprep.subr.bf16.mxu0 %v5710
    %5933 = vmatpush1.bf16.msra.mxu0 %v5709
    %5934 = vmatprep.subr.bf16.mxu0 %v5714
    %5935 = vmatpush1.bf16.msra.mxu0 %v5713
    %5936 = vmatprep.subr.bf16.mxu0 %v5718
    %5937 = vmatpush1.bf16.msra.mxu0 %v5717
    %5938 = vmatprep.subr.bf16.mxu0 %v5722
    %5939 = vmatpush1.bf16.msra.mxu0 %v5721
    %5940 = vmatprep.subr.bf16.mxu0 %v5726
    %5941 = vmatpush1.bf16.msra.mxu0 %v5725
    %5942 = vmatprep.subr.bf16.mxu0 %v5730
    %5943 = vmatpush1.bf16.msra.mxu0 %v5729
    %5944 = vmatprep.subr.bf16.mxu0 %v5734
    %5945 = vmatpush1.bf16.msra.mxu0 %v5733
    %5946 = vmatprep.subr.bf16.mxu0 %v5738
    %5947 = vmatpush1.bf16.msra.mxu0 %v5737
    %5948 = vmatprep.subr.bf16.mxu0 %v5742
    %5949 = vmatpush1.bf16.msra.mxu0 %v5741
    %5950 = vmatprep.subr.bf16.mxu0 %v5746
    %5951 = vmatpush1.bf16.msra.mxu0 %v5745
    %5952 = vmatprep.subr.bf16.mxu0 %v5750
    %5953 = vmatpush1.bf16.msra.mxu0 %v5749
    %5954 = vmatprep.mubr.bf16.mxu0 %v5090
    %5955 = vmatmul.mubr.bf16.gmra.mrb[0].mxu0 %v5089
    %v5956 = vpop.f32.mrb[0].mxu0
    %v5957 = vadd.f32 %v5916, %v5956
    %v5958 = vpop.f32.mrb[0].mxu0
    %v5959 = vadd.f32 %v5918, %v5958
    %v5960 = vpop.f32.mrb[0].mxu0
    %v5961 = vpop.f32.mrb[0].mxu0
    %5962 = vdwg.mxu0
    %5963 = vmatprep.subr.bf16.mxu0 %v5628
    %5964 = vmatpush1.bf16.msra.mxu0 %v5627
    %5965 = vmatprep.subr.bf16.mxu0 %v5632
    %5966 = vmatpush1.bf16.msra.mxu0 %v5631
    %5967 = vmatprep.subr.bf16.mxu0 %v5636
    %5968 = vmatpush1.bf16.msra.mxu0 %v5635
    %5969 = vmatprep.subr.bf16.mxu0 %v5640
    %5970 = vmatpush1.bf16.msra.mxu0 %v5639
    %5971 = vmatprep.subr.bf16.mxu0 %v5644
    %5972 = vmatpush1.bf16.msra.mxu0 %v5643
    %5973 = vmatprep.subr.bf16.mxu0 %v5648
    %5974 = vmatpush1.bf16.msra.mxu0 %v5647
    %5975 = vmatprep.subr.bf16.mxu0 %v5652
    %5976 = vmatpush1.bf16.msra.mxu0 %v5651
    %5977 = vmatprep.subr.bf16.mxu0 %v5656
    %5978 = vmatpush1.bf16.msra.mxu0 %v5655
    %5979 = vmatprep.subr.bf16.mxu0 %v5660
    %5980 = vmatpush1.bf16.msra.mxu0 %v5659
    %5981 = vmatprep.subr.bf16.mxu0 %v5664
    %5982 = vmatpush1.bf16.msra.mxu0 %v5663
    %5983 = vmatprep.subr.bf16.mxu0 %v5668
    %5984 = vmatpush1.bf16.msra.mxu0 %v5667
    %5985 = vmatprep.subr.bf16.mxu0 %v5672
    %5986 = vmatpush1.bf16.msra.mxu0 %v5671
    %5987 = vmatprep.subr.bf16.mxu0 %v5676
    %5988 = vmatpush1.bf16.msra.mxu0 %v5675
    %5989 = vmatprep.subr.bf16.mxu0 %v5680
    %5990 = vmatpush1.bf16.msra.mxu0 %v5679
    %5991 = vmatprep.subr.bf16.mxu0 %v5684
    %5992 = vmatpush1.bf16.msra.mxu0 %v5683
    %5993 = vmatprep.subr.bf16.mxu0 %v5688
    %5994 = vmatpush1.bf16.msra.mxu0 %v5687
    %5995 = vmatprep.mubr.bf16.mxu0 %v5088
    %5996 = vmatmul.mubr.bf16.gmra.mrb[0].mxu0 %v5087
    %v5997 = vpop.f32.mrb[0].mxu0
    %v5998 = vadd.f32 %v5232, %v5997
    %v5999 = vpop.f32.mrb[0].mxu0
    %v6000 = vadd.f32 %v5236, %v5999
    %v6001 = vpop.f32.mrb[0].mxu0
    %v6002 = vpop.f32.mrb[0].mxu0
    %6003 = vdwg.mxu0
    %6004 = vmatprep.subr.bf16.mxu0 %v5692
    %6005 = vmatpush1.bf16.msra.mxu0 %v5691
    %6006 = vmatprep.subr.bf16.mxu0 %v5696
    %6007 = vmatpush1.bf16.msra.mxu0 %v5695
    %6008 = vmatprep.subr.bf16.mxu0 %v5700
    %6009 = vmatpush1.bf16.msra.mxu0 %v5699
    %6010 = vmatprep.subr.bf16.mxu0 %v5704
    %6011 = vmatpush1.bf16.msra.mxu0 %v5703
    %6012 = vmatprep.subr.bf16.mxu0 %v5708
    %6013 = vmatpush1.bf16.msra.mxu0 %v5707
    %6014 = vmatprep.subr.bf16.mxu0 %v5712
    %6015 = vmatpush1.bf16.msra.mxu0 %v5711
    %6016 = vmatprep.subr.bf16.mxu0 %v5716
    %6017 = vmatpush1.bf16.msra.mxu0 %v5715
    %6018 = vmatprep.subr.bf16.mxu0 %v5720
    %6019 = vmatpush1.bf16.msra.mxu0 %v5719
    %6020 = vmatprep.subr.bf16.mxu0 %v5724
    %6021 = vmatpush1.bf16.msra.mxu0 %v5723
    %6022 = vmatprep.subr.bf16.mxu0 %v5728
    %6023 = vmatpush1.bf16.msra.mxu0 %v5727
    %6024 = vmatprep.subr.bf16.mxu0 %v5732
    %6025 = vmatpush1.bf16.msra.mxu0 %v5731
    %6026 = vmatprep.subr.bf16.mxu0 %v5736
    %6027 = vmatpush1.bf16.msra.mxu0 %v5735
    %6028 = vmatprep.subr.bf16.mxu0 %v5740
    %6029 = vmatpush1.bf16.msra.mxu0 %v5739
    %6030 = vmatprep.subr.bf16.mxu0 %v5744
    %6031 = vmatpush1.bf16.msra.mxu0 %v5743
    %6032 = vmatprep.subr.bf16.mxu0 %v5748
    %6033 = vmatpush1.bf16.msra.mxu0 %v5747
    %6034 = vmatprep.subr.bf16.mxu0 %v5752
    %6035 = vmatpush1.bf16.msra.mxu0 %v5751
    %6036 = vmatprep.mubr.bf16.mxu0 %v5090
    %6037 = vmatmul.mubr.bf16.gmra.mrb[0].mxu0 %v5089
    %v6038 = vpop.f32.mrb[0].mxu0
    %v6039 = vadd.f32 %v5998, %v6038
    %v6040 = vpop.f32.mrb[0].mxu0
    %v6041 = vadd.f32 %v6000, %v6040
    %v6042 = vpop.f32.mrb[0].mxu0
    %v6043 = vpop.f32.mrb[0].mxu0
    %6044 = vdwg.mxu0
    %v6045 = vpack.c.bf16 %v5957, %v5957
    %v6046 = vpack.c.bf16 %v5959, %v5959
    %v6047 = vpack.c.bf16 %v6039, %v6039
    %v6048 = vpack.c.bf16 %v6041, %v6041
    %v6049 = vmax.bf16 %v6045, 0
    %v6050 = vmax.bf16 %v6046, 0
    %v6051 = vmax.bf16 %v6047, 0
    %v6052 = vmax.bf16 %v6048, 0
    %v6053 = vld [vmem:[#allocation14] sm:$0xff]
    %v6054 = vld [vmem:[#allocation14 + $0x8] sm:$0xff]
    %v6055 = vld [vmem:[#allocation14 + $0x10] sm:$0xff]
    %v6056 = vld [vmem:[#allocation14 + $0x18] sm:$0xff]
    %v6057 = vld [vmem:[#allocation14 + $0x20] sm:$0xff]
    %v6058 = vld [vmem:[#allocation14 + $0x28] sm:$0xff]
    %v6059 = vld [vmem:[#allocation14 + $0x30] sm:$0xff]
    %v6060 = vld [vmem:[#allocation14 + $0x38] sm:$0xff]
    %v6061 = vld [vmem:[#allocation14 + $0x40] sm:$0xff]
    %v6062 = vld [vmem:[#allocation14 + $0x48] sm:$0xff]
    %v6063 = vld [vmem:[#allocation14 + $0x50] sm:$0xff]
    %v6064 = vld [vmem:[#allocation14 + $0x58] sm:$0xff]
    %v6065 = vld [vmem:[#allocation14 + $0x60] sm:$0xff]
    %v6066 = vld [vmem:[#allocation14 + $0x68] sm:$0xff]
    %v6067 = vld [vmem:[#allocation14 + $0x70] sm:$0xff]
    %v6068 = vld [vmem:[#allocation14 + $0x78] sm:$0xff]
    %v6069 = vld [vmem:[#allocation14 + $0x80] sm:$0xff]
    %v6070 = vld [vmem:[#allocation14 + $0x88] sm:$0xff]
    %v6071 = vld [vmem:[#allocation14 + $0x90] sm:$0xff]
    %v6072 = vld [vmem:[#allocation14 + $0x98] sm:$0xff]
    %v6073 = vld [vmem:[#allocation14 + $0xa0] sm:$0xff]
    %v6074 = vld [vmem:[#allocation14 + $0xa8] sm:$0xff]
    %v6075 = vld [vmem:[#allocation14 + $0xb0] sm:$0xff]
    %v6076 = vld [vmem:[#allocation14 + $0xb8] sm:$0xff]
    %v6077 = vld [vmem:[#allocation14 + $0xc0] sm:$0xff]
    %v6078 = vld [vmem:[#allocation14 + $0xc8] sm:$0xff]
    %v6079 = vld [vmem:[#allocation14 + $0xd0] sm:$0xff]
    %v6080 = vld [vmem:[#allocation14 + $0xd8] sm:$0xff]
    %v6081 = vld [vmem:[#allocation14 + $0xe0] sm:$0xff]
    %v6082 = vld [vmem:[#allocation14 + $0xe8] sm:$0xff]
    %v6083 = vld [vmem:[#allocation14 + $0xf0] sm:$0xff]
    %v6084 = vld [vmem:[#allocation14 + $0xf8] sm:$0xff]
    %v6085 = vld [vmem:[#allocation14 + $0x100] sm:$0xff]
    %v6086 = vld [vmem:[#allocation14 + $0x108] sm:$0xff]
    %v6087 = vld [vmem:[#allocation14 + $0x110] sm:$0xff]
    %v6088 = vld [vmem:[#allocation14 + $0x118] sm:$0xff]
    %v6089 = vld [vmem:[#allocation14 + $0x120] sm:$0xff]
    %v6090 = vld [vmem:[#allocation14 + $0x128] sm:$0xff]
    %v6091 = vld [vmem:[#allocation14 + $0x130] sm:$0xff]
    %v6092 = vld [vmem:[#allocation14 + $0x138] sm:$0xff]
    %v6093 = vld [vmem:[#allocation14 + $0x140] sm:$0xff]
    %v6094 = vld [vmem:[#allocation14 + $0x148] sm:$0xff]
    %v6095 = vld [vmem:[#allocation14 + $0x150] sm:$0xff]
    %v6096 = vld [vmem:[#allocation14 + $0x158] sm:$0xff]
    %v6097 = vld [vmem:[#allocation14 + $0x160] sm:$0xff]
    %v6098 = vld [vmem:[#allocation14 + $0x168] sm:$0xff]
    %v6099 = vld [vmem:[#allocation14 + $0x170] sm:$0xff]
    %v6100 = vld [vmem:[#allocation14 + $0x178] sm:$0xff]
    %v6101 = vld [vmem:[#allocation14 + $0x180] sm:$0xff]
    %v6102 = vld [vmem:[#allocation14 + $0x188] sm:$0xff]
    %v6103 = vld [vmem:[#allocation14 + $0x190] sm:$0xff]
    %v6104 = vld [vmem:[#allocation14 + $0x198] sm:$0xff]
    %v6105 = vld [vmem:[#allocation14 + $0x1a0] sm:$0xff]
    %v6106 = vld [vmem:[#allocation14 + $0x1a8] sm:$0xff]
    %v6107 = vld [vmem:[#allocation14 + $0x1b0] sm:$0xff]
    %v6108 = vld [vmem:[#allocation14 + $0x1b8] sm:$0xff]
    %v6109 = vld [vmem:[#allocation14 + $0x1c0] sm:$0xff]
    %v6110 = vld [vmem:[#allocation14 + $0x1c8] sm:$0xff]
    %v6111 = vld [vmem:[#allocation14 + $0x1d0] sm:$0xff]
    %v6112 = vld [vmem:[#allocation14 + $0x1d8] sm:$0xff]
    %v6113 = vld [vmem:[#allocation14 + $0x1e0] sm:$0xff]
    %v6114 = vld [vmem:[#allocation14 + $0x1e8] sm:$0xff]
    %v6115 = vld [vmem:[#allocation14 + $0x1f0] sm:$0xff]
    %v6116 = vld [vmem:[#allocation14 + $0x1f8] sm:$0xff]
    %v6117 = vld [vmem:[#allocation14 + $0x200] sm:$0xff]
    %v6118 = vld [vmem:[#allocation14 + $0x208] sm:$0xff]
    %v6119 = vld [vmem:[#allocation14 + $0x210] sm:$0xff]
    %v6120 = vld [vmem:[#allocation14 + $0x218] sm:$0xff]
    %v6121 = vld [vmem:[#allocation14 + $0x220] sm:$0xff]
    %v6122 = vld [vmem:[#allocation14 + $0x228] sm:$0xff]
    %v6123 = vld [vmem:[#allocation14 + $0x230] sm:$0xff]
    %v6124 = vld [vmem:[#allocation14 + $0x238] sm:$0xff]
    %v6125 = vld [vmem:[#allocation14 + $0x240] sm:$0xff]
    %v6126 = vld [vmem:[#allocation14 + $0x248] sm:$0xff]
    %v6127 = vld [vmem:[#allocation14 + $0x250] sm:$0xff]
    %v6128 = vld [vmem:[#allocation14 + $0x258] sm:$0xff]
    %v6129 = vld [vmem:[#allocation14 + $0x260] sm:$0xff]
    %v6130 = vld [vmem:[#allocation14 + $0x268] sm:$0xff]
    %v6131 = vld [vmem:[#allocation14 + $0x270] sm:$0xff]
    %v6132 = vld [vmem:[#allocation14 + $0x278] sm:$0xff]
    %v6133 = vld [vmem:[#allocation14 + $0x280] sm:$0xff]
    %v6134 = vld [vmem:[#allocation14 + $0x288] sm:$0xff]
    %v6135 = vld [vmem:[#allocation14 + $0x290] sm:$0xff]
    %v6136 = vld [vmem:[#allocation14 + $0x298] sm:$0xff]
    %v6137 = vld [vmem:[#allocation14 + $0x2a0] sm:$0xff]
    %v6138 = vld [vmem:[#allocation14 + $0x2a8] sm:$0xff]
    %v6139 = vld [vmem:[#allocation14 + $0x2b0] sm:$0xff]
    %v6140 = vld [vmem:[#allocation14 + $0x2b8] sm:$0xff]
    %v6141 = vld [vmem:[#allocation14 + $0x2c0] sm:$0xff]
    %v6142 = vld [vmem:[#allocation14 + $0x2c8] sm:$0xff]
    %v6143 = vld [vmem:[#allocation14 + $0x2d0] sm:$0xff]
    %v6144 = vld [vmem:[#allocation14 + $0x2d8] sm:$0xff]
    %v6145 = vld [vmem:[#allocation14 + $0x2e0] sm:$0xff]
    %v6146 = vld [vmem:[#allocation14 + $0x2e8] sm:$0xff]
    %v6147 = vld [vmem:[#allocation14 + $0x2f0] sm:$0xff]
    %v6148 = vld [vmem:[#allocation14 + $0x2f8] sm:$0xff]
    %v6149 = vld [vmem:[#allocation14 + $0x300] sm:$0xff]
    %v6150 = vld [vmem:[#allocation14 + $0x308] sm:$0xff]
    %v6151 = vld [vmem:[#allocation14 + $0x310] sm:$0xff]
    %v6152 = vld [vmem:[#allocation14 + $0x318] sm:$0xff]
    %v6153 = vld [vmem:[#allocation14 + $0x320] sm:$0xff]
    %v6154 = vld [vmem:[#allocation14 + $0x328] sm:$0xff]
    %v6155 = vld [vmem:[#allocation14 + $0x330] sm:$0xff]
    %v6156 = vld [vmem:[#allocation14 + $0x338] sm:$0xff]
    %v6157 = vld [vmem:[#allocation14 + $0x340] sm:$0xff]
    %v6158 = vld [vmem:[#allocation14 + $0x348] sm:$0xff]
    %v6159 = vld [vmem:[#allocation14 + $0x350] sm:$0xff]
    %v6160 = vld [vmem:[#allocation14 + $0x358] sm:$0xff]
    %v6161 = vld [vmem:[#allocation14 + $0x360] sm:$0xff]
    %v6162 = vld [vmem:[#allocation14 + $0x368] sm:$0xff]
    %v6163 = vld [vmem:[#allocation14 + $0x370] sm:$0xff]
    %v6164 = vld [vmem:[#allocation14 + $0x378] sm:$0xff]
    %v6165 = vld [vmem:[#allocation14 + $0x380] sm:$0xff]
    %v6166 = vld [vmem:[#allocation14 + $0x388] sm:$0xff]
    %v6167 = vld [vmem:[#allocation14 + $0x390] sm:$0xff]
    %v6168 = vld [vmem:[#allocation14 + $0x398] sm:$0xff]
    %v6169 = vld [vmem:[#allocation14 + $0x3a0] sm:$0xff]
    %v6170 = vld [vmem:[#allocation14 + $0x3a8] sm:$0xff]
    %v6171 = vld [vmem:[#allocation14 + $0x3b0] sm:$0xff]
    %v6172 = vld [vmem:[#allocation14 + $0x3b8] sm:$0xff]
    %v6173 = vld [vmem:[#allocation14 + $0x3c0] sm:$0xff]
    %v6174 = vld [vmem:[#allocation14 + $0x3c8] sm:$0xff]
    %v6175 = vld [vmem:[#allocation14 + $0x3d0] sm:$0xff]
    %v6176 = vld [vmem:[#allocation14 + $0x3d8] sm:$0xff]
    %v6177 = vld [vmem:[#allocation14 + $0x3e0] sm:$0xff]
    %v6178 = vld [vmem:[#allocation14 + $0x3e8] sm:$0xff]
    %v6179 = vld [vmem:[#allocation14 + $0x3f0] sm:$0xff]
    %v6180 = vld [vmem:[#allocation14 + $0x3f8] sm:$0xff]
    %v6181 = vld [vmem:[%s13] sm:$0xf]
    %v6183 = vlaneseq
    %v6184 = vshrl.u32 %v6183, 7
    %v6185 = vsub.s32 0, %v6184
    %v6186 = vrot.slane %v6181, %v6185
    %v6187 = vlaneseq
    %v6188 = vshrl.u32 %v6187, 7
    %v6189 = vsub.s32 1, %v6188
    %v6190 = vrot.slane %v6181, %v6189
    %v6191 = vlaneseq
    %v6192 = vshrl.u32 %v6191, 7
    %v6193 = vsub.s32 2, %v6192
    %v6194 = vrot.slane %v6181, %v6193
    %v6195 = vlaneseq
    %v6196 = vshrl.u32 %v6195, 7
    %v6197 = vsub.s32 3, %v6196
    %v6198 = vrot.slane %v6181, %v6197
    %v6331 = vunpack.c.l.b16 %v6053
    %v6332 = vunpack.c.h.b16 %v6053
    %v6333 = vunpack.c.l.b16 %v6054
    %v6334 = vunpack.c.h.b16 %v6054
    %v6335 = vunpack.c.l.b16 %v6055
    %v6336 = vunpack.c.h.b16 %v6055
    %v6337 = vunpack.c.l.b16 %v6056
    %v6338 = vunpack.c.h.b16 %v6056
    %v6339 = vunpack.c.l.b16 %v6057
    %v6340 = vunpack.c.h.b16 %v6057
    %v6341 = vunpack.c.l.b16 %v6058
    %v6342 = vunpack.c.h.b16 %v6058
    %v6343 = vunpack.c.l.b16 %v6059
    %v6344 = vunpack.c.h.b16 %v6059
    %v6345 = vunpack.c.l.b16 %v6060
    %v6346 = vunpack.c.h.b16 %v6060
    %v6347 = vunpack.c.l.b16 %v6061
    %v6348 = vunpack.c.h.b16 %v6061
    %v6349 = vunpack.c.l.b16 %v6062
    %v6350 = vunpack.c.h.b16 %v6062
    %v6351 = vunpack.c.l.b16 %v6063
    %v6352 = vunpack.c.h.b16 %v6063
    %v6353 = vunpack.c.l.b16 %v6064
    %v6354 = vunpack.c.h.b16 %v6064
    %v6355 = vunpack.c.l.b16 %v6065
    %v6356 = vunpack.c.h.b16 %v6065
    %v6357 = vunpack.c.l.b16 %v6066
    %v6358 = vunpack.c.h.b16 %v6066
    %v6359 = vunpack.c.l.b16 %v6067
    %v6360 = vunpack.c.h.b16 %v6067
    %v6361 = vunpack.c.l.b16 %v6068
    %v6362 = vunpack.c.h.b16 %v6068
    %v6363 = vunpack.c.l.b16 %v6069
    %v6364 = vunpack.c.h.b16 %v6069
    %v6365 = vunpack.c.l.b16 %v6070
    %v6366 = vunpack.c.h.b16 %v6070
    %v6367 = vunpack.c.l.b16 %v6071
    %v6368 = vunpack.c.h.b16 %v6071
    %v6369 = vunpack.c.l.b16 %v6072
    %v6370 = vunpack.c.h.b16 %v6072
    %v6371 = vunpack.c.l.b16 %v6073
    %v6372 = vunpack.c.h.b16 %v6073
    %v6373 = vunpack.c.l.b16 %v6074
    %v6374 = vunpack.c.h.b16 %v6074
    %v6375 = vunpack.c.l.b16 %v6075
    %v6376 = vunpack.c.h.b16 %v6075
    %v6377 = vunpack.c.l.b16 %v6076
    %v6378 = vunpack.c.h.b16 %v6076
    %v6379 = vunpack.c.l.b16 %v6077
    %v6380 = vunpack.c.h.b16 %v6077
    %v6381 = vunpack.c.l.b16 %v6078
    %v6382 = vunpack.c.h.b16 %v6078
    %v6383 = vunpack.c.l.b16 %v6079
    %v6384 = vunpack.c.h.b16 %v6079
    %v6385 = vunpack.c.l.b16 %v6080
    %v6386 = vunpack.c.h.b16 %v6080
    %v6387 = vunpack.c.l.b16 %v6081
    %v6388 = vunpack.c.h.b16 %v6081
    %v6389 = vunpack.c.l.b16 %v6082
    %v6390 = vunpack.c.h.b16 %v6082
    %v6391 = vunpack.c.l.b16 %v6083
    %v6392 = vunpack.c.h.b16 %v6083
    %v6393 = vunpack.c.l.b16 %v6084
    %v6394 = vunpack.c.h.b16 %v6084
    %v6395 = vunpack.c.l.b16 %v6085
    %v6396 = vunpack.c.h.b16 %v6085
    %v6397 = vunpack.c.l.b16 %v6086
    %v6398 = vunpack.c.h.b16 %v6086
    %v6399 = vunpack.c.l.b16 %v6087
    %v6400 = vunpack.c.h.b16 %v6087
    %v6401 = vunpack.c.l.b16 %v6088
    %v6402 = vunpack.c.h.b16 %v6088
    %v6403 = vunpack.c.l.b16 %v6089
    %v6404 = vunpack.c.h.b16 %v6089
    %v6405 = vunpack.c.l.b16 %v6090
    %v6406 = vunpack.c.h.b16 %v6090
    %v6407 = vunpack.c.l.b16 %v6091
    %v6408 = vunpack.c.h.b16 %v6091
    %v6409 = vunpack.c.l.b16 %v6092
    %v6410 = vunpack.c.h.b16 %v6092
    %v6411 = vunpack.c.l.b16 %v6093
    %v6412 = vunpack.c.h.b16 %v6093
    %v6413 = vunpack.c.l.b16 %v6094
    %v6414 = vunpack.c.h.b16 %v6094
    %v6415 = vunpack.c.l.b16 %v6095
    %v6416 = vunpack.c.h.b16 %v6095
    %v6417 = vunpack.c.l.b16 %v6096
    %v6418 = vunpack.c.h.b16 %v6096
    %v6419 = vunpack.c.l.b16 %v6097
    %v6420 = vunpack.c.h.b16 %v6097
    %v6421 = vunpack.c.l.b16 %v6098
    %v6422 = vunpack.c.h.b16 %v6098
    %v6423 = vunpack.c.l.b16 %v6099
    %v6424 = vunpack.c.h.b16 %v6099
    %v6425 = vunpack.c.l.b16 %v6100
    %v6426 = vunpack.c.h.b16 %v6100
    %v6427 = vunpack.c.l.b16 %v6101
    %v6428 = vunpack.c.h.b16 %v6101
    %v6429 = vunpack.c.l.b16 %v6102
    %v6430 = vunpack.c.h.b16 %v6102
    %v6431 = vunpack.c.l.b16 %v6103
    %v6432 = vunpack.c.h.b16 %v6103
    %v6433 = vunpack.c.l.b16 %v6104
    %v6434 = vunpack.c.h.b16 %v6104
    %v6435 = vunpack.c.l.b16 %v6105
    %v6436 = vunpack.c.h.b16 %v6105
    %v6437 = vunpack.c.l.b16 %v6106
    %v6438 = vunpack.c.h.b16 %v6106
    %v6439 = vunpack.c.l.b16 %v6107
    %v6440 = vunpack.c.h.b16 %v6107
    %v6441 = vunpack.c.l.b16 %v6108
    %v6442 = vunpack.c.h.b16 %v6108
    %v6443 = vunpack.c.l.b16 %v6109
    %v6444 = vunpack.c.h.b16 %v6109
    %v6445 = vunpack.c.l.b16 %v6110
    %v6446 = vunpack.c.h.b16 %v6110
    %v6447 = vunpack.c.l.b16 %v6111
    %v6448 = vunpack.c.h.b16 %v6111
    %v6449 = vunpack.c.l.b16 %v6112
    %v6450 = vunpack.c.h.b16 %v6112
    %v6451 = vunpack.c.l.b16 %v6113
    %v6452 = vunpack.c.h.b16 %v6113
    %v6453 = vunpack.c.l.b16 %v6114
    %v6454 = vunpack.c.h.b16 %v6114
    %v6455 = vunpack.c.l.b16 %v6115
    %v6456 = vunpack.c.h.b16 %v6115
    %v6457 = vunpack.c.l.b16 %v6116
    %v6458 = vunpack.c.h.b16 %v6116
    %v6459 = vunpack.c.l.b16 %v6117
    %v6460 = vunpack.c.h.b16 %v6117
    %v6461 = vunpack.c.l.b16 %v6118
    %v6462 = vunpack.c.h.b16 %v6118
    %v6463 = vunpack.c.l.b16 %v6119
    %v6464 = vunpack.c.h.b16 %v6119
    %v6465 = vunpack.c.l.b16 %v6120
    %v6466 = vunpack.c.h.b16 %v6120
    %v6467 = vunpack.c.l.b16 %v6121
    %v6468 = vunpack.c.h.b16 %v6121
    %v6469 = vunpack.c.l.b16 %v6122
    %v6470 = vunpack.c.h.b16 %v6122
    %v6471 = vunpack.c.l.b16 %v6123
    %v6472 = vunpack.c.h.b16 %v6123
    %v6473 = vunpack.c.l.b16 %v6124
    %v6474 = vunpack.c.h.b16 %v6124
    %v6475 = vunpack.c.l.b16 %v6125
    %v6476 = vunpack.c.h.b16 %v6125
    %v6477 = vunpack.c.l.b16 %v6126
    %v6478 = vunpack.c.h.b16 %v6126
    %v6479 = vunpack.c.l.b16 %v6127
    %v6480 = vunpack.c.h.b16 %v6127
    %v6481 = vunpack.c.l.b16 %v6128
    %v6482 = vunpack.c.h.b16 %v6128
    %v6483 = vunpack.c.l.b16 %v6129
    %v6484 = vunpack.c.h.b16 %v6129
    %v6485 = vunpack.c.l.b16 %v6130
    %v6486 = vunpack.c.h.b16 %v6130
    %v6487 = vunpack.c.l.b16 %v6131
    %v6488 = vunpack.c.h.b16 %v6131
    %v6489 = vunpack.c.l.b16 %v6132
    %v6490 = vunpack.c.h.b16 %v6132
    %v6491 = vunpack.c.l.b16 %v6133
    %v6492 = vunpack.c.h.b16 %v6133
    %v6493 = vunpack.c.l.b16 %v6134
    %v6494 = vunpack.c.h.b16 %v6134
    %v6495 = vunpack.c.l.b16 %v6135
    %v6496 = vunpack.c.h.b16 %v6135
    %v6497 = vunpack.c.l.b16 %v6136
    %v6498 = vunpack.c.h.b16 %v6136
    %v6499 = vunpack.c.l.b16 %v6137
    %v6500 = vunpack.c.h.b16 %v6137
    %v6501 = vunpack.c.l.b16 %v6138
    %v6502 = vunpack.c.h.b16 %v6138
    %v6503 = vunpack.c.l.b16 %v6139
    %v6504 = vunpack.c.h.b16 %v6139
    %v6505 = vunpack.c.l.b16 %v6140
    %v6506 = vunpack.c.h.b16 %v6140
    %v6507 = vunpack.c.l.b16 %v6141
    %v6508 = vunpack.c.h.b16 %v6141
    %v6509 = vunpack.c.l.b16 %v6142
    %v6510 = vunpack.c.h.b16 %v6142
    %v6511 = vunpack.c.l.b16 %v6143
    %v6512 = vunpack.c.h.b16 %v6143
    %v6513 = vunpack.c.l.b16 %v6144
    %v6514 = vunpack.c.h.b16 %v6144
    %v6515 = vunpack.c.l.b16 %v6145
    %v6516 = vunpack.c.h.b16 %v6145
    %v6517 = vunpack.c.l.b16 %v6146
    %v6518 = vunpack.c.h.b16 %v6146
    %v6519 = vunpack.c.l.b16 %v6147
    %v6520 = vunpack.c.h.b16 %v6147
    %v6521 = vunpack.c.l.b16 %v6148
    %v6522 = vunpack.c.h.b16 %v6148
    %v6523 = vunpack.c.l.b16 %v6149
    %v6524 = vunpack.c.h.b16 %v6149
    %v6525 = vunpack.c.l.b16 %v6150
    %v6526 = vunpack.c.h.b16 %v6150
    %v6527 = vunpack.c.l.b16 %v6151
    %v6528 = vunpack.c.h.b16 %v6151
    %v6529 = vunpack.c.l.b16 %v6152
    %v6530 = vunpack.c.h.b16 %v6152
    %v6531 = vunpack.c.l.b16 %v6153
    %v6532 = vunpack.c.h.b16 %v6153
    %v6533 = vunpack.c.l.b16 %v6154
    %v6534 = vunpack.c.h.b16 %v6154
    %v6535 = vunpack.c.l.b16 %v6155
    %v6536 = vunpack.c.h.b16 %v6155
    %v6537 = vunpack.c.l.b16 %v6156
    %v6538 = vunpack.c.h.b16 %v6156
    %v6539 = vunpack.c.l.b16 %v6157
    %v6540 = vunpack.c.h.b16 %v6157
    %v6541 = vunpack.c.l.b16 %v6158
    %v6542 = vunpack.c.h.b16 %v6158
    %v6543 = vunpack.c.l.b16 %v6159
    %v6544 = vunpack.c.h.b16 %v6159
    %v6545 = vunpack.c.l.b16 %v6160
    %v6546 = vunpack.c.h.b16 %v6160
    %v6547 = vunpack.c.l.b16 %v6161
    %v6548 = vunpack.c.h.b16 %v6161
    %v6549 = vunpack.c.l.b16 %v6162
    %v6550 = vunpack.c.h.b16 %v6162
    %v6551 = vunpack.c.l.b16 %v6163
    %v6552 = vunpack.c.h.b16 %v6163
    %v6553 = vunpack.c.l.b16 %v6164
    %v6554 = vunpack.c.h.b16 %v6164
    %v6555 = vunpack.c.l.b16 %v6165
    %v6556 = vunpack.c.h.b16 %v6165
    %v6557 = vunpack.c.l.b16 %v6166
    %v6558 = vunpack.c.h.b16 %v6166
    %v6559 = vunpack.c.l.b16 %v6167
    %v6560 = vunpack.c.h.b16 %v6167
    %v6561 = vunpack.c.l.b16 %v6168
    %v6562 = vunpack.c.h.b16 %v6168
    %v6563 = vunpack.c.l.b16 %v6169
    %v6564 = vunpack.c.h.b16 %v6169
    %v6565 = vunpack.c.l.b16 %v6170
    %v6566 = vunpack.c.h.b16 %v6170
    %v6567 = vunpack.c.l.b16 %v6171
    %v6568 = vunpack.c.h.b16 %v6171
    %v6569 = vunpack.c.l.b16 %v6172
    %v6570 = vunpack.c.h.b16 %v6172
    %v6571 = vunpack.c.l.b16 %v6173
    %v6572 = vunpack.c.h.b16 %v6173
    %v6573 = vunpack.c.l.b16 %v6174
    %v6574 = vunpack.c.h.b16 %v6174
    %v6575 = vunpack.c.l.b16 %v6175
    %v6576 = vunpack.c.h.b16 %v6175
    %v6577 = vunpack.c.l.b16 %v6176
    %v6578 = vunpack.c.h.b16 %v6176
    %v6579 = vunpack.c.l.b16 %v6177
    %v6580 = vunpack.c.h.b16 %v6177
    %v6581 = vunpack.c.l.b16 %v6178
    %v6582 = vunpack.c.h.b16 %v6178
    %v6583 = vunpack.c.l.b16 %v6179
    %v6584 = vunpack.c.h.b16 %v6179
    %v6585 = vunpack.c.l.b16 %v6180
    %v6586 = vunpack.c.h.b16 %v6180
    %v6587 = vpack.c.b16 %v6335, %v6331
    %v6588 = vpack.c.b16 %v6336, %v6332
    %v6589 = vpack.c.b16 %v6337, %v6333
    %v6590 = vpack.c.b16 %v6338, %v6334
    %v6591 = vpack.c.b16 %v6343, %v6339
    %v6592 = vpack.c.b16 %v6344, %v6340
    %v6593 = vpack.c.b16 %v6345, %v6341
    %v6594 = vpack.c.b16 %v6346, %v6342
    %v6595 = vpack.c.b16 %v6351, %v6347
    %v6596 = vpack.c.b16 %v6352, %v6348
    %v6597 = vpack.c.b16 %v6353, %v6349
    %v6598 = vpack.c.b16 %v6354, %v6350
    %v6599 = vpack.c.b16 %v6359, %v6355
    %v6600 = vpack.c.b16 %v6360, %v6356
    %v6601 = vpack.c.b16 %v6361, %v6357
    %v6602 = vpack.c.b16 %v6362, %v6358
    %v6603 = vpack.c.b16 %v6367, %v6363
    %v6604 = vpack.c.b16 %v6368, %v6364
    %v6605 = vpack.c.b16 %v6369, %v6365
    %v6606 = vpack.c.b16 %v6370, %v6366
    %v6607 = vpack.c.b16 %v6375, %v6371
    %v6608 = vpack.c.b16 %v6376, %v6372
    %v6609 = vpack.c.b16 %v6377, %v6373
    %v6610 = vpack.c.b16 %v6378, %v6374
    %v6611 = vpack.c.b16 %v6383, %v6379
    %v6612 = vpack.c.b16 %v6384, %v6380
    %v6613 = vpack.c.b16 %v6385, %v6381
    %v6614 = vpack.c.b16 %v6386, %v6382
    %v6615 = vpack.c.b16 %v6391, %v6387
    %v6616 = vpack.c.b16 %v6392, %v6388
    %v6617 = vpack.c.b16 %v6393, %v6389
    %v6618 = vpack.c.b16 %v6394, %v6390
    %v6619 = vpack.c.b16 %v6399, %v6395
    %v6620 = vpack.c.b16 %v6400, %v6396
    %v6621 = vpack.c.b16 %v6401, %v6397
    %v6622 = vpack.c.b16 %v6402, %v6398
    %v6623 = vpack.c.b16 %v6407, %v6403
    %v6624 = vpack.c.b16 %v6408, %v6404
    %v6625 = vpack.c.b16 %v6409, %v6405
    %v6626 = vpack.c.b16 %v6410, %v6406
    %v6627 = vpack.c.b16 %v6415, %v6411
    %v6628 = vpack.c.b16 %v6416, %v6412
    %v6629 = vpack.c.b16 %v6417, %v6413
    %v6630 = vpack.c.b16 %v6418, %v6414
    %v6631 = vpack.c.b16 %v6423, %v6419
    %v6632 = vpack.c.b16 %v6424, %v6420
    %v6633 = vpack.c.b16 %v6425, %v6421
    %v6634 = vpack.c.b16 %v6426, %v6422
    %v6635 = vpack.c.b16 %v6431, %v6427
    %v6636 = vpack.c.b16 %v6432, %v6428
    %v6637 = vpack.c.b16 %v6433, %v6429
    %v6638 = vpack.c.b16 %v6434, %v6430
    %v6639 = vpack.c.b16 %v6439, %v6435
    %v6640 = vpack.c.b16 %v6440, %v6436
    %v6641 = vpack.c.b16 %v6441, %v6437
    %v6642 = vpack.c.b16 %v6442, %v6438
    %v6643 = vpack.c.b16 %v6447, %v6443
    %v6644 = vpack.c.b16 %v6448, %v6444
    %v6645 = vpack.c.b16 %v6449, %v6445
    %v6646 = vpack.c.b16 %v6450, %v6446
    %v6647 = vpack.c.b16 %v6455, %v6451
    %v6648 = vpack.c.b16 %v6456, %v6452
    %v6649 = vpack.c.b16 %v6457, %v6453
    %v6650 = vpack.c.b16 %v6458, %v6454
    %v6651 = vpack.c.b16 %v6463, %v6459
    %v6652 = vpack.c.b16 %v6464, %v6460
    %v6653 = vpack.c.b16 %v6465, %v6461
    %v6654 = vpack.c.b16 %v6466, %v6462
    %v6655 = vpack.c.b16 %v6471, %v6467
    %v6656 = vpack.c.b16 %v6472, %v6468
    %v6657 = vpack.c.b16 %v6473, %v6469
    %v6658 = vpack.c.b16 %v6474, %v6470
    %v6659 = vpack.c.b16 %v6479, %v6475
    %v6660 = vpack.c.b16 %v6480, %v6476
    %v6661 = vpack.c.b16 %v6481, %v6477
    %v6662 = vpack.c.b16 %v6482, %v6478
    %v6663 = vpack.c.b16 %v6487, %v6483
    %v6664 = vpack.c.b16 %v6488, %v6484
    %v6665 = vpack.c.b16 %v6489, %v6485
    %v6666 = vpack.c.b16 %v6490, %v6486
    %v6667 = vpack.c.b16 %v6495, %v6491
    %v6668 = vpack.c.b16 %v6496, %v6492
    %v6669 = vpack.c.b16 %v6497, %v6493
    %v6670 = vpack.c.b16 %v6498, %v6494
    %v6671 = vpack.c.b16 %v6503, %v6499
    %v6672 = vpack.c.b16 %v6504, %v6500
    %v6673 = vpack.c.b16 %v6505, %v6501
    %v6674 = vpack.c.b16 %v6506, %v6502
    %v6675 = vpack.c.b16 %v6511, %v6507
    %v6676 = vpack.c.b16 %v6512, %v6508
    %v6677 = vpack.c.b16 %v6513, %v6509
    %v6678 = vpack.c.b16 %v6514, %v6510
    %v6679 = vpack.c.b16 %v6519, %v6515
    %v6680 = vpack.c.b16 %v6520, %v6516
    %v6681 = vpack.c.b16 %v6521, %v6517
    %v6682 = vpack.c.b16 %v6522, %v6518
    %v6683 = vpack.c.b16 %v6527, %v6523
    %v6684 = vpack.c.b16 %v6528, %v6524
    %v6685 = vpack.c.b16 %v6529, %v6525
    %v6686 = vpack.c.b16 %v6530, %v6526
    %v6687 = vpack.c.b16 %v6535, %v6531
    %v6688 = vpack.c.b16 %v6536, %v6532
    %v6689 = vpack.c.b16 %v6537, %v6533
    %v6690 = vpack.c.b16 %v6538, %v6534
    %v6691 = vpack.c.b16 %v6543, %v6539
    %v6692 = vpack.c.b16 %v6544, %v6540
    %v6693 = vpack.c.b16 %v6545, %v6541
    %v6694 = vpack.c.b16 %v6546, %v6542
    %v6695 = vpack.c.b16 %v6551, %v6547
    %v6696 = vpack.c.b16 %v6552, %v6548
    %v6697 = vpack.c.b16 %v6553, %v6549
    %v6698 = vpack.c.b16 %v6554, %v6550
    %v6699 = vpack.c.b16 %v6559, %v6555
    %v6700 = vpack.c.b16 %v6560, %v6556
    %v6701 = vpack.c.b16 %v6561, %v6557
    %v6702 = vpack.c.b16 %v6562, %v6558
    %v6703 = vpack.c.b16 %v6567, %v6563
    %v6704 = vpack.c.b16 %v6568, %v6564
    %v6705 = vpack.c.b16 %v6569, %v6565
    %v6706 = vpack.c.b16 %v6570, %v6566
    %v6707 = vpack.c.b16 %v6575, %v6571
    %v6708 = vpack.c.b16 %v6576, %v6572
    %v6709 = vpack.c.b16 %v6577, %v6573
    %v6710 = vpack.c.b16 %v6578, %v6574
    %v6711 = vpack.c.b16 %v6583, %v6579
    %v6712 = vpack.c.b16 %v6584, %v6580
    %v6713 = vpack.c.b16 %v6585, %v6581
    %v6714 = vpack.c.b16 %v6586, %v6582
    %6843 = vmatprep.subr.bf16.mxu0 %v6588
    %6844 = vmatpush1.bf16.msra.mxu0 %v6587
    %6845 = vmatprep.subr.bf16.mxu0 %v6592
    %6846 = vmatpush1.bf16.msra.mxu0 %v6591
    %6847 = vmatprep.subr.bf16.mxu0 %v6596
    %6848 = vmatpush1.bf16.msra.mxu0 %v6595
    %6849 = vmatprep.subr.bf16.mxu0 %v6600
    %6850 = vmatpush1.bf16.msra.mxu0 %v6599
    %6851 = vmatprep.subr.bf16.mxu0 %v6604
    %6852 = vmatpush1.bf16.msra.mxu0 %v6603
    %6853 = vmatprep.subr.bf16.mxu0 %v6608
    %6854 = vmatpush1.bf16.msra.mxu0 %v6607
    %6855 = vmatprep.subr.bf16.mxu0 %v6612
    %6856 = vmatpush1.bf16.msra.mxu0 %v6611
    %6857 = vmatprep.subr.bf16.mxu0 %v6616
    %6858 = vmatpush1.bf16.msra.mxu0 %v6615
    %6859 = vmatprep.subr.bf16.mxu0 %v6620
    %6860 = vmatpush1.bf16.msra.mxu0 %v6619
    %6861 = vmatprep.subr.bf16.mxu0 %v6624
    %6862 = vmatpush1.bf16.msra.mxu0 %v6623
    %6863 = vmatprep.subr.bf16.mxu0 %v6628
    %6864 = vmatpush1.bf16.msra.mxu0 %v6627
    %6865 = vmatprep.subr.bf16.mxu0 %v6632
    %6866 = vmatpush1.bf16.msra.mxu0 %v6631
    %6867 = vmatprep.subr.bf16.mxu0 %v6636
    %6868 = vmatpush1.bf16.msra.mxu0 %v6635
    %6869 = vmatprep.subr.bf16.mxu0 %v6640
    %6870 = vmatpush1.bf16.msra.mxu0 %v6639
    %6871 = vmatprep.subr.bf16.mxu0 %v6644
    %6872 = vmatpush1.bf16.msra.mxu0 %v6643
    %6873 = vmatprep.subr.bf16.mxu0 %v6648
    %6874 = vmatpush1.bf16.msra.mxu0 %v6647
    %6875 = vmatprep.mubr.bf16.mxu0 %v6050
    %6876 = vmatmul.mubr.bf16.gmra.mrb[0].mxu0 %v6049
    %v6877 = vpop.f32.mrb[0].mxu0
    %v6878 = vadd.f32 %v6186, %v6877
    %v6879 = vpop.f32.mrb[0].mxu0
    %v6880 = vadd.f32 %v6190, %v6879
    %v6881 = vpop.f32.mrb[0].mxu0
    %v6882 = vpop.f32.mrb[0].mxu0
    %6883 = vdwg.mxu0
    %6884 = vmatprep.subr.bf16.mxu0 %v6652
    %6885 = vmatpush1.bf16.msra.mxu0 %v6651
    %6886 = vmatprep.subr.bf16.mxu0 %v6656
    %6887 = vmatpush1.bf16.msra.mxu0 %v6655
    %6888 = vmatprep.subr.bf16.mxu0 %v6660
    %6889 = vmatpush1.bf16.msra.mxu0 %v6659
    %6890 = vmatprep.subr.bf16.mxu0 %v6664
    %6891 = vmatpush1.bf16.msra.mxu0 %v6663
    %6892 = vmatprep.subr.bf16.mxu0 %v6668
    %6893 = vmatpush1.bf16.msra.mxu0 %v6667
    %6894 = vmatprep.subr.bf16.mxu0 %v6672
    %6895 = vmatpush1.bf16.msra.mxu0 %v6671
    %6896 = vmatprep.subr.bf16.mxu0 %v6676
    %6897 = vmatpush1.bf16.msra.mxu0 %v6675
    %6898 = vmatprep.subr.bf16.mxu0 %v6680
    %6899 = vmatpush1.bf16.msra.mxu0 %v6679
    %6900 = vmatprep.subr.bf16.mxu0 %v6684
    %6901 = vmatpush1.bf16.msra.mxu0 %v6683
    %6902 = vmatprep.subr.bf16.mxu0 %v6688
    %6903 = vmatpush1.bf16.msra.mxu0 %v6687
    %6904 = vmatprep.subr.bf16.mxu0 %v6692
    %6905 = vmatpush1.bf16.msra.mxu0 %v6691
    %6906 = vmatprep.subr.bf16.mxu0 %v6696
    %6907 = vmatpush1.bf16.msra.mxu0 %v6695
    %6908 = vmatprep.subr.bf16.mxu0 %v6700
    %6909 = vmatpush1.bf16.msra.mxu0 %v6699
    %6910 = vmatprep.subr.bf16.mxu0 %v6704
    %6911 = vmatpush1.bf16.msra.mxu0 %v6703
    %6912 = vmatprep.subr.bf16.mxu0 %v6708
    %6913 = vmatpush1.bf16.msra.mxu0 %v6707
    %6914 = vmatprep.subr.bf16.mxu0 %v6712
    %6915 = vmatpush1.bf16.msra.mxu0 %v6711
    %6916 = vmatprep.mubr.bf16.mxu0 %v6052
    %6917 = vmatmul.mubr.bf16.gmra.mrb[0].mxu0 %v6051
    %v6918 = vpop.f32.mrb[0].mxu0
    %v6919 = vadd.f32 %v6878, %v6918
    %v6920 = vpop.f32.mrb[0].mxu0
    %v6921 = vadd.f32 %v6880, %v6920
    %v6922 = vpop.f32.mrb[0].mxu0
    %v6923 = vpop.f32.mrb[0].mxu0
    %6924 = vdwg.mxu0
    %6925 = vmatprep.subr.bf16.mxu0 %v6590
    %6926 = vmatpush1.bf16.msra.mxu0 %v6589
    %6927 = vmatprep.subr.bf16.mxu0 %v6594
    %6928 = vmatpush1.bf16.msra.mxu0 %v6593
    %6929 = vmatprep.subr.bf16.mxu0 %v6598
    %6930 = vmatpush1.bf16.msra.mxu0 %v6597
    %6931 = vmatprep.subr.bf16.mxu0 %v6602
    %6932 = vmatpush1.bf16.msra.mxu0 %v6601
    %6933 = vmatprep.subr.bf16.mxu0 %v6606
    %6934 = vmatpush1.bf16.msra.mxu0 %v6605
    %6935 = vmatprep.subr.bf16.mxu0 %v6610
    %6936 = vmatpush1.bf16.msra.mxu0 %v6609
    %6937 = vmatprep.subr.bf16.mxu0 %v6614
    %6938 = vmatpush1.bf16.msra.mxu0 %v6613
    %6939 = vmatprep.subr.bf16.mxu0 %v6618
    %6940 = vmatpush1.bf16.msra.mxu0 %v6617
    %6941 = vmatprep.subr.bf16.mxu0 %v6622
    %6942 = vmatpush1.bf16.msra.mxu0 %v6621
    %6943 = vmatprep.subr.bf16.mxu0 %v6626
    %6944 = vmatpush1.bf16.msra.mxu0 %v6625
    %6945 = vmatprep.subr.bf16.mxu0 %v6630
    %6946 = vmatpush1.bf16.msra.mxu0 %v6629
    %6947 = vmatprep.subr.bf16.mxu0 %v6634
    %6948 = vmatpush1.bf16.msra.mxu0 %v6633
    %6949 = vmatprep.subr.bf16.mxu0 %v6638
    %6950 = vmatpush1.bf16.msra.mxu0 %v6637
    %6951 = vmatprep.subr.bf16.mxu0 %v6642
    %6952 = vmatpush1.bf16.msra.mxu0 %v6641
    %6953 = vmatprep.subr.bf16.mxu0 %v6646
    %6954 = vmatpush1.bf16.msra.mxu0 %v6645
    %6955 = vmatprep.subr.bf16.mxu0 %v6650
    %6956 = vmatpush1.bf16.msra.mxu0 %v6649
    %6957 = vmatprep.mubr.bf16.mxu0 %v6050
    %6958 = vmatmul.mubr.bf16.gmra.mrb[0].mxu0 %v6049
    %v6959 = vpop.f32.mrb[0].mxu0
    %v6960 = vadd.f32 %v6194, %v6959
    %v6961 = vpop.f32.mrb[0].mxu0
    %v6962 = vadd.f32 %v6198, %v6961
    %v6963 = vpop.f32.mrb[0].mxu0
    %v6964 = vpop.f32.mrb[0].mxu0
    %6965 = vdwg.mxu0
    %6966 = vmatprep.subr.bf16.mxu0 %v6654
    %6967 = vmatpush1.bf16.msra.mxu0 %v6653
    %6968 = vmatprep.subr.bf16.mxu0 %v6658
    %6969 = vmatpush1.bf16.msra.mxu0 %v6657
    %6970 = vmatprep.subr.bf16.mxu0 %v6662
    %6971 = vmatpush1.bf16.msra.mxu0 %v6661
    %6972 = vmatprep.subr.bf16.mxu0 %v6666
    %6973 = vmatpush1.bf16.msra.mxu0 %v6665
    %6974 = vmatprep.subr.bf16.mxu0 %v6670
    %6975 = vmatpush1.bf16.msra.mxu0 %v6669
    %6976 = vmatprep.subr.bf16.mxu0 %v6674
    %6977 = vmatpush1.bf16.msra.mxu0 %v6673
    %6978 = vmatprep.subr.bf16.mxu0 %v6678
    %6979 = vmatpush1.bf16.msra.mxu0 %v6677
    %6980 = vmatprep.subr.bf16.mxu0 %v6682
    %6981 = vmatpush1.bf16.msra.mxu0 %v6681
    %6982 = vmatprep.subr.bf16.mxu0 %v6686
    %6983 = vmatpush1.bf16.msra.mxu0 %v6685
    %6984 = vmatprep.subr.bf16.mxu0 %v6690
    %6985 = vmatpush1.bf16.msra.mxu0 %v6689
    %6986 = vmatprep.subr.bf16.mxu0 %v6694
    %6987 = vmatpush1.bf16.msra.mxu0 %v6693
    %6988 = vmatprep.subr.bf16.mxu0 %v6698
    %6989 = vmatpush1.bf16.msra.mxu0 %v6697
    %6990 = vmatprep.subr.bf16.mxu0 %v6702
    %6991 = vmatpush1.bf16.msra.mxu0 %v6701
    %6992 = vmatprep.subr.bf16.mxu0 %v6706
    %6993 = vmatpush1.bf16.msra.mxu0 %v6705
    %6994 = vmatprep.subr.bf16.mxu0 %v6710
    %6995 = vmatpush1.bf16.msra.mxu0 %v6709
    %6996 = vmatprep.subr.bf16.mxu0 %v6714
    %6997 = vmatpush1.bf16.msra.mxu0 %v6713
    %6998 = vmatprep.mubr.bf16.mxu0 %v6052
    %6999 = vmatmul.mubr.bf16.gmra.mrb[0].mxu0 %v6051
    %v7000 = vpop.f32.mrb[0].mxu0
    %v7001 = vadd.f32 %v6960, %v7000
    %v7002 = vpop.f32.mrb[0].mxu0
    %v7003 = vadd.f32 %v6962, %v7002
    %v7004 = vpop.f32.mrb[0].mxu0
    %v7005 = vpop.f32.mrb[0].mxu0
    %7006 = vdwg.mxu0
    %v7007 = vpack.c.bf16 %v6919, %v6919
    %v7008 = vpack.c.bf16 %v6921, %v6921
    %v7009 = vpack.c.bf16 %v7001, %v7001
    %v7010 = vpack.c.bf16 %v7003, %v7003
    %v7011 = vmax.bf16 %v7007, 0
    %v7012 = vmax.bf16 %v7008, 0
    %v7013 = vmax.bf16 %v7009, 0
    %v7014 = vmax.bf16 %v7010, 0
    %v7015 = vld [vmem:[#allocation5] sm:$0xff]
    %v7016 = vand.u32 2147483647, %v7015
    %vm7017 = vcmp.le.f32.partialorder %v7016, 0.7853982
    %vm7018 = vcmp.lt.s32.totalorder %v7015, 0
    %v7019 = vand.u32 %v7015, 2139095040
    %v7020 = vshrl.u32 %v7019, 23
    %v7021 = vsub.s32 %v7020, 127
    %v7022 = vand.u32 2147483647, %v7015
    %v7023 = vand.u32 %v7022, 8388607
    %v7024 = vor.u32 %v7023, 8388608
    %v7025 = vsub.s32 0, %v7024
    %v7026 = vadd.s32 %v7021, 1
    %vm7027 = vcmp.gt.s32.totalorder %v7026, 0
    %v7028 = vsel %vm7027, %v7026, 0
    %v7029 = vshrl.u32 %v7028, 5
    %v7030 = vand.u32 %v7028, 31
    %v7031 = vsub.s32 32, %v7030
    %v7032 = vshrl.u32 683565275, %v7031
    %v7033 = vshll.u32 683565275, %v7030
    %v7034 = vshrl.u32 2475754826, %v7031
    %v7035 = vor.u32 %v7033, %v7034
    %v7036 = vshll.u32 2475754826, %v7030
    %v7037 = vshrl.u32 2131351028, %v7031
    %v7038 = vor.u32 %v7036, %v7037
    %v7039 = vshll.u32 2131351028, %v7030
    %v7040 = vshrl.u32 2102212464, %v7031
    %v7041 = vor.u32 %v7039, %v7040
    %v7042 = vshll.u32 2102212464, %v7030
    %v7043 = vshrl.u32 920167782, %v7031
    %v7044 = vor.u32 %v7042, %v7043
    %v7045 = vshll.u32 920167782, %v7030
    %v7046 = vshrl.u32 1326507024, %v7031
    %v7047 = vor.u32 %v7045, %v7046
    %vm7048 = vcmp.lt.s32.totalorder %v7029, 1
    %vm7049 = vcmp.lt.s32.totalorder %v7029, 2
    %vm7050 = vcmp.lt.s32.totalorder %v7029, 3
    %vm7051 = vcmp.lt.s32.totalorder %v7029, 4
    %v7052 = vsel %vm7048, %v7032, %v7035
    %v7053 = vsel %vm7051, %v7041, 2102212464
    %v7054 = vsel %vm7050, %v7038, %v7053
    %v7055 = vsel %vm7049, %v7052, %v7054
    %v7056 = vsel %vm7048, %v7035, %v7038
    %v7057 = vsel %vm7051, %v7044, 920167782
    %v7058 = vsel %vm7050, %v7041, %v7057
    %v7059 = vsel %vm7049, %v7056, %v7058
    %v7060 = vsel %vm7048, %v7038, %v7041
    %v7061 = vsel %vm7051, %v7047, 1326507024
    %v7062 = vsel %vm7050, %v7044, %v7061
    %v7063 = vsel %vm7049, %v7060, %v7062
    %v7064 = vshll.u32 %v7024, 8
    %v7065 = vmul.u32.u64.compose %v7064, %v7063
    %v7066 = vextract.low.u32 %v7065
    %v7067 = vextract.high.u32 %v7065
    %v7068 = vmul.u32.u64.compose %v7064, %v7059
    %v7069 = vextract.low.u32 %v7068
    %v7070 = vextract.high.u32 %v7068
    %v7071 = vmul.u32 %v7064, %v7055
    %v7072 = vadd.s32 %v7067, %v7069
    %vm7073 = vc.u32 %v7067, %v7069
    %v7074 = vadd.s32 %v7070, 1
    %v7075 = vsel %vm7073, %v7074, %v7070
    %v7076 = vadd.s32 %v7071, %v7075
    %v7077 = vadd.s32 %v7076, 536870912
    %v7078 = vshrl.u32 %v7077, 30
    %v7079 = vshll.u32 %v7078, 30
    %v7080 = vsub.s32 %v7076, %v7079
    %vm7081 = vcmp.lt.s32.totalorder %v7080, 0
    %v7082 = vsub.s32 0, %v7080
    %v7083 = vsel %vm7081, %v7082, %v7080
    %v7084 = vclz %v7083
    %v7085 = vsub.s32 %v7084, 2
    %vm7086 = vcmp.gt.s32.totalorder 0, %v7085
    %v7087 = vsel %vm7086, 0, %v7085
    %v7088 = vsub.s32 32, %v7087
    %v7089 = vshll.u32 %v7080, %v7087
    %v7090 = vshrl.u32 %v7072, %v7088
    %v7091 = vor.u32 %v7089, %v7090
    %v7092 = vsub.s32 4294967266, %v7087
    %v7093 = vadd.s32 %v7092, 127
    %v7094 = vshll.u32 %v7093, 23
    %v7095 = vor.u32 4788187, %v7094
    %v7096 = vand.u32 2147483647, %v7095
    %v7098 = vcvt.s32.f32 %v7091
    %v7099 = vmul.f32 %v7098, %v7096
    %v7100 = vxor.u32 %v7099, 2147483648
    %v7101 = vsel %vm7018, %v7100, %v7099
    %v7102 = vsub.s32 4, %v7078
    %v7103 = vsel %vm7018, %v7102, %v7078
    %v7104 = vsel %vm7017, %v7015, %v7101
    %v7105 = vsel %vm7017, 0, %v7103
    %v7106 = vcosq.f32.pop %v7104
    %v7107 = vsinq.f32.pop %v7104
    %vm7108 = vweird.f32 %v7015
    %v7109 = vadd.s32 %v7105, 3
    %v7110 = vand.u32 %v7109, 3
    %vm7111 = vcmp.lt.s32.totalorder %v7110, 2
    %vm7112 = vcmp.eq.s32.totalorder %v7110, 0
    %v7113 = vxor.u32 %v7107, 2147483648
    %v7114 = vsel %vm7112, %v7106, %v7113
    %vm7115 = vcmp.eq.s32.totalorder %v7110, 2
    %v7116 = vxor.u32 %v7106, 2147483648
    %v7117 = vsel %vm7115, %v7116, %v7107
    %v7118 = vsel %vm7111, %v7114, %v7117
    %v7119 = vsel %vm7108, nan, %v7118
    %v7120 = vpack.c.bf16 %v7119, %v7119
    %v7121 = vld [vmem:[#allocation16] sm:$0xff]
    %v7122 = vld [vmem:[#allocation16 + $0x8] sm:$0xff]
    %v7123 = vld [vmem:[#allocation16 + $0x10] sm:$0xff]
    %v7124 = vld [vmem:[#allocation16 + $0x18] sm:$0xff]
    %v7125 = vld [vmem:[#allocation16 + $0x20] sm:$0xff]
    %v7126 = vld [vmem:[#allocation16 + $0x28] sm:$0xff]
    %v7127 = vld [vmem:[#allocation16 + $0x30] sm:$0xff]
    %v7128 = vld [vmem:[#allocation16 + $0x38] sm:$0xff]
    %v7129 = vld [vmem:[#allocation16 + $0x40] sm:$0xff]
    %v7130 = vld [vmem:[#allocation16 + $0x48] sm:$0xff]
    %v7131 = vld [vmem:[#allocation16 + $0x50] sm:$0xff]
    %v7132 = vld [vmem:[#allocation16 + $0x58] sm:$0xff]
    %v7133 = vld [vmem:[#allocation16 + $0x60] sm:$0xff]
    %v7134 = vld [vmem:[#allocation16 + $0x68] sm:$0xff]
    %v7135 = vld [vmem:[#allocation16 + $0x70] sm:$0xff]
    %v7136 = vld [vmem:[#allocation16 + $0x78] sm:$0xff]
    %v7137 = vld [vmem:[#allocation16 + $0x80] sm:$0xff]
    %v7138 = vld [vmem:[#allocation16 + $0x88] sm:$0xff]
    %v7139 = vld [vmem:[#allocation16 + $0x90] sm:$0xff]
    %v7140 = vld [vmem:[#allocation16 + $0x98] sm:$0xff]
    %v7141 = vld [vmem:[#allocation16 + $0xa0] sm:$0xff]
    %v7142 = vld [vmem:[#allocation16 + $0xa8] sm:$0xff]
    %v7143 = vld [vmem:[#allocation16 + $0xb0] sm:$0xff]
    %v7144 = vld [vmem:[#allocation16 + $0xb8] sm:$0xff]
    %v7145 = vld [vmem:[#allocation16 + $0xc0] sm:$0xff]
    %v7146 = vld [vmem:[#allocation16 + $0xc8] sm:$0xff]
    %v7147 = vld [vmem:[#allocation16 + $0xd0] sm:$0xff]
    %v7148 = vld [vmem:[#allocation16 + $0xd8] sm:$0xff]
    %v7149 = vld [vmem:[#allocation16 + $0xe0] sm:$0xff]
    %v7150 = vld [vmem:[#allocation16 + $0xe8] sm:$0xff]
    %v7151 = vld [vmem:[#allocation16 + $0xf0] sm:$0xff]
    %v7152 = vld [vmem:[#allocation16 + $0xf8] sm:$0xff]
    %v7153 = vld [vmem:[#allocation16 + $0x100] sm:$0xff]
    %v7154 = vld [vmem:[#allocation16 + $0x108] sm:$0xff]
    %v7155 = vld [vmem:[#allocation16 + $0x110] sm:$0xff]
    %v7156 = vld [vmem:[#allocation16 + $0x118] sm:$0xff]
    %v7157 = vld [vmem:[#allocation16 + $0x120] sm:$0xff]
    %v7158 = vld [vmem:[#allocation16 + $0x128] sm:$0xff]
    %v7159 = vld [vmem:[#allocation16 + $0x130] sm:$0xff]
    %v7160 = vld [vmem:[#allocation16 + $0x138] sm:$0xff]
    %v7161 = vld [vmem:[#allocation16 + $0x140] sm:$0xff]
    %v7162 = vld [vmem:[#allocation16 + $0x148] sm:$0xff]
    %v7163 = vld [vmem:[#allocation16 + $0x150] sm:$0xff]
    %v7164 = vld [vmem:[#allocation16 + $0x158] sm:$0xff]
    %v7165 = vld [vmem:[#allocation16 + $0x160] sm:$0xff]
    %v7166 = vld [vmem:[#allocation16 + $0x168] sm:$0xff]
    %v7167 = vld [vmem:[#allocation16 + $0x170] sm:$0xff]
    %v7168 = vld [vmem:[#allocation16 + $0x178] sm:$0xff]
    %v7169 = vld [vmem:[#allocation16 + $0x180] sm:$0xff]
    %v7170 = vld [vmem:[#allocation16 + $0x188] sm:$0xff]
    %v7171 = vld [vmem:[#allocation16 + $0x190] sm:$0xff]
    %v7172 = vld [vmem:[#allocation16 + $0x198] sm:$0xff]
    %v7173 = vld [vmem:[#allocation16 + $0x1a0] sm:$0xff]
    %v7174 = vld [vmem:[#allocation16 + $0x1a8] sm:$0xff]
    %v7175 = vld [vmem:[#allocation16 + $0x1b0] sm:$0xff]
    %v7176 = vld [vmem:[#allocation16 + $0x1b8] sm:$0xff]
    %v7177 = vld [vmem:[#allocation16 + $0x1c0] sm:$0xff]
    %v7178 = vld [vmem:[#allocation16 + $0x1c8] sm:$0xff]
    %v7179 = vld [vmem:[#allocation16 + $0x1d0] sm:$0xff]
    %v7180 = vld [vmem:[#allocation16 + $0x1d8] sm:$0xff]
    %v7181 = vld [vmem:[#allocation16 + $0x1e0] sm:$0xff]
    %v7182 = vld [vmem:[#allocation16 + $0x1e8] sm:$0xff]
    %v7183 = vld [vmem:[#allocation16 + $0x1f0] sm:$0xff]
    %v7184 = vld [vmem:[#allocation16 + $0x1f8] sm:$0xff]
    %v7185 = vld [vmem:[#allocation16 + $0x200] sm:$0xff]
    %v7186 = vld [vmem:[#allocation16 + $0x208] sm:$0xff]
    %v7187 = vld [vmem:[#allocation16 + $0x210] sm:$0xff]
    %v7188 = vld [vmem:[#allocation16 + $0x218] sm:$0xff]
    %v7189 = vld [vmem:[#allocation16 + $0x220] sm:$0xff]
    %v7190 = vld [vmem:[#allocation16 + $0x228] sm:$0xff]
    %v7191 = vld [vmem:[#allocation16 + $0x230] sm:$0xff]
    %v7192 = vld [vmem:[#allocation16 + $0x238] sm:$0xff]
    %v7193 = vld [vmem:[#allocation16 + $0x240] sm:$0xff]
    %v7194 = vld [vmem:[#allocation16 + $0x248] sm:$0xff]
    %v7195 = vld [vmem:[#allocation16 + $0x250] sm:$0xff]
    %v7196 = vld [vmem:[#allocation16 + $0x258] sm:$0xff]
    %v7197 = vld [vmem:[#allocation16 + $0x260] sm:$0xff]
    %v7198 = vld [vmem:[#allocation16 + $0x268] sm:$0xff]
    %v7199 = vld [vmem:[#allocation16 + $0x270] sm:$0xff]
    %v7200 = vld [vmem:[#allocation16 + $0x278] sm:$0xff]
    %v7201 = vld [vmem:[#allocation16 + $0x280] sm:$0xff]
    %v7202 = vld [vmem:[#allocation16 + $0x288] sm:$0xff]
    %v7203 = vld [vmem:[#allocation16 + $0x290] sm:$0xff]
    %v7204 = vld [vmem:[#allocation16 + $0x298] sm:$0xff]
    %v7205 = vld [vmem:[#allocation16 + $0x2a0] sm:$0xff]
    %v7206 = vld [vmem:[#allocation16 + $0x2a8] sm:$0xff]
    %v7207 = vld [vmem:[#allocation16 + $0x2b0] sm:$0xff]
    %v7208 = vld [vmem:[#allocation16 + $0x2b8] sm:$0xff]
    %v7209 = vld [vmem:[#allocation16 + $0x2c0] sm:$0xff]
    %v7210 = vld [vmem:[#allocation16 + $0x2c8] sm:$0xff]
    %v7211 = vld [vmem:[#allocation16 + $0x2d0] sm:$0xff]
    %v7212 = vld [vmem:[#allocation16 + $0x2d8] sm:$0xff]
    %v7213 = vld [vmem:[#allocation16 + $0x2e0] sm:$0xff]
    %v7214 = vld [vmem:[#allocation16 + $0x2e8] sm:$0xff]
    %v7215 = vld [vmem:[#allocation16 + $0x2f0] sm:$0xff]
    %v7216 = vld [vmem:[#allocation16 + $0x2f8] sm:$0xff]
    %v7217 = vld [vmem:[#allocation16 + $0x300] sm:$0xff]
    %v7218 = vld [vmem:[#allocation16 + $0x308] sm:$0xff]
    %v7219 = vld [vmem:[#allocation16 + $0x310] sm:$0xff]
    %v7220 = vld [vmem:[#allocation16 + $0x318] sm:$0xff]
    %v7221 = vld [vmem:[#allocation16 + $0x320] sm:$0xff]
    %v7222 = vld [vmem:[#allocation16 + $0x328] sm:$0xff]
    %v7223 = vld [vmem:[#allocation16 + $0x330] sm:$0xff]
    %v7224 = vld [vmem:[#allocation16 + $0x338] sm:$0xff]
    %v7225 = vld [vmem:[#allocation16 + $0x340] sm:$0xff]
    %v7226 = vld [vmem:[#allocation16 + $0x348] sm:$0xff]
    %v7227 = vld [vmem:[#allocation16 + $0x350] sm:$0xff]
    %v7228 = vld [vmem:[#allocation16 + $0x358] sm:$0xff]
    %v7229 = vld [vmem:[#allocation16 + $0x360] sm:$0xff]
    %v7230 = vld [vmem:[#allocation16 + $0x368] sm:$0xff]
    %v7231 = vld [vmem:[#allocation16 + $0x370] sm:$0xff]
    %v7232 = vld [vmem:[#allocation16 + $0x378] sm:$0xff]
    %v7233 = vld [vmem:[#allocation16 + $0x380] sm:$0xff]
    %v7234 = vld [vmem:[#allocation16 + $0x388] sm:$0xff]
    %v7235 = vld [vmem:[#allocation16 + $0x390] sm:$0xff]
    %v7236 = vld [vmem:[#allocation16 + $0x398] sm:$0xff]
    %v7237 = vld [vmem:[#allocation16 + $0x3a0] sm:$0xff]
    %v7238 = vld [vmem:[#allocation16 + $0x3a8] sm:$0xff]
    %v7239 = vld [vmem:[#allocation16 + $0x3b0] sm:$0xff]
    %v7240 = vld [vmem:[#allocation16 + $0x3b8] sm:$0xff]
    %v7241 = vld [vmem:[#allocation16 + $0x3c0] sm:$0xff]
    %v7242 = vld [vmem:[#allocation16 + $0x3c8] sm:$0xff]
    %v7243 = vld [vmem:[#allocation16 + $0x3d0] sm:$0xff]
    %v7244 = vld [vmem:[#allocation16 + $0x3d8] sm:$0xff]
    %v7245 = vld [vmem:[#allocation16 + $0x3e0] sm:$0xff]
    %v7246 = vld [vmem:[#allocation16 + $0x3e8] sm:$0xff]
    %v7247 = vld [vmem:[#allocation16 + $0x3f0] sm:$0xff]
    %v7248 = vld [vmem:[#allocation16 + $0x3f8] sm:$0xff]
    %v7249 = vld [vmem:[#allocation17] sm:$0xff]
    %v7250 = vld [vmem:[#allocation17 + $0x8] sm:$0xff]
    %v7251 = vld [vmem:[#allocation17 + $0x10] sm:$0xff]
    %v7252 = vld [vmem:[#allocation17 + $0x18] sm:$0xff]
    %v7253 = vld [vmem:[#allocation17 + $0x20] sm:$0xff]
    %v7254 = vld [vmem:[#allocation17 + $0x28] sm:$0xff]
    %v7255 = vld [vmem:[#allocation17 + $0x30] sm:$0xff]
    %v7256 = vld [vmem:[#allocation17 + $0x38] sm:$0xff]
    %v7257 = vld [vmem:[#allocation17 + $0x40] sm:$0xff]
    %v7258 = vld [vmem:[#allocation17 + $0x48] sm:$0xff]
    %v7259 = vld [vmem:[#allocation17 + $0x50] sm:$0xff]
    %v7260 = vld [vmem:[#allocation17 + $0x58] sm:$0xff]
    %v7261 = vld [vmem:[#allocation17 + $0x60] sm:$0xff]
    %v7262 = vld [vmem:[#allocation17 + $0x68] sm:$0xff]
    %v7263 = vld [vmem:[#allocation17 + $0x70] sm:$0xff]
    %v7264 = vld [vmem:[#allocation17 + $0x78] sm:$0xff]
    %v7265 = vld [vmem:[#allocation17 + $0x80] sm:$0xff]
    %v7266 = vld [vmem:[#allocation17 + $0x88] sm:$0xff]
    %v7267 = vld [vmem:[#allocation17 + $0x90] sm:$0xff]
    %v7268 = vld [vmem:[#allocation17 + $0x98] sm:$0xff]
    %v7269 = vld [vmem:[#allocation17 + $0xa0] sm:$0xff]
    %v7270 = vld [vmem:[#allocation17 + $0xa8] sm:$0xff]
    %v7271 = vld [vmem:[#allocation17 + $0xb0] sm:$0xff]
    %v7272 = vld [vmem:[#allocation17 + $0xb8] sm:$0xff]
    %v7273 = vld [vmem:[#allocation17 + $0xc0] sm:$0xff]
    %v7274 = vld [vmem:[#allocation17 + $0xc8] sm:$0xff]
    %v7275 = vld [vmem:[#allocation17 + $0xd0] sm:$0xff]
    %v7276 = vld [vmem:[#allocation17 + $0xd8] sm:$0xff]
    %v7277 = vld [vmem:[#allocation17 + $0xe0] sm:$0xff]
    %v7278 = vld [vmem:[#allocation17 + $0xe8] sm:$0xff]
    %v7279 = vld [vmem:[#allocation17 + $0xf0] sm:$0xff]
    %v7280 = vld [vmem:[#allocation17 + $0xf8] sm:$0xff]
    %v7313 = vunpack.c.l.b16 %v7249
    %v7314 = vunpack.c.h.b16 %v7249
    %v7315 = vunpack.c.l.b16 %v7250
    %v7316 = vunpack.c.h.b16 %v7250
    %v7317 = vunpack.c.l.b16 %v7251
    %v7318 = vunpack.c.h.b16 %v7251
    %v7319 = vunpack.c.l.b16 %v7252
    %v7320 = vunpack.c.h.b16 %v7252
    %v7321 = vunpack.c.l.b16 %v7253
    %v7322 = vunpack.c.h.b16 %v7253
    %v7323 = vunpack.c.l.b16 %v7254
    %v7324 = vunpack.c.h.b16 %v7254
    %v7325 = vunpack.c.l.b16 %v7255
    %v7326 = vunpack.c.h.b16 %v7255
    %v7327 = vunpack.c.l.b16 %v7256
    %v7328 = vunpack.c.h.b16 %v7256
    %v7329 = vunpack.c.l.b16 %v7257
    %v7330 = vunpack.c.h.b16 %v7257
    %v7331 = vunpack.c.l.b16 %v7258
    %v7332 = vunpack.c.h.b16 %v7258
    %v7333 = vunpack.c.l.b16 %v7259
    %v7334 = vunpack.c.h.b16 %v7259
    %v7335 = vunpack.c.l.b16 %v7260
    %v7336 = vunpack.c.h.b16 %v7260
    %v7337 = vunpack.c.l.b16 %v7261
    %v7338 = vunpack.c.h.b16 %v7261
    %v7339 = vunpack.c.l.b16 %v7262
    %v7340 = vunpack.c.h.b16 %v7262
    %v7341 = vunpack.c.l.b16 %v7263
    %v7342 = vunpack.c.h.b16 %v7263
    %v7343 = vunpack.c.l.b16 %v7264
    %v7344 = vunpack.c.h.b16 %v7264
    %v7345 = vunpack.c.l.b16 %v7265
    %v7346 = vunpack.c.h.b16 %v7265
    %v7347 = vunpack.c.l.b16 %v7266
    %v7348 = vunpack.c.h.b16 %v7266
    %v7349 = vunpack.c.l.b16 %v7267
    %v7350 = vunpack.c.h.b16 %v7267
    %v7351 = vunpack.c.l.b16 %v7268
    %v7352 = vunpack.c.h.b16 %v7268
    %v7353 = vunpack.c.l.b16 %v7269
    %v7354 = vunpack.c.h.b16 %v7269
    %v7355 = vunpack.c.l.b16 %v7270
    %v7356 = vunpack.c.h.b16 %v7270
    %v7357 = vunpack.c.l.b16 %v7271
    %v7358 = vunpack.c.h.b16 %v7271
    %v7359 = vunpack.c.l.b16 %v7272
    %v7360 = vunpack.c.h.b16 %v7272
    %v7361 = vunpack.c.l.b16 %v7273
    %v7362 = vunpack.c.h.b16 %v7273
    %v7363 = vunpack.c.l.b16 %v7274
    %v7364 = vunpack.c.h.b16 %v7274
    %v7365 = vunpack.c.l.b16 %v7275
    %v7366 = vunpack.c.h.b16 %v7275
    %v7367 = vunpack.c.l.b16 %v7276
    %v7368 = vunpack.c.h.b16 %v7276
    %v7369 = vunpack.c.l.b16 %v7277
    %v7370 = vunpack.c.h.b16 %v7277
    %v7371 = vunpack.c.l.b16 %v7278
    %v7372 = vunpack.c.h.b16 %v7278
    %v7373 = vunpack.c.l.b16 %v7279
    %v7374 = vunpack.c.h.b16 %v7279
    %v7375 = vunpack.c.l.b16 %v7280
    %v7376 = vunpack.c.h.b16 %v7280
    %v7377 = vpack.c.b16 %v7317, %v7313
    %v7378 = vpack.c.b16 %v7318, %v7314
    %v7379 = vpack.c.b16 %v7319, %v7315
    %v7380 = vpack.c.b16 %v7320, %v7316
    %v7381 = vpack.c.b16 %v7325, %v7321
    %v7382 = vpack.c.b16 %v7326, %v7322
    %v7383 = vpack.c.b16 %v7327, %v7323
    %v7384 = vpack.c.b16 %v7328, %v7324
    %v7385 = vpack.c.b16 %v7333, %v7329
    %v7386 = vpack.c.b16 %v7334, %v7330
    %v7387 = vpack.c.b16 %v7335, %v7331
    %v7388 = vpack.c.b16 %v7336, %v7332
    %v7389 = vpack.c.b16 %v7341, %v7337
    %v7390 = vpack.c.b16 %v7342, %v7338
    %v7391 = vpack.c.b16 %v7343, %v7339
    %v7392 = vpack.c.b16 %v7344, %v7340
    %v7393 = vpack.c.b16 %v7349, %v7345
    %v7394 = vpack.c.b16 %v7350, %v7346
    %v7395 = vpack.c.b16 %v7351, %v7347
    %v7396 = vpack.c.b16 %v7352, %v7348
    %v7397 = vpack.c.b16 %v7357, %v7353
    %v7398 = vpack.c.b16 %v7358, %v7354
    %v7399 = vpack.c.b16 %v7359, %v7355
    %v7400 = vpack.c.b16 %v7360, %v7356
    %v7401 = vpack.c.b16 %v7365, %v7361
    %v7402 = vpack.c.b16 %v7366, %v7362
    %v7403 = vpack.c.b16 %v7367, %v7363
    %v7404 = vpack.c.b16 %v7368, %v7364
    %v7405 = vpack.c.b16 %v7373, %v7369
    %v7406 = vpack.c.b16 %v7374, %v7370
    %v7407 = vpack.c.b16 %v7375, %v7371
    %v7408 = vpack.c.b16 %v7376, %v7372
    %7441 = vmatprep.subr.bf16.mxu0 %v7378
    %7442 = vmatpush1.bf16.msra.mxu0 %v7377
    %7443 = vmatprep.subr.bf16.mxu0 %v7382
    %7444 = vmatpush1.bf16.msra.mxu0 %v7381
    %7445 = vmatprep.subr.bf16.mxu0 %v7386
    %7446 = vmatpush1.bf16.msra.mxu0 %v7385
    %7447 = vmatprep.subr.bf16.mxu0 %v7390
    %7448 = vmatpush1.bf16.msra.mxu0 %v7389
    %7449 = vmatprep.subr.bf16.mxu0 %v7394
    %7450 = vmatpush1.bf16.msra.mxu0 %v7393
    %7451 = vmatprep.subr.bf16.mxu0 %v7398
    %7452 = vmatpush1.bf16.msra.mxu0 %v7397
    %7453 = vmatprep.subr.bf16.mxu0 %v7402
    %7454 = vmatpush1.bf16.msra.mxu0 %v7401
    %7455 = vmatprep.subr.bf16.mxu0 %v7406
    %7456 = vmatpush1.bf16.msra.mxu0 %v7405
    %7457 = vmatprep.subr.bf16.mxu0 0
    %7458 = vmatpush1.bf16.msra.mxu0 0
    %7459 = vmatprep.subr.bf16.mxu0 0
    %7460 = vmatpush1.bf16.msra.mxu0 0
    %7461 = vmatprep.subr.bf16.mxu0 0
    %7462 = vmatpush1.bf16.msra.mxu0 0
    %7463 = vmatprep.subr.bf16.mxu0 0
    %7464 = vmatpush1.bf16.msra.mxu0 0
    %7465 = vmatprep.subr.bf16.mxu0 0
    %7466 = vmatpush1.bf16.msra.mxu0 0
    %7467 = vmatprep.subr.bf16.mxu0 0
    %7468 = vmatpush1.bf16.msra.mxu0 0
    %7469 = vmatprep.subr.bf16.mxu0 0
    %7470 = vmatpush1.bf16.msra.mxu0 0
    %7471 = vmatprep.subr.bf16.mxu0 0
    %7472 = vmatpush1.bf16.msra.mxu0 0
    %7473 = vmatprep.mubr.bf16.mxu0 0
    %7474 = vmatmul.mubr.bf16.gmra.mrb[0].mxu0 %v7120
    %v7475 = vpop.f32.mrb[0].mxu0
    %v7476 = vadd.f32 0.0, %v7475
    %v7477 = vpop.f32.mrb[0].mxu0
    %v7478 = vadd.f32 0.0, %v7477
    %v7479 = vpop.f32.mrb[0].mxu0
    %v7480 = vpop.f32.mrb[0].mxu0
    %7481 = vdwg.mxu0
    %7482 = vmatprep.subr.bf16.mxu0 %v7380
    %7483 = vmatpush1.bf16.msra.mxu0 %v7379
    %7484 = vmatprep.subr.bf16.mxu0 %v7384
    %7485 = vmatpush1.bf16.msra.mxu0 %v7383
    %7486 = vmatprep.subr.bf16.mxu0 %v7388
    %7487 = vmatpush1.bf16.msra.mxu0 %v7387
    %7488 = vmatprep.subr.bf16.mxu0 %v7392
    %7489 = vmatpush1.bf16.msra.mxu0 %v7391
    %7490 = vmatprep.subr.bf16.mxu0 %v7396
    %7491 = vmatpush1.bf16.msra.mxu0 %v7395
    %7492 = vmatprep.subr.bf16.mxu0 %v7400
    %7493 = vmatpush1.bf16.msra.mxu0 %v7399
    %7494 = vmatprep.subr.bf16.mxu0 %v7404
    %7495 = vmatpush1.bf16.msra.mxu0 %v7403
    %7496 = vmatprep.subr.bf16.mxu0 %v7408
    %7497 = vmatpush1.bf16.msra.mxu0 %v7407
    %7498 = vmatprep.subr.bf16.mxu0 0
    %7499 = vmatpush1.bf16.msra.mxu0 0
    %7500 = vmatprep.subr.bf16.mxu0 0
    %7501 = vmatpush1.bf16.msra.mxu0 0
    %7502 = vmatprep.subr.bf16.mxu0 0
    %7503 = vmatpush1.bf16.msra.mxu0 0
    %7504 = vmatprep.subr.bf16.mxu0 0
    %7505 = vmatpush1.bf16.msra.mxu0 0
    %7506 = vmatprep.subr.bf16.mxu0 0
    %7507 = vmatpush1.bf16.msra.mxu0 0
    %7508 = vmatprep.subr.bf16.mxu0 0
    %7509 = vmatpush1.bf16.msra.mxu0 0
    %7510 = vmatprep.subr.bf16.mxu0 0
    %7511 = vmatpush1.bf16.msra.mxu0 0
    %7512 = vmatprep.subr.bf16.mxu0 0
    %7513 = vmatpush1.bf16.msra.mxu0 0
    %7514 = vmatprep.mubr.bf16.mxu0 0
    %7515 = vmatmul.mubr.bf16.gmra.mrb[0].mxu0 %v7120
    %v7516 = vpop.f32.mrb[0].mxu0
    %v7517 = vadd.f32 0.0, %v7516
    %v7518 = vpop.f32.mrb[0].mxu0
    %v7519 = vadd.f32 0.0, %v7518
    %v7520 = vpop.f32.mrb[0].mxu0
    %v7521 = vpop.f32.mrb[0].mxu0
    %7522 = vdwg.mxu0
    %v7651 = vunpack.c.l.b16 %v7121
    %v7652 = vunpack.c.h.b16 %v7121
    %v7653 = vunpack.c.l.b16 %v7122
    %v7654 = vunpack.c.h.b16 %v7122
    %v7655 = vunpack.c.l.b16 %v7123
    %v7656 = vunpack.c.h.b16 %v7123
    %v7657 = vunpack.c.l.b16 %v7124
    %v7658 = vunpack.c.h.b16 %v7124
    %v7659 = vunpack.c.l.b16 %v7125
    %v7660 = vunpack.c.h.b16 %v7125
    %v7661 = vunpack.c.l.b16 %v7126
    %v7662 = vunpack.c.h.b16 %v7126
    %v7663 = vunpack.c.l.b16 %v7127
    %v7664 = vunpack.c.h.b16 %v7127
    %v7665 = vunpack.c.l.b16 %v7128
    %v7666 = vunpack.c.h.b16 %v7128
    %v7667 = vunpack.c.l.b16 %v7129
    %v7668 = vunpack.c.h.b16 %v7129
    %v7669 = vunpack.c.l.b16 %v7130
    %v7670 = vunpack.c.h.b16 %v7130
    %v7671 = vunpack.c.l.b16 %v7131
    %v7672 = vunpack.c.h.b16 %v7131
    %v7673 = vunpack.c.l.b16 %v7132
    %v7674 = vunpack.c.h.b16 %v7132
    %v7675 = vunpack.c.l.b16 %v7133
    %v7676 = vunpack.c.h.b16 %v7133
    %v7677 = vunpack.c.l.b16 %v7134
    %v7678 = vunpack.c.h.b16 %v7134
    %v7679 = vunpack.c.l.b16 %v7135
    %v7680 = vunpack.c.h.b16 %v7135
    %v7681 = vunpack.c.l.b16 %v7136
    %v7682 = vunpack.c.h.b16 %v7136
    %v7683 = vunpack.c.l.b16 %v7137
    %v7684 = vunpack.c.h.b16 %v7137
    %v7685 = vunpack.c.l.b16 %v7138
    %v7686 = vunpack.c.h.b16 %v7138
    %v7687 = vunpack.c.l.b16 %v7139
    %v7688 = vunpack.c.h.b16 %v7139
    %v7689 = vunpack.c.l.b16 %v7140
    %v7690 = vunpack.c.h.b16 %v7140
    %v7691 = vunpack.c.l.b16 %v7141
    %v7692 = vunpack.c.h.b16 %v7141
    %v7693 = vunpack.c.l.b16 %v7142
    %v7694 = vunpack.c.h.b16 %v7142
    %v7695 = vunpack.c.l.b16 %v7143
    %v7696 = vunpack.c.h.b16 %v7143
    %v7697 = vunpack.c.l.b16 %v7144
    %v7698 = vunpack.c.h.b16 %v7144
    %v7699 = vunpack.c.l.b16 %v7145
    %v7700 = vunpack.c.h.b16 %v7145
    %v7701 = vunpack.c.l.b16 %v7146
    %v7702 = vunpack.c.h.b16 %v7146
    %v7703 = vunpack.c.l.b16 %v7147
    %v7704 = vunpack.c.h.b16 %v7147
    %v7705 = vunpack.c.l.b16 %v7148
    %v7706 = vunpack.c.h.b16 %v7148
    %v7707 = vunpack.c.l.b16 %v7149
    %v7708 = vunpack.c.h.b16 %v7149
    %v7709 = vunpack.c.l.b16 %v7150
    %v7710 = vunpack.c.h.b16 %v7150
    %v7711 = vunpack.c.l.b16 %v7151
    %v7712 = vunpack.c.h.b16 %v7151
    %v7713 = vunpack.c.l.b16 %v7152
    %v7714 = vunpack.c.h.b16 %v7152
    %v7715 = vunpack.c.l.b16 %v7153
    %v7716 = vunpack.c.h.b16 %v7153
    %v7717 = vunpack.c.l.b16 %v7154
    %v7718 = vunpack.c.h.b16 %v7154
    %v7719 = vunpack.c.l.b16 %v7155
    %v7720 = vunpack.c.h.b16 %v7155
    %v7721 = vunpack.c.l.b16 %v7156
    %v7722 = vunpack.c.h.b16 %v7156
    %v7723 = vunpack.c.l.b16 %v7157
    %v7724 = vunpack.c.h.b16 %v7157
    %v7725 = vunpack.c.l.b16 %v7158
    %v7726 = vunpack.c.h.b16 %v7158
    %v7727 = vunpack.c.l.b16 %v7159
    %v7728 = vunpack.c.h.b16 %v7159
    %v7729 = vunpack.c.l.b16 %v7160
    %v7730 = vunpack.c.h.b16 %v7160
    %v7731 = vunpack.c.l.b16 %v7161
    %v7732 = vunpack.c.h.b16 %v7161
    %v7733 = vunpack.c.l.b16 %v7162
    %v7734 = vunpack.c.h.b16 %v7162
    %v7735 = vunpack.c.l.b16 %v7163
    %v7736 = vunpack.c.h.b16 %v7163
    %v7737 = vunpack.c.l.b16 %v7164
    %v7738 = vunpack.c.h.b16 %v7164
    %v7739 = vunpack.c.l.b16 %v7165
    %v7740 = vunpack.c.h.b16 %v7165
    %v7741 = vunpack.c.l.b16 %v7166
    %v7742 = vunpack.c.h.b16 %v7166
    %v7743 = vunpack.c.l.b16 %v7167
    %v7744 = vunpack.c.h.b16 %v7167
    %v7745 = vunpack.c.l.b16 %v7168
    %v7746 = vunpack.c.h.b16 %v7168
    %v7747 = vunpack.c.l.b16 %v7169
    %v7748 = vunpack.c.h.b16 %v7169
    %v7749 = vunpack.c.l.b16 %v7170
    %v7750 = vunpack.c.h.b16 %v7170
    %v7751 = vunpack.c.l.b16 %v7171
    %v7752 = vunpack.c.h.b16 %v7171
    %v7753 = vunpack.c.l.b16 %v7172
    %v7754 = vunpack.c.h.b16 %v7172
    %v7755 = vunpack.c.l.b16 %v7173
    %v7756 = vunpack.c.h.b16 %v7173
    %v7757 = vunpack.c.l.b16 %v7174
    %v7758 = vunpack.c.h.b16 %v7174
    %v7759 = vunpack.c.l.b16 %v7175
    %v7760 = vunpack.c.h.b16 %v7175
    %v7761 = vunpack.c.l.b16 %v7176
    %v7762 = vunpack.c.h.b16 %v7176
    %v7763 = vunpack.c.l.b16 %v7177
    %v7764 = vunpack.c.h.b16 %v7177
    %v7765 = vunpack.c.l.b16 %v7178
    %v7766 = vunpack.c.h.b16 %v7178
    %v7767 = vunpack.c.l.b16 %v7179
    %v7768 = vunpack.c.h.b16 %v7179
    %v7769 = vunpack.c.l.b16 %v7180
    %v7770 = vunpack.c.h.b16 %v7180
    %v7771 = vunpack.c.l.b16 %v7181
    %v7772 = vunpack.c.h.b16 %v7181
    %v7773 = vunpack.c.l.b16 %v7182
    %v7774 = vunpack.c.h.b16 %v7182
    %v7775 = vunpack.c.l.b16 %v7183
    %v7776 = vunpack.c.h.b16 %v7183
    %v7777 = vunpack.c.l.b16 %v7184
    %v7778 = vunpack.c.h.b16 %v7184
    %v7779 = vunpack.c.l.b16 %v7185
    %v7780 = vunpack.c.h.b16 %v7185
    %v7781 = vunpack.c.l.b16 %v7186
    %v7782 = vunpack.c.h.b16 %v7186
    %v7783 = vunpack.c.l.b16 %v7187
    %v7784 = vunpack.c.h.b16 %v7187
    %v7785 = vunpack.c.l.b16 %v7188
    %v7786 = vunpack.c.h.b16 %v7188
    %v7787 = vunpack.c.l.b16 %v7189
    %v7788 = vunpack.c.h.b16 %v7189
    %v7789 = vunpack.c.l.b16 %v7190
    %v7790 = vunpack.c.h.b16 %v7190
    %v7791 = vunpack.c.l.b16 %v7191
    %v7792 = vunpack.c.h.b16 %v7191
    %v7793 = vunpack.c.l.b16 %v7192
    %v7794 = vunpack.c.h.b16 %v7192
    %v7795 = vunpack.c.l.b16 %v7193
    %v7796 = vunpack.c.h.b16 %v7193
    %v7797 = vunpack.c.l.b16 %v7194
    %v7798 = vunpack.c.h.b16 %v7194
    %v7799 = vunpack.c.l.b16 %v7195
    %v7800 = vunpack.c.h.b16 %v7195
    %v7801 = vunpack.c.l.b16 %v7196
    %v7802 = vunpack.c.h.b16 %v7196
    %v7803 = vunpack.c.l.b16 %v7197
    %v7804 = vunpack.c.h.b16 %v7197
    %v7805 = vunpack.c.l.b16 %v7198
    %v7806 = vunpack.c.h.b16 %v7198
    %v7807 = vunpack.c.l.b16 %v7199
    %v7808 = vunpack.c.h.b16 %v7199
    %v7809 = vunpack.c.l.b16 %v7200
    %v7810 = vunpack.c.h.b16 %v7200
    %v7811 = vunpack.c.l.b16 %v7201
    %v7812 = vunpack.c.h.b16 %v7201
    %v7813 = vunpack.c.l.b16 %v7202
    %v7814 = vunpack.c.h.b16 %v7202
    %v7815 = vunpack.c.l.b16 %v7203
    %v7816 = vunpack.c.h.b16 %v7203
    %v7817 = vunpack.c.l.b16 %v7204
    %v7818 = vunpack.c.h.b16 %v7204
    %v7819 = vunpack.c.l.b16 %v7205
    %v7820 = vunpack.c.h.b16 %v7205
    %v7821 = vunpack.c.l.b16 %v7206
    %v7822 = vunpack.c.h.b16 %v7206
    %v7823 = vunpack.c.l.b16 %v7207
    %v7824 = vunpack.c.h.b16 %v7207
    %v7825 = vunpack.c.l.b16 %v7208
    %v7826 = vunpack.c.h.b16 %v7208
    %v7827 = vunpack.c.l.b16 %v7209
    %v7828 = vunpack.c.h.b16 %v7209
    %v7829 = vunpack.c.l.b16 %v7210
    %v7830 = vunpack.c.h.b16 %v7210
    %v7831 = vunpack.c.l.b16 %v7211
    %v7832 = vunpack.c.h.b16 %v7211
    %v7833 = vunpack.c.l.b16 %v7212
    %v7834 = vunpack.c.h.b16 %v7212
    %v7835 = vunpack.c.l.b16 %v7213
    %v7836 = vunpack.c.h.b16 %v7213
    %v7837 = vunpack.c.l.b16 %v7214
    %v7838 = vunpack.c.h.b16 %v7214
    %v7839 = vunpack.c.l.b16 %v7215
    %v7840 = vunpack.c.h.b16 %v7215
    %v7841 = vunpack.c.l.b16 %v7216
    %v7842 = vunpack.c.h.b16 %v7216
    %v7843 = vunpack.c.l.b16 %v7217
    %v7844 = vunpack.c.h.b16 %v7217
    %v7845 = vunpack.c.l.b16 %v7218
    %v7846 = vunpack.c.h.b16 %v7218
    %v7847 = vunpack.c.l.b16 %v7219
    %v7848 = vunpack.c.h.b16 %v7219
    %v7849 = vunpack.c.l.b16 %v7220
    %v7850 = vunpack.c.h.b16 %v7220
    %v7851 = vunpack.c.l.b16 %v7221
    %v7852 = vunpack.c.h.b16 %v7221
    %v7853 = vunpack.c.l.b16 %v7222
    %v7854 = vunpack.c.h.b16 %v7222
    %v7855 = vunpack.c.l.b16 %v7223
    %v7856 = vunpack.c.h.b16 %v7223
    %v7857 = vunpack.c.l.b16 %v7224
    %v7858 = vunpack.c.h.b16 %v7224
    %v7859 = vunpack.c.l.b16 %v7225
    %v7860 = vunpack.c.h.b16 %v7225
    %v7861 = vunpack.c.l.b16 %v7226
    %v7862 = vunpack.c.h.b16 %v7226
    %v7863 = vunpack.c.l.b16 %v7227
    %v7864 = vunpack.c.h.b16 %v7227
    %v7865 = vunpack.c.l.b16 %v7228
    %v7866 = vunpack.c.h.b16 %v7228
    %v7867 = vunpack.c.l.b16 %v7229
    %v7868 = vunpack.c.h.b16 %v7229
    %v7869 = vunpack.c.l.b16 %v7230
    %v7870 = vunpack.c.h.b16 %v7230
    %v7871 = vunpack.c.l.b16 %v7231
    %v7872 = vunpack.c.h.b16 %v7231
    %v7873 = vunpack.c.l.b16 %v7232
    %v7874 = vunpack.c.h.b16 %v7232
    %v7875 = vunpack.c.l.b16 %v7233
    %v7876 = vunpack.c.h.b16 %v7233
    %v7877 = vunpack.c.l.b16 %v7234
    %v7878 = vunpack.c.h.b16 %v7234
    %v7879 = vunpack.c.l.b16 %v7235
    %v7880 = vunpack.c.h.b16 %v7235
    %v7881 = vunpack.c.l.b16 %v7236
    %v7882 = vunpack.c.h.b16 %v7236
    %v7883 = vunpack.c.l.b16 %v7237
    %v7884 = vunpack.c.h.b16 %v7237
    %v7885 = vunpack.c.l.b16 %v7238
    %v7886 = vunpack.c.h.b16 %v7238
    %v7887 = vunpack.c.l.b16 %v7239
    %v7888 = vunpack.c.h.b16 %v7239
    %v7889 = vunpack.c.l.b16 %v7240
    %v7890 = vunpack.c.h.b16 %v7240
    %v7891 = vunpack.c.l.b16 %v7241
    %v7892 = vunpack.c.h.b16 %v7241
    %v7893 = vunpack.c.l.b16 %v7242
    %v7894 = vunpack.c.h.b16 %v7242
    %v7895 = vunpack.c.l.b16 %v7243
    %v7896 = vunpack.c.h.b16 %v7243
    %v7897 = vunpack.c.l.b16 %v7244
    %v7898 = vunpack.c.h.b16 %v7244
    %v7899 = vunpack.c.l.b16 %v7245
    %v7900 = vunpack.c.h.b16 %v7245
    %v7901 = vunpack.c.l.b16 %v7246
    %v7902 = vunpack.c.h.b16 %v7246
    %v7903 = vunpack.c.l.b16 %v7247
    %v7904 = vunpack.c.h.b16 %v7247
    %v7905 = vunpack.c.l.b16 %v7248
    %v7906 = vunpack.c.h.b16 %v7248
    %v7907 = vpack.c.b16 %v7655, %v7651
    %v7908 = vpack.c.b16 %v7656, %v7652
    %v7909 = vpack.c.b16 %v7657, %v7653
    %v7910 = vpack.c.b16 %v7658, %v7654
    %v7911 = vpack.c.b16 %v7663, %v7659
    %v7912 = vpack.c.b16 %v7664, %v7660
    %v7913 = vpack.c.b16 %v7665, %v7661
    %v7914 = vpack.c.b16 %v7666, %v7662
    %v7915 = vpack.c.b16 %v7671, %v7667
    %v7916 = vpack.c.b16 %v7672, %v7668
    %v7917 = vpack.c.b16 %v7673, %v7669
    %v7918 = vpack.c.b16 %v7674, %v7670
    %v7919 = vpack.c.b16 %v7679, %v7675
    %v7920 = vpack.c.b16 %v7680, %v7676
    %v7921 = vpack.c.b16 %v7681, %v7677
    %v7922 = vpack.c.b16 %v7682, %v7678
    %v7923 = vpack.c.b16 %v7687, %v7683
    %v7924 = vpack.c.b16 %v7688, %v7684
    %v7925 = vpack.c.b16 %v7689, %v7685
    %v7926 = vpack.c.b16 %v7690, %v7686
    %v7927 = vpack.c.b16 %v7695, %v7691
    %v7928 = vpack.c.b16 %v7696, %v7692
    %v7929 = vpack.c.b16 %v7697, %v7693
    %v7930 = vpack.c.b16 %v7698, %v7694
    %v7931 = vpack.c.b16 %v7703, %v7699
    %v7932 = vpack.c.b16 %v7704, %v7700
    %v7933 = vpack.c.b16 %v7705, %v7701
    %v7934 = vpack.c.b16 %v7706, %v7702
    %v7935 = vpack.c.b16 %v7711, %v7707
    %v7936 = vpack.c.b16 %v7712, %v7708
    %v7937 = vpack.c.b16 %v7713, %v7709
    %v7938 = vpack.c.b16 %v7714, %v7710
    %v7939 = vpack.c.b16 %v7719, %v7715
    %v7940 = vpack.c.b16 %v7720, %v7716
    %v7941 = vpack.c.b16 %v7721, %v7717
    %v7942 = vpack.c.b16 %v7722, %v7718
    %v7943 = vpack.c.b16 %v7727, %v7723
    %v7944 = vpack.c.b16 %v7728, %v7724
    %v7945 = vpack.c.b16 %v7729, %v7725
    %v7946 = vpack.c.b16 %v7730, %v7726
    %v7947 = vpack.c.b16 %v7735, %v7731
    %v7948 = vpack.c.b16 %v7736, %v7732
    %v7949 = vpack.c.b16 %v7737, %v7733
    %v7950 = vpack.c.b16 %v7738, %v7734
    %v7951 = vpack.c.b16 %v7743, %v7739
    %v7952 = vpack.c.b16 %v7744, %v7740
    %v7953 = vpack.c.b16 %v7745, %v7741
    %v7954 = vpack.c.b16 %v7746, %v7742
    %v7955 = vpack.c.b16 %v7751, %v7747
    %v7956 = vpack.c.b16 %v7752, %v7748
    %v7957 = vpack.c.b16 %v7753, %v7749
    %v7958 = vpack.c.b16 %v7754, %v7750
    %v7959 = vpack.c.b16 %v7759, %v7755
    %v7960 = vpack.c.b16 %v7760, %v7756
    %v7961 = vpack.c.b16 %v7761, %v7757
    %v7962 = vpack.c.b16 %v7762, %v7758
    %v7963 = vpack.c.b16 %v7767, %v7763
    %v7964 = vpack.c.b16 %v7768, %v7764
    %v7965 = vpack.c.b16 %v7769, %v7765
    %v7966 = vpack.c.b16 %v7770, %v7766
    %v7967 = vpack.c.b16 %v7775, %v7771
    %v7968 = vpack.c.b16 %v7776, %v7772
    %v7969 = vpack.c.b16 %v7777, %v7773
    %v7970 = vpack.c.b16 %v7778, %v7774
    %v7971 = vpack.c.b16 %v7783, %v7779
    %v7972 = vpack.c.b16 %v7784, %v7780
    %v7973 = vpack.c.b16 %v7785, %v7781
    %v7974 = vpack.c.b16 %v7786, %v7782
    %v7975 = vpack.c.b16 %v7791, %v7787
    %v7976 = vpack.c.b16 %v7792, %v7788
    %v7977 = vpack.c.b16 %v7793, %v7789
    %v7978 = vpack.c.b16 %v7794, %v7790
    %v7979 = vpack.c.b16 %v7799, %v7795
    %v7980 = vpack.c.b16 %v7800, %v7796
    %v7981 = vpack.c.b16 %v7801, %v7797
    %v7982 = vpack.c.b16 %v7802, %v7798
    %v7983 = vpack.c.b16 %v7807, %v7803
    %v7984 = vpack.c.b16 %v7808, %v7804
    %v7985 = vpack.c.b16 %v7809, %v7805
    %v7986 = vpack.c.b16 %v7810, %v7806
    %v7987 = vpack.c.b16 %v7815, %v7811
    %v7988 = vpack.c.b16 %v7816, %v7812
    %v7989 = vpack.c.b16 %v7817, %v7813
    %v7990 = vpack.c.b16 %v7818, %v7814
    %v7991 = vpack.c.b16 %v7823, %v7819
    %v7992 = vpack.c.b16 %v7824, %v7820
    %v7993 = vpack.c.b16 %v7825, %v7821
    %v7994 = vpack.c.b16 %v7826, %v7822
    %v7995 = vpack.c.b16 %v7831, %v7827
    %v7996 = vpack.c.b16 %v7832, %v7828
    %v7997 = vpack.c.b16 %v7833, %v7829
    %v7998 = vpack.c.b16 %v7834, %v7830
    %v7999 = vpack.c.b16 %v7839, %v7835
    %v8000 = vpack.c.b16 %v7840, %v7836
    %v8001 = vpack.c.b16 %v7841, %v7837
    %v8002 = vpack.c.b16 %v7842, %v7838
    %v8003 = vpack.c.b16 %v7847, %v7843
    %v8004 = vpack.c.b16 %v7848, %v7844
    %v8005 = vpack.c.b16 %v7849, %v7845
    %v8006 = vpack.c.b16 %v7850, %v7846
    %v8007 = vpack.c.b16 %v7855, %v7851
    %v8008 = vpack.c.b16 %v7856, %v7852
    %v8009 = vpack.c.b16 %v7857, %v7853
    %v8010 = vpack.c.b16 %v7858, %v7854
    %v8011 = vpack.c.b16 %v7863, %v7859
    %v8012 = vpack.c.b16 %v7864, %v7860
    %v8013 = vpack.c.b16 %v7865, %v7861
    %v8014 = vpack.c.b16 %v7866, %v7862
    %v8015 = vpack.c.b16 %v7871, %v7867
    %v8016 = vpack.c.b16 %v7872, %v7868
    %v8017 = vpack.c.b16 %v7873, %v7869
    %v8018 = vpack.c.b16 %v7874, %v7870
    %v8019 = vpack.c.b16 %v7879, %v7875
    %v8020 = vpack.c.b16 %v7880, %v7876
    %v8021 = vpack.c.b16 %v7881, %v7877
    %v8022 = vpack.c.b16 %v7882, %v7878
    %v8023 = vpack.c.b16 %v7887, %v7883
    %v8024 = vpack.c.b16 %v7888, %v7884
    %v8025 = vpack.c.b16 %v7889, %v7885
    %v8026 = vpack.c.b16 %v7890, %v7886
    %v8027 = vpack.c.b16 %v7895, %v7891
    %v8028 = vpack.c.b16 %v7896, %v7892
    %v8029 = vpack.c.b16 %v7897, %v7893
    %v8030 = vpack.c.b16 %v7898, %v7894
    %v8031 = vpack.c.b16 %v7903, %v7899
    %v8032 = vpack.c.b16 %v7904, %v7900
    %v8033 = vpack.c.b16 %v7905, %v7901
    %v8034 = vpack.c.b16 %v7906, %v7902
    %8163 = vmatprep.subr.bf16.mxu0 %v7908
    %8164 = vmatpush1.bf16.msra.mxu0 %v7907
    %8165 = vmatprep.subr.bf16.mxu0 %v7912
    %8166 = vmatpush1.bf16.msra.mxu0 %v7911
    %8167 = vmatprep.subr.bf16.mxu0 %v7916
    %8168 = vmatpush1.bf16.msra.mxu0 %v7915
    %8169 = vmatprep.subr.bf16.mxu0 %v7920
    %8170 = vmatpush1.bf16.msra.mxu0 %v7919
    %8171 = vmatprep.subr.bf16.mxu0 %v7924
    %8172 = vmatpush1.bf16.msra.mxu0 %v7923
    %8173 = vmatprep.subr.bf16.mxu0 %v7928
    %8174 = vmatpush1.bf16.msra.mxu0 %v7927
    %8175 = vmatprep.subr.bf16.mxu0 %v7932
    %8176 = vmatpush1.bf16.msra.mxu0 %v7931
    %8177 = vmatprep.subr.bf16.mxu0 %v7936
    %8178 = vmatpush1.bf16.msra.mxu0 %v7935
    %8179 = vmatprep.subr.bf16.mxu0 %v7940
    %8180 = vmatpush1.bf16.msra.mxu0 %v7939
    %8181 = vmatprep.subr.bf16.mxu0 %v7944
    %8182 = vmatpush1.bf16.msra.mxu0 %v7943
    %8183 = vmatprep.subr.bf16.mxu0 %v7948
    %8184 = vmatpush1.bf16.msra.mxu0 %v7947
    %8185 = vmatprep.subr.bf16.mxu0 %v7952
    %8186 = vmatpush1.bf16.msra.mxu0 %v7951
    %8187 = vmatprep.subr.bf16.mxu0 %v7956
    %8188 = vmatpush1.bf16.msra.mxu0 %v7955
    %8189 = vmatprep.subr.bf16.mxu0 %v7960
    %8190 = vmatpush1.bf16.msra.mxu0 %v7959
    %8191 = vmatprep.subr.bf16.mxu0 %v7964
    %8192 = vmatpush1.bf16.msra.mxu0 %v7963
    %8193 = vmatprep.subr.bf16.mxu0 %v7968
    %8194 = vmatpush1.bf16.msra.mxu0 %v7967
    %8195 = vmatprep.mubr.bf16.mxu0 %v7012
    %8196 = vmatmul.mubr.bf16.gmra.mrb[0].mxu0 %v7011
    %v8197 = vpop.f32.mrb[0].mxu0
    %v8198 = vadd.f32 %v7476, %v8197
    %v8199 = vpop.f32.mrb[0].mxu0
    %v8200 = vadd.f32 %v7478, %v8199
    %v8201 = vpop.f32.mrb[0].mxu0
    %v8202 = vpop.f32.mrb[0].mxu0
    %8203 = vdwg.mxu0
    %8204 = vmatprep.subr.bf16.mxu0 %v7972
    %8205 = vmatpush1.bf16.msra.mxu0 %v7971
    %8206 = vmatprep.subr.bf16.mxu0 %v7976
    %8207 = vmatpush1.bf16.msra.mxu0 %v7975
    %8208 = vmatprep.subr.bf16.mxu0 %v7980
    %8209 = vmatpush1.bf16.msra.mxu0 %v7979
    %8210 = vmatprep.subr.bf16.mxu0 %v7984
    %8211 = vmatpush1.bf16.msra.mxu0 %v7983
    %8212 = vmatprep.subr.bf16.mxu0 %v7988
    %8213 = vmatpush1.bf16.msra.mxu0 %v7987
    %8214 = vmatprep.subr.bf16.mxu0 %v7992
    %8215 = vmatpush1.bf16.msra.mxu0 %v7991
    %8216 = vmatprep.subr.bf16.mxu0 %v7996
    %8217 = vmatpush1.bf16.msra.mxu0 %v7995
    %8218 = vmatprep.subr.bf16.mxu0 %v8000
    %8219 = vmatpush1.bf16.msra.mxu0 %v7999
    %8220 = vmatprep.subr.bf16.mxu0 %v8004
    %8221 = vmatpush1.bf16.msra.mxu0 %v8003
    %8222 = vmatprep.subr.bf16.mxu0 %v8008
    %8223 = vmatpush1.bf16.msra.mxu0 %v8007
    %8224 = vmatprep.subr.bf16.mxu0 %v8012
    %8225 = vmatpush1.bf16.msra.mxu0 %v8011
    %8226 = vmatprep.subr.bf16.mxu0 %v8016
    %8227 = vmatpush1.bf16.msra.mxu0 %v8015
    %8228 = vmatprep.subr.bf16.mxu0 %v8020
    %8229 = vmatpush1.bf16.msra.mxu0 %v8019
    %8230 = vmatprep.subr.bf16.mxu0 %v8024
    %8231 = vmatpush1.bf16.msra.mxu0 %v8023
    %8232 = vmatprep.subr.bf16.mxu0 %v8028
    %8233 = vmatpush1.bf16.msra.mxu0 %v8027
    %8234 = vmatprep.subr.bf16.mxu0 %v8032
    %8235 = vmatpush1.bf16.msra.mxu0 %v8031
    %8236 = vmatprep.mubr.bf16.mxu0 %v7014
    %8237 = vmatmul.mubr.bf16.gmra.mrb[0].mxu0 %v7013
    %v8238 = vpop.f32.mrb[0].mxu0
    %v8239 = vadd.f32 %v8198, %v8238
    %v8240 = vpop.f32.mrb[0].mxu0
    %v8241 = vadd.f32 %v8200, %v8240
    %v8242 = vpop.f32.mrb[0].mxu0
    %v8243 = vpop.f32.mrb[0].mxu0
    %8244 = vdwg.mxu0
    %8245 = vmatprep.subr.bf16.mxu0 %v7910
    %8246 = vmatpush1.bf16.msra.mxu0 %v7909
    %8247 = vmatprep.subr.bf16.mxu0 %v7914
    %8248 = vmatpush1.bf16.msra.mxu0 %v7913
    %8249 = vmatprep.subr.bf16.mxu0 %v7918
    %8250 = vmatpush1.bf16.msra.mxu0 %v7917
    %8251 = vmatprep.subr.bf16.mxu0 %v7922
    %8252 = vmatpush1.bf16.msra.mxu0 %v7921
    %8253 = vmatprep.subr.bf16.mxu0 %v7926
    %8254 = vmatpush1.bf16.msra.mxu0 %v7925
    %8255 = vmatprep.subr.bf16.mxu0 %v7930
    %8256 = vmatpush1.bf16.msra.mxu0 %v7929
    %8257 = vmatprep.subr.bf16.mxu0 %v7934
    %8258 = vmatpush1.bf16.msra.mxu0 %v7933
    %8259 = vmatprep.subr.bf16.mxu0 %v7938
    %8260 = vmatpush1.bf16.msra.mxu0 %v7937
    %8261 = vmatprep.subr.bf16.mxu0 %v7942
    %8262 = vmatpush1.bf16.msra.mxu0 %v7941
    %8263 = vmatprep.subr.bf16.mxu0 %v7946
    %8264 = vmatpush1.bf16.msra.mxu0 %v7945
    %8265 = vmatprep.subr.bf16.mxu0 %v7950
    %8266 = vmatpush1.bf16.msra.mxu0 %v7949
    %8267 = vmatprep.subr.bf16.mxu0 %v7954
    %8268 = vmatpush1.bf16.msra.mxu0 %v7953
    %8269 = vmatprep.subr.bf16.mxu0 %v7958
    %8270 = vmatpush1.bf16.msra.mxu0 %v7957
    %8271 = vmatprep.subr.bf16.mxu0 %v7962
    %8272 = vmatpush1.bf16.msra.mxu0 %v7961
    %8273 = vmatprep.subr.bf16.mxu0 %v7966
    %8274 = vmatpush1.bf16.msra.mxu0 %v7965
    %8275 = vmatprep.subr.bf16.mxu0 %v7970
    %8276 = vmatpush1.bf16.msra.mxu0 %v7969
    %8277 = vmatprep.mubr.bf16.mxu0 %v7012
    %8278 = vmatmul.mubr.bf16.gmra.mrb[0].mxu0 %v7011
    %v8279 = vpop.f32.mrb[0].mxu0
    %v8280 = vadd.f32 %v7517, %v8279
    %v8281 = vpop.f32.mrb[0].mxu0
    %v8282 = vadd.f32 %v7519, %v8281
    %v8283 = vpop.f32.mrb[0].mxu0
    %v8284 = vpop.f32.mrb[0].mxu0
    %8285 = vdwg.mxu0
    %8286 = vmatprep.subr.bf16.mxu0 %v7974
    %8287 = vmatpush1.bf16.msra.mxu0 %v7973
    %8288 = vmatprep.subr.bf16.mxu0 %v7978
    %8289 = vmatpush1.bf16.msra.mxu0 %v7977
    %8290 = vmatprep.subr.bf16.mxu0 %v7982
    %8291 = vmatpush1.bf16.msra.mxu0 %v7981
    %8292 = vmatprep.subr.bf16.mxu0 %v7986
    %8293 = vmatpush1.bf16.msra.mxu0 %v7985
    %8294 = vmatprep.subr.bf16.mxu0 %v7990
    %8295 = vmatpush1.bf16.msra.mxu0 %v7989
    %8296 = vmatprep.subr.bf16.mxu0 %v7994
    %8297 = vmatpush1.bf16.msra.mxu0 %v7993
    %8298 = vmatprep.subr.bf16.mxu0 %v7998
    %8299 = vmatpush1.bf16.msra.mxu0 %v7997
    %8300 = vmatprep.subr.bf16.mxu0 %v8002
    %8301 = vmatpush1.bf16.msra.mxu0 %v8001
    %8302 = vmatprep.subr.bf16.mxu0 %v8006
    %8303 = vmatpush1.bf16.msra.mxu0 %v8005
    %8304 = vmatprep.subr.bf16.mxu0 %v8010
    %8305 = vmatpush1.bf16.msra.mxu0 %v8009
    %8306 = vmatprep.subr.bf16.mxu0 %v8014
    %8307 = vmatpush1.bf16.msra.mxu0 %v8013
    %8308 = vmatprep.subr.bf16.mxu0 %v8018
    %8309 = vmatpush1.bf16.msra.mxu0 %v8017
    %8310 = vmatprep.subr.bf16.mxu0 %v8022
    %8311 = vmatpush1.bf16.msra.mxu0 %v8021
    %8312 = vmatprep.subr.bf16.mxu0 %v8026
    %8313 = vmatpush1.bf16.msra.mxu0 %v8025
    %8314 = vmatprep.subr.bf16.mxu0 %v8030
    %8315 = vmatpush1.bf16.msra.mxu0 %v8029
    %8316 = vmatprep.subr.bf16.mxu0 %v8034
    %8317 = vmatpush1.bf16.msra.mxu0 %v8033
    %8318 = vmatprep.mubr.bf16.mxu0 %v7014
    %8319 = vmatmul.mubr.bf16.gmra.mrb[0].mxu0 %v7013
    %v8320 = vpop.f32.mrb[0].mxu0
    %v8321 = vadd.f32 %v8280, %v8320
    %v8322 = vpop.f32.mrb[0].mxu0
    %v8323 = vadd.f32 %v8282, %v8322
    %v8324 = vpop.f32.mrb[0].mxu0
    %v8325 = vpop.f32.mrb[0].mxu0
    %8326 = vdwg.mxu0
    %v8327 = vld [vmem:[%s16] sm:$0xf]
    %v8329 = vlaneseq
    %v8330 = vshrl.u32 %v8329, 7
    %v8331 = vsub.s32 0, %v8330
    %v8332 = vrot.slane %v8327, %v8331
    %v8333 = vlaneseq
    %v8334 = vshrl.u32 %v8333, 7
    %v8335 = vsub.s32 1, %v8334
    %v8336 = vrot.slane %v8327, %v8335
    %v8337 = vlaneseq
    %v8338 = vshrl.u32 %v8337, 7
    %v8339 = vsub.s32 2, %v8338
    %v8340 = vrot.slane %v8327, %v8339
    %v8341 = vlaneseq
    %v8342 = vshrl.u32 %v8341, 7
    %v8343 = vsub.s32 3, %v8342
    %v8344 = vrot.slane %v8327, %v8343
    %v8349 = vadd.f32 %v8239, %v8332
    %v8350 = vadd.f32 %v8241, %v8336
    %v8351 = vadd.f32 %v8321, %v8340
    %v8352 = vadd.f32 %v8323, %v8344
    %v8353 = vpack.c.bf16 %v8349, %v8349
    %v8354 = vpack.c.bf16 %v8350, %v8350
    %v8355 = vpack.c.bf16 %v8351, %v8351
    %v8356 = vpack.c.bf16 %v8352, %v8352
    %v8357 = vmax.bf16 %v8353, 0
    %v8358 = vmax.bf16 %v8354, 0
    %v8359 = vmax.bf16 %v8355, 0
    %v8360 = vmax.bf16 %v8356, 0
    %v8361 = vld [vmem:[#allocation19] sm:$0xff]
    %v8362 = vld [vmem:[#allocation19 + $0x8] sm:$0xff]
    %v8363 = vld [vmem:[#allocation19 + $0x10] sm:$0xff]
    %v8364 = vld [vmem:[#allocation19 + $0x18] sm:$0xff]
    %v8365 = vld [vmem:[#allocation19 + $0x20] sm:$0xff]
    %v8366 = vld [vmem:[#allocation19 + $0x28] sm:$0xff]
    %v8367 = vld [vmem:[#allocation19 + $0x30] sm:$0xff]
    %v8368 = vld [vmem:[#allocation19 + $0x38] sm:$0xff]
    %v8369 = vld [vmem:[#allocation19 + $0x40] sm:$0xff]
    %v8370 = vld [vmem:[#allocation19 + $0x48] sm:$0xff]
    %v8371 = vld [vmem:[#allocation19 + $0x50] sm:$0xff]
    %v8372 = vld [vmem:[#allocation19 + $0x58] sm:$0xff]
    %v8373 = vld [vmem:[#allocation19 + $0x60] sm:$0xff]
    %v8374 = vld [vmem:[#allocation19 + $0x68] sm:$0xff]
    %v8375 = vld [vmem:[#allocation19 + $0x70] sm:$0xff]
    %v8376 = vld [vmem:[#allocation19 + $0x78] sm:$0xff]
    %v8377 = vld [vmem:[#allocation19 + $0x80] sm:$0xff]
    %v8378 = vld [vmem:[#allocation19 + $0x88] sm:$0xff]
    %v8379 = vld [vmem:[#allocation19 + $0x90] sm:$0xff]
    %v8380 = vld [vmem:[#allocation19 + $0x98] sm:$0xff]
    %v8381 = vld [vmem:[#allocation19 + $0xa0] sm:$0xff]
    %v8382 = vld [vmem:[#allocation19 + $0xa8] sm:$0xff]
    %v8383 = vld [vmem:[#allocation19 + $0xb0] sm:$0xff]
    %v8384 = vld [vmem:[#allocation19 + $0xb8] sm:$0xff]
    %v8385 = vld [vmem:[#allocation19 + $0xc0] sm:$0xff]
    %v8386 = vld [vmem:[#allocation19 + $0xc8] sm:$0xff]
    %v8387 = vld [vmem:[#allocation19 + $0xd0] sm:$0xff]
    %v8388 = vld [vmem:[#allocation19 + $0xd8] sm:$0xff]
    %v8389 = vld [vmem:[#allocation19 + $0xe0] sm:$0xff]
    %v8390 = vld [vmem:[#allocation19 + $0xe8] sm:$0xff]
    %v8391 = vld [vmem:[#allocation19 + $0xf0] sm:$0xff]
    %v8392 = vld [vmem:[#allocation19 + $0xf8] sm:$0xff]
    %v8393 = vld [vmem:[#allocation19 + $0x100] sm:$0xff]
    %v8394 = vld [vmem:[#allocation19 + $0x108] sm:$0xff]
    %v8395 = vld [vmem:[#allocation19 + $0x110] sm:$0xff]
    %v8396 = vld [vmem:[#allocation19 + $0x118] sm:$0xff]
    %v8397 = vld [vmem:[#allocation19 + $0x120] sm:$0xff]
    %v8398 = vld [vmem:[#allocation19 + $0x128] sm:$0xff]
    %v8399 = vld [vmem:[#allocation19 + $0x130] sm:$0xff]
    %v8400 = vld [vmem:[#allocation19 + $0x138] sm:$0xff]
    %v8401 = vld [vmem:[#allocation19 + $0x140] sm:$0xff]
    %v8402 = vld [vmem:[#allocation19 + $0x148] sm:$0xff]
    %v8403 = vld [vmem:[#allocation19 + $0x150] sm:$0xff]
    %v8404 = vld [vmem:[#allocation19 + $0x158] sm:$0xff]
    %v8405 = vld [vmem:[#allocation19 + $0x160] sm:$0xff]
    %v8406 = vld [vmem:[#allocation19 + $0x168] sm:$0xff]
    %v8407 = vld [vmem:[#allocation19 + $0x170] sm:$0xff]
    %v8408 = vld [vmem:[#allocation19 + $0x178] sm:$0xff]
    %v8409 = vld [vmem:[#allocation19 + $0x180] sm:$0xff]
    %v8410 = vld [vmem:[#allocation19 + $0x188] sm:$0xff]
    %v8411 = vld [vmem:[#allocation19 + $0x190] sm:$0xff]
    %v8412 = vld [vmem:[#allocation19 + $0x198] sm:$0xff]
    %v8413 = vld [vmem:[#allocation19 + $0x1a0] sm:$0xff]
    %v8414 = vld [vmem:[#allocation19 + $0x1a8] sm:$0xff]
    %v8415 = vld [vmem:[#allocation19 + $0x1b0] sm:$0xff]
    %v8416 = vld [vmem:[#allocation19 + $0x1b8] sm:$0xff]
    %v8417 = vld [vmem:[#allocation19 + $0x1c0] sm:$0xff]
    %v8418 = vld [vmem:[#allocation19 + $0x1c8] sm:$0xff]
    %v8419 = vld [vmem:[#allocation19 + $0x1d0] sm:$0xff]
    %v8420 = vld [vmem:[#allocation19 + $0x1d8] sm:$0xff]
    %v8421 = vld [vmem:[#allocation19 + $0x1e0] sm:$0xff]
    %v8422 = vld [vmem:[#allocation19 + $0x1e8] sm:$0xff]
    %v8423 = vld [vmem:[#allocation19 + $0x1f0] sm:$0xff]
    %v8424 = vld [vmem:[#allocation19 + $0x1f8] sm:$0xff]
    %v8425 = vld [vmem:[#allocation19 + $0x200] sm:$0xff]
    %v8426 = vld [vmem:[#allocation19 + $0x208] sm:$0xff]
    %v8427 = vld [vmem:[#allocation19 + $0x210] sm:$0xff]
    %v8428 = vld [vmem:[#allocation19 + $0x218] sm:$0xff]
    %v8429 = vld [vmem:[#allocation19 + $0x220] sm:$0xff]
    %v8430 = vld [vmem:[#allocation19 + $0x228] sm:$0xff]
    %v8431 = vld [vmem:[#allocation19 + $0x230] sm:$0xff]
    %v8432 = vld [vmem:[#allocation19 + $0x238] sm:$0xff]
    %v8433 = vld [vmem:[#allocation19 + $0x240] sm:$0xff]
    %v8434 = vld [vmem:[#allocation19 + $0x248] sm:$0xff]
    %v8435 = vld [vmem:[#allocation19 + $0x250] sm:$0xff]
    %v8436 = vld [vmem:[#allocation19 + $0x258] sm:$0xff]
    %v8437 = vld [vmem:[#allocation19 + $0x260] sm:$0xff]
    %v8438 = vld [vmem:[#allocation19 + $0x268] sm:$0xff]
    %v8439 = vld [vmem:[#allocation19 + $0x270] sm:$0xff]
    %v8440 = vld [vmem:[#allocation19 + $0x278] sm:$0xff]
    %v8441 = vld [vmem:[#allocation19 + $0x280] sm:$0xff]
    %v8442 = vld [vmem:[#allocation19 + $0x288] sm:$0xff]
    %v8443 = vld [vmem:[#allocation19 + $0x290] sm:$0xff]
    %v8444 = vld [vmem:[#allocation19 + $0x298] sm:$0xff]
    %v8445 = vld [vmem:[#allocation19 + $0x2a0] sm:$0xff]
    %v8446 = vld [vmem:[#allocation19 + $0x2a8] sm:$0xff]
    %v8447 = vld [vmem:[#allocation19 + $0x2b0] sm:$0xff]
    %v8448 = vld [vmem:[#allocation19 + $0x2b8] sm:$0xff]
    %v8449 = vld [vmem:[#allocation19 + $0x2c0] sm:$0xff]
    %v8450 = vld [vmem:[#allocation19 + $0x2c8] sm:$0xff]
    %v8451 = vld [vmem:[#allocation19 + $0x2d0] sm:$0xff]
    %v8452 = vld [vmem:[#allocation19 + $0x2d8] sm:$0xff]
    %v8453 = vld [vmem:[#allocation19 + $0x2e0] sm:$0xff]
    %v8454 = vld [vmem:[#allocation19 + $0x2e8] sm:$0xff]
    %v8455 = vld [vmem:[#allocation19 + $0x2f0] sm:$0xff]
    %v8456 = vld [vmem:[#allocation19 + $0x2f8] sm:$0xff]
    %v8457 = vld [vmem:[#allocation19 + $0x300] sm:$0xff]
    %v8458 = vld [vmem:[#allocation19 + $0x308] sm:$0xff]
    %v8459 = vld [vmem:[#allocation19 + $0x310] sm:$0xff]
    %v8460 = vld [vmem:[#allocation19 + $0x318] sm:$0xff]
    %v8461 = vld [vmem:[#allocation19 + $0x320] sm:$0xff]
    %v8462 = vld [vmem:[#allocation19 + $0x328] sm:$0xff]
    %v8463 = vld [vmem:[#allocation19 + $0x330] sm:$0xff]
    %v8464 = vld [vmem:[#allocation19 + $0x338] sm:$0xff]
    %v8465 = vld [vmem:[#allocation19 + $0x340] sm:$0xff]
    %v8466 = vld [vmem:[#allocation19 + $0x348] sm:$0xff]
    %v8467 = vld [vmem:[#allocation19 + $0x350] sm:$0xff]
    %v8468 = vld [vmem:[#allocation19 + $0x358] sm:$0xff]
    %v8469 = vld [vmem:[#allocation19 + $0x360] sm:$0xff]
    %v8470 = vld [vmem:[#allocation19 + $0x368] sm:$0xff]
    %v8471 = vld [vmem:[#allocation19 + $0x370] sm:$0xff]
    %v8472 = vld [vmem:[#allocation19 + $0x378] sm:$0xff]
    %v8473 = vld [vmem:[#allocation19 + $0x380] sm:$0xff]
    %v8474 = vld [vmem:[#allocation19 + $0x388] sm:$0xff]
    %v8475 = vld [vmem:[#allocation19 + $0x390] sm:$0xff]
    %v8476 = vld [vmem:[#allocation19 + $0x398] sm:$0xff]
    %v8477 = vld [vmem:[#allocation19 + $0x3a0] sm:$0xff]
    %v8478 = vld [vmem:[#allocation19 + $0x3a8] sm:$0xff]
    %v8479 = vld [vmem:[#allocation19 + $0x3b0] sm:$0xff]
    %v8480 = vld [vmem:[#allocation19 + $0x3b8] sm:$0xff]
    %v8481 = vld [vmem:[#allocation19 + $0x3c0] sm:$0xff]
    %v8482 = vld [vmem:[#allocation19 + $0x3c8] sm:$0xff]
    %v8483 = vld [vmem:[#allocation19 + $0x3d0] sm:$0xff]
    %v8484 = vld [vmem:[#allocation19 + $0x3d8] sm:$0xff]
    %v8485 = vld [vmem:[#allocation19 + $0x3e0] sm:$0xff]
    %v8486 = vld [vmem:[#allocation19 + $0x3e8] sm:$0xff]
    %v8487 = vld [vmem:[#allocation19 + $0x3f0] sm:$0xff]
    %v8488 = vld [vmem:[#allocation19 + $0x3f8] sm:$0xff]
    %v8489 = vld [vmem:[%s18] sm:$0xf]
    %v8491 = vlaneseq
    %v8492 = vshrl.u32 %v8491, 7
    %v8493 = vsub.s32 0, %v8492
    %v8494 = vrot.slane %v8489, %v8493
    %v8495 = vlaneseq
    %v8496 = vshrl.u32 %v8495, 7
    %v8497 = vsub.s32 1, %v8496
    %v8498 = vrot.slane %v8489, %v8497
    %v8499 = vlaneseq
    %v8500 = vshrl.u32 %v8499, 7
    %v8501 = vsub.s32 2, %v8500
    %v8502 = vrot.slane %v8489, %v8501
    %v8503 = vlaneseq
    %v8504 = vshrl.u32 %v8503, 7
    %v8505 = vsub.s32 3, %v8504
    %v8506 = vrot.slane %v8489, %v8505
    %v8639 = vunpack.c.l.b16 %v8361
    %v8640 = vunpack.c.h.b16 %v8361
    %v8641 = vunpack.c.l.b16 %v8362
    %v8642 = vunpack.c.h.b16 %v8362
    %v8643 = vunpack.c.l.b16 %v8363
    %v8644 = vunpack.c.h.b16 %v8363
    %v8645 = vunpack.c.l.b16 %v8364
    %v8646 = vunpack.c.h.b16 %v8364
    %v8647 = vunpack.c.l.b16 %v8365
    %v8648 = vunpack.c.h.b16 %v8365
    %v8649 = vunpack.c.l.b16 %v8366
    %v8650 = vunpack.c.h.b16 %v8366
    %v8651 = vunpack.c.l.b16 %v8367
    %v8652 = vunpack.c.h.b16 %v8367
    %v8653 = vunpack.c.l.b16 %v8368
    %v8654 = vunpack.c.h.b16 %v8368
    %v8655 = vunpack.c.l.b16 %v8369
    %v8656 = vunpack.c.h.b16 %v8369
    %v8657 = vunpack.c.l.b16 %v8370
    %v8658 = vunpack.c.h.b16 %v8370
    %v8659 = vunpack.c.l.b16 %v8371
    %v8660 = vunpack.c.h.b16 %v8371
    %v8661 = vunpack.c.l.b16 %v8372
    %v8662 = vunpack.c.h.b16 %v8372
    %v8663 = vunpack.c.l.b16 %v8373
    %v8664 = vunpack.c.h.b16 %v8373
    %v8665 = vunpack.c.l.b16 %v8374
    %v8666 = vunpack.c.h.b16 %v8374
    %v8667 = vunpack.c.l.b16 %v8375
    %v8668 = vunpack.c.h.b16 %v8375
    %v8669 = vunpack.c.l.b16 %v8376
    %v8670 = vunpack.c.h.b16 %v8376
    %v8671 = vunpack.c.l.b16 %v8377
    %v8672 = vunpack.c.h.b16 %v8377
    %v8673 = vunpack.c.l.b16 %v8378
    %v8674 = vunpack.c.h.b16 %v8378
    %v8675 = vunpack.c.l.b16 %v8379
    %v8676 = vunpack.c.h.b16 %v8379
    %v8677 = vunpack.c.l.b16 %v8380
    %v8678 = vunpack.c.h.b16 %v8380
    %v8679 = vunpack.c.l.b16 %v8381
    %v8680 = vunpack.c.h.b16 %v8381
    %v8681 = vunpack.c.l.b16 %v8382
    %v8682 = vunpack.c.h.b16 %v8382
    %v8683 = vunpack.c.l.b16 %v8383
    %v8684 = vunpack.c.h.b16 %v8383
    %v8685 = vunpack.c.l.b16 %v8384
    %v8686 = vunpack.c.h.b16 %v8384
    %v8687 = vunpack.c.l.b16 %v8385
    %v8688 = vunpack.c.h.b16 %v8385
    %v8689 = vunpack.c.l.b16 %v8386
    %v8690 = vunpack.c.h.b16 %v8386
    %v8691 = vunpack.c.l.b16 %v8387
    %v8692 = vunpack.c.h.b16 %v8387
    %v8693 = vunpack.c.l.b16 %v8388
    %v8694 = vunpack.c.h.b16 %v8388
    %v8695 = vunpack.c.l.b16 %v8389
    %v8696 = vunpack.c.h.b16 %v8389
    %v8697 = vunpack.c.l.b16 %v8390
    %v8698 = vunpack.c.h.b16 %v8390
    %v8699 = vunpack.c.l.b16 %v8391
    %v8700 = vunpack.c.h.b16 %v8391
    %v8701 = vunpack.c.l.b16 %v8392
    %v8702 = vunpack.c.h.b16 %v8392
    %v8703 = vunpack.c.l.b16 %v8393
    %v8704 = vunpack.c.h.b16 %v8393
    %v8705 = vunpack.c.l.b16 %v8394
    %v8706 = vunpack.c.h.b16 %v8394
    %v8707 = vunpack.c.l.b16 %v8395
    %v8708 = vunpack.c.h.b16 %v8395
    %v8709 = vunpack.c.l.b16 %v8396
    %v8710 = vunpack.c.h.b16 %v8396
    %v8711 = vunpack.c.l.b16 %v8397
    %v8712 = vunpack.c.h.b16 %v8397
    %v8713 = vunpack.c.l.b16 %v8398
    %v8714 = vunpack.c.h.b16 %v8398
    %v8715 = vunpack.c.l.b16 %v8399
    %v8716 = vunpack.c.h.b16 %v8399
    %v8717 = vunpack.c.l.b16 %v8400
    %v8718 = vunpack.c.h.b16 %v8400
    %v8719 = vunpack.c.l.b16 %v8401
    %v8720 = vunpack.c.h.b16 %v8401
    %v8721 = vunpack.c.l.b16 %v8402
    %v8722 = vunpack.c.h.b16 %v8402
    %v8723 = vunpack.c.l.b16 %v8403
    %v8724 = vunpack.c.h.b16 %v8403
    %v8725 = vunpack.c.l.b16 %v8404
    %v8726 = vunpack.c.h.b16 %v8404
    %v8727 = vunpack.c.l.b16 %v8405
    %v8728 = vunpack.c.h.b16 %v8405
    %v8729 = vunpack.c.l.b16 %v8406
    %v8730 = vunpack.c.h.b16 %v8406
    %v8731 = vunpack.c.l.b16 %v8407
    %v8732 = vunpack.c.h.b16 %v8407
    %v8733 = vunpack.c.l.b16 %v8408
    %v8734 = vunpack.c.h.b16 %v8408
    %v8735 = vunpack.c.l.b16 %v8409
    %v8736 = vunpack.c.h.b16 %v8409
    %v8737 = vunpack.c.l.b16 %v8410
    %v8738 = vunpack.c.h.b16 %v8410
    %v8739 = vunpack.c.l.b16 %v8411
    %v8740 = vunpack.c.h.b16 %v8411
    %v8741 = vunpack.c.l.b16 %v8412
    %v8742 = vunpack.c.h.b16 %v8412
    %v8743 = vunpack.c.l.b16 %v8413
    %v8744 = vunpack.c.h.b16 %v8413
    %v8745 = vunpack.c.l.b16 %v8414
    %v8746 = vunpack.c.h.b16 %v8414
    %v8747 = vunpack.c.l.b16 %v8415
    %v8748 = vunpack.c.h.b16 %v8415
    %v8749 = vunpack.c.l.b16 %v8416
    %v8750 = vunpack.c.h.b16 %v8416
    %v8751 = vunpack.c.l.b16 %v8417
    %v8752 = vunpack.c.h.b16 %v8417
    %v8753 = vunpack.c.l.b16 %v8418
    %v8754 = vunpack.c.h.b16 %v8418
    %v8755 = vunpack.c.l.b16 %v8419
    %v8756 = vunpack.c.h.b16 %v8419
    %v8757 = vunpack.c.l.b16 %v8420
    %v8758 = vunpack.c.h.b16 %v8420
    %v8759 = vunpack.c.l.b16 %v8421
    %v8760 = vunpack.c.h.b16 %v8421
    %v8761 = vunpack.c.l.b16 %v8422
    %v8762 = vunpack.c.h.b16 %v8422
    %v8763 = vunpack.c.l.b16 %v8423
    %v8764 = vunpack.c.h.b16 %v8423
    %v8765 = vunpack.c.l.b16 %v8424
    %v8766 = vunpack.c.h.b16 %v8424
    %v8767 = vunpack.c.l.b16 %v8425
    %v8768 = vunpack.c.h.b16 %v8425
    %v8769 = vunpack.c.l.b16 %v8426
    %v8770 = vunpack.c.h.b16 %v8426
    %v8771 = vunpack.c.l.b16 %v8427
    %v8772 = vunpack.c.h.b16 %v8427
    %v8773 = vunpack.c.l.b16 %v8428
    %v8774 = vunpack.c.h.b16 %v8428
    %v8775 = vunpack.c.l.b16 %v8429
    %v8776 = vunpack.c.h.b16 %v8429
    %v8777 = vunpack.c.l.b16 %v8430
    %v8778 = vunpack.c.h.b16 %v8430
    %v8779 = vunpack.c.l.b16 %v8431
    %v8780 = vunpack.c.h.b16 %v8431
    %v8781 = vunpack.c.l.b16 %v8432
    %v8782 = vunpack.c.h.b16 %v8432
    %v8783 = vunpack.c.l.b16 %v8433
    %v8784 = vunpack.c.h.b16 %v8433
    %v8785 = vunpack.c.l.b16 %v8434
    %v8786 = vunpack.c.h.b16 %v8434
    %v8787 = vunpack.c.l.b16 %v8435
    %v8788 = vunpack.c.h.b16 %v8435
    %v8789 = vunpack.c.l.b16 %v8436
    %v8790 = vunpack.c.h.b16 %v8436
    %v8791 = vunpack.c.l.b16 %v8437
    %v8792 = vunpack.c.h.b16 %v8437
    %v8793 = vunpack.c.l.b16 %v8438
    %v8794 = vunpack.c.h.b16 %v8438
    %v8795 = vunpack.c.l.b16 %v8439
    %v8796 = vunpack.c.h.b16 %v8439
    %v8797 = vunpack.c.l.b16 %v8440
    %v8798 = vunpack.c.h.b16 %v8440
    %v8799 = vunpack.c.l.b16 %v8441
    %v8800 = vunpack.c.h.b16 %v8441
    %v8801 = vunpack.c.l.b16 %v8442
    %v8802 = vunpack.c.h.b16 %v8442
    %v8803 = vunpack.c.l.b16 %v8443
    %v8804 = vunpack.c.h.b16 %v8443
    %v8805 = vunpack.c.l.b16 %v8444
    %v8806 = vunpack.c.h.b16 %v8444
    %v8807 = vunpack.c.l.b16 %v8445
    %v8808 = vunpack.c.h.b16 %v8445
    %v8809 = vunpack.c.l.b16 %v8446
    %v8810 = vunpack.c.h.b16 %v8446
    %v8811 = vunpack.c.l.b16 %v8447
    %v8812 = vunpack.c.h.b16 %v8447
    %v8813 = vunpack.c.l.b16 %v8448
    %v8814 = vunpack.c.h.b16 %v8448
    %v8815 = vunpack.c.l.b16 %v8449
    %v8816 = vunpack.c.h.b16 %v8449
    %v8817 = vunpack.c.l.b16 %v8450
    %v8818 = vunpack.c.h.b16 %v8450
    %v8819 = vunpack.c.l.b16 %v8451
    %v8820 = vunpack.c.h.b16 %v8451
    %v8821 = vunpack.c.l.b16 %v8452
    %v8822 = vunpack.c.h.b16 %v8452
    %v8823 = vunpack.c.l.b16 %v8453
    %v8824 = vunpack.c.h.b16 %v8453
    %v8825 = vunpack.c.l.b16 %v8454
    %v8826 = vunpack.c.h.b16 %v8454
    %v8827 = vunpack.c.l.b16 %v8455
    %v8828 = vunpack.c.h.b16 %v8455
    %v8829 = vunpack.c.l.b16 %v8456
    %v8830 = vunpack.c.h.b16 %v8456
    %v8831 = vunpack.c.l.b16 %v8457
    %v8832 = vunpack.c.h.b16 %v8457
    %v8833 = vunpack.c.l.b16 %v8458
    %v8834 = vunpack.c.h.b16 %v8458
    %v8835 = vunpack.c.l.b16 %v8459
    %v8836 = vunpack.c.h.b16 %v8459
    %v8837 = vunpack.c.l.b16 %v8460
    %v8838 = vunpack.c.h.b16 %v8460
    %v8839 = vunpack.c.l.b16 %v8461
    %v8840 = vunpack.c.h.b16 %v8461
    %v8841 = vunpack.c.l.b16 %v8462
    %v8842 = vunpack.c.h.b16 %v8462
    %v8843 = vunpack.c.l.b16 %v8463
    %v8844 = vunpack.c.h.b16 %v8463
    %v8845 = vunpack.c.l.b16 %v8464
    %v8846 = vunpack.c.h.b16 %v8464
    %v8847 = vunpack.c.l.b16 %v8465
    %v8848 = vunpack.c.h.b16 %v8465
    %v8849 = vunpack.c.l.b16 %v8466
    %v8850 = vunpack.c.h.b16 %v8466
    %v8851 = vunpack.c.l.b16 %v8467
    %v8852 = vunpack.c.h.b16 %v8467
    %v8853 = vunpack.c.l.b16 %v8468
    %v8854 = vunpack.c.h.b16 %v8468
    %v8855 = vunpack.c.l.b16 %v8469
    %v8856 = vunpack.c.h.b16 %v8469
    %v8857 = vunpack.c.l.b16 %v8470
    %v8858 = vunpack.c.h.b16 %v8470
    %v8859 = vunpack.c.l.b16 %v8471
    %v8860 = vunpack.c.h.b16 %v8471
    %v8861 = vunpack.c.l.b16 %v8472
    %v8862 = vunpack.c.h.b16 %v8472
    %v8863 = vunpack.c.l.b16 %v8473
    %v8864 = vunpack.c.h.b16 %v8473
    %v8865 = vunpack.c.l.b16 %v8474
    %v8866 = vunpack.c.h.b16 %v8474
    %v8867 = vunpack.c.l.b16 %v8475
    %v8868 = vunpack.c.h.b16 %v8475
    %v8869 = vunpack.c.l.b16 %v8476
    %v8870 = vunpack.c.h.b16 %v8476
    %v8871 = vunpack.c.l.b16 %v8477
    %v8872 = vunpack.c.h.b16 %v8477
    %v8873 = vunpack.c.l.b16 %v8478
    %v8874 = vunpack.c.h.b16 %v8478
    %v8875 = vunpack.c.l.b16 %v8479
    %v8876 = vunpack.c.h.b16 %v8479
    %v8877 = vunpack.c.l.b16 %v8480
    %v8878 = vunpack.c.h.b16 %v8480
    %v8879 = vunpack.c.l.b16 %v8481
    %v8880 = vunpack.c.h.b16 %v8481
    %v8881 = vunpack.c.l.b16 %v8482
    %v8882 = vunpack.c.h.b16 %v8482
    %v8883 = vunpack.c.l.b16 %v8483
    %v8884 = vunpack.c.h.b16 %v8483
    %v8885 = vunpack.c.l.b16 %v8484
    %v8886 = vunpack.c.h.b16 %v8484
    %v8887 = vunpack.c.l.b16 %v8485
    %v8888 = vunpack.c.h.b16 %v8485
    %v8889 = vunpack.c.l.b16 %v8486
    %v8890 = vunpack.c.h.b16 %v8486
    %v8891 = vunpack.c.l.b16 %v8487
    %v8892 = vunpack.c.h.b16 %v8487
    %v8893 = vunpack.c.l.b16 %v8488
    %v8894 = vunpack.c.h.b16 %v8488
    %v8895 = vpack.c.b16 %v8643, %v8639
    %v8896 = vpack.c.b16 %v8644, %v8640
    %v8897 = vpack.c.b16 %v8645, %v8641
    %v8898 = vpack.c.b16 %v8646, %v8642
    %v8899 = vpack.c.b16 %v8651, %v8647
    %v8900 = vpack.c.b16 %v8652, %v8648
    %v8901 = vpack.c.b16 %v8653, %v8649
    %v8902 = vpack.c.b16 %v8654, %v8650
    %v8903 = vpack.c.b16 %v8659, %v8655
    %v8904 = vpack.c.b16 %v8660, %v8656
    %v8905 = vpack.c.b16 %v8661, %v8657
    %v8906 = vpack.c.b16 %v8662, %v8658
    %v8907 = vpack.c.b16 %v8667, %v8663
    %v8908 = vpack.c.b16 %v8668, %v8664
    %v8909 = vpack.c.b16 %v8669, %v8665
    %v8910 = vpack.c.b16 %v8670, %v8666
    %v8911 = vpack.c.b16 %v8675, %v8671
    %v8912 = vpack.c.b16 %v8676, %v8672
    %v8913 = vpack.c.b16 %v8677, %v8673
    %v8914 = vpack.c.b16 %v8678, %v8674
    %v8915 = vpack.c.b16 %v8683, %v8679
    %v8916 = vpack.c.b16 %v8684, %v8680
    %v8917 = vpack.c.b16 %v8685, %v8681
    %v8918 = vpack.c.b16 %v8686, %v8682
    %v8919 = vpack.c.b16 %v8691, %v8687
    %v8920 = vpack.c.b16 %v8692, %v8688
    %v8921 = vpack.c.b16 %v8693, %v8689
    %v8922 = vpack.c.b16 %v8694, %v8690
    %v8923 = vpack.c.b16 %v8699, %v8695
    %v8924 = vpack.c.b16 %v8700, %v8696
    %v8925 = vpack.c.b16 %v8701, %v8697
    %v8926 = vpack.c.b16 %v8702, %v8698
    %v8927 = vpack.c.b16 %v8707, %v8703
    %v8928 = vpack.c.b16 %v8708, %v8704
    %v8929 = vpack.c.b16 %v8709, %v8705
    %v8930 = vpack.c.b16 %v8710, %v8706
    %v8931 = vpack.c.b16 %v8715, %v8711
    %v8932 = vpack.c.b16 %v8716, %v8712
    %v8933 = vpack.c.b16 %v8717, %v8713
    %v8934 = vpack.c.b16 %v8718, %v8714
    %v8935 = vpack.c.b16 %v8723, %v8719
    %v8936 = vpack.c.b16 %v8724, %v8720
    %v8937 = vpack.c.b16 %v8725, %v8721
    %v8938 = vpack.c.b16 %v8726, %v8722
    %v8939 = vpack.c.b16 %v8731, %v8727
    %v8940 = vpack.c.b16 %v8732, %v8728
    %v8941 = vpack.c.b16 %v8733, %v8729
    %v8942 = vpack.c.b16 %v8734, %v8730
    %v8943 = vpack.c.b16 %v8739, %v8735
    %v8944 = vpack.c.b16 %v8740, %v8736
    %v8945 = vpack.c.b16 %v8741, %v8737
    %v8946 = vpack.c.b16 %v8742, %v8738
    %v8947 = vpack.c.b16 %v8747, %v8743
    %v8948 = vpack.c.b16 %v8748, %v8744
    %v8949 = vpack.c.b16 %v8749, %v8745
    %v8950 = vpack.c.b16 %v8750, %v8746
    %v8951 = vpack.c.b16 %v8755, %v8751
    %v8952 = vpack.c.b16 %v8756, %v8752
    %v8953 = vpack.c.b16 %v8757, %v8753
    %v8954 = vpack.c.b16 %v8758, %v8754
    %v8955 = vpack.c.b16 %v8763, %v8759
    %v8956 = vpack.c.b16 %v8764, %v8760
    %v8957 = vpack.c.b16 %v8765, %v8761
    %v8958 = vpack.c.b16 %v8766, %v8762
    %v8959 = vpack.c.b16 %v8771, %v8767
    %v8960 = vpack.c.b16 %v8772, %v8768
    %v8961 = vpack.c.b16 %v8773, %v8769
    %v8962 = vpack.c.b16 %v8774, %v8770
    %v8963 = vpack.c.b16 %v8779, %v8775
    %v8964 = vpack.c.b16 %v8780, %v8776
    %v8965 = vpack.c.b16 %v8781, %v8777
    %v8966 = vpack.c.b16 %v8782, %v8778
    %v8967 = vpack.c.b16 %v8787, %v8783
    %v8968 = vpack.c.b16 %v8788, %v8784
    %v8969 = vpack.c.b16 %v8789, %v8785
    %v8970 = vpack.c.b16 %v8790, %v8786
    %v8971 = vpack.c.b16 %v8795, %v8791
    %v8972 = vpack.c.b16 %v8796, %v8792
    %v8973 = vpack.c.b16 %v8797, %v8793
    %v8974 = vpack.c.b16 %v8798, %v8794
    %v8975 = vpack.c.b16 %v8803, %v8799
    %v8976 = vpack.c.b16 %v8804, %v8800
    %v8977 = vpack.c.b16 %v8805, %v8801
    %v8978 = vpack.c.b16 %v8806, %v8802
    %v8979 = vpack.c.b16 %v8811, %v8807
    %v8980 = vpack.c.b16 %v8812, %v8808
    %v8981 = vpack.c.b16 %v8813, %v8809
    %v8982 = vpack.c.b16 %v8814, %v8810
    %v8983 = vpack.c.b16 %v8819, %v8815
    %v8984 = vpack.c.b16 %v8820, %v8816
    %v8985 = vpack.c.b16 %v8821, %v8817
    %v8986 = vpack.c.b16 %v8822, %v8818
    %v8987 = vpack.c.b16 %v8827, %v8823
    %v8988 = vpack.c.b16 %v8828, %v8824
    %v8989 = vpack.c.b16 %v8829, %v8825
    %v8990 = vpack.c.b16 %v8830, %v8826
    %v8991 = vpack.c.b16 %v8835, %v8831
    %v8992 = vpack.c.b16 %v8836, %v8832
    %v8993 = vpack.c.b16 %v8837, %v8833
    %v8994 = vpack.c.b16 %v8838, %v8834
    %v8995 = vpack.c.b16 %v8843, %v8839
    %v8996 = vpack.c.b16 %v8844, %v8840
    %v8997 = vpack.c.b16 %v8845, %v8841
    %v8998 = vpack.c.b16 %v8846, %v8842
    %v8999 = vpack.c.b16 %v8851, %v8847
    %v9000 = vpack.c.b16 %v8852, %v8848
    %v9001 = vpack.c.b16 %v8853, %v8849
    %v9002 = vpack.c.b16 %v8854, %v8850
    %v9003 = vpack.c.b16 %v8859, %v8855
    %v9004 = vpack.c.b16 %v8860, %v8856
    %v9005 = vpack.c.b16 %v8861, %v8857
    %v9006 = vpack.c.b16 %v8862, %v8858
    %v9007 = vpack.c.b16 %v8867, %v8863
    %v9008 = vpack.c.b16 %v8868, %v8864
    %v9009 = vpack.c.b16 %v8869, %v8865
    %v9010 = vpack.c.b16 %v8870, %v8866
    %v9011 = vpack.c.b16 %v8875, %v8871
    %v9012 = vpack.c.b16 %v8876, %v8872
    %v9013 = vpack.c.b16 %v8877, %v8873
    %v9014 = vpack.c.b16 %v8878, %v8874
    %v9015 = vpack.c.b16 %v8883, %v8879
    %v9016 = vpack.c.b16 %v8884, %v8880
    %v9017 = vpack.c.b16 %v8885, %v8881
    %v9018 = vpack.c.b16 %v8886, %v8882
    %v9019 = vpack.c.b16 %v8891, %v8887
    %v9020 = vpack.c.b16 %v8892, %v8888
    %v9021 = vpack.c.b16 %v8893, %v8889
    %v9022 = vpack.c.b16 %v8894, %v8890
    %9151 = vmatprep.subr.bf16.mxu0 %v8896
    %9152 = vmatpush1.bf16.msra.mxu0 %v8895
    %9153 = vmatprep.subr.bf16.mxu0 %v8900
    %9154 = vmatpush1.bf16.msra.mxu0 %v8899
    %9155 = vmatprep.subr.bf16.mxu0 %v8904
    %9156 = vmatpush1.bf16.msra.mxu0 %v8903
    %9157 = vmatprep.subr.bf16.mxu0 %v8908
    %9158 = vmatpush1.bf16.msra.mxu0 %v8907
    %9159 = vmatprep.subr.bf16.mxu0 %v8912
    %9160 = vmatpush1.bf16.msra.mxu0 %v8911
    %9161 = vmatprep.subr.bf16.mxu0 %v8916
    %9162 = vmatpush1.bf16.msra.mxu0 %v8915
    %9163 = vmatprep.subr.bf16.mxu0 %v8920
    %9164 = vmatpush1.bf16.msra.mxu0 %v8919
    %9165 = vmatprep.subr.bf16.mxu0 %v8924
    %9166 = vmatpush1.bf16.msra.mxu0 %v8923
    %9167 = vmatprep.subr.bf16.mxu0 %v8928
    %9168 = vmatpush1.bf16.msra.mxu0 %v8927
    %9169 = vmatprep.subr.bf16.mxu0 %v8932
    %9170 = vmatpush1.bf16.msra.mxu0 %v8931
    %9171 = vmatprep.subr.bf16.mxu0 %v8936
    %9172 = vmatpush1.bf16.msra.mxu0 %v8935
    %9173 = vmatprep.subr.bf16.mxu0 %v8940
    %9174 = vmatpush1.bf16.msra.mxu0 %v8939
    %9175 = vmatprep.subr.bf16.mxu0 %v8944
    %9176 = vmatpush1.bf16.msra.mxu0 %v8943
    %9177 = vmatprep.subr.bf16.mxu0 %v8948
    %9178 = vmatpush1.bf16.msra.mxu0 %v8947
    %9179 = vmatprep.subr.bf16.mxu0 %v8952
    %9180 = vmatpush1.bf16.msra.mxu0 %v8951
    %9181 = vmatprep.subr.bf16.mxu0 %v8956
    %9182 = vmatpush1.bf16.msra.mxu0 %v8955
    %9183 = vmatprep.mubr.bf16.mxu0 %v8358
    %9184 = vmatmul.mubr.bf16.gmra.mrb[0].mxu0 %v8357
    %v9185 = vpop.f32.mrb[0].mxu0
    %v9186 = vadd.f32 %v8494, %v9185
    %v9187 = vpop.f32.mrb[0].mxu0
    %v9188 = vadd.f32 %v8498, %v9187
    %v9189 = vpop.f32.mrb[0].mxu0
    %v9190 = vpop.f32.mrb[0].mxu0
    %9191 = vdwg.mxu0
    %9192 = vmatprep.subr.bf16.mxu0 %v8960
    %9193 = vmatpush1.bf16.msra.mxu0 %v8959
    %9194 = vmatprep.subr.bf16.mxu0 %v8964
    %9195 = vmatpush1.bf16.msra.mxu0 %v8963
    %9196 = vmatprep.subr.bf16.mxu0 %v8968
    %9197 = vmatpush1.bf16.msra.mxu0 %v8967
    %9198 = vmatprep.subr.bf16.mxu0 %v8972
    %9199 = vmatpush1.bf16.msra.mxu0 %v8971
    %9200 = vmatprep.subr.bf16.mxu0 %v8976
    %9201 = vmatpush1.bf16.msra.mxu0 %v8975
    %9202 = vmatprep.subr.bf16.mxu0 %v8980
    %9203 = vmatpush1.bf16.msra.mxu0 %v8979
    %9204 = vmatprep.subr.bf16.mxu0 %v8984
    %9205 = vmatpush1.bf16.msra.mxu0 %v8983
    %9206 = vmatprep.subr.bf16.mxu0 %v8988
    %9207 = vmatpush1.bf16.msra.mxu0 %v8987
    %9208 = vmatprep.subr.bf16.mxu0 %v8992
    %9209 = vmatpush1.bf16.msra.mxu0 %v8991
    %9210 = vmatprep.subr.bf16.mxu0 %v8996
    %9211 = vmatpush1.bf16.msra.mxu0 %v8995
    %9212 = vmatprep.subr.bf16.mxu0 %v9000
    %9213 = vmatpush1.bf16.msra.mxu0 %v8999
    %9214 = vmatprep.subr.bf16.mxu0 %v9004
    %9215 = vmatpush1.bf16.msra.mxu0 %v9003
    %9216 = vmatprep.subr.bf16.mxu0 %v9008
    %9217 = vmatpush1.bf16.msra.mxu0 %v9007
    %9218 = vmatprep.subr.bf16.mxu0 %v9012
    %9219 = vmatpush1.bf16.msra.mxu0 %v9011
    %9220 = vmatprep.subr.bf16.mxu0 %v9016
    %9221 = vmatpush1.bf16.msra.mxu0 %v9015
    %9222 = vmatprep.subr.bf16.mxu0 %v9020
    %9223 = vmatpush1.bf16.msra.mxu0 %v9019
    %9224 = vmatprep.mubr.bf16.mxu0 %v8360
    %9225 = vmatmul.mubr.bf16.gmra.mrb[0].mxu0 %v8359
    %v9226 = vpop.f32.mrb[0].mxu0
    %v9227 = vadd.f32 %v9186, %v9226
    %v9228 = vpop.f32.mrb[0].mxu0
    %v9229 = vadd.f32 %v9188, %v9228
    %v9230 = vpop.f32.mrb[0].mxu0
    %v9231 = vpop.f32.mrb[0].mxu0
    %9232 = vdwg.mxu0
    %9233 = vmatprep.subr.bf16.mxu0 %v8898
    %9234 = vmatpush1.bf16.msra.mxu0 %v8897
    %9235 = vmatprep.subr.bf16.mxu0 %v8902
    %9236 = vmatpush1.bf16.msra.mxu0 %v8901
    %9237 = vmatprep.subr.bf16.mxu0 %v8906
    %9238 = vmatpush1.bf16.msra.mxu0 %v8905
    %9239 = vmatprep.subr.bf16.mxu0 %v8910
    %9240 = vmatpush1.bf16.msra.mxu0 %v8909
    %9241 = vmatprep.subr.bf16.mxu0 %v8914
    %9242 = vmatpush1.bf16.msra.mxu0 %v8913
    %9243 = vmatprep.subr.bf16.mxu0 %v8918
    %9244 = vmatpush1.bf16.msra.mxu0 %v8917
    %9245 = vmatprep.subr.bf16.mxu0 %v8922
    %9246 = vmatpush1.bf16.msra.mxu0 %v8921
    %9247 = vmatprep.subr.bf16.mxu0 %v8926
    %9248 = vmatpush1.bf16.msra.mxu0 %v8925
    %9249 = vmatprep.subr.bf16.mxu0 %v8930
    %9250 = vmatpush1.bf16.msra.mxu0 %v8929
    %9251 = vmatprep.subr.bf16.mxu0 %v8934
    %9252 = vmatpush1.bf16.msra.mxu0 %v8933
    %9253 = vmatprep.subr.bf16.mxu0 %v8938
    %9254 = vmatpush1.bf16.msra.mxu0 %v8937
    %9255 = vmatprep.subr.bf16.mxu0 %v8942
    %9256 = vmatpush1.bf16.msra.mxu0 %v8941
    %9257 = vmatprep.subr.bf16.mxu0 %v8946
    %9258 = vmatpush1.bf16.msra.mxu0 %v8945
    %9259 = vmatprep.subr.bf16.mxu0 %v8950
    %9260 = vmatpush1.bf16.msra.mxu0 %v8949
    %9261 = vmatprep.subr.bf16.mxu0 %v8954
    %9262 = vmatpush1.bf16.msra.mxu0 %v8953
    %9263 = vmatprep.subr.bf16.mxu0 %v8958
    %9264 = vmatpush1.bf16.msra.mxu0 %v8957
    %9265 = vmatprep.mubr.bf16.mxu0 %v8358
    %9266 = vmatmul.mubr.bf16.gmra.mrb[0].mxu0 %v8357
    %v9267 = vpop.f32.mrb[0].mxu0
    %v9268 = vadd.f32 %v8502, %v9267
    %v9269 = vpop.f32.mrb[0].mxu0
    %v9270 = vadd.f32 %v8506, %v9269
    %v9271 = vpop.f32.mrb[0].mxu0
    %v9272 = vpop.f32.mrb[0].mxu0
    %9273 = vdwg.mxu0
    %9274 = vmatprep.subr.bf16.mxu0 %v8962
    %9275 = vmatpush1.bf16.msra.mxu0 %v8961
    %9276 = vmatprep.subr.bf16.mxu0 %v8966
    %9277 = vmatpush1.bf16.msra.mxu0 %v8965
    %9278 = vmatprep.subr.bf16.mxu0 %v8970
    %9279 = vmatpush1.bf16.msra.mxu0 %v8969
    %9280 = vmatprep.subr.bf16.mxu0 %v8974
    %9281 = vmatpush1.bf16.msra.mxu0 %v8973
    %9282 = vmatprep.subr.bf16.mxu0 %v8978
    %9283 = vmatpush1.bf16.msra.mxu0 %v8977
    %9284 = vmatprep.subr.bf16.mxu0 %v8982
    %9285 = vmatpush1.bf16.msra.mxu0 %v8981
    %9286 = vmatprep.subr.bf16.mxu0 %v8986
    %9287 = vmatpush1.bf16.msra.mxu0 %v8985
    %9288 = vmatprep.subr.bf16.mxu0 %v8990
    %9289 = vmatpush1.bf16.msra.mxu0 %v8989
    %9290 = vmatprep.subr.bf16.mxu0 %v8994
    %9291 = vmatpush1.bf16.msra.mxu0 %v8993
    %9292 = vmatprep.subr.bf16.mxu0 %v8998
    %9293 = vmatpush1.bf16.msra.mxu0 %v8997
    %9294 = vmatprep.subr.bf16.mxu0 %v9002
    %9295 = vmatpush1.bf16.msra.mxu0 %v9001
    %9296 = vmatprep.subr.bf16.mxu0 %v9006
    %9297 = vmatpush1.bf16.msra.mxu0 %v9005
    %9298 = vmatprep.subr.bf16.mxu0 %v9010
    %9299 = vmatpush1.bf16.msra.mxu0 %v9009
    %9300 = vmatprep.subr.bf16.mxu0 %v9014
    %9301 = vmatpush1.bf16.msra.mxu0 %v9013
    %9302 = vmatprep.subr.bf16.mxu0 %v9018
    %9303 = vmatpush1.bf16.msra.mxu0 %v9017
    %9304 = vmatprep.subr.bf16.mxu0 %v9022
    %9305 = vmatpush1.bf16.msra.mxu0 %v9021
    %9306 = vmatprep.mubr.bf16.mxu0 %v8360
    %9307 = vmatmul.mubr.bf16.gmra.mrb[0].mxu0 %v8359
    %v9308 = vpop.f32.mrb[0].mxu0
    %v9309 = vadd.f32 %v9268, %v9308
    %v9310 = vpop.f32.mrb[0].mxu0
    %v9311 = vadd.f32 %v9270, %v9310
    %v9312 = vpop.f32.mrb[0].mxu0
    %v9313 = vpop.f32.mrb[0].mxu0
    %9314 = vdwg.mxu0
    %v9315 = vpack.c.bf16 %v9227, %v9227
    %v9316 = vpack.c.bf16 %v9229, %v9229
    %v9317 = vpack.c.bf16 %v9309, %v9309
    %v9318 = vpack.c.bf16 %v9311, %v9311
    %v9319 = vmax.bf16 %v9315, 0
    %v9320 = vmax.bf16 %v9316, 0
    %v9321 = vmax.bf16 %v9317, 0
    %v9322 = vmax.bf16 %v9318, 0
    %v9323 = vld [vmem:[#allocation20] sm:$0xff]
    %v9324 = vld [vmem:[#allocation20 + $0x8] sm:$0xff]
    %v9325 = vld [vmem:[#allocation20 + $0x10] sm:$0xff]
    %v9326 = vld [vmem:[#allocation20 + $0x18] sm:$0xff]
    %v9327 = vld [vmem:[#allocation20 + $0x20] sm:$0xff]
    %v9328 = vld [vmem:[#allocation20 + $0x28] sm:$0xff]
    %v9329 = vld [vmem:[#allocation20 + $0x30] sm:$0xff]
    %v9330 = vld [vmem:[#allocation20 + $0x38] sm:$0xff]
    %v9331 = vld [vmem:[#allocation20 + $0x40] sm:$0xff]
    %v9332 = vld [vmem:[#allocation20 + $0x48] sm:$0xff]
    %v9333 = vld [vmem:[#allocation20 + $0x50] sm:$0xff]
    %v9334 = vld [vmem:[#allocation20 + $0x58] sm:$0xff]
    %v9335 = vld [vmem:[#allocation20 + $0x60] sm:$0xff]
    %v9336 = vld [vmem:[#allocation20 + $0x68] sm:$0xff]
    %v9337 = vld [vmem:[#allocation20 + $0x70] sm:$0xff]
    %v9338 = vld [vmem:[#allocation20 + $0x78] sm:$0xff]
    %v9339 = vld [vmem:[#allocation20 + $0x80] sm:$0xff]
    %v9340 = vld [vmem:[#allocation20 + $0x88] sm:$0xff]
    %v9341 = vld [vmem:[#allocation20 + $0x90] sm:$0xff]
    %v9342 = vld [vmem:[#allocation20 + $0x98] sm:$0xff]
    %v9343 = vld [vmem:[#allocation20 + $0xa0] sm:$0xff]
    %v9344 = vld [vmem:[#allocation20 + $0xa8] sm:$0xff]
    %v9345 = vld [vmem:[#allocation20 + $0xb0] sm:$0xff]
    %v9346 = vld [vmem:[#allocation20 + $0xb8] sm:$0xff]
    %v9347 = vld [vmem:[#allocation20 + $0xc0] sm:$0xff]
    %v9348 = vld [vmem:[#allocation20 + $0xc8] sm:$0xff]
    %v9349 = vld [vmem:[#allocation20 + $0xd0] sm:$0xff]
    %v9350 = vld [vmem:[#allocation20 + $0xd8] sm:$0xff]
    %v9351 = vld [vmem:[#allocation20 + $0xe0] sm:$0xff]
    %v9352 = vld [vmem:[#allocation20 + $0xe8] sm:$0xff]
    %v9353 = vld [vmem:[#allocation20 + $0xf0] sm:$0xff]
    %v9354 = vld [vmem:[#allocation20 + $0xf8] sm:$0xff]
    %v9355 = vld [vmem:[#allocation20 + $0x100] sm:$0xff]
    %v9356 = vld [vmem:[#allocation20 + $0x108] sm:$0xff]
    %v9357 = vld [vmem:[#allocation20 + $0x110] sm:$0xff]
    %v9358 = vld [vmem:[#allocation20 + $0x118] sm:$0xff]
    %v9359 = vld [vmem:[#allocation20 + $0x120] sm:$0xff]
    %v9360 = vld [vmem:[#allocation20 + $0x128] sm:$0xff]
    %v9361 = vld [vmem:[#allocation20 + $0x130] sm:$0xff]
    %v9362 = vld [vmem:[#allocation20 + $0x138] sm:$0xff]
    %v9363 = vld [vmem:[#allocation20 + $0x140] sm:$0xff]
    %v9364 = vld [vmem:[#allocation20 + $0x148] sm:$0xff]
    %v9365 = vld [vmem:[#allocation20 + $0x150] sm:$0xff]
    %v9366 = vld [vmem:[#allocation20 + $0x158] sm:$0xff]
    %v9367 = vld [vmem:[#allocation20 + $0x160] sm:$0xff]
    %v9368 = vld [vmem:[#allocation20 + $0x168] sm:$0xff]
    %v9369 = vld [vmem:[#allocation20 + $0x170] sm:$0xff]
    %v9370 = vld [vmem:[#allocation20 + $0x178] sm:$0xff]
    %v9371 = vld [vmem:[#allocation20 + $0x180] sm:$0xff]
    %v9372 = vld [vmem:[#allocation20 + $0x188] sm:$0xff]
    %v9373 = vld [vmem:[#allocation20 + $0x190] sm:$0xff]
    %v9374 = vld [vmem:[#allocation20 + $0x198] sm:$0xff]
    %v9375 = vld [vmem:[#allocation20 + $0x1a0] sm:$0xff]
    %v9376 = vld [vmem:[#allocation20 + $0x1a8] sm:$0xff]
    %v9377 = vld [vmem:[#allocation20 + $0x1b0] sm:$0xff]
    %v9378 = vld [vmem:[#allocation20 + $0x1b8] sm:$0xff]
    %v9379 = vld [vmem:[#allocation20 + $0x1c0] sm:$0xff]
    %v9380 = vld [vmem:[#allocation20 + $0x1c8] sm:$0xff]
    %v9381 = vld [vmem:[#allocation20 + $0x1d0] sm:$0xff]
    %v9382 = vld [vmem:[#allocation20 + $0x1d8] sm:$0xff]
    %v9383 = vld [vmem:[#allocation20 + $0x1e0] sm:$0xff]
    %v9384 = vld [vmem:[#allocation20 + $0x1e8] sm:$0xff]
    %v9385 = vld [vmem:[#allocation20 + $0x1f0] sm:$0xff]
    %v9386 = vld [vmem:[#allocation20 + $0x1f8] sm:$0xff]
    %v9387 = vld [vmem:[#allocation20 + $0x200] sm:$0xff]
    %v9388 = vld [vmem:[#allocation20 + $0x208] sm:$0xff]
    %v9389 = vld [vmem:[#allocation20 + $0x210] sm:$0xff]
    %v9390 = vld [vmem:[#allocation20 + $0x218] sm:$0xff]
    %v9391 = vld [vmem:[#allocation20 + $0x220] sm:$0xff]
    %v9392 = vld [vmem:[#allocation20 + $0x228] sm:$0xff]
    %v9393 = vld [vmem:[#allocation20 + $0x230] sm:$0xff]
    %v9394 = vld [vmem:[#allocation20 + $0x238] sm:$0xff]
    %v9395 = vld [vmem:[#allocation20 + $0x240] sm:$0xff]
    %v9396 = vld [vmem:[#allocation20 + $0x248] sm:$0xff]
    %v9397 = vld [vmem:[#allocation20 + $0x250] sm:$0xff]
    %v9398 = vld [vmem:[#allocation20 + $0x258] sm:$0xff]
    %v9399 = vld [vmem:[#allocation20 + $0x260] sm:$0xff]
    %v9400 = vld [vmem:[#allocation20 + $0x268] sm:$0xff]
    %v9401 = vld [vmem:[#allocation20 + $0x270] sm:$0xff]
    %v9402 = vld [vmem:[#allocation20 + $0x278] sm:$0xff]
    %v9403 = vld [vmem:[#allocation20 + $0x280] sm:$0xff]
    %v9404 = vld [vmem:[#allocation20 + $0x288] sm:$0xff]
    %v9405 = vld [vmem:[#allocation20 + $0x290] sm:$0xff]
    %v9406 = vld [vmem:[#allocation20 + $0x298] sm:$0xff]
    %v9407 = vld [vmem:[#allocation20 + $0x2a0] sm:$0xff]
    %v9408 = vld [vmem:[#allocation20 + $0x2a8] sm:$0xff]
    %v9409 = vld [vmem:[#allocation20 + $0x2b0] sm:$0xff]
    %v9410 = vld [vmem:[#allocation20 + $0x2b8] sm:$0xff]
    %v9411 = vld [vmem:[#allocation20 + $0x2c0] sm:$0xff]
    %v9412 = vld [vmem:[#allocation20 + $0x2c8] sm:$0xff]
    %v9413 = vld [vmem:[#allocation20 + $0x2d0] sm:$0xff]
    %v9414 = vld [vmem:[#allocation20 + $0x2d8] sm:$0xff]
    %v9415 = vld [vmem:[#allocation20 + $0x2e0] sm:$0xff]
    %v9416 = vld [vmem:[#allocation20 + $0x2e8] sm:$0xff]
    %v9417 = vld [vmem:[#allocation20 + $0x2f0] sm:$0xff]
    %v9418 = vld [vmem:[#allocation20 + $0x2f8] sm:$0xff]
    %v9419 = vld [vmem:[#allocation20 + $0x300] sm:$0xff]
    %v9420 = vld [vmem:[#allocation20 + $0x308] sm:$0xff]
    %v9421 = vld [vmem:[#allocation20 + $0x310] sm:$0xff]
    %v9422 = vld [vmem:[#allocation20 + $0x318] sm:$0xff]
    %v9423 = vld [vmem:[#allocation20 + $0x320] sm:$0xff]
    %v9424 = vld [vmem:[#allocation20 + $0x328] sm:$0xff]
    %v9425 = vld [vmem:[#allocation20 + $0x330] sm:$0xff]
    %v9426 = vld [vmem:[#allocation20 + $0x338] sm:$0xff]
    %v9427 = vld [vmem:[#allocation20 + $0x340] sm:$0xff]
    %v9428 = vld [vmem:[#allocation20 + $0x348] sm:$0xff]
    %v9429 = vld [vmem:[#allocation20 + $0x350] sm:$0xff]
    %v9430 = vld [vmem:[#allocation20 + $0x358] sm:$0xff]
    %v9431 = vld [vmem:[#allocation20 + $0x360] sm:$0xff]
    %v9432 = vld [vmem:[#allocation20 + $0x368] sm:$0xff]
    %v9433 = vld [vmem:[#allocation20 + $0x370] sm:$0xff]
    %v9434 = vld [vmem:[#allocation20 + $0x378] sm:$0xff]
    %v9435 = vld [vmem:[#allocation20 + $0x380] sm:$0xff]
    %v9436 = vld [vmem:[#allocation20 + $0x388] sm:$0xff]
    %v9437 = vld [vmem:[#allocation20 + $0x390] sm:$0xff]
    %v9438 = vld [vmem:[#allocation20 + $0x398] sm:$0xff]
    %v9439 = vld [vmem:[#allocation20 + $0x3a0] sm:$0xff]
    %v9440 = vld [vmem:[#allocation20 + $0x3a8] sm:$0xff]
    %v9441 = vld [vmem:[#allocation20 + $0x3b0] sm:$0xff]
    %v9442 = vld [vmem:[#allocation20 + $0x3b8] sm:$0xff]
    %v9443 = vld [vmem:[#allocation20 + $0x3c0] sm:$0xff]
    %v9444 = vld [vmem:[#allocation20 + $0x3c8] sm:$0xff]
    %v9445 = vld [vmem:[#allocation20 + $0x3d0] sm:$0xff]
    %v9446 = vld [vmem:[#allocation20 + $0x3d8] sm:$0xff]
    %v9447 = vld [vmem:[#allocation20 + $0x3e0] sm:$0xff]
    %v9448 = vld [vmem:[#allocation20 + $0x3e8] sm:$0xff]
    %v9449 = vld [vmem:[#allocation20 + $0x3f0] sm:$0xff]
    %v9450 = vld [vmem:[#allocation20 + $0x3f8] sm:$0xff]
    %v9451 = vld [vmem:[%s20] sm:$0xf]
    %v9453 = vlaneseq
    %v9454 = vshrl.u32 %v9453, 7
    %v9455 = vsub.s32 0, %v9454
    %v9456 = vrot.slane %v9451, %v9455
    %v9457 = vlaneseq
    %v9458 = vshrl.u32 %v9457, 7
    %v9459 = vsub.s32 1, %v9458
    %v9460 = vrot.slane %v9451, %v9459
    %v9461 = vlaneseq
    %v9462 = vshrl.u32 %v9461, 7
    %v9463 = vsub.s32 2, %v9462
    %v9464 = vrot.slane %v9451, %v9463
    %v9465 = vlaneseq
    %v9466 = vshrl.u32 %v9465, 7
    %v9467 = vsub.s32 3, %v9466
    %v9468 = vrot.slane %v9451, %v9467
    %v9601 = vunpack.c.l.b16 %v9323
    %v9602 = vunpack.c.h.b16 %v9323
    %v9603 = vunpack.c.l.b16 %v9324
    %v9604 = vunpack.c.h.b16 %v9324
    %v9605 = vunpack.c.l.b16 %v9325
    %v9606 = vunpack.c.h.b16 %v9325
    %v9607 = vunpack.c.l.b16 %v9326
    %v9608 = vunpack.c.h.b16 %v9326
    %v9609 = vunpack.c.l.b16 %v9327
    %v9610 = vunpack.c.h.b16 %v9327
    %v9611 = vunpack.c.l.b16 %v9328
    %v9612 = vunpack.c.h.b16 %v9328
    %v9613 = vunpack.c.l.b16 %v9329
    %v9614 = vunpack.c.h.b16 %v9329
    %v9615 = vunpack.c.l.b16 %v9330
    %v9616 = vunpack.c.h.b16 %v9330
    %v9617 = vunpack.c.l.b16 %v9331
    %v9618 = vunpack.c.h.b16 %v9331
    %v9619 = vunpack.c.l.b16 %v9332
    %v9620 = vunpack.c.h.b16 %v9332
    %v9621 = vunpack.c.l.b16 %v9333
    %v9622 = vunpack.c.h.b16 %v9333
    %v9623 = vunpack.c.l.b16 %v9334
    %v9624 = vunpack.c.h.b16 %v9334
    %v9625 = vunpack.c.l.b16 %v9335
    %v9626 = vunpack.c.h.b16 %v9335
    %v9627 = vunpack.c.l.b16 %v9336
    %v9628 = vunpack.c.h.b16 %v9336
    %v9629 = vunpack.c.l.b16 %v9337
    %v9630 = vunpack.c.h.b16 %v9337
    %v9631 = vunpack.c.l.b16 %v9338
    %v9632 = vunpack.c.h.b16 %v9338
    %v9633 = vunpack.c.l.b16 %v9339
    %v9634 = vunpack.c.h.b16 %v9339
    %v9635 = vunpack.c.l.b16 %v9340
    %v9636 = vunpack.c.h.b16 %v9340
    %v9637 = vunpack.c.l.b16 %v9341
    %v9638 = vunpack.c.h.b16 %v9341
    %v9639 = vunpack.c.l.b16 %v9342
    %v9640 = vunpack.c.h.b16 %v9342
    %v9641 = vunpack.c.l.b16 %v9343
    %v9642 = vunpack.c.h.b16 %v9343
    %v9643 = vunpack.c.l.b16 %v9344
    %v9644 = vunpack.c.h.b16 %v9344
    %v9645 = vunpack.c.l.b16 %v9345
    %v9646 = vunpack.c.h.b16 %v9345
    %v9647 = vunpack.c.l.b16 %v9346
    %v9648 = vunpack.c.h.b16 %v9346
    %v9649 = vunpack.c.l.b16 %v9347
    %v9650 = vunpack.c.h.b16 %v9347
    %v9651 = vunpack.c.l.b16 %v9348
    %v9652 = vunpack.c.h.b16 %v9348
    %v9653 = vunpack.c.l.b16 %v9349
    %v9654 = vunpack.c.h.b16 %v9349
    %v9655 = vunpack.c.l.b16 %v9350
    %v9656 = vunpack.c.h.b16 %v9350
    %v9657 = vunpack.c.l.b16 %v9351
    %v9658 = vunpack.c.h.b16 %v9351
    %v9659 = vunpack.c.l.b16 %v9352
    %v9660 = vunpack.c.h.b16 %v9352
    %v9661 = vunpack.c.l.b16 %v9353
    %v9662 = vunpack.c.h.b16 %v9353
    %v9663 = vunpack.c.l.b16 %v9354
    %v9664 = vunpack.c.h.b16 %v9354
    %v9665 = vunpack.c.l.b16 %v9355
    %v9666 = vunpack.c.h.b16 %v9355
    %v9667 = vunpack.c.l.b16 %v9356
    %v9668 = vunpack.c.h.b16 %v9356
    %v9669 = vunpack.c.l.b16 %v9357
    %v9670 = vunpack.c.h.b16 %v9357
    %v9671 = vunpack.c.l.b16 %v9358
    %v9672 = vunpack.c.h.b16 %v9358
    %v9673 = vunpack.c.l.b16 %v9359
    %v9674 = vunpack.c.h.b16 %v9359
    %v9675 = vunpack.c.l.b16 %v9360
    %v9676 = vunpack.c.h.b16 %v9360
    %v9677 = vunpack.c.l.b16 %v9361
    %v9678 = vunpack.c.h.b16 %v9361
    %v9679 = vunpack.c.l.b16 %v9362
    %v9680 = vunpack.c.h.b16 %v9362
    %v9681 = vunpack.c.l.b16 %v9363
    %v9682 = vunpack.c.h.b16 %v9363
    %v9683 = vunpack.c.l.b16 %v9364
    %v9684 = vunpack.c.h.b16 %v9364
    %v9685 = vunpack.c.l.b16 %v9365
    %v9686 = vunpack.c.h.b16 %v9365
    %v9687 = vunpack.c.l.b16 %v9366
    %v9688 = vunpack.c.h.b16 %v9366
    %v9689 = vunpack.c.l.b16 %v9367
    %v9690 = vunpack.c.h.b16 %v9367
    %v9691 = vunpack.c.l.b16 %v9368
    %v9692 = vunpack.c.h.b16 %v9368
    %v9693 = vunpack.c.l.b16 %v9369
    %v9694 = vunpack.c.h.b16 %v9369
    %v9695 = vunpack.c.l.b16 %v9370
    %v9696 = vunpack.c.h.b16 %v9370
    %v9697 = vunpack.c.l.b16 %v9371
    %v9698 = vunpack.c.h.b16 %v9371
    %v9699 = vunpack.c.l.b16 %v9372
    %v9700 = vunpack.c.h.b16 %v9372
    %v9701 = vunpack.c.l.b16 %v9373
    %v9702 = vunpack.c.h.b16 %v9373
    %v9703 = vunpack.c.l.b16 %v9374
    %v9704 = vunpack.c.h.b16 %v9374
    %v9705 = vunpack.c.l.b16 %v9375
    %v9706 = vunpack.c.h.b16 %v9375
    %v9707 = vunpack.c.l.b16 %v9376
    %v9708 = vunpack.c.h.b16 %v9376
    %v9709 = vunpack.c.l.b16 %v9377
    %v9710 = vunpack.c.h.b16 %v9377
    %v9711 = vunpack.c.l.b16 %v9378
    %v9712 = vunpack.c.h.b16 %v9378
    %v9713 = vunpack.c.l.b16 %v9379
    %v9714 = vunpack.c.h.b16 %v9379
    %v9715 = vunpack.c.l.b16 %v9380
    %v9716 = vunpack.c.h.b16 %v9380
    %v9717 = vunpack.c.l.b16 %v9381
    %v9718 = vunpack.c.h.b16 %v9381
    %v9719 = vunpack.c.l.b16 %v9382
    %v9720 = vunpack.c.h.b16 %v9382
    %v9721 = vunpack.c.l.b16 %v9383
    %v9722 = vunpack.c.h.b16 %v9383
    %v9723 = vunpack.c.l.b16 %v9384
    %v9724 = vunpack.c.h.b16 %v9384
    %v9725 = vunpack.c.l.b16 %v9385
    %v9726 = vunpack.c.h.b16 %v9385
    %v9727 = vunpack.c.l.b16 %v9386
    %v9728 = vunpack.c.h.b16 %v9386
    %v9729 = vunpack.c.l.b16 %v9387
    %v9730 = vunpack.c.h.b16 %v9387
    %v9731 = vunpack.c.l.b16 %v9388
    %v9732 = vunpack.c.h.b16 %v9388
    %v9733 = vunpack.c.l.b16 %v9389
    %v9734 = vunpack.c.h.b16 %v9389
    %v9735 = vunpack.c.l.b16 %v9390
    %v9736 = vunpack.c.h.b16 %v9390
    %v9737 = vunpack.c.l.b16 %v9391
    %v9738 = vunpack.c.h.b16 %v9391
    %v9739 = vunpack.c.l.b16 %v9392
    %v9740 = vunpack.c.h.b16 %v9392
    %v9741 = vunpack.c.l.b16 %v9393
    %v9742 = vunpack.c.h.b16 %v9393
    %v9743 = vunpack.c.l.b16 %v9394
    %v9744 = vunpack.c.h.b16 %v9394
    %v9745 = vunpack.c.l.b16 %v9395
    %v9746 = vunpack.c.h.b16 %v9395
    %v9747 = vunpack.c.l.b16 %v9396
    %v9748 = vunpack.c.h.b16 %v9396
    %v9749 = vunpack.c.l.b16 %v9397
    %v9750 = vunpack.c.h.b16 %v9397
    %v9751 = vunpack.c.l.b16 %v9398
    %v9752 = vunpack.c.h.b16 %v9398
    %v9753 = vunpack.c.l.b16 %v9399
    %v9754 = vunpack.c.h.b16 %v9399
    %v9755 = vunpack.c.l.b16 %v9400
    %v9756 = vunpack.c.h.b16 %v9400
    %v9757 = vunpack.c.l.b16 %v9401
    %v9758 = vunpack.c.h.b16 %v9401
    %v9759 = vunpack.c.l.b16 %v9402
    %v9760 = vunpack.c.h.b16 %v9402
    %v9761 = vunpack.c.l.b16 %v9403
    %v9762 = vunpack.c.h.b16 %v9403
    %v9763 = vunpack.c.l.b16 %v9404
    %v9764 = vunpack.c.h.b16 %v9404
    %v9765 = vunpack.c.l.b16 %v9405
    %v9766 = vunpack.c.h.b16 %v9405
    %v9767 = vunpack.c.l.b16 %v9406
    %v9768 = vunpack.c.h.b16 %v9406
    %v9769 = vunpack.c.l.b16 %v9407
    %v9770 = vunpack.c.h.b16 %v9407
    %v9771 = vunpack.c.l.b16 %v9408
    %v9772 = vunpack.c.h.b16 %v9408
    %v9773 = vunpack.c.l.b16 %v9409
    %v9774 = vunpack.c.h.b16 %v9409
    %v9775 = vunpack.c.l.b16 %v9410
    %v9776 = vunpack.c.h.b16 %v9410
    %v9777 = vunpack.c.l.b16 %v9411
    %v9778 = vunpack.c.h.b16 %v9411
    %v9779 = vunpack.c.l.b16 %v9412
    %v9780 = vunpack.c.h.b16 %v9412
    %v9781 = vunpack.c.l.b16 %v9413
    %v9782 = vunpack.c.h.b16 %v9413
    %v9783 = vunpack.c.l.b16 %v9414
    %v9784 = vunpack.c.h.b16 %v9414
    %v9785 = vunpack.c.l.b16 %v9415
    %v9786 = vunpack.c.h.b16 %v9415
    %v9787 = vunpack.c.l.b16 %v9416
    %v9788 = vunpack.c.h.b16 %v9416
    %v9789 = vunpack.c.l.b16 %v9417
    %v9790 = vunpack.c.h.b16 %v9417
    %v9791 = vunpack.c.l.b16 %v9418
    %v9792 = vunpack.c.h.b16 %v9418
    %v9793 = vunpack.c.l.b16 %v9419
    %v9794 = vunpack.c.h.b16 %v9419
    %v9795 = vunpack.c.l.b16 %v9420
    %v9796 = vunpack.c.h.b16 %v9420
    %v9797 = vunpack.c.l.b16 %v9421
    %v9798 = vunpack.c.h.b16 %v9421
    %v9799 = vunpack.c.l.b16 %v9422
    %v9800 = vunpack.c.h.b16 %v9422
    %v9801 = vunpack.c.l.b16 %v9423
    %v9802 = vunpack.c.h.b16 %v9423
    %v9803 = vunpack.c.l.b16 %v9424
    %v9804 = vunpack.c.h.b16 %v9424
    %v9805 = vunpack.c.l.b16 %v9425
    %v9806 = vunpack.c.h.b16 %v9425
    %v9807 = vunpack.c.l.b16 %v9426
    %v9808 = vunpack.c.h.b16 %v9426
    %v9809 = vunpack.c.l.b16 %v9427
    %v9810 = vunpack.c.h.b16 %v9427
    %v9811 = vunpack.c.l.b16 %v9428
    %v9812 = vunpack.c.h.b16 %v9428
    %v9813 = vunpack.c.l.b16 %v9429
    %v9814 = vunpack.c.h.b16 %v9429
    %v9815 = vunpack.c.l.b16 %v9430
    %v9816 = vunpack.c.h.b16 %v9430
    %v9817 = vunpack.c.l.b16 %v9431
    %v9818 = vunpack.c.h.b16 %v9431
    %v9819 = vunpack.c.l.b16 %v9432
    %v9820 = vunpack.c.h.b16 %v9432
    %v9821 = vunpack.c.l.b16 %v9433
    %v9822 = vunpack.c.h.b16 %v9433
    %v9823 = vunpack.c.l.b16 %v9434
    %v9824 = vunpack.c.h.b16 %v9434
    %v9825 = vunpack.c.l.b16 %v9435
    %v9826 = vunpack.c.h.b16 %v9435
    %v9827 = vunpack.c.l.b16 %v9436
    %v9828 = vunpack.c.h.b16 %v9436
    %v9829 = vunpack.c.l.b16 %v9437
    %v9830 = vunpack.c.h.b16 %v9437
    %v9831 = vunpack.c.l.b16 %v9438
    %v9832 = vunpack.c.h.b16 %v9438
    %v9833 = vunpack.c.l.b16 %v9439
    %v9834 = vunpack.c.h.b16 %v9439
    %v9835 = vunpack.c.l.b16 %v9440
    %v9836 = vunpack.c.h.b16 %v9440
    %v9837 = vunpack.c.l.b16 %v9441
    %v9838 = vunpack.c.h.b16 %v9441
    %v9839 = vunpack.c.l.b16 %v9442
    %v9840 = vunpack.c.h.b16 %v9442
    %v9841 = vunpack.c.l.b16 %v9443
    %v9842 = vunpack.c.h.b16 %v9443
    %v9843 = vunpack.c.l.b16 %v9444
    %v9844 = vunpack.c.h.b16 %v9444
    %v9845 = vunpack.c.l.b16 %v9445
    %v9846 = vunpack.c.h.b16 %v9445
    %v9847 = vunpack.c.l.b16 %v9446
    %v9848 = vunpack.c.h.b16 %v9446
    %v9849 = vunpack.c.l.b16 %v9447
    %v9850 = vunpack.c.h.b16 %v9447
    %v9851 = vunpack.c.l.b16 %v9448
    %v9852 = vunpack.c.h.b16 %v9448
    %v9853 = vunpack.c.l.b16 %v9449
    %v9854 = vunpack.c.h.b16 %v9449
    %v9855 = vunpack.c.l.b16 %v9450
    %v9856 = vunpack.c.h.b16 %v9450
    %v9857 = vpack.c.b16 %v9605, %v9601
    %v9858 = vpack.c.b16 %v9606, %v9602
    %v9859 = vpack.c.b16 %v9607, %v9603
    %v9860 = vpack.c.b16 %v9608, %v9604
    %v9861 = vpack.c.b16 %v9613, %v9609
    %v9862 = vpack.c.b16 %v9614, %v9610
    %v9863 = vpack.c.b16 %v9615, %v9611
    %v9864 = vpack.c.b16 %v9616, %v9612
    %v9865 = vpack.c.b16 %v9621, %v9617
    %v9866 = vpack.c.b16 %v9622, %v9618
    %v9867 = vpack.c.b16 %v9623, %v9619
    %v9868 = vpack.c.b16 %v9624, %v9620
    %v9869 = vpack.c.b16 %v9629, %v9625
    %v9870 = vpack.c.b16 %v9630, %v9626
    %v9871 = vpack.c.b16 %v9631, %v9627
    %v9872 = vpack.c.b16 %v9632, %v9628
    %v9873 = vpack.c.b16 %v9637, %v9633
    %v9874 = vpack.c.b16 %v9638, %v9634
    %v9875 = vpack.c.b16 %v9639, %v9635
    %v9876 = vpack.c.b16 %v9640, %v9636
    %v9877 = vpack.c.b16 %v9645, %v9641
    %v9878 = vpack.c.b16 %v9646, %v9642
    %v9879 = vpack.c.b16 %v9647, %v9643
    %v9880 = vpack.c.b16 %v9648, %v9644
    %v9881 = vpack.c.b16 %v9653, %v9649
    %v9882 = vpack.c.b16 %v9654, %v9650
    %v9883 = vpack.c.b16 %v9655, %v9651
    %v9884 = vpack.c.b16 %v9656, %v9652
    %v9885 = vpack.c.b16 %v9661, %v9657
    %v9886 = vpack.c.b16 %v9662, %v9658
    %v9887 = vpack.c.b16 %v9663, %v9659
    %v9888 = vpack.c.b16 %v9664, %v9660
    %v9889 = vpack.c.b16 %v9669, %v9665
    %v9890 = vpack.c.b16 %v9670, %v9666
    %v9891 = vpack.c.b16 %v9671, %v9667
    %v9892 = vpack.c.b16 %v9672, %v9668
    %v9893 = vpack.c.b16 %v9677, %v9673
    %v9894 = vpack.c.b16 %v9678, %v9674
    %v9895 = vpack.c.b16 %v9679, %v9675
    %v9896 = vpack.c.b16 %v9680, %v9676
    %v9897 = vpack.c.b16 %v9685, %v9681
    %v9898 = vpack.c.b16 %v9686, %v9682
    %v9899 = vpack.c.b16 %v9687, %v9683
    %v9900 = vpack.c.b16 %v9688, %v9684
    %v9901 = vpack.c.b16 %v9693, %v9689
    %v9902 = vpack.c.b16 %v9694, %v9690
    %v9903 = vpack.c.b16 %v9695, %v9691
    %v9904 = vpack.c.b16 %v9696, %v9692
    %v9905 = vpack.c.b16 %v9701, %v9697
    %v9906 = vpack.c.b16 %v9702, %v9698
    %v9907 = vpack.c.b16 %v9703, %v9699
    %v9908 = vpack.c.b16 %v9704, %v9700
    %v9909 = vpack.c.b16 %v9709, %v9705
    %v9910 = vpack.c.b16 %v9710, %v9706
    %v9911 = vpack.c.b16 %v9711, %v9707
    %v9912 = vpack.c.b16 %v9712, %v9708
    %v9913 = vpack.c.b16 %v9717, %v9713
    %v9914 = vpack.c.b16 %v9718, %v9714
    %v9915 = vpack.c.b16 %v9719, %v9715
    %v9916 = vpack.c.b16 %v9720, %v9716
    %v9917 = vpack.c.b16 %v9725, %v9721
    %v9918 = vpack.c.b16 %v9726, %v9722
    %v9919 = vpack.c.b16 %v9727, %v9723
    %v9920 = vpack.c.b16 %v9728, %v9724
    %v9921 = vpack.c.b16 %v9733, %v9729
    %v9922 = vpack.c.b16 %v9734, %v9730
    %v9923 = vpack.c.b16 %v9735, %v9731
    %v9924 = vpack.c.b16 %v9736, %v9732
    %v9925 = vpack.c.b16 %v9741, %v9737
    %v9926 = vpack.c.b16 %v9742, %v9738
    %v9927 = vpack.c.b16 %v9743, %v9739
    %v9928 = vpack.c.b16 %v9744, %v9740
    %v9929 = vpack.c.b16 %v9749, %v9745
    %v9930 = vpack.c.b16 %v9750, %v9746
    %v9931 = vpack.c.b16 %v9751, %v9747
    %v9932 = vpack.c.b16 %v9752, %v9748
    %v9933 = vpack.c.b16 %v9757, %v9753
    %v9934 = vpack.c.b16 %v9758, %v9754
    %v9935 = vpack.c.b16 %v9759, %v9755
    %v9936 = vpack.c.b16 %v9760, %v9756
    %v9937 = vpack.c.b16 %v9765, %v9761
    %v9938 = vpack.c.b16 %v9766, %v9762
    %v9939 = vpack.c.b16 %v9767, %v9763
    %v9940 = vpack.c.b16 %v9768, %v9764
    %v9941 = vpack.c.b16 %v9773, %v9769
    %v9942 = vpack.c.b16 %v9774, %v9770
    %v9943 = vpack.c.b16 %v9775, %v9771
    %v9944 = vpack.c.b16 %v9776, %v9772
    %v9945 = vpack.c.b16 %v9781, %v9777
    %v9946 = vpack.c.b16 %v9782, %v9778
    %v9947 = vpack.c.b16 %v9783, %v9779
    %v9948 = vpack.c.b16 %v9784, %v9780
    %v9949 = vpack.c.b16 %v9789, %v9785
    %v9950 = vpack.c.b16 %v9790, %v9786
    %v9951 = vpack.c.b16 %v9791, %v9787
    %v9952 = vpack.c.b16 %v9792, %v9788
    %v9953 = vpack.c.b16 %v9797, %v9793
    %v9954 = vpack.c.b16 %v9798, %v9794
    %v9955 = vpack.c.b16 %v9799, %v9795
    %v9956 = vpack.c.b16 %v9800, %v9796
    %v9957 = vpack.c.b16 %v9805, %v9801
    %v9958 = vpack.c.b16 %v9806, %v9802
    %v9959 = vpack.c.b16 %v9807, %v9803
    %v9960 = vpack.c.b16 %v9808, %v9804
    %v9961 = vpack.c.b16 %v9813, %v9809
    %v9962 = vpack.c.b16 %v9814, %v9810
    %v9963 = vpack.c.b16 %v9815, %v9811
    %v9964 = vpack.c.b16 %v9816, %v9812
    %v9965 = vpack.c.b16 %v9821, %v9817
    %v9966 = vpack.c.b16 %v9822, %v9818
    %v9967 = vpack.c.b16 %v9823, %v9819
    %v9968 = vpack.c.b16 %v9824, %v9820
    %v9969 = vpack.c.b16 %v9829, %v9825
    %v9970 = vpack.c.b16 %v9830, %v9826
    %v9971 = vpack.c.b16 %v9831, %v9827
    %v9972 = vpack.c.b16 %v9832, %v9828
    %v9973 = vpack.c.b16 %v9837, %v9833
    %v9974 = vpack.c.b16 %v9838, %v9834
    %v9975 = vpack.c.b16 %v9839, %v9835
    %v9976 = vpack.c.b16 %v9840, %v9836
    %v9977 = vpack.c.b16 %v9845, %v9841
    %v9978 = vpack.c.b16 %v9846, %v9842
    %v9979 = vpack.c.b16 %v9847, %v9843
    %v9980 = vpack.c.b16 %v9848, %v9844
    %v9981 = vpack.c.b16 %v9853, %v9849
    %v9982 = vpack.c.b16 %v9854, %v9850
    %v9983 = vpack.c.b16 %v9855, %v9851
    %v9984 = vpack.c.b16 %v9856, %v9852
    %10113 = vmatprep.subr.bf16.mxu0 %v9858
    %10114 = vmatpush1.bf16.msra.mxu0 %v9857
    %10115 = vmatprep.subr.bf16.mxu0 %v9862
    %10116 = vmatpush1.bf16.msra.mxu0 %v9861
    %10117 = vmatprep.subr.bf16.mxu0 %v9866
    %10118 = vmatpush1.bf16.msra.mxu0 %v9865
    %10119 = vmatprep.subr.bf16.mxu0 %v9870
    %10120 = vmatpush1.bf16.msra.mxu0 %v9869
    %10121 = vmatprep.subr.bf16.mxu0 %v9874
    %10122 = vmatpush1.bf16.msra.mxu0 %v9873
    %10123 = vmatprep.subr.bf16.mxu0 %v9878
    %10124 = vmatpush1.bf16.msra.mxu0 %v9877
    %10125 = vmatprep.subr.bf16.mxu0 %v9882
    %10126 = vmatpush1.bf16.msra.mxu0 %v9881
    %10127 = vmatprep.subr.bf16.mxu0 %v9886
    %10128 = vmatpush1.bf16.msra.mxu0 %v9885
    %10129 = vmatprep.subr.bf16.mxu0 %v9890
    %10130 = vmatpush1.bf16.msra.mxu0 %v9889
    %10131 = vmatprep.subr.bf16.mxu0 %v9894
    %10132 = vmatpush1.bf16.msra.mxu0 %v9893
    %10133 = vmatprep.subr.bf16.mxu0 %v9898
    %10134 = vmatpush1.bf16.msra.mxu0 %v9897
    %10135 = vmatprep.subr.bf16.mxu0 %v9902
    %10136 = vmatpush1.bf16.msra.mxu0 %v9901
    %10137 = vmatprep.subr.bf16.mxu0 %v9906
    %10138 = vmatpush1.bf16.msra.mxu0 %v9905
    %10139 = vmatprep.subr.bf16.mxu0 %v9910
    %10140 = vmatpush1.bf16.msra.mxu0 %v9909
    %10141 = vmatprep.subr.bf16.mxu0 %v9914
    %10142 = vmatpush1.bf16.msra.mxu0 %v9913
    %10143 = vmatprep.subr.bf16.mxu0 %v9918
    %10144 = vmatpush1.bf16.msra.mxu0 %v9917
    %10145 = vmatprep.mubr.bf16.mxu0 %v9320
    %10146 = vmatmul.mubr.bf16.gmra.mrb[0].mxu0 %v9319
    %v10147 = vpop.f32.mrb[0].mxu0
    %v10148 = vadd.f32 %v9456, %v10147
    %v10149 = vpop.f32.mrb[0].mxu0
    %v10150 = vadd.f32 %v9460, %v10149
    %v10151 = vpop.f32.mrb[0].mxu0
    %v10152 = vpop.f32.mrb[0].mxu0
    %10153 = vdwg.mxu0
    %10154 = vmatprep.subr.bf16.mxu0 %v9922
    %10155 = vmatpush1.bf16.msra.mxu0 %v9921
    %10156 = vmatprep.subr.bf16.mxu0 %v9926
    %10157 = vmatpush1.bf16.msra.mxu0 %v9925
    %10158 = vmatprep.subr.bf16.mxu0 %v9930
    %10159 = vmatpush1.bf16.msra.mxu0 %v9929
    %10160 = vmatprep.subr.bf16.mxu0 %v9934
    %10161 = vmatpush1.bf16.msra.mxu0 %v9933
    %10162 = vmatprep.subr.bf16.mxu0 %v9938
    %10163 = vmatpush1.bf16.msra.mxu0 %v9937
    %10164 = vmatprep.subr.bf16.mxu0 %v9942
    %10165 = vmatpush1.bf16.msra.mxu0 %v9941
    %10166 = vmatprep.subr.bf16.mxu0 %v9946
    %10167 = vmatpush1.bf16.msra.mxu0 %v9945
    %10168 = vmatprep.subr.bf16.mxu0 %v9950
    %10169 = vmatpush1.bf16.msra.mxu0 %v9949
    %10170 = vmatprep.subr.bf16.mxu0 %v9954
    %10171 = vmatpush1.bf16.msra.mxu0 %v9953
    %10172 = vmatprep.subr.bf16.mxu0 %v9958
    %10173 = vmatpush1.bf16.msra.mxu0 %v9957
    %10174 = vmatprep.subr.bf16.mxu0 %v9962
    %10175 = vmatpush1.bf16.msra.mxu0 %v9961
    %10176 = vmatprep.subr.bf16.mxu0 %v9966
    %10177 = vmatpush1.bf16.msra.mxu0 %v9965
    %10178 = vmatprep.subr.bf16.mxu0 %v9970
    %10179 = vmatpush1.bf16.msra.mxu0 %v9969
    %10180 = vmatprep.subr.bf16.mxu0 %v9974
    %10181 = vmatpush1.bf16.msra.mxu0 %v9973
    %10182 = vmatprep.subr.bf16.mxu0 %v9978
    %10183 = vmatpush1.bf16.msra.mxu0 %v9977
    %10184 = vmatprep.subr.bf16.mxu0 %v9982
    %10185 = vmatpush1.bf16.msra.mxu0 %v9981
    %10186 = vmatprep.mubr.bf16.mxu0 %v9322
    %10187 = vmatmul.mubr.bf16.gmra.mrb[0].mxu0 %v9321
    %v10188 = vpop.f32.mrb[0].mxu0
    %v10189 = vadd.f32 %v10148, %v10188
    %v10190 = vpop.f32.mrb[0].mxu0
    %v10191 = vadd.f32 %v10150, %v10190
    %v10192 = vpop.f32.mrb[0].mxu0
    %v10193 = vpop.f32.mrb[0].mxu0
    %10194 = vdwg.mxu0
    %10195 = vmatprep.subr.bf16.mxu0 %v9860
    %10196 = vmatpush1.bf16.msra.mxu0 %v9859
    %10197 = vmatprep.subr.bf16.mxu0 %v9864
    %10198 = vmatpush1.bf16.msra.mxu0 %v9863
    %10199 = vmatprep.subr.bf16.mxu0 %v9868
    %10200 = vmatpush1.bf16.msra.mxu0 %v9867
    %10201 = vmatprep.subr.bf16.mxu0 %v9872
    %10202 = vmatpush1.bf16.msra.mxu0 %v9871
    %10203 = vmatprep.subr.bf16.mxu0 %v9876
    %10204 = vmatpush1.bf16.msra.mxu0 %v9875
    %10205 = vmatprep.subr.bf16.mxu0 %v9880
    %10206 = vmatpush1.bf16.msra.mxu0 %v9879
    %10207 = vmatprep.subr.bf16.mxu0 %v9884
    %10208 = vmatpush1.bf16.msra.mxu0 %v9883
    %10209 = vmatprep.subr.bf16.mxu0 %v9888
    %10210 = vmatpush1.bf16.msra.mxu0 %v9887
    %10211 = vmatprep.subr.bf16.mxu0 %v9892
    %10212 = vmatpush1.bf16.msra.mxu0 %v9891
    %10213 = vmatprep.subr.bf16.mxu0 %v9896
    %10214 = vmatpush1.bf16.msra.mxu0 %v9895
    %10215 = vmatprep.subr.bf16.mxu0 %v9900
    %10216 = vmatpush1.bf16.msra.mxu0 %v9899
    %10217 = vmatprep.subr.bf16.mxu0 %v9904
    %10218 = vmatpush1.bf16.msra.mxu0 %v9903
    %10219 = vmatprep.subr.bf16.mxu0 %v9908
    %10220 = vmatpush1.bf16.msra.mxu0 %v9907
    %10221 = vmatprep.subr.bf16.mxu0 %v9912
    %10222 = vmatpush1.bf16.msra.mxu0 %v9911
    %10223 = vmatprep.subr.bf16.mxu0 %v9916
    %10224 = vmatpush1.bf16.msra.mxu0 %v9915
    %10225 = vmatprep.subr.bf16.mxu0 %v9920
    %10226 = vmatpush1.bf16.msra.mxu0 %v9919
    %10227 = vmatprep.mubr.bf16.mxu0 %v9320
    %10228 = vmatmul.mubr.bf16.gmra.mrb[0].mxu0 %v9319
    %v10229 = vpop.f32.mrb[0].mxu0
    %v10230 = vadd.f32 %v9464, %v10229
    %v10231 = vpop.f32.mrb[0].mxu0
    %v10232 = vadd.f32 %v9468, %v10231
    %v10233 = vpop.f32.mrb[0].mxu0
    %v10234 = vpop.f32.mrb[0].mxu0
    %10235 = vdwg.mxu0
    %10236 = vmatprep.subr.bf16.mxu0 %v9924
    %10237 = vmatpush1.bf16.msra.mxu0 %v9923
    %10238 = vmatprep.subr.bf16.mxu0 %v9928
    %10239 = vmatpush1.bf16.msra.mxu0 %v9927
    %10240 = vmatprep.subr.bf16.mxu0 %v9932
    %10241 = vmatpush1.bf16.msra.mxu0 %v9931
    %10242 = vmatprep.subr.bf16.mxu0 %v9936
    %10243 = vmatpush1.bf16.msra.mxu0 %v9935
    %10244 = vmatprep.subr.bf16.mxu0 %v9940
    %10245 = vmatpush1.bf16.msra.mxu0 %v9939
    %10246 = vmatprep.subr.bf16.mxu0 %v9944
    %10247 = vmatpush1.bf16.msra.mxu0 %v9943
    %10248 = vmatprep.subr.bf16.mxu0 %v9948
    %10249 = vmatpush1.bf16.msra.mxu0 %v9947
    %10250 = vmatprep.subr.bf16.mxu0 %v9952
    %10251 = vmatpush1.bf16.msra.mxu0 %v9951
    %10252 = vmatprep.subr.bf16.mxu0 %v9956
    %10253 = vmatpush1.bf16.msra.mxu0 %v9955
    %10254 = vmatprep.subr.bf16.mxu0 %v9960
    %10255 = vmatpush1.bf16.msra.mxu0 %v9959
    %10256 = vmatprep.subr.bf16.mxu0 %v9964
    %10257 = vmatpush1.bf16.msra.mxu0 %v9963
    %10258 = vmatprep.subr.bf16.mxu0 %v9968
    %10259 = vmatpush1.bf16.msra.mxu0 %v9967
    %10260 = vmatprep.subr.bf16.mxu0 %v9972
    %10261 = vmatpush1.bf16.msra.mxu0 %v9971
    %10262 = vmatprep.subr.bf16.mxu0 %v9976
    %10263 = vmatpush1.bf16.msra.mxu0 %v9975
    %10264 = vmatprep.subr.bf16.mxu0 %v9980
    %10265 = vmatpush1.bf16.msra.mxu0 %v9979
    %10266 = vmatprep.subr.bf16.mxu0 %v9984
    %10267 = vmatpush1.bf16.msra.mxu0 %v9983
    %10268 = vmatprep.mubr.bf16.mxu0 %v9322
    %10269 = vmatmul.mubr.bf16.gmra.mrb[0].mxu0 %v9321
    %v10270 = vpop.f32.mrb[0].mxu0
    %v10271 = vadd.f32 %v10230, %v10270
    %v10272 = vpop.f32.mrb[0].mxu0
    %v10273 = vadd.f32 %v10232, %v10272
    %v10274 = vpop.f32.mrb[0].mxu0
    %v10275 = vpop.f32.mrb[0].mxu0
    %10276 = vdwg.mxu0
    %v10277 = vpack.c.bf16 %v10189, %v10189
    %v10278 = vpack.c.bf16 %v10191, %v10191
    %v10279 = vpack.c.bf16 %v10271, %v10271
    %v10280 = vpack.c.bf16 %v10273, %v10273
    %v10281 = vmax.bf16 %v10277, 0
    %v10282 = vmax.bf16 %v10278, 0
    %v10283 = vmax.bf16 %v10279, 0
    %v10284 = vmax.bf16 %v10280, 0
    %v10285 = vld [vmem:[#allocation22] sm:$0xff]
    %v10286 = vld [vmem:[#allocation22 + $0x8] sm:$0xff]
    %v10287 = vld [vmem:[#allocation22 + $0x10] sm:$0xff]
    %v10288 = vld [vmem:[#allocation22 + $0x18] sm:$0xff]
    %v10289 = vld [vmem:[#allocation22 + $0x20] sm:$0xff]
    %v10290 = vld [vmem:[#allocation22 + $0x28] sm:$0xff]
    %v10291 = vld [vmem:[#allocation22 + $0x30] sm:$0xff]
    %v10292 = vld [vmem:[#allocation22 + $0x38] sm:$0xff]
    %v10293 = vld [vmem:[#allocation22 + $0x40] sm:$0xff]
    %v10294 = vld [vmem:[#allocation22 + $0x48] sm:$0xff]
    %v10295 = vld [vmem:[#allocation22 + $0x50] sm:$0xff]
    %v10296 = vld [vmem:[#allocation22 + $0x58] sm:$0xff]
    %v10297 = vld [vmem:[#allocation22 + $0x60] sm:$0xff]
    %v10298 = vld [vmem:[#allocation22 + $0x68] sm:$0xff]
    %v10299 = vld [vmem:[#allocation22 + $0x70] sm:$0xff]
    %v10300 = vld [vmem:[#allocation22 + $0x78] sm:$0xff]
    %v10301 = vld [vmem:[#allocation22 + $0x80] sm:$0xff]
    %v10302 = vld [vmem:[#allocation22 + $0x88] sm:$0xff]
    %v10303 = vld [vmem:[#allocation22 + $0x90] sm:$0xff]
    %v10304 = vld [vmem:[#allocation22 + $0x98] sm:$0xff]
    %v10305 = vld [vmem:[#allocation22 + $0xa0] sm:$0xff]
    %v10306 = vld [vmem:[#allocation22 + $0xa8] sm:$0xff]
    %v10307 = vld [vmem:[#allocation22 + $0xb0] sm:$0xff]
    %v10308 = vld [vmem:[#allocation22 + $0xb8] sm:$0xff]
    %v10309 = vld [vmem:[#allocation22 + $0xc0] sm:$0xff]
    %v10310 = vld [vmem:[#allocation22 + $0xc8] sm:$0xff]
    %v10311 = vld [vmem:[#allocation22 + $0xd0] sm:$0xff]
    %v10312 = vld [vmem:[#allocation22 + $0xd8] sm:$0xff]
    %v10313 = vld [vmem:[#allocation22 + $0xe0] sm:$0xff]
    %v10314 = vld [vmem:[#allocation22 + $0xe8] sm:$0xff]
    %v10315 = vld [vmem:[#allocation22 + $0xf0] sm:$0xff]
    %v10316 = vld [vmem:[#allocation22 + $0xf8] sm:$0xff]
    %v10317 = vld [vmem:[#allocation22 + $0x100] sm:$0xff]
    %v10318 = vld [vmem:[#allocation22 + $0x108] sm:$0xff]
    %v10319 = vld [vmem:[#allocation22 + $0x110] sm:$0xff]
    %v10320 = vld [vmem:[#allocation22 + $0x118] sm:$0xff]
    %v10321 = vld [vmem:[#allocation22 + $0x120] sm:$0xff]
    %v10322 = vld [vmem:[#allocation22 + $0x128] sm:$0xff]
    %v10323 = vld [vmem:[#allocation22 + $0x130] sm:$0xff]
    %v10324 = vld [vmem:[#allocation22 + $0x138] sm:$0xff]
    %v10325 = vld [vmem:[#allocation22 + $0x140] sm:$0xff]
    %v10326 = vld [vmem:[#allocation22 + $0x148] sm:$0xff]
    %v10327 = vld [vmem:[#allocation22 + $0x150] sm:$0xff]
    %v10328 = vld [vmem:[#allocation22 + $0x158] sm:$0xff]
    %v10329 = vld [vmem:[#allocation22 + $0x160] sm:$0xff]
    %v10330 = vld [vmem:[#allocation22 + $0x168] sm:$0xff]
    %v10331 = vld [vmem:[#allocation22 + $0x170] sm:$0xff]
    %v10332 = vld [vmem:[#allocation22 + $0x178] sm:$0xff]
    %v10333 = vld [vmem:[#allocation22 + $0x180] sm:$0xff]
    %v10334 = vld [vmem:[#allocation22 + $0x188] sm:$0xff]
    %v10335 = vld [vmem:[#allocation22 + $0x190] sm:$0xff]
    %v10336 = vld [vmem:[#allocation22 + $0x198] sm:$0xff]
    %v10337 = vld [vmem:[#allocation22 + $0x1a0] sm:$0xff]
    %v10338 = vld [vmem:[#allocation22 + $0x1a8] sm:$0xff]
    %v10339 = vld [vmem:[#allocation22 + $0x1b0] sm:$0xff]
    %v10340 = vld [vmem:[#allocation22 + $0x1b8] sm:$0xff]
    %v10341 = vld [vmem:[#allocation22 + $0x1c0] sm:$0xff]
    %v10342 = vld [vmem:[#allocation22 + $0x1c8] sm:$0xff]
    %v10343 = vld [vmem:[#allocation22 + $0x1d0] sm:$0xff]
    %v10344 = vld [vmem:[#allocation22 + $0x1d8] sm:$0xff]
    %v10345 = vld [vmem:[#allocation22 + $0x1e0] sm:$0xff]
    %v10346 = vld [vmem:[#allocation22 + $0x1e8] sm:$0xff]
    %v10347 = vld [vmem:[#allocation22 + $0x1f0] sm:$0xff]
    %v10348 = vld [vmem:[#allocation22 + $0x1f8] sm:$0xff]
    %v10349 = vld [vmem:[#allocation22 + $0x200] sm:$0xff]
    %v10350 = vld [vmem:[#allocation22 + $0x208] sm:$0xff]
    %v10351 = vld [vmem:[#allocation22 + $0x210] sm:$0xff]
    %v10352 = vld [vmem:[#allocation22 + $0x218] sm:$0xff]
    %v10353 = vld [vmem:[#allocation22 + $0x220] sm:$0xff]
    %v10354 = vld [vmem:[#allocation22 + $0x228] sm:$0xff]
    %v10355 = vld [vmem:[#allocation22 + $0x230] sm:$0xff]
    %v10356 = vld [vmem:[#allocation22 + $0x238] sm:$0xff]
    %v10357 = vld [vmem:[#allocation22 + $0x240] sm:$0xff]
    %v10358 = vld [vmem:[#allocation22 + $0x248] sm:$0xff]
    %v10359 = vld [vmem:[#allocation22 + $0x250] sm:$0xff]
    %v10360 = vld [vmem:[#allocation22 + $0x258] sm:$0xff]
    %v10361 = vld [vmem:[#allocation22 + $0x260] sm:$0xff]
    %v10362 = vld [vmem:[#allocation22 + $0x268] sm:$0xff]
    %v10363 = vld [vmem:[#allocation22 + $0x270] sm:$0xff]
    %v10364 = vld [vmem:[#allocation22 + $0x278] sm:$0xff]
    %v10365 = vld [vmem:[#allocation22 + $0x280] sm:$0xff]
    %v10366 = vld [vmem:[#allocation22 + $0x288] sm:$0xff]
    %v10367 = vld [vmem:[#allocation22 + $0x290] sm:$0xff]
    %v10368 = vld [vmem:[#allocation22 + $0x298] sm:$0xff]
    %v10369 = vld [vmem:[#allocation22 + $0x2a0] sm:$0xff]
    %v10370 = vld [vmem:[#allocation22 + $0x2a8] sm:$0xff]
    %v10371 = vld [vmem:[#allocation22 + $0x2b0] sm:$0xff]
    %v10372 = vld [vmem:[#allocation22 + $0x2b8] sm:$0xff]
    %v10373 = vld [vmem:[#allocation22 + $0x2c0] sm:$0xff]
    %v10374 = vld [vmem:[#allocation22 + $0x2c8] sm:$0xff]
    %v10375 = vld [vmem:[#allocation22 + $0x2d0] sm:$0xff]
    %v10376 = vld [vmem:[#allocation22 + $0x2d8] sm:$0xff]
    %v10377 = vld [vmem:[#allocation22 + $0x2e0] sm:$0xff]
    %v10378 = vld [vmem:[#allocation22 + $0x2e8] sm:$0xff]
    %v10379 = vld [vmem:[#allocation22 + $0x2f0] sm:$0xff]
    %v10380 = vld [vmem:[#allocation22 + $0x2f8] sm:$0xff]
    %v10381 = vld [vmem:[#allocation22 + $0x300] sm:$0xff]
    %v10382 = vld [vmem:[#allocation22 + $0x308] sm:$0xff]
    %v10383 = vld [vmem:[#allocation22 + $0x310] sm:$0xff]
    %v10384 = vld [vmem:[#allocation22 + $0x318] sm:$0xff]
    %v10385 = vld [vmem:[#allocation22 + $0x320] sm:$0xff]
    %v10386 = vld [vmem:[#allocation22 + $0x328] sm:$0xff]
    %v10387 = vld [vmem:[#allocation22 + $0x330] sm:$0xff]
    %v10388 = vld [vmem:[#allocation22 + $0x338] sm:$0xff]
    %v10389 = vld [vmem:[#allocation22 + $0x340] sm:$0xff]
    %v10390 = vld [vmem:[#allocation22 + $0x348] sm:$0xff]
    %v10391 = vld [vmem:[#allocation22 + $0x350] sm:$0xff]
    %v10392 = vld [vmem:[#allocation22 + $0x358] sm:$0xff]
    %v10393 = vld [vmem:[#allocation22 + $0x360] sm:$0xff]
    %v10394 = vld [vmem:[#allocation22 + $0x368] sm:$0xff]
    %v10395 = vld [vmem:[#allocation22 + $0x370] sm:$0xff]
    %v10396 = vld [vmem:[#allocation22 + $0x378] sm:$0xff]
    %v10397 = vld [vmem:[#allocation22 + $0x380] sm:$0xff]
    %v10398 = vld [vmem:[#allocation22 + $0x388] sm:$0xff]
    %v10399 = vld [vmem:[#allocation22 + $0x390] sm:$0xff]
    %v10400 = vld [vmem:[#allocation22 + $0x398] sm:$0xff]
    %v10401 = vld [vmem:[#allocation22 + $0x3a0] sm:$0xff]
    %v10402 = vld [vmem:[#allocation22 + $0x3a8] sm:$0xff]
    %v10403 = vld [vmem:[#allocation22 + $0x3b0] sm:$0xff]
    %v10404 = vld [vmem:[#allocation22 + $0x3b8] sm:$0xff]
    %v10405 = vld [vmem:[#allocation22 + $0x3c0] sm:$0xff]
    %v10406 = vld [vmem:[#allocation22 + $0x3c8] sm:$0xff]
    %v10407 = vld [vmem:[#allocation22 + $0x3d0] sm:$0xff]
    %v10408 = vld [vmem:[#allocation22 + $0x3d8] sm:$0xff]
    %v10409 = vld [vmem:[#allocation22 + $0x3e0] sm:$0xff]
    %v10410 = vld [vmem:[#allocation22 + $0x3e8] sm:$0xff]
    %v10411 = vld [vmem:[#allocation22 + $0x3f0] sm:$0xff]
    %v10412 = vld [vmem:[#allocation22 + $0x3f8] sm:$0xff]
    %v10413 = vld [vmem:[%s22] sm:$0xf]
    %v10415 = vlaneseq
    %v10416 = vshrl.u32 %v10415, 7
    %v10417 = vsub.s32 0, %v10416
    %v10418 = vrot.slane %v10413, %v10417
    %v10419 = vlaneseq
    %v10420 = vshrl.u32 %v10419, 7
    %v10421 = vsub.s32 1, %v10420
    %v10422 = vrot.slane %v10413, %v10421
    %v10423 = vlaneseq
    %v10424 = vshrl.u32 %v10423, 7
    %v10425 = vsub.s32 2, %v10424
    %v10426 = vrot.slane %v10413, %v10425
    %v10427 = vlaneseq
    %v10428 = vshrl.u32 %v10427, 7
    %v10429 = vsub.s32 3, %v10428
    %v10430 = vrot.slane %v10413, %v10429
    %v10563 = vunpack.c.l.b16 %v10285
    %v10564 = vunpack.c.h.b16 %v10285
    %v10565 = vunpack.c.l.b16 %v10286
    %v10566 = vunpack.c.h.b16 %v10286
    %v10567 = vunpack.c.l.b16 %v10287
    %v10568 = vunpack.c.h.b16 %v10287
    %v10569 = vunpack.c.l.b16 %v10288
    %v10570 = vunpack.c.h.b16 %v10288
    %v10571 = vunpack.c.l.b16 %v10289
    %v10572 = vunpack.c.h.b16 %v10289
    %v10573 = vunpack.c.l.b16 %v10290
    %v10574 = vunpack.c.h.b16 %v10290
    %v10575 = vunpack.c.l.b16 %v10291
    %v10576 = vunpack.c.h.b16 %v10291
    %v10577 = vunpack.c.l.b16 %v10292
    %v10578 = vunpack.c.h.b16 %v10292
    %v10579 = vunpack.c.l.b16 %v10293
    %v10580 = vunpack.c.h.b16 %v10293
    %v10581 = vunpack.c.l.b16 %v10294
    %v10582 = vunpack.c.h.b16 %v10294
    %v10583 = vunpack.c.l.b16 %v10295
    %v10584 = vunpack.c.h.b16 %v10295
    %v10585 = vunpack.c.l.b16 %v10296
    %v10586 = vunpack.c.h.b16 %v10296
    %v10587 = vunpack.c.l.b16 %v10297
    %v10588 = vunpack.c.h.b16 %v10297
    %v10589 = vunpack.c.l.b16 %v10298
    %v10590 = vunpack.c.h.b16 %v10298
    %v10591 = vunpack.c.l.b16 %v10299
    %v10592 = vunpack.c.h.b16 %v10299
    %v10593 = vunpack.c.l.b16 %v10300
    %v10594 = vunpack.c.h.b16 %v10300
    %v10595 = vunpack.c.l.b16 %v10301
    %v10596 = vunpack.c.h.b16 %v10301
    %v10597 = vunpack.c.l.b16 %v10302
    %v10598 = vunpack.c.h.b16 %v10302
    %v10599 = vunpack.c.l.b16 %v10303
    %v10600 = vunpack.c.h.b16 %v10303
    %v10601 = vunpack.c.l.b16 %v10304
    %v10602 = vunpack.c.h.b16 %v10304
    %v10603 = vunpack.c.l.b16 %v10305
    %v10604 = vunpack.c.h.b16 %v10305
    %v10605 = vunpack.c.l.b16 %v10306
    %v10606 = vunpack.c.h.b16 %v10306
    %v10607 = vunpack.c.l.b16 %v10307
    %v10608 = vunpack.c.h.b16 %v10307
    %v10609 = vunpack.c.l.b16 %v10308
    %v10610 = vunpack.c.h.b16 %v10308
    %v10611 = vunpack.c.l.b16 %v10309
    %v10612 = vunpack.c.h.b16 %v10309
    %v10613 = vunpack.c.l.b16 %v10310
    %v10614 = vunpack.c.h.b16 %v10310
    %v10615 = vunpack.c.l.b16 %v10311
    %v10616 = vunpack.c.h.b16 %v10311
    %v10617 = vunpack.c.l.b16 %v10312
    %v10618 = vunpack.c.h.b16 %v10312
    %v10619 = vunpack.c.l.b16 %v10313
    %v10620 = vunpack.c.h.b16 %v10313
    %v10621 = vunpack.c.l.b16 %v10314
    %v10622 = vunpack.c.h.b16 %v10314
    %v10623 = vunpack.c.l.b16 %v10315
    %v10624 = vunpack.c.h.b16 %v10315
    %v10625 = vunpack.c.l.b16 %v10316
    %v10626 = vunpack.c.h.b16 %v10316
    %v10627 = vunpack.c.l.b16 %v10317
    %v10628 = vunpack.c.h.b16 %v10317
    %v10629 = vunpack.c.l.b16 %v10318
    %v10630 = vunpack.c.h.b16 %v10318
    %v10631 = vunpack.c.l.b16 %v10319
    %v10632 = vunpack.c.h.b16 %v10319
    %v10633 = vunpack.c.l.b16 %v10320
    %v10634 = vunpack.c.h.b16 %v10320
    %v10635 = vunpack.c.l.b16 %v10321
    %v10636 = vunpack.c.h.b16 %v10321
    %v10637 = vunpack.c.l.b16 %v10322
    %v10638 = vunpack.c.h.b16 %v10322
    %v10639 = vunpack.c.l.b16 %v10323
    %v10640 = vunpack.c.h.b16 %v10323
    %v10641 = vunpack.c.l.b16 %v10324
    %v10642 = vunpack.c.h.b16 %v10324
    %v10643 = vunpack.c.l.b16 %v10325
    %v10644 = vunpack.c.h.b16 %v10325
    %v10645 = vunpack.c.l.b16 %v10326
    %v10646 = vunpack.c.h.b16 %v10326
    %v10647 = vunpack.c.l.b16 %v10327
    %v10648 = vunpack.c.h.b16 %v10327
    %v10649 = vunpack.c.l.b16 %v10328
    %v10650 = vunpack.c.h.b16 %v10328
    %v10651 = vunpack.c.l.b16 %v10329
    %v10652 = vunpack.c.h.b16 %v10329
    %v10653 = vunpack.c.l.b16 %v10330
    %v10654 = vunpack.c.h.b16 %v10330
    %v10655 = vunpack.c.l.b16 %v10331
    %v10656 = vunpack.c.h.b16 %v10331
    %v10657 = vunpack.c.l.b16 %v10332
    %v10658 = vunpack.c.h.b16 %v10332
    %v10659 = vunpack.c.l.b16 %v10333
    %v10660 = vunpack.c.h.b16 %v10333
    %v10661 = vunpack.c.l.b16 %v10334
    %v10662 = vunpack.c.h.b16 %v10334
    %v10663 = vunpack.c.l.b16 %v10335
    %v10664 = vunpack.c.h.b16 %v10335
    %v10665 = vunpack.c.l.b16 %v10336
    %v10666 = vunpack.c.h.b16 %v10336
    %v10667 = vunpack.c.l.b16 %v10337
    %v10668 = vunpack.c.h.b16 %v10337
    %v10669 = vunpack.c.l.b16 %v10338
    %v10670 = vunpack.c.h.b16 %v10338
    %v10671 = vunpack.c.l.b16 %v10339
    %v10672 = vunpack.c.h.b16 %v10339
    %v10673 = vunpack.c.l.b16 %v10340
    %v10674 = vunpack.c.h.b16 %v10340
    %v10675 = vunpack.c.l.b16 %v10341
    %v10676 = vunpack.c.h.b16 %v10341
    %v10677 = vunpack.c.l.b16 %v10342
    %v10678 = vunpack.c.h.b16 %v10342
    %v10679 = vunpack.c.l.b16 %v10343
    %v10680 = vunpack.c.h.b16 %v10343
    %v10681 = vunpack.c.l.b16 %v10344
    %v10682 = vunpack.c.h.b16 %v10344
    %v10683 = vunpack.c.l.b16 %v10345
    %v10684 = vunpack.c.h.b16 %v10345
    %v10685 = vunpack.c.l.b16 %v10346
    %v10686 = vunpack.c.h.b16 %v10346
    %v10687 = vunpack.c.l.b16 %v10347
    %v10688 = vunpack.c.h.b16 %v10347
    %v10689 = vunpack.c.l.b16 %v10348
    %v10690 = vunpack.c.h.b16 %v10348
    %v10691 = vunpack.c.l.b16 %v10349
    %v10692 = vunpack.c.h.b16 %v10349
    %v10693 = vunpack.c.l.b16 %v10350
    %v10694 = vunpack.c.h.b16 %v10350
    %v10695 = vunpack.c.l.b16 %v10351
    %v10696 = vunpack.c.h.b16 %v10351
    %v10697 = vunpack.c.l.b16 %v10352
    %v10698 = vunpack.c.h.b16 %v10352
    %v10699 = vunpack.c.l.b16 %v10353
    %v10700 = vunpack.c.h.b16 %v10353
    %v10701 = vunpack.c.l.b16 %v10354
    %v10702 = vunpack.c.h.b16 %v10354
    %v10703 = vunpack.c.l.b16 %v10355
    %v10704 = vunpack.c.h.b16 %v10355
    %v10705 = vunpack.c.l.b16 %v10356
    %v10706 = vunpack.c.h.b16 %v10356
    %v10707 = vunpack.c.l.b16 %v10357
    %v10708 = vunpack.c.h.b16 %v10357
    %v10709 = vunpack.c.l.b16 %v10358
    %v10710 = vunpack.c.h.b16 %v10358
    %v10711 = vunpack.c.l.b16 %v10359
    %v10712 = vunpack.c.h.b16 %v10359
    %v10713 = vunpack.c.l.b16 %v10360
    %v10714 = vunpack.c.h.b16 %v10360
    %v10715 = vunpack.c.l.b16 %v10361
    %v10716 = vunpack.c.h.b16 %v10361
    %v10717 = vunpack.c.l.b16 %v10362
    %v10718 = vunpack.c.h.b16 %v10362
    %v10719 = vunpack.c.l.b16 %v10363
    %v10720 = vunpack.c.h.b16 %v10363
    %v10721 = vunpack.c.l.b16 %v10364
    %v10722 = vunpack.c.h.b16 %v10364
    %v10723 = vunpack.c.l.b16 %v10365
    %v10724 = vunpack.c.h.b16 %v10365
    %v10725 = vunpack.c.l.b16 %v10366
    %v10726 = vunpack.c.h.b16 %v10366
    %v10727 = vunpack.c.l.b16 %v10367
    %v10728 = vunpack.c.h.b16 %v10367
    %v10729 = vunpack.c.l.b16 %v10368
    %v10730 = vunpack.c.h.b16 %v10368
    %v10731 = vunpack.c.l.b16 %v10369
    %v10732 = vunpack.c.h.b16 %v10369
    %v10733 = vunpack.c.l.b16 %v10370
    %v10734 = vunpack.c.h.b16 %v10370
    %v10735 = vunpack.c.l.b16 %v10371
    %v10736 = vunpack.c.h.b16 %v10371
    %v10737 = vunpack.c.l.b16 %v10372
    %v10738 = vunpack.c.h.b16 %v10372
    %v10739 = vunpack.c.l.b16 %v10373
    %v10740 = vunpack.c.h.b16 %v10373
    %v10741 = vunpack.c.l.b16 %v10374
    %v10742 = vunpack.c.h.b16 %v10374
    %v10743 = vunpack.c.l.b16 %v10375
    %v10744 = vunpack.c.h.b16 %v10375
    %v10745 = vunpack.c.l.b16 %v10376
    %v10746 = vunpack.c.h.b16 %v10376
    %v10747 = vunpack.c.l.b16 %v10377
    %v10748 = vunpack.c.h.b16 %v10377
    %v10749 = vunpack.c.l.b16 %v10378
    %v10750 = vunpack.c.h.b16 %v10378
    %v10751 = vunpack.c.l.b16 %v10379
    %v10752 = vunpack.c.h.b16 %v10379
    %v10753 = vunpack.c.l.b16 %v10380
    %v10754 = vunpack.c.h.b16 %v10380
    %v10755 = vunpack.c.l.b16 %v10381
    %v10756 = vunpack.c.h.b16 %v10381
    %v10757 = vunpack.c.l.b16 %v10382
    %v10758 = vunpack.c.h.b16 %v10382
    %v10759 = vunpack.c.l.b16 %v10383
    %v10760 = vunpack.c.h.b16 %v10383
    %v10761 = vunpack.c.l.b16 %v10384
    %v10762 = vunpack.c.h.b16 %v10384
    %v10763 = vunpack.c.l.b16 %v10385
    %v10764 = vunpack.c.h.b16 %v10385
    %v10765 = vunpack.c.l.b16 %v10386
    %v10766 = vunpack.c.h.b16 %v10386
    %v10767 = vunpack.c.l.b16 %v10387
    %v10768 = vunpack.c.h.b16 %v10387
    %v10769 = vunpack.c.l.b16 %v10388
    %v10770 = vunpack.c.h.b16 %v10388
    %v10771 = vunpack.c.l.b16 %v10389
    %v10772 = vunpack.c.h.b16 %v10389
    %v10773 = vunpack.c.l.b16 %v10390
    %v10774 = vunpack.c.h.b16 %v10390
    %v10775 = vunpack.c.l.b16 %v10391
    %v10776 = vunpack.c.h.b16 %v10391
    %v10777 = vunpack.c.l.b16 %v10392
    %v10778 = vunpack.c.h.b16 %v10392
    %v10779 = vunpack.c.l.b16 %v10393
    %v10780 = vunpack.c.h.b16 %v10393
    %v10781 = vunpack.c.l.b16 %v10394
    %v10782 = vunpack.c.h.b16 %v10394
    %v10783 = vunpack.c.l.b16 %v10395
    %v10784 = vunpack.c.h.b16 %v10395
    %v10785 = vunpack.c.l.b16 %v10396
    %v10786 = vunpack.c.h.b16 %v10396
    %v10787 = vunpack.c.l.b16 %v10397
    %v10788 = vunpack.c.h.b16 %v10397
    %v10789 = vunpack.c.l.b16 %v10398
    %v10790 = vunpack.c.h.b16 %v10398
    %v10791 = vunpack.c.l.b16 %v10399
    %v10792 = vunpack.c.h.b16 %v10399
    %v10793 = vunpack.c.l.b16 %v10400
    %v10794 = vunpack.c.h.b16 %v10400
    %v10795 = vunpack.c.l.b16 %v10401
    %v10796 = vunpack.c.h.b16 %v10401
    %v10797 = vunpack.c.l.b16 %v10402
    %v10798 = vunpack.c.h.b16 %v10402
    %v10799 = vunpack.c.l.b16 %v10403
    %v10800 = vunpack.c.h.b16 %v10403
    %v10801 = vunpack.c.l.b16 %v10404
    %v10802 = vunpack.c.h.b16 %v10404
    %v10803 = vunpack.c.l.b16 %v10405
    %v10804 = vunpack.c.h.b16 %v10405
    %v10805 = vunpack.c.l.b16 %v10406
    %v10806 = vunpack.c.h.b16 %v10406
    %v10807 = vunpack.c.l.b16 %v10407
    %v10808 = vunpack.c.h.b16 %v10407
    %v10809 = vunpack.c.l.b16 %v10408
    %v10810 = vunpack.c.h.b16 %v10408
    %v10811 = vunpack.c.l.b16 %v10409
    %v10812 = vunpack.c.h.b16 %v10409
    %v10813 = vunpack.c.l.b16 %v10410
    %v10814 = vunpack.c.h.b16 %v10410
    %v10815 = vunpack.c.l.b16 %v10411
    %v10816 = vunpack.c.h.b16 %v10411
    %v10817 = vunpack.c.l.b16 %v10412
    %v10818 = vunpack.c.h.b16 %v10412
    %v10819 = vpack.c.b16 %v10567, %v10563
    %v10820 = vpack.c.b16 %v10568, %v10564
    %v10821 = vpack.c.b16 %v10569, %v10565
    %v10822 = vpack.c.b16 %v10570, %v10566
    %v10823 = vpack.c.b16 %v10575, %v10571
    %v10824 = vpack.c.b16 %v10576, %v10572
    %v10825 = vpack.c.b16 %v10577, %v10573
    %v10826 = vpack.c.b16 %v10578, %v10574
    %v10827 = vpack.c.b16 %v10583, %v10579
    %v10828 = vpack.c.b16 %v10584, %v10580
    %v10829 = vpack.c.b16 %v10585, %v10581
    %v10830 = vpack.c.b16 %v10586, %v10582
    %v10831 = vpack.c.b16 %v10591, %v10587
    %v10832 = vpack.c.b16 %v10592, %v10588
    %v10833 = vpack.c.b16 %v10593, %v10589
    %v10834 = vpack.c.b16 %v10594, %v10590
    %v10835 = vpack.c.b16 %v10599, %v10595
    %v10836 = vpack.c.b16 %v10600, %v10596
    %v10837 = vpack.c.b16 %v10601, %v10597
    %v10838 = vpack.c.b16 %v10602, %v10598
    %v10839 = vpack.c.b16 %v10607, %v10603
    %v10840 = vpack.c.b16 %v10608, %v10604
    %v10841 = vpack.c.b16 %v10609, %v10605
    %v10842 = vpack.c.b16 %v10610, %v10606
    %v10843 = vpack.c.b16 %v10615, %v10611
    %v10844 = vpack.c.b16 %v10616, %v10612
    %v10845 = vpack.c.b16 %v10617, %v10613
    %v10846 = vpack.c.b16 %v10618, %v10614
    %v10847 = vpack.c.b16 %v10623, %v10619
    %v10848 = vpack.c.b16 %v10624, %v10620
    %v10849 = vpack.c.b16 %v10625, %v10621
    %v10850 = vpack.c.b16 %v10626, %v10622
    %v10851 = vpack.c.b16 %v10631, %v10627
    %v10852 = vpack.c.b16 %v10632, %v10628
    %v10853 = vpack.c.b16 %v10633, %v10629
    %v10854 = vpack.c.b16 %v10634, %v10630
    %v10855 = vpack.c.b16 %v10639, %v10635
    %v10856 = vpack.c.b16 %v10640, %v10636
    %v10857 = vpack.c.b16 %v10641, %v10637
    %v10858 = vpack.c.b16 %v10642, %v10638
    %v10859 = vpack.c.b16 %v10647, %v10643
    %v10860 = vpack.c.b16 %v10648, %v10644
    %v10861 = vpack.c.b16 %v10649, %v10645
    %v10862 = vpack.c.b16 %v10650, %v10646
    %v10863 = vpack.c.b16 %v10655, %v10651
    %v10864 = vpack.c.b16 %v10656, %v10652
    %v10865 = vpack.c.b16 %v10657, %v10653
    %v10866 = vpack.c.b16 %v10658, %v10654
    %v10867 = vpack.c.b16 %v10663, %v10659
    %v10868 = vpack.c.b16 %v10664, %v10660
    %v10869 = vpack.c.b16 %v10665, %v10661
    %v10870 = vpack.c.b16 %v10666, %v10662
    %v10871 = vpack.c.b16 %v10671, %v10667
    %v10872 = vpack.c.b16 %v10672, %v10668
    %v10873 = vpack.c.b16 %v10673, %v10669
    %v10874 = vpack.c.b16 %v10674, %v10670
    %v10875 = vpack.c.b16 %v10679, %v10675
    %v10876 = vpack.c.b16 %v10680, %v10676
    %v10877 = vpack.c.b16 %v10681, %v10677
    %v10878 = vpack.c.b16 %v10682, %v10678
    %v10879 = vpack.c.b16 %v10687, %v10683
    %v10880 = vpack.c.b16 %v10688, %v10684
    %v10881 = vpack.c.b16 %v10689, %v10685
    %v10882 = vpack.c.b16 %v10690, %v10686
    %v10883 = vpack.c.b16 %v10695, %v10691
    %v10884 = vpack.c.b16 %v10696, %v10692
    %v10885 = vpack.c.b16 %v10697, %v10693
    %v10886 = vpack.c.b16 %v10698, %v10694
    %v10887 = vpack.c.b16 %v10703, %v10699
    %v10888 = vpack.c.b16 %v10704, %v10700
    %v10889 = vpack.c.b16 %v10705, %v10701
    %v10890 = vpack.c.b16 %v10706, %v10702
    %v10891 = vpack.c.b16 %v10711, %v10707
    %v10892 = vpack.c.b16 %v10712, %v10708
    %v10893 = vpack.c.b16 %v10713, %v10709
    %v10894 = vpack.c.b16 %v10714, %v10710
    %v10895 = vpack.c.b16 %v10719, %v10715
    %v10896 = vpack.c.b16 %v10720, %v10716
    %v10897 = vpack.c.b16 %v10721, %v10717
    %v10898 = vpack.c.b16 %v10722, %v10718
    %v10899 = vpack.c.b16 %v10727, %v10723
    %v10900 = vpack.c.b16 %v10728, %v10724
    %v10901 = vpack.c.b16 %v10729, %v10725
    %v10902 = vpack.c.b16 %v10730, %v10726
    %v10903 = vpack.c.b16 %v10735, %v10731
    %v10904 = vpack.c.b16 %v10736, %v10732
    %v10905 = vpack.c.b16 %v10737, %v10733
    %v10906 = vpack.c.b16 %v10738, %v10734
    %v10907 = vpack.c.b16 %v10743, %v10739
    %v10908 = vpack.c.b16 %v10744, %v10740
    %v10909 = vpack.c.b16 %v10745, %v10741
    %v10910 = vpack.c.b16 %v10746, %v10742
    %v10911 = vpack.c.b16 %v10751, %v10747
    %v10912 = vpack.c.b16 %v10752, %v10748
    %v10913 = vpack.c.b16 %v10753, %v10749
    %v10914 = vpack.c.b16 %v10754, %v10750
    %v10915 = vpack.c.b16 %v10759, %v10755
    %v10916 = vpack.c.b16 %v10760, %v10756
    %v10917 = vpack.c.b16 %v10761, %v10757
    %v10918 = vpack.c.b16 %v10762, %v10758
    %v10919 = vpack.c.b16 %v10767, %v10763
    %v10920 = vpack.c.b16 %v10768, %v10764
    %v10921 = vpack.c.b16 %v10769, %v10765
    %v10922 = vpack.c.b16 %v10770, %v10766
    %v10923 = vpack.c.b16 %v10775, %v10771
    %v10924 = vpack.c.b16 %v10776, %v10772
    %v10925 = vpack.c.b16 %v10777, %v10773
    %v10926 = vpack.c.b16 %v10778, %v10774
    %v10927 = vpack.c.b16 %v10783, %v10779
    %v10928 = vpack.c.b16 %v10784, %v10780
    %v10929 = vpack.c.b16 %v10785, %v10781
    %v10930 = vpack.c.b16 %v10786, %v10782
    %v10931 = vpack.c.b16 %v10791, %v10787
    %v10932 = vpack.c.b16 %v10792, %v10788
    %v10933 = vpack.c.b16 %v10793, %v10789
    %v10934 = vpack.c.b16 %v10794, %v10790
    %v10935 = vpack.c.b16 %v10799, %v10795
    %v10936 = vpack.c.b16 %v10800, %v10796
    %v10937 = vpack.c.b16 %v10801, %v10797
    %v10938 = vpack.c.b16 %v10802, %v10798
    %v10939 = vpack.c.b16 %v10807, %v10803
    %v10940 = vpack.c.b16 %v10808, %v10804
    %v10941 = vpack.c.b16 %v10809, %v10805
    %v10942 = vpack.c.b16 %v10810, %v10806
    %v10943 = vpack.c.b16 %v10815, %v10811
    %v10944 = vpack.c.b16 %v10816, %v10812
    %v10945 = vpack.c.b16 %v10817, %v10813
    %v10946 = vpack.c.b16 %v10818, %v10814
    %11075 = vmatprep.subr.bf16.mxu0 %v10820
    %11076 = vmatpush1.bf16.msra.mxu0 %v10819
    %11077 = vmatprep.subr.bf16.mxu0 %v10824
    %11078 = vmatpush1.bf16.msra.mxu0 %v10823
    %11079 = vmatprep.subr.bf16.mxu0 %v10828
    %11080 = vmatpush1.bf16.msra.mxu0 %v10827
    %11081 = vmatprep.subr.bf16.mxu0 %v10832
    %11082 = vmatpush1.bf16.msra.mxu0 %v10831
    %11083 = vmatprep.subr.bf16.mxu0 %v10836
    %11084 = vmatpush1.bf16.msra.mxu0 %v10835
    %11085 = vmatprep.subr.bf16.mxu0 %v10840
    %11086 = vmatpush1.bf16.msra.mxu0 %v10839
    %11087 = vmatprep.subr.bf16.mxu0 %v10844
    %11088 = vmatpush1.bf16.msra.mxu0 %v10843
    %11089 = vmatprep.subr.bf16.mxu0 %v10848
    %11090 = vmatpush1.bf16.msra.mxu0 %v10847
    %11091 = vmatprep.subr.bf16.mxu0 %v10852
    %11092 = vmatpush1.bf16.msra.mxu0 %v10851
    %11093 = vmatprep.subr.bf16.mxu0 %v10856
    %11094 = vmatpush1.bf16.msra.mxu0 %v10855
    %11095 = vmatprep.subr.bf16.mxu0 %v10860
    %11096 = vmatpush1.bf16.msra.mxu0 %v10859
    %11097 = vmatprep.subr.bf16.mxu0 %v10864
    %11098 = vmatpush1.bf16.msra.mxu0 %v10863
    %11099 = vmatprep.subr.bf16.mxu0 %v10868
    %11100 = vmatpush1.bf16.msra.mxu0 %v10867
    %11101 = vmatprep.subr.bf16.mxu0 %v10872
    %11102 = vmatpush1.bf16.msra.mxu0 %v10871
    %11103 = vmatprep.subr.bf16.mxu0 %v10876
    %11104 = vmatpush1.bf16.msra.mxu0 %v10875
    %11105 = vmatprep.subr.bf16.mxu0 %v10880
    %11106 = vmatpush1.bf16.msra.mxu0 %v10879
    %11107 = vmatprep.mubr.bf16.mxu0 %v10282
    %11108 = vmatmul.mubr.bf16.gmra.mrb[0].mxu0 %v10281
    %v11109 = vpop.f32.mrb[0].mxu0
    %v11110 = vadd.f32 %v10418, %v11109
    %v11111 = vpop.f32.mrb[0].mxu0
    %v11112 = vadd.f32 %v10422, %v11111
    %v11113 = vpop.f32.mrb[0].mxu0
    %v11114 = vpop.f32.mrb[0].mxu0
    %11115 = vdwg.mxu0
    %11116 = vmatprep.subr.bf16.mxu0 %v10884
    %11117 = vmatpush1.bf16.msra.mxu0 %v10883
    %11118 = vmatprep.subr.bf16.mxu0 %v10888
    %11119 = vmatpush1.bf16.msra.mxu0 %v10887
    %11120 = vmatprep.subr.bf16.mxu0 %v10892
    %11121 = vmatpush1.bf16.msra.mxu0 %v10891
    %11122 = vmatprep.subr.bf16.mxu0 %v10896
    %11123 = vmatpush1.bf16.msra.mxu0 %v10895
    %11124 = vmatprep.subr.bf16.mxu0 %v10900
    %11125 = vmatpush1.bf16.msra.mxu0 %v10899
    %11126 = vmatprep.subr.bf16.mxu0 %v10904
    %11127 = vmatpush1.bf16.msra.mxu0 %v10903
    %11128 = vmatprep.subr.bf16.mxu0 %v10908
    %11129 = vmatpush1.bf16.msra.mxu0 %v10907
    %11130 = vmatprep.subr.bf16.mxu0 %v10912
    %11131 = vmatpush1.bf16.msra.mxu0 %v10911
    %11132 = vmatprep.subr.bf16.mxu0 %v10916
    %11133 = vmatpush1.bf16.msra.mxu0 %v10915
    %11134 = vmatprep.subr.bf16.mxu0 %v10920
    %11135 = vmatpush1.bf16.msra.mxu0 %v10919
    %11136 = vmatprep.subr.bf16.mxu0 %v10924
    %11137 = vmatpush1.bf16.msra.mxu0 %v10923
    %11138 = vmatprep.subr.bf16.mxu0 %v10928
    %11139 = vmatpush1.bf16.msra.mxu0 %v10927
    %11140 = vmatprep.subr.bf16.mxu0 %v10932
    %11141 = vmatpush1.bf16.msra.mxu0 %v10931
    %11142 = vmatprep.subr.bf16.mxu0 %v10936
    %11143 = vmatpush1.bf16.msra.mxu0 %v10935
    %11144 = vmatprep.subr.bf16.mxu0 %v10940
    %11145 = vmatpush1.bf16.msra.mxu0 %v10939
    %11146 = vmatprep.subr.bf16.mxu0 %v10944
    %11147 = vmatpush1.bf16.msra.mxu0 %v10943
    %11148 = vmatprep.mubr.bf16.mxu0 %v10284
    %11149 = vmatmul.mubr.bf16.gmra.mrb[0].mxu0 %v10283
    %v11150 = vpop.f32.mrb[0].mxu0
    %v11151 = vadd.f32 %v11110, %v11150
    %v11152 = vpop.f32.mrb[0].mxu0
    %v11153 = vadd.f32 %v11112, %v11152
    %v11154 = vpop.f32.mrb[0].mxu0
    %v11155 = vpop.f32.mrb[0].mxu0
    %11156 = vdwg.mxu0
    %11157 = vmatprep.subr.bf16.mxu0 %v10822
    %11158 = vmatpush1.bf16.msra.mxu0 %v10821
    %11159 = vmatprep.subr.bf16.mxu0 %v10826
    %11160 = vmatpush1.bf16.msra.mxu0 %v10825
    %11161 = vmatprep.subr.bf16.mxu0 %v10830
    %11162 = vmatpush1.bf16.msra.mxu0 %v10829
    %11163 = vmatprep.subr.bf16.mxu0 %v10834
    %11164 = vmatpush1.bf16.msra.mxu0 %v10833
    %11165 = vmatprep.subr.bf16.mxu0 %v10838
    %11166 = vmatpush1.bf16.msra.mxu0 %v10837
    %11167 = vmatprep.subr.bf16.mxu0 %v10842
    %11168 = vmatpush1.bf16.msra.mxu0 %v10841
    %11169 = vmatprep.subr.bf16.mxu0 %v10846
    %11170 = vmatpush1.bf16.msra.mxu0 %v10845
    %11171 = vmatprep.subr.bf16.mxu0 %v10850
    %11172 = vmatpush1.bf16.msra.mxu0 %v10849
    %11173 = vmatprep.subr.bf16.mxu0 %v10854
    %11174 = vmatpush1.bf16.msra.mxu0 %v10853
    %11175 = vmatprep.subr.bf16.mxu0 %v10858
    %11176 = vmatpush1.bf16.msra.mxu0 %v10857
    %11177 = vmatprep.subr.bf16.mxu0 %v10862
    %11178 = vmatpush1.bf16.msra.mxu0 %v10861
    %11179 = vmatprep.subr.bf16.mxu0 %v10866
    %11180 = vmatpush1.bf16.msra.mxu0 %v10865
    %11181 = vmatprep.subr.bf16.mxu0 %v10870
    %11182 = vmatpush1.bf16.msra.mxu0 %v10869
    %11183 = vmatprep.subr.bf16.mxu0 %v10874
    %11184 = vmatpush1.bf16.msra.mxu0 %v10873
    %11185 = vmatprep.subr.bf16.mxu0 %v10878
    %11186 = vmatpush1.bf16.msra.mxu0 %v10877
    %11187 = vmatprep.subr.bf16.mxu0 %v10882
    %11188 = vmatpush1.bf16.msra.mxu0 %v10881
    %11189 = vmatprep.mubr.bf16.mxu0 %v10282
    %11190 = vmatmul.mubr.bf16.gmra.mrb[0].mxu0 %v10281
    %v11191 = vpop.f32.mrb[0].mxu0
    %v11192 = vadd.f32 %v10426, %v11191
    %v11193 = vpop.f32.mrb[0].mxu0
    %v11194 = vadd.f32 %v10430, %v11193
    %v11195 = vpop.f32.mrb[0].mxu0
    %v11196 = vpop.f32.mrb[0].mxu0
    %11197 = vdwg.mxu0
    %11198 = vmatprep.subr.bf16.mxu0 %v10886
    %11199 = vmatpush1.bf16.msra.mxu0 %v10885
    %11200 = vmatprep.subr.bf16.mxu0 %v10890
    %11201 = vmatpush1.bf16.msra.mxu0 %v10889
    %11202 = vmatprep.subr.bf16.mxu0 %v10894
    %11203 = vmatpush1.bf16.msra.mxu0 %v10893
    %11204 = vmatprep.subr.bf16.mxu0 %v10898
    %11205 = vmatpush1.bf16.msra.mxu0 %v10897
    %11206 = vmatprep.subr.bf16.mxu0 %v10902
    %11207 = vmatpush1.bf16.msra.mxu0 %v10901
    %11208 = vmatprep.subr.bf16.mxu0 %v10906
    %11209 = vmatpush1.bf16.msra.mxu0 %v10905
    %11210 = vmatprep.subr.bf16.mxu0 %v10910
    %11211 = vmatpush1.bf16.msra.mxu0 %v10909
    %11212 = vmatprep.subr.bf16.mxu0 %v10914
    %11213 = vmatpush1.bf16.msra.mxu0 %v10913
    %11214 = vmatprep.subr.bf16.mxu0 %v10918
    %11215 = vmatpush1.bf16.msra.mxu0 %v10917
    %11216 = vmatprep.subr.bf16.mxu0 %v10922
    %11217 = vmatpush1.bf16.msra.mxu0 %v10921
    %11218 = vmatprep.subr.bf16.mxu0 %v10926
    %11219 = vmatpush1.bf16.msra.mxu0 %v10925
    %11220 = vmatprep.subr.bf16.mxu0 %v10930
    %11221 = vmatpush1.bf16.msra.mxu0 %v10929
    %11222 = vmatprep.subr.bf16.mxu0 %v10934
    %11223 = vmatpush1.bf16.msra.mxu0 %v10933
    %11224 = vmatprep.subr.bf16.mxu0 %v10938
    %11225 = vmatpush1.bf16.msra.mxu0 %v10937
    %11226 = vmatprep.subr.bf16.mxu0 %v10942
    %11227 = vmatpush1.bf16.msra.mxu0 %v10941
    %11228 = vmatprep.subr.bf16.mxu0 %v10946
    %11229 = vmatpush1.bf16.msra.mxu0 %v10945
    %11230 = vmatprep.mubr.bf16.mxu0 %v10284
    %11231 = vmatmul.mubr.bf16.gmra.mrb[0].mxu0 %v10283
    %v11232 = vpop.f32.mrb[0].mxu0
    %v11233 = vadd.f32 %v11192, %v11232
    %v11234 = vpop.f32.mrb[0].mxu0
    %v11235 = vadd.f32 %v11194, %v11234
    %v11236 = vpop.f32.mrb[0].mxu0
    %v11237 = vpop.f32.mrb[0].mxu0
    %11238 = vdwg.mxu0
    %v11239 = vpack.c.bf16 %v11151, %v11151
    %v11240 = vpack.c.bf16 %v11153, %v11153
    %v11241 = vpack.c.bf16 %v11233, %v11233
    %v11242 = vpack.c.bf16 %v11235, %v11235
    %v11243 = vmax.bf16 %v11239, 0
    %v11244 = vmax.bf16 %v11240, 0
    %v11245 = vmax.bf16 %v11241, 0
    %v11246 = vmax.bf16 %v11242, 0
    %v11247 = vadd.bf16 %v11243, %v8357
    %v11248 = vadd.bf16 %v11244, %v8358
    %v11249 = vadd.bf16 %v11245, %v8359
    %v11250 = vadd.bf16 %v11246, %v8360
    %v11251 = vld [vmem:[#allocation23] sm:$0xff]
    %v11252 = vld [vmem:[#allocation23 + $0x8] sm:$0xff]
    %v11253 = vld [vmem:[#allocation23 + $0x10] sm:$0xff]
    %v11254 = vld [vmem:[#allocation23 + $0x18] sm:$0xff]
    %v11255 = vld [vmem:[#allocation23 + $0x20] sm:$0xff]
    %v11256 = vld [vmem:[#allocation23 + $0x28] sm:$0xff]
    %v11257 = vld [vmem:[#allocation23 + $0x30] sm:$0xff]
    %v11258 = vld [vmem:[#allocation23 + $0x38] sm:$0xff]
    %v11259 = vld [vmem:[#allocation23 + $0x40] sm:$0xff]
    %v11260 = vld [vmem:[#allocation23 + $0x48] sm:$0xff]
    %v11261 = vld [vmem:[#allocation23 + $0x50] sm:$0xff]
    %v11262 = vld [vmem:[#allocation23 + $0x58] sm:$0xff]
    %v11263 = vld [vmem:[#allocation23 + $0x60] sm:$0xff]
    %v11264 = vld [vmem:[#allocation23 + $0x68] sm:$0xff]
    %v11265 = vld [vmem:[#allocation23 + $0x70] sm:$0xff]
    %v11266 = vld [vmem:[#allocation23 + $0x78] sm:$0xff]
    %v11267 = vld [vmem:[#allocation23 + $0x80] sm:$0xff]
    %v11268 = vld [vmem:[#allocation23 + $0x88] sm:$0xff]
    %v11269 = vld [vmem:[#allocation23 + $0x90] sm:$0xff]
    %v11270 = vld [vmem:[#allocation23 + $0x98] sm:$0xff]
    %v11271 = vld [vmem:[#allocation23 + $0xa0] sm:$0xff]
    %v11272 = vld [vmem:[#allocation23 + $0xa8] sm:$0xff]
    %v11273 = vld [vmem:[#allocation23 + $0xb0] sm:$0xff]
    %v11274 = vld [vmem:[#allocation23 + $0xb8] sm:$0xff]
    %v11275 = vld [vmem:[#allocation23 + $0xc0] sm:$0xff]
    %v11276 = vld [vmem:[#allocation23 + $0xc8] sm:$0xff]
    %v11277 = vld [vmem:[#allocation23 + $0xd0] sm:$0xff]
    %v11278 = vld [vmem:[#allocation23 + $0xd8] sm:$0xff]
    %v11279 = vld [vmem:[#allocation23 + $0xe0] sm:$0xff]
    %v11280 = vld [vmem:[#allocation23 + $0xe8] sm:$0xff]
    %v11281 = vld [vmem:[#allocation23 + $0xf0] sm:$0xff]
    %v11282 = vld [vmem:[#allocation23 + $0xf8] sm:$0xff]
    %v11283 = vld [vmem:[#allocation23 + $0x100] sm:$0xff]
    %v11284 = vld [vmem:[#allocation23 + $0x108] sm:$0xff]
    %v11285 = vld [vmem:[#allocation23 + $0x110] sm:$0xff]
    %v11286 = vld [vmem:[#allocation23 + $0x118] sm:$0xff]
    %v11287 = vld [vmem:[#allocation23 + $0x120] sm:$0xff]
    %v11288 = vld [vmem:[#allocation23 + $0x128] sm:$0xff]
    %v11289 = vld [vmem:[#allocation23 + $0x130] sm:$0xff]
    %v11290 = vld [vmem:[#allocation23 + $0x138] sm:$0xff]
    %v11291 = vld [vmem:[#allocation23 + $0x140] sm:$0xff]
    %v11292 = vld [vmem:[#allocation23 + $0x148] sm:$0xff]
    %v11293 = vld [vmem:[#allocation23 + $0x150] sm:$0xff]
    %v11294 = vld [vmem:[#allocation23 + $0x158] sm:$0xff]
    %v11295 = vld [vmem:[#allocation23 + $0x160] sm:$0xff]
    %v11296 = vld [vmem:[#allocation23 + $0x168] sm:$0xff]
    %v11297 = vld [vmem:[#allocation23 + $0x170] sm:$0xff]
    %v11298 = vld [vmem:[#allocation23 + $0x178] sm:$0xff]
    %v11299 = vld [vmem:[#allocation23 + $0x180] sm:$0xff]
    %v11300 = vld [vmem:[#allocation23 + $0x188] sm:$0xff]
    %v11301 = vld [vmem:[#allocation23 + $0x190] sm:$0xff]
    %v11302 = vld [vmem:[#allocation23 + $0x198] sm:$0xff]
    %v11303 = vld [vmem:[#allocation23 + $0x1a0] sm:$0xff]
    %v11304 = vld [vmem:[#allocation23 + $0x1a8] sm:$0xff]
    %v11305 = vld [vmem:[#allocation23 + $0x1b0] sm:$0xff]
    %v11306 = vld [vmem:[#allocation23 + $0x1b8] sm:$0xff]
    %v11307 = vld [vmem:[#allocation23 + $0x1c0] sm:$0xff]
    %v11308 = vld [vmem:[#allocation23 + $0x1c8] sm:$0xff]
    %v11309 = vld [vmem:[#allocation23 + $0x1d0] sm:$0xff]
    %v11310 = vld [vmem:[#allocation23 + $0x1d8] sm:$0xff]
    %v11311 = vld [vmem:[#allocation23 + $0x1e0] sm:$0xff]
    %v11312 = vld [vmem:[#allocation23 + $0x1e8] sm:$0xff]
    %v11313 = vld [vmem:[#allocation23 + $0x1f0] sm:$0xff]
    %v11314 = vld [vmem:[#allocation23 + $0x1f8] sm:$0xff]
    %v11315 = vld [vmem:[#allocation23 + $0x200] sm:$0xff]
    %v11316 = vld [vmem:[#allocation23 + $0x208] sm:$0xff]
    %v11317 = vld [vmem:[#allocation23 + $0x210] sm:$0xff]
    %v11318 = vld [vmem:[#allocation23 + $0x218] sm:$0xff]
    %v11319 = vld [vmem:[#allocation23 + $0x220] sm:$0xff]
    %v11320 = vld [vmem:[#allocation23 + $0x228] sm:$0xff]
    %v11321 = vld [vmem:[#allocation23 + $0x230] sm:$0xff]
    %v11322 = vld [vmem:[#allocation23 + $0x238] sm:$0xff]
    %v11323 = vld [vmem:[#allocation23 + $0x240] sm:$0xff]
    %v11324 = vld [vmem:[#allocation23 + $0x248] sm:$0xff]
    %v11325 = vld [vmem:[#allocation23 + $0x250] sm:$0xff]
    %v11326 = vld [vmem:[#allocation23 + $0x258] sm:$0xff]
    %v11327 = vld [vmem:[#allocation23 + $0x260] sm:$0xff]
    %v11328 = vld [vmem:[#allocation23 + $0x268] sm:$0xff]
    %v11329 = vld [vmem:[#allocation23 + $0x270] sm:$0xff]
    %v11330 = vld [vmem:[#allocation23 + $0x278] sm:$0xff]
    %v11331 = vld [vmem:[#allocation23 + $0x280] sm:$0xff]
    %v11332 = vld [vmem:[#allocation23 + $0x288] sm:$0xff]
    %v11333 = vld [vmem:[#allocation23 + $0x290] sm:$0xff]
    %v11334 = vld [vmem:[#allocation23 + $0x298] sm:$0xff]
    %v11335 = vld [vmem:[#allocation23 + $0x2a0] sm:$0xff]
    %v11336 = vld [vmem:[#allocation23 + $0x2a8] sm:$0xff]
    %v11337 = vld [vmem:[#allocation23 + $0x2b0] sm:$0xff]
    %v11338 = vld [vmem:[#allocation23 + $0x2b8] sm:$0xff]
    %v11339 = vld [vmem:[#allocation23 + $0x2c0] sm:$0xff]
    %v11340 = vld [vmem:[#allocation23 + $0x2c8] sm:$0xff]
    %v11341 = vld [vmem:[#allocation23 + $0x2d0] sm:$0xff]
    %v11342 = vld [vmem:[#allocation23 + $0x2d8] sm:$0xff]
    %v11343 = vld [vmem:[#allocation23 + $0x2e0] sm:$0xff]
    %v11344 = vld [vmem:[#allocation23 + $0x2e8] sm:$0xff]
    %v11345 = vld [vmem:[#allocation23 + $0x2f0] sm:$0xff]
    %v11346 = vld [vmem:[#allocation23 + $0x2f8] sm:$0xff]
    %v11347 = vld [vmem:[#allocation23 + $0x300] sm:$0xff]
    %v11348 = vld [vmem:[#allocation23 + $0x308] sm:$0xff]
    %v11349 = vld [vmem:[#allocation23 + $0x310] sm:$0xff]
    %v11350 = vld [vmem:[#allocation23 + $0x318] sm:$0xff]
    %v11351 = vld [vmem:[#allocation23 + $0x320] sm:$0xff]
    %v11352 = vld [vmem:[#allocation23 + $0x328] sm:$0xff]
    %v11353 = vld [vmem:[#allocation23 + $0x330] sm:$0xff]
    %v11354 = vld [vmem:[#allocation23 + $0x338] sm:$0xff]
    %v11355 = vld [vmem:[#allocation23 + $0x340] sm:$0xff]
    %v11356 = vld [vmem:[#allocation23 + $0x348] sm:$0xff]
    %v11357 = vld [vmem:[#allocation23 + $0x350] sm:$0xff]
    %v11358 = vld [vmem:[#allocation23 + $0x358] sm:$0xff]
    %v11359 = vld [vmem:[#allocation23 + $0x360] sm:$0xff]
    %v11360 = vld [vmem:[#allocation23 + $0x368] sm:$0xff]
    %v11361 = vld [vmem:[#allocation23 + $0x370] sm:$0xff]
    %v11362 = vld [vmem:[#allocation23 + $0x378] sm:$0xff]
    %v11363 = vld [vmem:[#allocation23 + $0x380] sm:$0xff]
    %v11364 = vld [vmem:[#allocation23 + $0x388] sm:$0xff]
    %v11365 = vld [vmem:[#allocation23 + $0x390] sm:$0xff]
    %v11366 = vld [vmem:[#allocation23 + $0x398] sm:$0xff]
    %v11367 = vld [vmem:[#allocation23 + $0x3a0] sm:$0xff]
    %v11368 = vld [vmem:[#allocation23 + $0x3a8] sm:$0xff]
    %v11369 = vld [vmem:[#allocation23 + $0x3b0] sm:$0xff]
    %v11370 = vld [vmem:[#allocation23 + $0x3b8] sm:$0xff]
    %v11371 = vld [vmem:[#allocation23 + $0x3c0] sm:$0xff]
    %v11372 = vld [vmem:[#allocation23 + $0x3c8] sm:$0xff]
    %v11373 = vld [vmem:[#allocation23 + $0x3d0] sm:$0xff]
    %v11374 = vld [vmem:[#allocation23 + $0x3d8] sm:$0xff]
    %v11375 = vld [vmem:[#allocation23 + $0x3e0] sm:$0xff]
    %v11376 = vld [vmem:[#allocation23 + $0x3e8] sm:$0xff]
    %v11377 = vld [vmem:[#allocation23 + $0x3f0] sm:$0xff]
    %v11378 = vld [vmem:[#allocation23 + $0x3f8] sm:$0xff]
    %v11379 = vld [vmem:[%s24] sm:$0xf]
    %v11381 = vlaneseq
    %v11382 = vshrl.u32 %v11381, 7
    %v11383 = vsub.s32 0, %v11382
    %v11384 = vrot.slane %v11379, %v11383
    %v11385 = vlaneseq
    %v11386 = vshrl.u32 %v11385, 7
    %v11387 = vsub.s32 1, %v11386
    %v11388 = vrot.slane %v11379, %v11387
    %v11389 = vlaneseq
    %v11390 = vshrl.u32 %v11389, 7
    %v11391 = vsub.s32 2, %v11390
    %v11392 = vrot.slane %v11379, %v11391
    %v11393 = vlaneseq
    %v11394 = vshrl.u32 %v11393, 7
    %v11395 = vsub.s32 3, %v11394
    %v11396 = vrot.slane %v11379, %v11395
    %v11529 = vunpack.c.l.b16 %v11251
    %v11530 = vunpack.c.h.b16 %v11251
    %v11531 = vunpack.c.l.b16 %v11252
    %v11532 = vunpack.c.h.b16 %v11252
    %v11533 = vunpack.c.l.b16 %v11253
    %v11534 = vunpack.c.h.b16 %v11253
    %v11535 = vunpack.c.l.b16 %v11254
    %v11536 = vunpack.c.h.b16 %v11254
    %v11537 = vunpack.c.l.b16 %v11255
    %v11538 = vunpack.c.h.b16 %v11255
    %v11539 = vunpack.c.l.b16 %v11256
    %v11540 = vunpack.c.h.b16 %v11256
    %v11541 = vunpack.c.l.b16 %v11257
    %v11542 = vunpack.c.h.b16 %v11257
    %v11543 = vunpack.c.l.b16 %v11258
    %v11544 = vunpack.c.h.b16 %v11258
    %v11545 = vunpack.c.l.b16 %v11259
    %v11546 = vunpack.c.h.b16 %v11259
    %v11547 = vunpack.c.l.b16 %v11260
    %v11548 = vunpack.c.h.b16 %v11260
    %v11549 = vunpack.c.l.b16 %v11261
    %v11550 = vunpack.c.h.b16 %v11261
    %v11551 = vunpack.c.l.b16 %v11262
    %v11552 = vunpack.c.h.b16 %v11262
    %v11553 = vunpack.c.l.b16 %v11263
    %v11554 = vunpack.c.h.b16 %v11263
    %v11555 = vunpack.c.l.b16 %v11264
    %v11556 = vunpack.c.h.b16 %v11264
    %v11557 = vunpack.c.l.b16 %v11265
    %v11558 = vunpack.c.h.b16 %v11265
    %v11559 = vunpack.c.l.b16 %v11266
    %v11560 = vunpack.c.h.b16 %v11266
    %v11561 = vunpack.c.l.b16 %v11267
    %v11562 = vunpack.c.h.b16 %v11267
    %v11563 = vunpack.c.l.b16 %v11268
    %v11564 = vunpack.c.h.b16 %v11268
    %v11565 = vunpack.c.l.b16 %v11269
    %v11566 = vunpack.c.h.b16 %v11269
    %v11567 = vunpack.c.l.b16 %v11270
    %v11568 = vunpack.c.h.b16 %v11270
    %v11569 = vunpack.c.l.b16 %v11271
    %v11570 = vunpack.c.h.b16 %v11271
    %v11571 = vunpack.c.l.b16 %v11272
    %v11572 = vunpack.c.h.b16 %v11272
    %v11573 = vunpack.c.l.b16 %v11273
    %v11574 = vunpack.c.h.b16 %v11273
    %v11575 = vunpack.c.l.b16 %v11274
    %v11576 = vunpack.c.h.b16 %v11274
    %v11577 = vunpack.c.l.b16 %v11275
    %v11578 = vunpack.c.h.b16 %v11275
    %v11579 = vunpack.c.l.b16 %v11276
    %v11580 = vunpack.c.h.b16 %v11276
    %v11581 = vunpack.c.l.b16 %v11277
    %v11582 = vunpack.c.h.b16 %v11277
    %v11583 = vunpack.c.l.b16 %v11278
    %v11584 = vunpack.c.h.b16 %v11278
    %v11585 = vunpack.c.l.b16 %v11279
    %v11586 = vunpack.c.h.b16 %v11279
    %v11587 = vunpack.c.l.b16 %v11280
    %v11588 = vunpack.c.h.b16 %v11280
    %v11589 = vunpack.c.l.b16 %v11281
    %v11590 = vunpack.c.h.b16 %v11281
    %v11591 = vunpack.c.l.b16 %v11282
    %v11592 = vunpack.c.h.b16 %v11282
    %v11593 = vunpack.c.l.b16 %v11283
    %v11594 = vunpack.c.h.b16 %v11283
    %v11595 = vunpack.c.l.b16 %v11284
    %v11596 = vunpack.c.h.b16 %v11284
    %v11597 = vunpack.c.l.b16 %v11285
    %v11598 = vunpack.c.h.b16 %v11285
    %v11599 = vunpack.c.l.b16 %v11286
    %v11600 = vunpack.c.h.b16 %v11286
    %v11601 = vunpack.c.l.b16 %v11287
    %v11602 = vunpack.c.h.b16 %v11287
    %v11603 = vunpack.c.l.b16 %v11288
    %v11604 = vunpack.c.h.b16 %v11288
    %v11605 = vunpack.c.l.b16 %v11289
    %v11606 = vunpack.c.h.b16 %v11289
    %v11607 = vunpack.c.l.b16 %v11290
    %v11608 = vunpack.c.h.b16 %v11290
    %v11609 = vunpack.c.l.b16 %v11291
    %v11610 = vunpack.c.h.b16 %v11291
    %v11611 = vunpack.c.l.b16 %v11292
    %v11612 = vunpack.c.h.b16 %v11292
    %v11613 = vunpack.c.l.b16 %v11293
    %v11614 = vunpack.c.h.b16 %v11293
    %v11615 = vunpack.c.l.b16 %v11294
    %v11616 = vunpack.c.h.b16 %v11294
    %v11617 = vunpack.c.l.b16 %v11295
    %v11618 = vunpack.c.h.b16 %v11295
    %v11619 = vunpack.c.l.b16 %v11296
    %v11620 = vunpack.c.h.b16 %v11296
    %v11621 = vunpack.c.l.b16 %v11297
    %v11622 = vunpack.c.h.b16 %v11297
    %v11623 = vunpack.c.l.b16 %v11298
    %v11624 = vunpack.c.h.b16 %v11298
    %v11625 = vunpack.c.l.b16 %v11299
    %v11626 = vunpack.c.h.b16 %v11299
    %v11627 = vunpack.c.l.b16 %v11300
    %v11628 = vunpack.c.h.b16 %v11300
    %v11629 = vunpack.c.l.b16 %v11301
    %v11630 = vunpack.c.h.b16 %v11301
    %v11631 = vunpack.c.l.b16 %v11302
    %v11632 = vunpack.c.h.b16 %v11302
    %v11633 = vunpack.c.l.b16 %v11303
    %v11634 = vunpack.c.h.b16 %v11303
    %v11635 = vunpack.c.l.b16 %v11304
    %v11636 = vunpack.c.h.b16 %v11304
    %v11637 = vunpack.c.l.b16 %v11305
    %v11638 = vunpack.c.h.b16 %v11305
    %v11639 = vunpack.c.l.b16 %v11306
    %v11640 = vunpack.c.h.b16 %v11306
    %v11641 = vunpack.c.l.b16 %v11307
    %v11642 = vunpack.c.h.b16 %v11307
    %v11643 = vunpack.c.l.b16 %v11308
    %v11644 = vunpack.c.h.b16 %v11308
    %v11645 = vunpack.c.l.b16 %v11309
    %v11646 = vunpack.c.h.b16 %v11309
    %v11647 = vunpack.c.l.b16 %v11310
    %v11648 = vunpack.c.h.b16 %v11310
    %v11649 = vunpack.c.l.b16 %v11311
    %v11650 = vunpack.c.h.b16 %v11311
    %v11651 = vunpack.c.l.b16 %v11312
    %v11652 = vunpack.c.h.b16 %v11312
    %v11653 = vunpack.c.l.b16 %v11313
    %v11654 = vunpack.c.h.b16 %v11313
    %v11655 = vunpack.c.l.b16 %v11314
    %v11656 = vunpack.c.h.b16 %v11314
    %v11657 = vunpack.c.l.b16 %v11315
    %v11658 = vunpack.c.h.b16 %v11315
    %v11659 = vunpack.c.l.b16 %v11316
    %v11660 = vunpack.c.h.b16 %v11316
    %v11661 = vunpack.c.l.b16 %v11317
    %v11662 = vunpack.c.h.b16 %v11317
    %v11663 = vunpack.c.l.b16 %v11318
    %v11664 = vunpack.c.h.b16 %v11318
    %v11665 = vunpack.c.l.b16 %v11319
    %v11666 = vunpack.c.h.b16 %v11319
    %v11667 = vunpack.c.l.b16 %v11320
    %v11668 = vunpack.c.h.b16 %v11320
    %v11669 = vunpack.c.l.b16 %v11321
    %v11670 = vunpack.c.h.b16 %v11321
    %v11671 = vunpack.c.l.b16 %v11322
    %v11672 = vunpack.c.h.b16 %v11322
    %v11673 = vunpack.c.l.b16 %v11323
    %v11674 = vunpack.c.h.b16 %v11323
    %v11675 = vunpack.c.l.b16 %v11324
    %v11676 = vunpack.c.h.b16 %v11324
    %v11677 = vunpack.c.l.b16 %v11325
    %v11678 = vunpack.c.h.b16 %v11325
    %v11679 = vunpack.c.l.b16 %v11326
    %v11680 = vunpack.c.h.b16 %v11326
    %v11681 = vunpack.c.l.b16 %v11327
    %v11682 = vunpack.c.h.b16 %v11327
    %v11683 = vunpack.c.l.b16 %v11328
    %v11684 = vunpack.c.h.b16 %v11328
    %v11685 = vunpack.c.l.b16 %v11329
    %v11686 = vunpack.c.h.b16 %v11329
    %v11687 = vunpack.c.l.b16 %v11330
    %v11688 = vunpack.c.h.b16 %v11330
    %v11689 = vunpack.c.l.b16 %v11331
    %v11690 = vunpack.c.h.b16 %v11331
    %v11691 = vunpack.c.l.b16 %v11332
    %v11692 = vunpack.c.h.b16 %v11332
    %v11693 = vunpack.c.l.b16 %v11333
    %v11694 = vunpack.c.h.b16 %v11333
    %v11695 = vunpack.c.l.b16 %v11334
    %v11696 = vunpack.c.h.b16 %v11334
    %v11697 = vunpack.c.l.b16 %v11335
    %v11698 = vunpack.c.h.b16 %v11335
    %v11699 = vunpack.c.l.b16 %v11336
    %v11700 = vunpack.c.h.b16 %v11336
    %v11701 = vunpack.c.l.b16 %v11337
    %v11702 = vunpack.c.h.b16 %v11337
    %v11703 = vunpack.c.l.b16 %v11338
    %v11704 = vunpack.c.h.b16 %v11338
    %v11705 = vunpack.c.l.b16 %v11339
    %v11706 = vunpack.c.h.b16 %v11339
    %v11707 = vunpack.c.l.b16 %v11340
    %v11708 = vunpack.c.h.b16 %v11340
    %v11709 = vunpack.c.l.b16 %v11341
    %v11710 = vunpack.c.h.b16 %v11341
    %v11711 = vunpack.c.l.b16 %v11342
    %v11712 = vunpack.c.h.b16 %v11342
    %v11713 = vunpack.c.l.b16 %v11343
    %v11714 = vunpack.c.h.b16 %v11343
    %v11715 = vunpack.c.l.b16 %v11344
    %v11716 = vunpack.c.h.b16 %v11344
    %v11717 = vunpack.c.l.b16 %v11345
    %v11718 = vunpack.c.h.b16 %v11345
    %v11719 = vunpack.c.l.b16 %v11346
    %v11720 = vunpack.c.h.b16 %v11346
    %v11721 = vunpack.c.l.b16 %v11347
    %v11722 = vunpack.c.h.b16 %v11347
    %v11723 = vunpack.c.l.b16 %v11348
    %v11724 = vunpack.c.h.b16 %v11348
    %v11725 = vunpack.c.l.b16 %v11349
    %v11726 = vunpack.c.h.b16 %v11349
    %v11727 = vunpack.c.l.b16 %v11350
    %v11728 = vunpack.c.h.b16 %v11350
    %v11729 = vunpack.c.l.b16 %v11351
    %v11730 = vunpack.c.h.b16 %v11351
    %v11731 = vunpack.c.l.b16 %v11352
    %v11732 = vunpack.c.h.b16 %v11352
    %v11733 = vunpack.c.l.b16 %v11353
    %v11734 = vunpack.c.h.b16 %v11353
    %v11735 = vunpack.c.l.b16 %v11354
    %v11736 = vunpack.c.h.b16 %v11354
    %v11737 = vunpack.c.l.b16 %v11355
    %v11738 = vunpack.c.h.b16 %v11355
    %v11739 = vunpack.c.l.b16 %v11356
    %v11740 = vunpack.c.h.b16 %v11356
    %v11741 = vunpack.c.l.b16 %v11357
    %v11742 = vunpack.c.h.b16 %v11357
    %v11743 = vunpack.c.l.b16 %v11358
    %v11744 = vunpack.c.h.b16 %v11358
    %v11745 = vunpack.c.l.b16 %v11359
    %v11746 = vunpack.c.h.b16 %v11359
    %v11747 = vunpack.c.l.b16 %v11360
    %v11748 = vunpack.c.h.b16 %v11360
    %v11749 = vunpack.c.l.b16 %v11361
    %v11750 = vunpack.c.h.b16 %v11361
    %v11751 = vunpack.c.l.b16 %v11362
    %v11752 = vunpack.c.h.b16 %v11362
    %v11753 = vunpack.c.l.b16 %v11363
    %v11754 = vunpack.c.h.b16 %v11363
    %v11755 = vunpack.c.l.b16 %v11364
    %v11756 = vunpack.c.h.b16 %v11364
    %v11757 = vunpack.c.l.b16 %v11365
    %v11758 = vunpack.c.h.b16 %v11365
    %v11759 = vunpack.c.l.b16 %v11366
    %v11760 = vunpack.c.h.b16 %v11366
    %v11761 = vunpack.c.l.b16 %v11367
    %v11762 = vunpack.c.h.b16 %v11367
    %v11763 = vunpack.c.l.b16 %v11368
    %v11764 = vunpack.c.h.b16 %v11368
    %v11765 = vunpack.c.l.b16 %v11369
    %v11766 = vunpack.c.h.b16 %v11369
    %v11767 = vunpack.c.l.b16 %v11370
    %v11768 = vunpack.c.h.b16 %v11370
    %v11769 = vunpack.c.l.b16 %v11371
    %v11770 = vunpack.c.h.b16 %v11371
    %v11771 = vunpack.c.l.b16 %v11372
    %v11772 = vunpack.c.h.b16 %v11372
    %v11773 = vunpack.c.l.b16 %v11373
    %v11774 = vunpack.c.h.b16 %v11373
    %v11775 = vunpack.c.l.b16 %v11374
    %v11776 = vunpack.c.h.b16 %v11374
    %v11777 = vunpack.c.l.b16 %v11375
    %v11778 = vunpack.c.h.b16 %v11375
    %v11779 = vunpack.c.l.b16 %v11376
    %v11780 = vunpack.c.h.b16 %v11376
    %v11781 = vunpack.c.l.b16 %v11377
    %v11782 = vunpack.c.h.b16 %v11377
    %v11783 = vunpack.c.l.b16 %v11378
    %v11784 = vunpack.c.h.b16 %v11378
    %v11785 = vpack.c.b16 %v11533, %v11529
    %v11786 = vpack.c.b16 %v11534, %v11530
    %v11787 = vpack.c.b16 %v11535, %v11531
    %v11788 = vpack.c.b16 %v11536, %v11532
    %v11789 = vpack.c.b16 %v11541, %v11537
    %v11790 = vpack.c.b16 %v11542, %v11538
    %v11791 = vpack.c.b16 %v11543, %v11539
    %v11792 = vpack.c.b16 %v11544, %v11540
    %v11793 = vpack.c.b16 %v11549, %v11545
    %v11794 = vpack.c.b16 %v11550, %v11546
    %v11795 = vpack.c.b16 %v11551, %v11547
    %v11796 = vpack.c.b16 %v11552, %v11548
    %v11797 = vpack.c.b16 %v11557, %v11553
    %v11798 = vpack.c.b16 %v11558, %v11554
    %v11799 = vpack.c.b16 %v11559, %v11555
    %v11800 = vpack.c.b16 %v11560, %v11556
    %v11801 = vpack.c.b16 %v11565, %v11561
    %v11802 = vpack.c.b16 %v11566, %v11562
    %v11803 = vpack.c.b16 %v11567, %v11563
    %v11804 = vpack.c.b16 %v11568, %v11564
    %v11805 = vpack.c.b16 %v11573, %v11569
    %v11806 = vpack.c.b16 %v11574, %v11570
    %v11807 = vpack.c.b16 %v11575, %v11571
    %v11808 = vpack.c.b16 %v11576, %v11572
    %v11809 = vpack.c.b16 %v11581, %v11577
    %v11810 = vpack.c.b16 %v11582, %v11578
    %v11811 = vpack.c.b16 %v11583, %v11579
    %v11812 = vpack.c.b16 %v11584, %v11580
    %v11813 = vpack.c.b16 %v11589, %v11585
    %v11814 = vpack.c.b16 %v11590, %v11586
    %v11815 = vpack.c.b16 %v11591, %v11587
    %v11816 = vpack.c.b16 %v11592, %v11588
    %v11817 = vpack.c.b16 %v11597, %v11593
    %v11818 = vpack.c.b16 %v11598, %v11594
    %v11819 = vpack.c.b16 %v11599, %v11595
    %v11820 = vpack.c.b16 %v11600, %v11596
    %v11821 = vpack.c.b16 %v11605, %v11601
    %v11822 = vpack.c.b16 %v11606, %v11602
    %v11823 = vpack.c.b16 %v11607, %v11603
    %v11824 = vpack.c.b16 %v11608, %v11604
    %v11825 = vpack.c.b16 %v11613, %v11609
    %v11826 = vpack.c.b16 %v11614, %v11610
    %v11827 = vpack.c.b16 %v11615, %v11611
    %v11828 = vpack.c.b16 %v11616, %v11612
    %v11829 = vpack.c.b16 %v11621, %v11617
    %v11830 = vpack.c.b16 %v11622, %v11618
    %v11831 = vpack.c.b16 %v11623, %v11619
    %v11832 = vpack.c.b16 %v11624, %v11620
    %v11833 = vpack.c.b16 %v11629, %v11625
    %v11834 = vpack.c.b16 %v11630, %v11626
    %v11835 = vpack.c.b16 %v11631, %v11627
    %v11836 = vpack.c.b16 %v11632, %v11628
    %v11837 = vpack.c.b16 %v11637, %v11633
    %v11838 = vpack.c.b16 %v11638, %v11634
    %v11839 = vpack.c.b16 %v11639, %v11635
    %v11840 = vpack.c.b16 %v11640, %v11636
    %v11841 = vpack.c.b16 %v11645, %v11641
    %v11842 = vpack.c.b16 %v11646, %v11642
    %v11843 = vpack.c.b16 %v11647, %v11643
    %v11844 = vpack.c.b16 %v11648, %v11644
    %v11845 = vpack.c.b16 %v11653, %v11649
    %v11846 = vpack.c.b16 %v11654, %v11650
    %v11847 = vpack.c.b16 %v11655, %v11651
    %v11848 = vpack.c.b16 %v11656, %v11652
    %v11849 = vpack.c.b16 %v11661, %v11657
    %v11850 = vpack.c.b16 %v11662, %v11658
    %v11851 = vpack.c.b16 %v11663, %v11659
    %v11852 = vpack.c.b16 %v11664, %v11660
    %v11853 = vpack.c.b16 %v11669, %v11665
    %v11854 = vpack.c.b16 %v11670, %v11666
    %v11855 = vpack.c.b16 %v11671, %v11667
    %v11856 = vpack.c.b16 %v11672, %v11668
    %v11857 = vpack.c.b16 %v11677, %v11673
    %v11858 = vpack.c.b16 %v11678, %v11674
    %v11859 = vpack.c.b16 %v11679, %v11675
    %v11860 = vpack.c.b16 %v11680, %v11676
    %v11861 = vpack.c.b16 %v11685, %v11681
    %v11862 = vpack.c.b16 %v11686, %v11682
    %v11863 = vpack.c.b16 %v11687, %v11683
    %v11864 = vpack.c.b16 %v11688, %v11684
    %v11865 = vpack.c.b16 %v11693, %v11689
    %v11866 = vpack.c.b16 %v11694, %v11690
    %v11867 = vpack.c.b16 %v11695, %v11691
    %v11868 = vpack.c.b16 %v11696, %v11692
    %v11869 = vpack.c.b16 %v11701, %v11697
    %v11870 = vpack.c.b16 %v11702, %v11698
    %v11871 = vpack.c.b16 %v11703, %v11699
    %v11872 = vpack.c.b16 %v11704, %v11700
    %v11873 = vpack.c.b16 %v11709, %v11705
    %v11874 = vpack.c.b16 %v11710, %v11706
    %v11875 = vpack.c.b16 %v11711, %v11707
    %v11876 = vpack.c.b16 %v11712, %v11708
    %v11877 = vpack.c.b16 %v11717, %v11713
    %v11878 = vpack.c.b16 %v11718, %v11714
    %v11879 = vpack.c.b16 %v11719, %v11715
    %v11880 = vpack.c.b16 %v11720, %v11716
    %v11881 = vpack.c.b16 %v11725, %v11721
    %v11882 = vpack.c.b16 %v11726, %v11722
    %v11883 = vpack.c.b16 %v11727, %v11723
    %v11884 = vpack.c.b16 %v11728, %v11724
    %v11885 = vpack.c.b16 %v11733, %v11729
    %v11886 = vpack.c.b16 %v11734, %v11730
    %v11887 = vpack.c.b16 %v11735, %v11731
    %v11888 = vpack.c.b16 %v11736, %v11732
    %v11889 = vpack.c.b16 %v11741, %v11737
    %v11890 = vpack.c.b16 %v11742, %v11738
    %v11891 = vpack.c.b16 %v11743, %v11739
    %v11892 = vpack.c.b16 %v11744, %v11740
    %v11893 = vpack.c.b16 %v11749, %v11745
    %v11894 = vpack.c.b16 %v11750, %v11746
    %v11895 = vpack.c.b16 %v11751, %v11747
    %v11896 = vpack.c.b16 %v11752, %v11748
    %v11897 = vpack.c.b16 %v11757, %v11753
    %v11898 = vpack.c.b16 %v11758, %v11754
    %v11899 = vpack.c.b16 %v11759, %v11755
    %v11900 = vpack.c.b16 %v11760, %v11756
    %v11901 = vpack.c.b16 %v11765, %v11761
    %v11902 = vpack.c.b16 %v11766, %v11762
    %v11903 = vpack.c.b16 %v11767, %v11763
    %v11904 = vpack.c.b16 %v11768, %v11764
    %v11905 = vpack.c.b16 %v11773, %v11769
    %v11906 = vpack.c.b16 %v11774, %v11770
    %v11907 = vpack.c.b16 %v11775, %v11771
    %v11908 = vpack.c.b16 %v11776, %v11772
    %v11909 = vpack.c.b16 %v11781, %v11777
    %v11910 = vpack.c.b16 %v11782, %v11778
    %v11911 = vpack.c.b16 %v11783, %v11779
    %v11912 = vpack.c.b16 %v11784, %v11780
    %12041 = vmatprep.subr.bf16.mxu0 %v11786
    %12042 = vmatpush1.bf16.msra.mxu0 %v11785
    %12043 = vmatprep.subr.bf16.mxu0 %v11790
    %12044 = vmatpush1.bf16.msra.mxu0 %v11789
    %12045 = vmatprep.subr.bf16.mxu0 %v11794
    %12046 = vmatpush1.bf16.msra.mxu0 %v11793
    %12047 = vmatprep.subr.bf16.mxu0 %v11798
    %12048 = vmatpush1.bf16.msra.mxu0 %v11797
    %12049 = vmatprep.subr.bf16.mxu0 %v11802
    %12050 = vmatpush1.bf16.msra.mxu0 %v11801
    %12051 = vmatprep.subr.bf16.mxu0 %v11806
    %12052 = vmatpush1.bf16.msra.mxu0 %v11805
    %12053 = vmatprep.subr.bf16.mxu0 %v11810
    %12054 = vmatpush1.bf16.msra.mxu0 %v11809
    %12055 = vmatprep.subr.bf16.mxu0 %v11814
    %12056 = vmatpush1.bf16.msra.mxu0 %v11813
    %12057 = vmatprep.subr.bf16.mxu0 %v11818
    %12058 = vmatpush1.bf16.msra.mxu0 %v11817
    %12059 = vmatprep.subr.bf16.mxu0 %v11822
    %12060 = vmatpush1.bf16.msra.mxu0 %v11821
    %12061 = vmatprep.subr.bf16.mxu0 %v11826
    %12062 = vmatpush1.bf16.msra.mxu0 %v11825
    %12063 = vmatprep.subr.bf16.mxu0 %v11830
    %12064 = vmatpush1.bf16.msra.mxu0 %v11829
    %12065 = vmatprep.subr.bf16.mxu0 %v11834
    %12066 = vmatpush1.bf16.msra.mxu0 %v11833
    %12067 = vmatprep.subr.bf16.mxu0 %v11838
    %12068 = vmatpush1.bf16.msra.mxu0 %v11837
    %12069 = vmatprep.subr.bf16.mxu0 %v11842
    %12070 = vmatpush1.bf16.msra.mxu0 %v11841
    %12071 = vmatprep.subr.bf16.mxu0 %v11846
    %12072 = vmatpush1.bf16.msra.mxu0 %v11845
    %12073 = vmatprep.mubr.bf16.mxu0 %v11248
    %12074 = vmatmul.mubr.bf16.gmra.mrb[0].mxu0 %v11247
    %v12075 = vpop.f32.mrb[0].mxu0
    %v12076 = vadd.f32 %v11384, %v12075
    %v12077 = vpop.f32.mrb[0].mxu0
    %v12078 = vadd.f32 %v11388, %v12077
    %v12079 = vpop.f32.mrb[0].mxu0
    %v12080 = vpop.f32.mrb[0].mxu0
    %12081 = vdwg.mxu0
    %12082 = vmatprep.subr.bf16.mxu0 %v11850
    %12083 = vmatpush1.bf16.msra.mxu0 %v11849
    %12084 = vmatprep.subr.bf16.mxu0 %v11854
    %12085 = vmatpush1.bf16.msra.mxu0 %v11853
    %12086 = vmatprep.subr.bf16.mxu0 %v11858
    %12087 = vmatpush1.bf16.msra.mxu0 %v11857
    %12088 = vmatprep.subr.bf16.mxu0 %v11862
    %12089 = vmatpush1.bf16.msra.mxu0 %v11861
    %12090 = vmatprep.subr.bf16.mxu0 %v11866
    %12091 = vmatpush1.bf16.msra.mxu0 %v11865
    %12092 = vmatprep.subr.bf16.mxu0 %v11870
    %12093 = vmatpush1.bf16.msra.mxu0 %v11869
    %12094 = vmatprep.subr.bf16.mxu0 %v11874
    %12095 = vmatpush1.bf16.msra.mxu0 %v11873
    %12096 = vmatprep.subr.bf16.mxu0 %v11878
    %12097 = vmatpush1.bf16.msra.mxu0 %v11877
    %12098 = vmatprep.subr.bf16.mxu0 %v11882
    %12099 = vmatpush1.bf16.msra.mxu0 %v11881
    %12100 = vmatprep.subr.bf16.mxu0 %v11886
    %12101 = vmatpush1.bf16.msra.mxu0 %v11885
    %12102 = vmatprep.subr.bf16.mxu0 %v11890
    %12103 = vmatpush1.bf16.msra.mxu0 %v11889
    %12104 = vmatprep.subr.bf16.mxu0 %v11894
    %12105 = vmatpush1.bf16.msra.mxu0 %v11893
    %12106 = vmatprep.subr.bf16.mxu0 %v11898
    %12107 = vmatpush1.bf16.msra.mxu0 %v11897
    %12108 = vmatprep.subr.bf16.mxu0 %v11902
    %12109 = vmatpush1.bf16.msra.mxu0 %v11901
    %12110 = vmatprep.subr.bf16.mxu0 %v11906
    %12111 = vmatpush1.bf16.msra.mxu0 %v11905
    %12112 = vmatprep.subr.bf16.mxu0 %v11910
    %12113 = vmatpush1.bf16.msra.mxu0 %v11909
    %12114 = vmatprep.mubr.bf16.mxu0 %v11250
    %12115 = vmatmul.mubr.bf16.gmra.mrb[0].mxu0 %v11249
    %v12116 = vpop.f32.mrb[0].mxu0
    %v12117 = vadd.f32 %v12076, %v12116
    %v12118 = vpop.f32.mrb[0].mxu0
    %v12119 = vadd.f32 %v12078, %v12118
    %v12120 = vpop.f32.mrb[0].mxu0
    %v12121 = vpop.f32.mrb[0].mxu0
    %12122 = vdwg.mxu0
    %12123 = vmatprep.subr.bf16.mxu0 %v11788
    %12124 = vmatpush1.bf16.msra.mxu0 %v11787
    %12125 = vmatprep.subr.bf16.mxu0 %v11792
    %12126 = vmatpush1.bf16.msra.mxu0 %v11791
    %12127 = vmatprep.subr.bf16.mxu0 %v11796
    %12128 = vmatpush1.bf16.msra.mxu0 %v11795
    %12129 = vmatprep.subr.bf16.mxu0 %v11800
    %12130 = vmatpush1.bf16.msra.mxu0 %v11799
    %12131 = vmatprep.subr.bf16.mxu0 %v11804
    %12132 = vmatpush1.bf16.msra.mxu0 %v11803
    %12133 = vmatprep.subr.bf16.mxu0 %v11808
    %12134 = vmatpush1.bf16.msra.mxu0 %v11807
    %12135 = vmatprep.subr.bf16.mxu0 %v11812
    %12136 = vmatpush1.bf16.msra.mxu0 %v11811
    %12137 = vmatprep.subr.bf16.mxu0 %v11816
    %12138 = vmatpush1.bf16.msra.mxu0 %v11815
    %12139 = vmatprep.subr.bf16.mxu0 %v11820
    %12140 = vmatpush1.bf16.msra.mxu0 %v11819
    %12141 = vmatprep.subr.bf16.mxu0 %v11824
    %12142 = vmatpush1.bf16.msra.mxu0 %v11823
    %12143 = vmatprep.subr.bf16.mxu0 %v11828
    %12144 = vmatpush1.bf16.msra.mxu0 %v11827
    %12145 = vmatprep.subr.bf16.mxu0 %v11832
    %12146 = vmatpush1.bf16.msra.mxu0 %v11831
    %12147 = vmatprep.subr.bf16.mxu0 %v11836
    %12148 = vmatpush1.bf16.msra.mxu0 %v11835
    %12149 = vmatprep.subr.bf16.mxu0 %v11840
    %12150 = vmatpush1.bf16.msra.mxu0 %v11839
    %12151 = vmatprep.subr.bf16.mxu0 %v11844
    %12152 = vmatpush1.bf16.msra.mxu0 %v11843
    %12153 = vmatprep.subr.bf16.mxu0 %v11848
    %12154 = vmatpush1.bf16.msra.mxu0 %v11847
    %12155 = vmatprep.mubr.bf16.mxu0 %v11248
    %12156 = vmatmul.mubr.bf16.gmra.mrb[0].mxu0 %v11247
    %v12157 = vpop.f32.mrb[0].mxu0
    %v12158 = vadd.f32 %v11392, %v12157
    %v12159 = vpop.f32.mrb[0].mxu0
    %v12160 = vadd.f32 %v11396, %v12159
    %v12161 = vpop.f32.mrb[0].mxu0
    %v12162 = vpop.f32.mrb[0].mxu0
    %12163 = vdwg.mxu0
    %12164 = vmatprep.subr.bf16.mxu0 %v11852
    %12165 = vmatpush1.bf16.msra.mxu0 %v11851
    %12166 = vmatprep.subr.bf16.mxu0 %v11856
    %12167 = vmatpush1.bf16.msra.mxu0 %v11855
    %12168 = vmatprep.subr.bf16.mxu0 %v11860
    %12169 = vmatpush1.bf16.msra.mxu0 %v11859
    %12170 = vmatprep.subr.bf16.mxu0 %v11864
    %12171 = vmatpush1.bf16.msra.mxu0 %v11863
    %12172 = vmatprep.subr.bf16.mxu0 %v11868
    %12173 = vmatpush1.bf16.msra.mxu0 %v11867
    %12174 = vmatprep.subr.bf16.mxu0 %v11872
    %12175 = vmatpush1.bf16.msra.mxu0 %v11871
    %12176 = vmatprep.subr.bf16.mxu0 %v11876
    %12177 = vmatpush1.bf16.msra.mxu0 %v11875
    %12178 = vmatprep.subr.bf16.mxu0 %v11880
    %12179 = vmatpush1.bf16.msra.mxu0 %v11879
    %12180 = vmatprep.subr.bf16.mxu0 %v11884
    %12181 = vmatpush1.bf16.msra.mxu0 %v11883
    %12182 = vmatprep.subr.bf16.mxu0 %v11888
    %12183 = vmatpush1.bf16.msra.mxu0 %v11887
    %12184 = vmatprep.subr.bf16.mxu0 %v11892
    %12185 = vmatpush1.bf16.msra.mxu0 %v11891
    %12186 = vmatprep.subr.bf16.mxu0 %v11896
    %12187 = vmatpush1.bf16.msra.mxu0 %v11895
    %12188 = vmatprep.subr.bf16.mxu0 %v11900
    %12189 = vmatpush1.bf16.msra.mxu0 %v11899
    %12190 = vmatprep.subr.bf16.mxu0 %v11904
    %12191 = vmatpush1.bf16.msra.mxu0 %v11903
    %12192 = vmatprep.subr.bf16.mxu0 %v11908
    %12193 = vmatpush1.bf16.msra.mxu0 %v11907
    %12194 = vmatprep.subr.bf16.mxu0 %v11912
    %12195 = vmatpush1.bf16.msra.mxu0 %v11911
    %12196 = vmatprep.mubr.bf16.mxu0 %v11250
    %12197 = vmatmul.mubr.bf16.gmra.mrb[0].mxu0 %v11249
    %v12198 = vpop.f32.mrb[0].mxu0
    %v12199 = vadd.f32 %v12158, %v12198
    %v12200 = vpop.f32.mrb[0].mxu0
    %v12201 = vadd.f32 %v12160, %v12200
    %v12202 = vpop.f32.mrb[0].mxu0
    %v12203 = vpop.f32.mrb[0].mxu0
    %12204 = vdwg.mxu0
    %v12205 = vpack.c.bf16 %v12117, %v12117
    %v12206 = vpack.c.bf16 %v12119, %v12119
    %v12207 = vpack.c.bf16 %v12199, %v12199
    %v12208 = vpack.c.bf16 %v12201, %v12201
    %v12209 = vmax.bf16 %v12205, 0
    %v12210 = vmax.bf16 %v12206, 0
    %v12211 = vmax.bf16 %v12207, 0
    %v12212 = vmax.bf16 %v12208, 0
    %v12213 = vunpack.c.l.bf16 %v12209
    %v12214 = vunpack.c.l.bf16 %v12210
    %v12215 = vunpack.c.l.bf16 %v12211
    %v12216 = vunpack.c.l.bf16 %v12212
    %v12217 = vld [vmem:[%s25] sm:$0xf]
    %v12219 = vlaneseq
    %v12220 = vshrl.u32 %v12219, 7
    %v12221 = vsub.s32 0, %v12220
    %v12222 = vrot.slane %v12217, %v12221
    %v12223 = vlaneseq
    %v12224 = vshrl.u32 %v12223, 7
    %v12225 = vsub.s32 1, %v12224
    %v12226 = vrot.slane %v12217, %v12225
    %v12227 = vlaneseq
    %v12228 = vshrl.u32 %v12227, 7
    %v12229 = vsub.s32 2, %v12228
    %v12230 = vrot.slane %v12217, %v12229
    %v12231 = vlaneseq
    %v12232 = vshrl.u32 %v12231, 7
    %v12233 = vsub.s32 3, %v12232
    %v12234 = vrot.slane %v12217, %v12233
    %v12239 = vmul.f32 %v12213, %v12222
    %v12240 = vmul.f32 %v12214, %v12226
    %v12241 = vmul.f32 %v12215, %v12230
    %v12242 = vmul.f32 %v12216, %v12234
    %v12243 = vadd.f32 %v12239, %v12240
    %v12244 = vadd.f32 %v12243, %v12241
    %v12245 = vadd.f32 %v12244, %v12242
    %12246 = vadd.xlane.f32.xlu0 %v12245
    %v12247 = vpop.xlane.xlu0 %12246
    %v12248 = vld [vmem:[#allocation2] sm:$0x1]
    %v12250 = vlaneseq
    %v12251 = vshrl.u32 %v12250, 7
    %v12252 = vsub.s32 0, %v12251
    %v12253 = vrot.slane %v12248, %v12252
    %v12255 = vadd.f32 %v12247, %v12253
    %vm12256 = vcmask 7168
    %12257 = vst.msk [vmem:[%s27] sm:$0xff] %vm12256, %v12255
    // Predicated region
    $region166: #{tpu_custom_call.1} parent=1 // pred_check
      _
    $region167: #{tpu_custom_call.1} parent=1 // pred_check_branch
      %12259 = sbr.rel (0) target = $region169
    $region168: #{tpu_custom_call.1} parent=1 // pred_region
      _
    $region169: #{tpu_custom_call.1} parent=1 // pred_fallthru
      _
    // Predicated region
    $region170: #{tpu_custom_call.1} parent=1 // pred_check
      _
    $region171: #{tpu_custom_call.1} parent=1 // pred_check_branch
      %12261 = sbr.rel (0) target = $region173
    $region172: #{tpu_custom_call.1} parent=1 // pred_region
      _
    $region173: #{tpu_custom_call.1} parent=1 // pred_fallthru
      _
    %12262 = vsyncpa [#allocation4], 1
    %12263 = vsyncpa [#allocation6], 1
    %12264 = vsyncpa [#allocation9], 1
    %12265 = vsyncpa [#allocation12], 1
    %12266 = vsyncpa [#allocation15], 1
    %12267 = vsyncpa [#allocation18], 1
    %12268 = vsyncpa [#allocation21], 1
    %12269 = vsyncpa [#allocation24], 1

</llo_original>
